<compile_context>
chip_gen: v7x
topology: tpu7x:2x2x1
jax: 0.10.0
libtpu: 0.0.40
codegen_flags: <defaults>
</compile_context>

<pallas_src>
import functools

import jax
import jax.numpy as jnp
from jax.experimental import pallas as pl
from jax.experimental.pallas import tpu as pltpu


def _recon_loss_kernel(logits_ref, labels_ref, out_ref, *,
                       n_rows, tile, tiles_per_core):
    """One grid step: CE over a (tile, C) block, accumulate weighted sums.

    out_ref is an (8, 128) f32 block private to this core:
      [0, 0] = sum(ce * w), [1, 0] = sum(exp(ce) * w), [2, 0] = sum(w).
    """
    c = pl.program_id(0)          # core axis ("parallel")
    j = pl.program_id(1)          # sequential reduction axis ("arbitrary")

    @pl.when(j == 0)
    def _init():
        out_ref[...] = jnp.zeros_like(out_ref)

    # Rows this (c, j) step is nominally responsible for.  The index_map clamps
    # the DMA'd block index to stay in bounds, so duplicated / partial blocks
    # are neutralized here via `valid`.
    block_idx = c * tiles_per_core + j
    row_start = block_idx * tile

    logits = logits_ref[...].astype(jnp.float32)                  # (tile, C)
    labels = labels_ref[...]                                      # (tile, 1)

    row_ids = row_start + jax.lax.broadcasted_iota(jnp.int32, (tile, 1), 0)
    valid = row_ids < n_rows                                      # (tile, 1)
    # keep-weight: label >= 0 means "position not masked"; tail rows -> 0.
    w = jnp.where(valid & (labels >= 0), 1.0, 0.0)                # (tile, 1) f32
    # Neutralize garbage logits of out-of-bounds rows BEFORE exp/log.
    logits = jnp.where(valid, logits, 0.0)

    # Stable log-softmax cross entropy: ce = logsumexp(logits) - logits[label]
    m = jnp.max(logits, axis=-1, keepdims=True)                   # (tile, 1)
    lse = m + jnp.log(jnp.sum(jnp.exp(logits - m), axis=-1, keepdims=True))
    cls_iota = jax.lax.broadcasted_iota(jnp.int32, logits.shape, 1)
    onehot = (cls_iota == labels).astype(jnp.float32)             # (tile, C)
    true_logit = jnp.sum(onehot * logits, axis=-1, keepdims=True)
    ce = lse - true_logit                                         # (tile, 1)

    out_ref[0:1, 0:1] += jnp.sum(ce * w, axis=0, keepdims=True)
    out_ref[1:2, 0:1] += jnp.sum(jnp.exp(ce) * w, axis=0, keepdims=True)
    out_ref[2:3, 0:1] += jnp.sum(w, axis=0, keepdims=True)


@functools.partial(jax.jit, static_argnames=("msa_depth", "tile", "num_cores"))
def reconstruction_loss(msa_true, msa_pred, mask, msa_depth,
                        tile=2048, num_cores=2):
    """Returns (loss, perplexity) matching the PyTorch ReconstructionLoss."""
    B, D, L = msa_true.shape
    C = msa_pred.shape[-1]
    assert D == msa_depth
    n = B * D * L

    # Glue (no extra HBM passes): fuse keep-mask into the labels, keep logits
    # in their native dtype, contiguous reshapes only.
    keep = jnp.logical_not(jnp.broadcast_to(mask[:, None, :], (B, D, L)))
    labels = jnp.where(keep, msa_true.astype(jnp.int32), -1).reshape(-1, 1)
    logits = msa_pred.reshape(-1, C)          # native dtype, upcast in-kernel

    # Tile / grid bookkeeping (all static under jit).
    tile = max(8, (int(tile) // 8) * 8)
    tile = min(tile, ((n + 7) // 8) * 8)      # don't use a tile far beyond N
    nblocks = pl.cdiv(n, tile)
    nc = num_cores if nblocks >= num_cores else 1
    tiles_per_core = pl.cdiv(nblocks, nc)
    grid = (nc, tiles_per_core)

    def row_block(c, j):
        # Clamp so the DMA never targets a block fully outside the array;
        # duplicated blocks contribute nothing (masked in-kernel).
        return (jnp.minimum(c * tiles_per_core + j, nblocks - 1), 0)

    kernel = functools.partial(_recon_loss_kernel, n_rows=n, tile=tile,
                               tiles_per_core=tiles_per_core)

    sums = pl.pallas_call(
        kernel,
        out_shape=jax.ShapeDtypeStruct((nc * 8, 128), jnp.float32),
        grid_spec=pltpu.PrefetchScalarGridSpec(
            num_scalar_prefetch=0,
            grid=grid,
            in_specs=[
                pl.BlockSpec((tile, C), row_block),
                pl.BlockSpec((tile, 1), row_block),
            ],
            out_specs=pl.BlockSpec((8, 128), lambda c, j: (c, 0)),
        ),
        compiler_params=pltpu.CompilerParams(
            dimension_semantics=("parallel", "arbitrary")),
    )(logits, labels)

    per_core = sums.reshape(nc, 8, 128)
    sum_loss = jnp.sum(per_core[:, 0, 0])
    sum_exp = jnp.sum(per_core[:, 1, 0])
    cnt = jnp.sum(per_core[:, 2, 0])
    loss = sum_loss / cnt
    perplexity = sum_exp / cnt
    return loss, perplexity


def _reference(msa_true, msa_pred, mask, msa_depth):
    """Pure-JAX reference reproducing the PyTorch forward."""
    B, D, L = msa_true.shape
    mask_exp = jnp.broadcast_to(mask[:, None, :], (B, D, L))
    keep = jnp.logical_not(mask_exp)
    logits = msa_pred.reshape(-1, msa_pred.shape[-1]).astype(jnp.float32)
    labels = msa_true.reshape(-1)
    logz = jax.scipy.special.logsumexp(logits, axis=-1)
    ce = logz - jnp.take_along_axis(logits, labels[:, None], axis=-1)[:, 0]
    w = keep.reshape(-1).astype(jnp.float32)
    cnt = jnp.sum(w)
    return jnp.sum(ce * w) / cnt, jnp.sum(jnp.exp(ce) * w) / cnt


if __name__ == "__main__":
    # Shapes chosen so the default tile exercises multi-step accumulation,
    # the partial last block, the clamped duplicate block and the 2-core split
    # (N = 2*8*520 = 8320 rows, nblocks = 5, grid = (2, 3)).
    B, D, L, C = 2, 8, 520, 33
    key = jax.random.PRNGKey(0)
    k1, k2, k3 = jax.random.split(key, 3)

    msa_true = jax.random.randint(k1, (B, D, L), 0, C, dtype=jnp.int32)
    msa_pred = jax.random.normal(k2, (B, D, L, C), dtype=jnp.float32)
    mask = jax.random.bernoulli(k3, 0.3, (B, L))          # True = masked out

    loss, ppl = reconstruction_loss(msa_true, msa_pred, mask, msa_depth=D)
    jax.block_until_ready((loss, ppl))

    ref_loss, ref_ppl = _reference(msa_true, msa_pred, mask, D)
    assert jnp.allclose(loss, ref_loss, rtol=1e-4, atol=1e-4), (loss, ref_loss)
    assert jnp.allclose(ppl, ref_ppl, rtol=1e-4, atol=1e-4), (ppl, ref_ppl)

    print("KERNEL_OK")
</pallas_src>

<mosaic_0001>
module attributes {stable_mosaic.version = 11 : i64} {
  func.func @_recon_loss_kernel(%arg0: i32, %arg1: i32, %arg2: memref<2048x33xf32, #tpu.memory_space<vmem>>, %arg3: memref<2048x1xi32, #tpu.memory_space<vmem>>, %arg4: memref<8x128xf32, #tpu.memory_space<vmem>>) attributes {dimension_semantics = [#tpu.dimension_semantics<parallel>, #tpu.dimension_semantics<arbitrary>], iteration_bounds = array<i64: 2, 3>, scalar_prefetch = 0 : i64, scratch_operands = 0 : i64, tpu.core_type = #tpu.core_type<tc>, window_params = [{transform_indices = @transform_0, window_bounds = array<i64: 2048, 33>}, {transform_indices = @transform_1, window_bounds = array<i64: 2048, 1>}, {transform_indices = @transform_2, window_bounds = array<i64: 8, 128>}]} {
    %c0_i32 = arith.constant 0 : i32
    %0 = arith.cmpi eq, %arg1, %c0_i32 : i32
    %1 = arith.extui %0 : i1 to i32
    %c0_i32_0 = arith.constant 0 : i32
    %2 = arith.cmpi ne, %1, %c0_i32_0 : i32
    scf.if %2 {
      %cst_23 = arith.constant 0.000000e+00 : f32
      %59 = vector.broadcast %cst_23 : f32 to vector<8x128xf32>
      %c0_24 = arith.constant 0 : index
      %c0_25 = arith.constant 0 : index
      %60 = vector.load %arg4[%c0_24, %c0_25] : memref<8x128xf32, #tpu.memory_space<vmem>>, vector<8x128xf32>
      tpu.vector_store %arg4[%c0_24, %c0_25], %59 {strides = array<i32>} : memref<8x128xf32, #tpu.memory_space<vmem>>, vector<8x128xf32>,
    } else {
    }
    %c3_i32 = arith.constant 3 : i32
    %3 = arith.muli %arg0, %c3_i32 : i32
    %4 = arith.addi %3, %arg1 : i32
    %c2048_i32 = arith.constant 2048 : i32
    %5 = arith.muli %4, %c2048_i32 : i32
    %c0 = arith.constant 0 : index
    %c0_1 = arith.constant 0 : index
    %6 = vector.load %arg2[%c0, %c0_1] : memref<2048x33xf32, #tpu.memory_space<vmem>>, vector<2048x33xf32>
    %c0_2 = arith.constant 0 : index
    %c0_3 = arith.constant 0 : index
    %7 = vector.load %arg3[%c0_2, %c0_3] : memref<2048x1xi32, #tpu.memory_space<vmem>>, vector<2048x1xi32>
    %8 = tpu.iota {dimensions = array<i32: 0>} : vector<2048x1xi32>
    %9 = vector.broadcast %5 : i32 to vector<2048x1xi32>
    %10 = arith.addi %9, %8 : vector<2048x1xi32>
    %c8320_i32 = arith.constant 8320 : i32
    %11 = vector.broadcast %c8320_i32 : i32 to vector<2048x1xi32>
    %12 = arith.cmpi slt, %10, %11 : vector<2048x1xi32>
    %c0_i32_4 = arith.constant 0 : i32
    %13 = vector.broadcast %c0_i32_4 : i32 to vector<2048x1xi32>
    %14 = arith.cmpi sge, %7, %13 : vector<2048x1xi32>
    %15 = arith.andi %12, %14 : vector<2048x1xi1>
    %cst = arith.constant 1.000000e+00 : f32
    %cst_5 = arith.constant 0.000000e+00 : f32
    %16 = vector.broadcast %cst : f32 to vector<2048x1xf32>
    %17 = vector.broadcast %cst_5 : f32 to vector<2048x1xf32>
    %18 = arith.select %15, %16, %17 : vector<2048x1xi1>, vector<2048x1xf32>
    %cst_6 = arith.constant 0.000000e+00 : f32
    %19 = vector.shape_cast %12 : vector<2048x1xi1> to vector<2048x1xi1>
    %20 = vector.broadcast %19 : vector<2048x1xi1> to vector<2048x33xi1>
    %21 = vector.broadcast %cst_6 : f32 to vector<2048x33xf32>
    %22 = arith.select %20, %6, %21 : vector<2048x33xi1>, vector<2048x33xf32>
    %cst_7 = arith.constant dense<0xFF800000> : vector<2048xf32>
    %23 = vector.multi_reduction <maximumf>, %22, %cst_7 [1] : vector<2048x33xf32> to vector<2048xf32>
    %24 = vector.shape_cast %23 : vector<2048xf32> to vector<2048x1xf32>
    %25 = vector.broadcast %24 : vector<2048x1xf32> to vector<2048x33xf32>
    %26 = arith.subf %22, %25 : vector<2048x33xf32>
    %27 = math.exp %26 : vector<2048x33xf32>
    %cst_8 = arith.constant dense<0.000000e+00> : vector<2048xf32>
    %28 = vector.multi_reduction <add>, %27, %cst_8 [1] : vector<2048x33xf32> to vector<2048xf32>
    %29 = vector.shape_cast %28 : vector<2048xf32> to vector<2048x1xf32>
    %30 = math.log %29 : vector<2048x1xf32>
    %31 = arith.addf %24, %30 : vector<2048x1xf32>
    %32 = tpu.iota {dimensions = array<i32: 1>} : vector<2048x33xi32>
    %33 = vector.broadcast %7 : vector<2048x1xi32> to vector<2048x33xi32>
    %34 = arith.cmpi eq, %32, %33 : vector<2048x33xi32>
    %35 = arith.extui %34 : vector<2048x33xi1> to vector<2048x33xi32>
    %36 = arith.sitofp %35 : vector<2048x33xi32> to vector<2048x33xf32>
    %37 = arith.mulf %36, %22 : vector<2048x33xf32>
    %cst_9 = arith.constant dense<0.000000e+00> : vector<2048xf32>
    %38 = vector.multi_reduction <add>, %37, %cst_9 [1] : vector<2048x33xf32> to vector<2048xf32>
    %39 = vector.shape_cast %38 : vector<2048xf32> to vector<2048x1xf32>
    %40 = arith.subf %31, %39 : vector<2048x1xf32>
    %c0_10 = arith.constant 0 : index
    %c0_11 = arith.constant 0 : index
    %41 = vector.load %arg4[%c0_10, %c0_11] : memref<8x128xf32, #tpu.memory_space<vmem>>, vector<1x1xf32>
    %42 = arith.mulf %40, %18 : vector<2048x1xf32>
    %cst_12 = arith.constant dense<0.000000e+00> : vector<1xf32>
    %43 = vector.multi_reduction <add>, %42, %cst_12 [0] : vector<2048x1xf32> to vector<1xf32>
    %44 = vector.shape_cast %43 : vector<1xf32> to vector<1x1xf32>
    %45 = arith.addf %41, %44 : vector<1x1xf32>
    %c0_13 = arith.constant 0 : index
    %c0_14 = arith.constant 0 : index
    %46 = vector.load %arg4[%c0_13, %c0_14] : memref<8x128xf32, #tpu.memory_space<vmem>>, vector<1x1xf32>
    tpu.vector_store %arg4[%c0_13, %c0_14], %45 {strides = array<i32>} : memref<8x128xf32, #tpu.memory_space<vmem>>, vector<1x1xf32>,
    %c1 = arith.constant 1 : index
    %c0_15 = arith.constant 0 : index
    %47 = vector.load %arg4[%c1, %c0_15] : memref<8x128xf32, #tpu.memory_space<vmem>>, vector<1x1xf32>
    %48 = math.exp %40 : vector<2048x1xf32>
    %49 = arith.mulf %48, %18 : vector<2048x1xf32>
    %cst_16 = arith.constant dense<0.000000e+00> : vector<1xf32>
    %50 = vector.multi_reduction <add>, %49, %cst_16 [0] : vector<2048x1xf32> to vector<1xf32>
    %51 = vector.shape_cast %50 : vector<1xf32> to vector<1x1xf32>
    %52 = arith.addf %47, %51 : vector<1x1xf32>
    %c1_17 = arith.constant 1 : index
    %c0_18 = arith.constant 0 : index
    %53 = vector.load %arg4[%c1_17, %c0_18] : memref<8x128xf32, #tpu.memory_space<vmem>>, vector<1x1xf32>
    tpu.vector_store %arg4[%c1_17, %c0_18], %52 {strides = array<i32>} : memref<8x128xf32, #tpu.memory_space<vmem>>, vector<1x1xf32>,
    %c2 = arith.constant 2 : index
    %c0_19 = arith.constant 0 : index
    %54 = vector.load %arg4[%c2, %c0_19] : memref<8x128xf32, #tpu.memory_space<vmem>>, vector<1x1xf32>
    %cst_20 = arith.constant dense<0.000000e+00> : vector<1xf32>
    %55 = vector.multi_reduction <add>, %18, %cst_20 [0] : vector<2048x1xf32> to vector<1xf32>
    %56 = vector.shape_cast %55 : vector<1xf32> to vector<1x1xf32>
    %57 = arith.addf %54, %56 : vector<1x1xf32>
    %c2_21 = arith.constant 2 : index
    %c0_22 = arith.constant 0 : index
    %58 = vector.load %arg4[%c2_21, %c0_22] : memref<8x128xf32, #tpu.memory_space<vmem>>, vector<1x1xf32>
    tpu.vector_store %arg4[%c2_21, %c0_22], %57 {strides = array<i32>} : memref<8x128xf32, #tpu.memory_space<vmem>>, vector<1x1xf32>,
    return
  }
  func.func @transform_0(%arg0: i32, %arg1: i32) -> (i32, i32) {
    %c3_i32 = arith.constant 3 : i32
    %0 = arith.muli %arg0, %c3_i32 : i32
    %1 = arith.addi %0, %arg1 : i32
    %c4_i32 = arith.constant 4 : i32
    %2 = arith.minsi %1, %c4_i32 : i32
    %c0_i32 = arith.constant 0 : i32
    %c0_i32_0 = arith.constant 0 : i32
    return %2, %c0_i32 : i32, i32
  }
  func.func @transform_1(%arg0: i32, %arg1: i32) -> (i32, i32) {
    %c3_i32 = arith.constant 3 : i32
    %0 = arith.muli %arg0, %c3_i32 : i32
    %1 = arith.addi %0, %arg1 : i32
    %c4_i32 = arith.constant 4 : i32
    %2 = arith.minsi %1, %c4_i32 : i32
    %c0_i32 = arith.constant 0 : i32
    %c0_i32_0 = arith.constant 0 : i32
    return %2, %c0_i32 : i32, i32
  }
  func.func @transform_2(%arg0: i32, %arg1: i32) -> (i32, i32) {
    %c0_i32 = arith.constant 0 : i32
    %c0_i32_0 = arith.constant 0 : i32
    return %arg0, %c0_i32 : i32, i32
  }
}

</mosaic_0001>

<llo_original>
// kernel: reconstruction_loss.1
$region0: #{reconstruction_loss.1}
  #allocation0 [shape = 'u32[]', space=smem, size = 0x4, offset = 0x4, fixed_abs, tag = 'smem constant byte address 0x4 - core index']
  #allocation1 [shape = 'u32[144,128]{1,0:T(1,128)}', space=vmem, size = 0x12000, scoped, tag = 'internal scratch']
  %s0 = inlined_call_operand.vmem [shape: f32[8320,33], index: 0, kind: input, shape index: {}]
  %s1 = inlined_call_operand.vmem [shape: s32[8320,1], index: 1, kind: input, shape index: {}]
  %s2 = inlined_call_operand.vmem [shape: f32[16,128], index: 2, kind: output, shape index: {}]
  %s3 = sld [smem:[#allocation0]]
  $region45: #{reconstruction_loss.1} parent=0
    _
  %s5 = ssub.s32 1, %s3
  %s6 = scalar_select 0, %s5, %s3
  loop: start=0, step=1, limit=8
  $region2: #{reconstruction_loss.1} parent=0 // loop_pre_header
    _
  $region3: #{reconstruction_loss.1} parent=0 // loop_header
    %s8 = sphi 0, %s12
    %p9 = scmp.ge.s32.totalorder %s8, 8
    %s15 = sphi 0, %s27
    %s16 = sphi 0, %s23
    %s17 = sphi 0, %s15
    %s18 = sphi 0, %s16
    %s19 = sphi 0, %s17
    %s20 = sphi 0, %s18
    %s38 = sphi 0, %s40
    %s41 = sphi 0, %s38
    %s42 = sphi 0, %s41
    %s58 = sphi 0, %s42
    %s72 = sphi 0, %s74
    %s75 = sphi 0, %s72
    %s76 = sphi 0, %s75
    %s92 = sphi 0, %s76
    %s98 = sphi 0, %s100
    %s101 = sphi 0, %s98
    %s102 = sphi 0, %s101
    %s118 = sphi 0, %s102
  $region4: #{reconstruction_loss.1} parent=0 // loop_header_branch
    %11 = sbr.rel (%p9) target = $region8
  $region5: #{reconstruction_loss.1} parent=0 // loop_body
    %s13 = ssub.s32 %s8, 1
    %s14 = ssub.s32 %s8, 2
    %s21 = sadd.s32 1, %s16
    %p22 = scmp.ge.s32.totalorder %s21, 3
    %s23 = scalar_select %p22, 0, %s21
    %s24 = sadd.s32 1, %s15
    %s25 = scalar_select %p22, %s24, %s15
    %p26 = scmp.ge.s32.totalorder %s25, 2
    %s27 = scalar_select %p26, 0, %s25
    %s28 = smul.u32 %s15, 3
    %s29 = sadd.s32 %s28, %s16
    %p30 = scmp.lt.s32.totalorder %s29, 4
    %s31 = scalar_select %p30, %s29, 4
    %s32 = smul.u32 %s27, 3
    %s33 = sadd.s32 %s32, %s23
    %p34 = scmp.lt.s32.totalorder %s33, 4
    %s35 = scalar_select %p34, %s33, 4
    %s36 = ssub.s32 %s31, %s35
    %p37 = scmp.eq.s32.totalorder %s36, 0
    %s39 = sadd.s32 %s38, 1
    %s40 = scalar_select %p37, %s38, %s39
    %p43 = pneg %p37
    %p44 = scmp.eq.s32.totalorder %s8, 5
    %p45 = por %p43, %p44
    %p46 = scmp.ne.s32.totalorder %s38, %s41
    %p47 = scmp.eq.s32.totalorder %s8, 0
    %p48 = por %p46, %p47
    %p49 = scmp.ne.s32.totalorder %s38, %s41
    %p50 = scmp.eq.s32.totalorder %s13, 5
    %p51 = por %p49, %p50
    %p52 = scmp.ne.s32.totalorder %s41, %s42
    %p53 = scmp.eq.s32.totalorder %s13, 0
    %p54 = por %p52, %p53
    %p55 = scmp.ne.s32.totalorder %s41, %s42
    %p56 = scmp.eq.s32.totalorder %s14, 5
    %p57 = por %p55, %p56
    %p59 = scmp.ne.s32.totalorder %s42, %s58
    %p60 = scmp.eq.s32.totalorder %s14, 0
    %p61 = por %p59, %p60
    %s62 = smul.u32 %s15, 3
    %s63 = sadd.s32 %s62, %s16
    %p64 = scmp.lt.s32.totalorder %s63, 4
    %s65 = scalar_select %p64, %s63, 4
    %s66 = smul.u32 %s27, 3
    %s67 = sadd.s32 %s66, %s23
    %p68 = scmp.lt.s32.totalorder %s67, 4
    %s69 = scalar_select %p68, %s67, 4
    %s70 = ssub.s32 %s65, %s69
    %p71 = scmp.eq.s32.totalorder %s70, 0
    %s73 = sadd.s32 %s72, 1
    %s74 = scalar_select %p71, %s72, %s73
    %p77 = pneg %p71
    %p78 = scmp.eq.s32.totalorder %s8, 5
    %p79 = por %p77, %p78
    %p80 = scmp.ne.s32.totalorder %s72, %s75
    %p81 = scmp.eq.s32.totalorder %s8, 0
    %p82 = por %p80, %p81
    %p83 = scmp.ne.s32.totalorder %s72, %s75
    %p84 = scmp.eq.s32.totalorder %s13, 5
    %p85 = por %p83, %p84
    %p86 = scmp.ne.s32.totalorder %s75, %s76
    %p87 = scmp.eq.s32.totalorder %s13, 0
    %p88 = por %p86, %p87
    %p89 = scmp.ne.s32.totalorder %s75, %s76
    %p90 = scmp.eq.s32.totalorder %s14, 5
    %p91 = por %p89, %p90
    %p93 = scmp.ne.s32.totalorder %s76, %s92
    %p94 = scmp.eq.s32.totalorder %s14, 0
    %p95 = por %p93, %p94
    %s96 = ssub.s32 %s15, %s27
    %p97 = scmp.eq.s32.totalorder %s96, 0
    %s99 = sadd.s32 %s98, 1
    %s100 = scalar_select %p97, %s98, %s99
    %p103 = pneg %p97
    %p104 = scmp.eq.s32.totalorder %s8, 5
    %p105 = por %p103, %p104
    %p106 = scmp.ne.s32.totalorder %s98, %s101
    %p107 = scmp.eq.s32.totalorder %s8, 0
    %p108 = por %p106, %p107
    %p109 = scmp.ne.s32.totalorder %s98, %s101
    %p110 = scmp.eq.s32.totalorder %s13, 5
    %p111 = por %p109, %p110
    %p112 = scmp.ne.s32.totalorder %s101, %s102
    %p113 = scmp.eq.s32.totalorder %s13, 0
    %p114 = por %p112, %p113
    %p115 = scmp.ne.s32.totalorder %s101, %s102
    %p116 = scmp.eq.s32.totalorder %s14, 5
    %p117 = por %p115, %p116
    %p119 = scmp.ne.s32.totalorder %s102, %s118
    %p120 = scmp.eq.s32.totalorder %s14, 0
    %p121 = por %p119, %p120
    %p122 = scmp.le.s32.totalorder 1, %s8
    %p123 = scmp.lt.s32.totalorder %s8, 7
    %p124 = pnand %p122, %p123
    %p125 = pneg %p124
    // Predicated region
    $region9: #{reconstruction_loss.1} parent=5 // pred_check
      _
    $region10: #{reconstruction_loss.1} parent=5 // pred_check_branch
      %127 = sbr.rel (%p124) target = $region12
    $region11: #{reconstruction_loss.1} parent=5 // pred_region
      %s128 = ssub.s32 %s8, 1
    $region12: #{reconstruction_loss.1} parent=5 // pred_fallthru
      _
    %p129 = scmp.lt.s32.totalorder %s8, 6
    // Predicated region
    $region13: #{reconstruction_loss.1} parent=5 // pred_check
      %p130 = pneg %p129
    $region14: #{reconstruction_loss.1} parent=5 // pred_check_branch
      %132 = sbr.rel (%p130) target = $region16
    $region15: #{reconstruction_loss.1} parent=5 // pred_region
      // Predicated region
      $region17: #{reconstruction_loss.1} parent=15 // pred_check
        %p133 = pneg %p48
      $region18: #{reconstruction_loss.1} parent=15 // pred_check_branch
        %135 = sbr.rel (%p133) target = $region20
      $region19: #{reconstruction_loss.1} parent=15 // pred_region
        %s136 = smul.u32 %s15, 3
        %s137 = sadd.s32 %s136, %s16
        %p138 = scmp.lt.s32.totalorder %s137, 4
        %s139 = scalar_select %p138, %s137, 4
        %s140 = smul.u32 256, %s139
        %s141 = ssub.s32 1040, %s140
        %p142 = scmp.lt.s32.totalorder %s141, 256
        %s143 = scalar_select %p142, %s141, 256
        %s144 = smul.u32 128, %s143
        %p145 = scmp.lt.s32.totalorder %s140, 1039
        %s146 = scalar_select %p145, %s140, 1039
        %s147 = smul.addr %s146, 8
        %s148 = scalar_lea.vmem %s0, %s147
        %s149 = smul.u32 %s15, 3
        %s150 = sadd.s32 %s149, %s16
        %p151 = scmp.lt.s32.totalorder %s150, 4
        %s152 = scalar_select %p151, %s150, 4
        %s153 = smul.u32 256, %s152
        %s154 = ssub.s32 1040, %s153
        %p155 = scmp.lt.s32.totalorder %s154, 256
        %s156 = scalar_select %p155, %s154, 256
        %s157 = smul.u32 128, %s156
      $region20: #{reconstruction_loss.1} parent=15 // pred_fallthru
        _
      // Predicated region
      $region21: #{reconstruction_loss.1} parent=15 // pred_check
        %p158 = pneg %p82
      $region22: #{reconstruction_loss.1} parent=15 // pred_check_branch
        %160 = sbr.rel (%p158) target = $region24
      $region23: #{reconstruction_loss.1} parent=15 // pred_region
        %s161 = smul.u32 %s15, 3
        %s162 = sadd.s32 %s161, %s16
        %p163 = scmp.lt.s32.totalorder %s162, 4
        %s164 = scalar_select %p163, %s162, 4
        %s165 = smul.u32 256, %s164
        %s166 = ssub.s32 1040, %s165
        %p167 = scmp.lt.s32.totalorder %s166, 256
        %s168 = scalar_select %p167, %s166, 256
        %s169 = smul.u32 128, %s168
        %p170 = scmp.lt.s32.totalorder %s165, 1039
        %s171 = scalar_select %p170, %s165, 1039
        %s172 = smul.addr %s171, 8
        %s173 = scalar_lea.vmem %s1, %s172
        %s174 = smul.u32 %s15, 3
        %s175 = sadd.s32 %s174, %s16
        %p176 = scmp.lt.s32.totalorder %s175, 4
        %s177 = scalar_select %p176, %s175, 4
        %s178 = smul.u32 256, %s177
        %s179 = ssub.s32 1040, %s178
        %p180 = scmp.lt.s32.totalorder %s179, 256
        %s181 = scalar_select %p180, %s179, 256
        %s182 = smul.u32 128, %s181
      $region24: #{reconstruction_loss.1} parent=15 // pred_fallthru
        _
    $region16: #{reconstruction_loss.1} parent=5 // pred_fallthru
      _
    %p183 = scmp.le.s32.totalorder 1, %s8
    %p184 = scmp.lt.s32.totalorder %s8, 7
    %p185 = pnand %p183, %p184
    %p186 = pneg %p185
    // Predicated region
    $region25: #{reconstruction_loss.1} parent=5 // pred_check
      _
    $region26: #{reconstruction_loss.1} parent=5 // pred_check_branch
      %188 = sbr.rel (%p185) target = $region28
    $region27: #{reconstruction_loss.1} parent=5 // pred_region
      %s189 = ssub.s32 %s8, 1
      %s190 = smul.u32 %s17, 3
      %s191 = sadd.s32 %s190, %s18
      %p192 = scmp.lt.s32.totalorder %s191, 4
      %s193 = scalar_select %p192, %s191, 4
      %s194 = smul.u32 256, %s193
      %s195 = ssub.s32 1040, %s194
      %p196 = scmp.lt.s32.totalorder %s195, 256
      %s197 = scalar_select %p196, %s195, 256
      %s198 = smul.u32 128, %s197
      %p199 = scmp.lt.s32.totalorder %s194, 1039
      %s200 = scalar_select %p199, %s194, 1039
      %s201 = smul.addr %s200, 8
      %s202 = scalar_lea.vmem %s0, %s201
      %p203 = pneg %p54
      %p204 = pneg %p51
      %s205 = smul.u32 %s17, 3
      %s206 = sadd.s32 %s205, %s18
      %p207 = scmp.lt.s32.totalorder %s206, 4
      %s208 = scalar_select %p207, %s206, 4
      %s209 = smul.u32 256, %s208
      %s210 = ssub.s32 1040, %s209
      %p211 = scmp.lt.s32.totalorder %s210, 256
      %s212 = scalar_select %p211, %s210, 256
      %s213 = smul.u32 128, %s212
      %p214 = scmp.lt.s32.totalorder %s209, 1039
      %s215 = scalar_select %p214, %s209, 1039
      %s216 = smul.addr %s215, 8
      %s217 = scalar_lea.vmem %s1, %s216
      %p218 = pneg %p88
      %p219 = pneg %p85
      %p220 = pneg %p114
      %p221 = pneg %p111
      %p222 = scmp.lt.s32.totalorder %s17, 1
      %s223 = scalar_select %p222, %s17, 1
      %s224 = smul.addr %s223, 8
      %s225 = scalar_lea.vmem %s2, %s224
      %s226 = smul.u32 %s17, 3
      %s227 = sadd.s32 %s226, %s18
      %p228 = scmp.lt.s32.totalorder %s227, 4
      %s229 = scalar_select %p228, %s227, 4
      %s230 = smul.u32 256, %s229
      %s231 = ssub.s32 1040, %s230
      %p232 = scmp.lt.s32.totalorder %s231, 256
      %s233 = scalar_select %p232, %s231, 256
      %s234 = smul.u32 128, %s233
      %p235 = scmp.lt.s32.totalorder %s230, 1039
      %s236 = scalar_select %p235, %s230, 1039
      %s237 = smul.addr %s236, 8
      %s238 = scalar_lea.vmem %s0, %s237
      %s239 = smul.u32 %s17, 3
      %s240 = sadd.s32 %s239, %s18
      %p241 = scmp.lt.s32.totalorder %s240, 4
      %s242 = scalar_select %p241, %s240, 4
      %s243 = smul.u32 256, %s242
      %s244 = ssub.s32 1040, %s243
      %p245 = scmp.lt.s32.totalorder %s244, 256
      %s246 = scalar_select %p245, %s244, 256
      %s247 = smul.u32 128, %s246
      %s248 = smul.u32 %s17, 3
      %s249 = sadd.s32 %s248, %s18
      %p250 = scmp.lt.s32.totalorder %s249, 4
      %s251 = scalar_select %p250, %s249, 4
      %s252 = smul.u32 256, %s251
      %s253 = ssub.s32 1040, %s252
      %p254 = scmp.lt.s32.totalorder %s253, 256
      %s255 = scalar_select %p254, %s253, 256
      %s256 = smul.u32 128, %s255
      %p257 = scmp.lt.s32.totalorder %s252, 1039
      %s258 = scalar_select %p257, %s252, 1039
      %s259 = smul.addr %s258, 8
      %s260 = scalar_lea.vmem %s1, %s259
      %s261 = smul.u32 %s17, 3
      %s262 = sadd.s32 %s261, %s18
      %p263 = scmp.lt.s32.totalorder %s262, 4
      %s264 = scalar_select %p263, %s262, 4
      %s265 = smul.u32 256, %s264
      %s266 = ssub.s32 1040, %s265
      %p267 = scmp.lt.s32.totalorder %s266, 256
      %s268 = scalar_select %p267, %s266, 256
      %s269 = smul.u32 128, %s268
      %p270 = scmp.lt.s32.totalorder %s17, 1
      %s271 = scalar_select %p270, %s17, 1
      %s272 = smul.addr %s271, 8
      %s273 = scalar_lea.vmem %s2, %s272
      %p274 = scmp.eq.s32.totalorder %s18, 0
      // Predicated region
      $region29: #{reconstruction_loss.1} parent=27 // pred_check
        %p275 = pneg %p274
      $region30: #{reconstruction_loss.1} parent=27 // pred_check_branch
        %277 = sbr.rel (%p275) target = $region32
      $region31: #{reconstruction_loss.1} parent=27 // pred_region
        %278 = vst [vmem:[%s273] sm:$0xff] 0.0
      $region32: #{reconstruction_loss.1} parent=27 // pred_fallthru
        _
      %s279 = smul.u32 %s17, 3
      %s280 = sadd.s32 %s279, %s18
      %s281 = smul.u32 %s280, 2048
      %v282 = vld [vmem:[%s238] sm:$0xff]
      %v283 = vld [vmem:[%s238 + $0x8] sm:$0xff]
      %v284 = vld [vmem:[%s238 + $0x10] sm:$0xff]
      %v285 = vld [vmem:[%s238 + $0x18] sm:$0xff]
      %v286 = vld [vmem:[%s238 + $0x20] sm:$0xff]
      %v287 = vld [vmem:[%s238 + $0x28] sm:$0xff]
      %v288 = vld [vmem:[%s238 + $0x30] sm:$0xff]
      %v289 = vld [vmem:[%s238 + $0x38] sm:$0xff]
      %v290 = vld [vmem:[%s238 + $0x40] sm:$0xff]
      %v291 = vld [vmem:[%s238 + $0x48] sm:$0xff]
      %v292 = vld [vmem:[%s238 + $0x50] sm:$0xff]
      %v293 = vld [vmem:[%s238 + $0x58] sm:$0xff]
      %v294 = vld [vmem:[%s238 + $0x60] sm:$0xff]
      %v295 = vld [vmem:[%s238 + $0x68] sm:$0xff]
      %v296 = vld [vmem:[%s238 + $0x70] sm:$0xff]
      %v297 = vld [vmem:[%s238 + $0x78] sm:$0xff]
      %v298 = vld [vmem:[%s238 + $0x80] sm:$0xff]
      %v299 = vld [vmem:[%s238 + $0x88] sm:$0xff]
      %v300 = vld [vmem:[%s238 + $0x90] sm:$0xff]
      %v301 = vld [vmem:[%s238 + $0x98] sm:$0xff]
      %v302 = vld [vmem:[%s238 + $0xa0] sm:$0xff]
      %v303 = vld [vmem:[%s238 + $0xa8] sm:$0xff]
      %v304 = vld [vmem:[%s238 + $0xb0] sm:$0xff]
      %v305 = vld [vmem:[%s238 + $0xb8] sm:$0xff]
      %v306 = vld [vmem:[%s238 + $0xc0] sm:$0xff]
      %v307 = vld [vmem:[%s238 + $0xc8] sm:$0xff]
      %v308 = vld [vmem:[%s238 + $0xd0] sm:$0xff]
      %v309 = vld [vmem:[%s238 + $0xd8] sm:$0xff]
      %v310 = vld [vmem:[%s238 + $0xe0] sm:$0xff]
      %v311 = vld [vmem:[%s238 + $0xe8] sm:$0xff]
      %v312 = vld [vmem:[%s238 + $0xf0] sm:$0xff]
      %v313 = vld [vmem:[%s238 + $0xf8] sm:$0xff]
      %v314 = vld [vmem:[%s238 + $0x100] sm:$0xff]
      %v315 = vld [vmem:[%s238 + $0x108] sm:$0xff]
      %v316 = vld [vmem:[%s238 + $0x110] sm:$0xff]
      %v317 = vld [vmem:[%s238 + $0x118] sm:$0xff]
      %v318 = vld [vmem:[%s238 + $0x120] sm:$0xff]
      %v319 = vld [vmem:[%s238 + $0x128] sm:$0xff]
      %v320 = vld [vmem:[%s238 + $0x130] sm:$0xff]
      %v321 = vld [vmem:[%s238 + $0x138] sm:$0xff]
      %v322 = vld [vmem:[%s238 + $0x140] sm:$0xff]
      %v323 = vld [vmem:[%s238 + $0x148] sm:$0xff]
      %v324 = vld [vmem:[%s238 + $0x150] sm:$0xff]
      %v325 = vld [vmem:[%s238 + $0x158] sm:$0xff]
      %v326 = vld [vmem:[%s238 + $0x160] sm:$0xff]
      %v327 = vld [vmem:[%s238 + $0x168] sm:$0xff]
      %v328 = vld [vmem:[%s238 + $0x170] sm:$0xff]
      %v329 = vld [vmem:[%s238 + $0x178] sm:$0xff]
      %v330 = vld [vmem:[%s238 + $0x180] sm:$0xff]
      %v331 = vld [vmem:[%s238 + $0x188] sm:$0xff]
      %v332 = vld [vmem:[%s238 + $0x190] sm:$0xff]
      %v333 = vld [vmem:[%s238 + $0x198] sm:$0xff]
      %v334 = vld [vmem:[%s238 + $0x1a0] sm:$0xff]
      %v335 = vld [vmem:[%s238 + $0x1a8] sm:$0xff]
      %v336 = vld [vmem:[%s238 + $0x1b0] sm:$0xff]
      %v337 = vld [vmem:[%s238 + $0x1b8] sm:$0xff]
      %v338 = vld [vmem:[%s238 + $0x1c0] sm:$0xff]
      %v339 = vld [vmem:[%s238 + $0x1c8] sm:$0xff]
      %v340 = vld [vmem:[%s238 + $0x1d0] sm:$0xff]
      %v341 = vld [vmem:[%s238 + $0x1d8] sm:$0xff]
      %v342 = vld [vmem:[%s238 + $0x1e0] sm:$0xff]
      %v343 = vld [vmem:[%s238 + $0x1e8] sm:$0xff]
      %v344 = vld [vmem:[%s238 + $0x1f0] sm:$0xff]
      %v345 = vld [vmem:[%s238 + $0x1f8] sm:$0xff]
      %v346 = vld [vmem:[%s238 + $0x200] sm:$0xff]
      %v347 = vld [vmem:[%s238 + $0x208] sm:$0xff]
      %v348 = vld [vmem:[%s238 + $0x210] sm:$0xff]
      %v349 = vld [vmem:[%s238 + $0x218] sm:$0xff]
      %v350 = vld [vmem:[%s238 + $0x220] sm:$0xff]
      %v351 = vld [vmem:[%s238 + $0x228] sm:$0xff]
      %v352 = vld [vmem:[%s238 + $0x230] sm:$0xff]
      %v353 = vld [vmem:[%s238 + $0x238] sm:$0xff]
      %v354 = vld [vmem:[%s238 + $0x240] sm:$0xff]
      %v355 = vld [vmem:[%s238 + $0x248] sm:$0xff]
      %v356 = vld [vmem:[%s238 + $0x250] sm:$0xff]
      %v357 = vld [vmem:[%s238 + $0x258] sm:$0xff]
      %v358 = vld [vmem:[%s238 + $0x260] sm:$0xff]
      %v359 = vld [vmem:[%s238 + $0x268] sm:$0xff]
      %v360 = vld [vmem:[%s238 + $0x270] sm:$0xff]
      %v361 = vld [vmem:[%s238 + $0x278] sm:$0xff]
      %v362 = vld [vmem:[%s238 + $0x280] sm:$0xff]
      %v363 = vld [vmem:[%s238 + $0x288] sm:$0xff]
      %v364 = vld [vmem:[%s238 + $0x290] sm:$0xff]
      %v365 = vld [vmem:[%s238 + $0x298] sm:$0xff]
      %v366 = vld [vmem:[%s238 + $0x2a0] sm:$0xff]
      %v367 = vld [vmem:[%s238 + $0x2a8] sm:$0xff]
      %v368 = vld [vmem:[%s238 + $0x2b0] sm:$0xff]
      %v369 = vld [vmem:[%s238 + $0x2b8] sm:$0xff]
      %v370 = vld [vmem:[%s238 + $0x2c0] sm:$0xff]
      %v371 = vld [vmem:[%s238 + $0x2c8] sm:$0xff]
      %v372 = vld [vmem:[%s238 + $0x2d0] sm:$0xff]
      %v373 = vld [vmem:[%s238 + $0x2d8] sm:$0xff]
      %v374 = vld [vmem:[%s238 + $0x2e0] sm:$0xff]
      %v375 = vld [vmem:[%s238 + $0x2e8] sm:$0xff]
      %v376 = vld [vmem:[%s238 + $0x2f0] sm:$0xff]
      %v377 = vld [vmem:[%s238 + $0x2f8] sm:$0xff]
      %v378 = vld [vmem:[%s238 + $0x300] sm:$0xff]
      %v379 = vld [vmem:[%s238 + $0x308] sm:$0xff]
      %v380 = vld [vmem:[%s238 + $0x310] sm:$0xff]
      %v381 = vld [vmem:[%s238 + $0x318] sm:$0xff]
      %v382 = vld [vmem:[%s238 + $0x320] sm:$0xff]
      %v383 = vld [vmem:[%s238 + $0x328] sm:$0xff]
      %v384 = vld [vmem:[%s238 + $0x330] sm:$0xff]
      %v385 = vld [vmem:[%s238 + $0x338] sm:$0xff]
      %v386 = vld [vmem:[%s238 + $0x340] sm:$0xff]
      %v387 = vld [vmem:[%s238 + $0x348] sm:$0xff]
      %v388 = vld [vmem:[%s238 + $0x350] sm:$0xff]
      %v389 = vld [vmem:[%s238 + $0x358] sm:$0xff]
      %v390 = vld [vmem:[%s238 + $0x360] sm:$0xff]
      %v391 = vld [vmem:[%s238 + $0x368] sm:$0xff]
      %v392 = vld [vmem:[%s238 + $0x370] sm:$0xff]
      %v393 = vld [vmem:[%s238 + $0x378] sm:$0xff]
      %v394 = vld [vmem:[%s238 + $0x380] sm:$0xff]
      %v395 = vld [vmem:[%s238 + $0x388] sm:$0xff]
      %v396 = vld [vmem:[%s238 + $0x390] sm:$0xff]
      %v397 = vld [vmem:[%s238 + $0x398] sm:$0xff]
      %v398 = vld [vmem:[%s238 + $0x3a0] sm:$0xff]
      %v399 = vld [vmem:[%s238 + $0x3a8] sm:$0xff]
      %v400 = vld [vmem:[%s238 + $0x3b0] sm:$0xff]
      %v401 = vld [vmem:[%s238 + $0x3b8] sm:$0xff]
      %v402 = vld [vmem:[%s238 + $0x3c0] sm:$0xff]
      %v403 = vld [vmem:[%s238 + $0x3c8] sm:$0xff]
      %v404 = vld [vmem:[%s238 + $0x3d0] sm:$0xff]
      %v405 = vld [vmem:[%s238 + $0x3d8] sm:$0xff]
      %v406 = vld [vmem:[%s238 + $0x3e0] sm:$0xff]
      %v407 = vld [vmem:[%s238 + $0x3e8] sm:$0xff]
      %v408 = vld [vmem:[%s238 + $0x3f0] sm:$0xff]
      %v409 = vld [vmem:[%s238 + $0x3f8] sm:$0xff]
      %v410 = vld [vmem:[%s238 + $0x400] sm:$0xff]
      %v411 = vld [vmem:[%s238 + $0x408] sm:$0xff]
      %v412 = vld [vmem:[%s238 + $0x410] sm:$0xff]
      %v413 = vld [vmem:[%s238 + $0x418] sm:$0xff]
      %v414 = vld [vmem:[%s238 + $0x420] sm:$0xff]
      %v415 = vld [vmem:[%s238 + $0x428] sm:$0xff]
      %v416 = vld [vmem:[%s238 + $0x430] sm:$0xff]
      %v417 = vld [vmem:[%s238 + $0x438] sm:$0xff]
      %v418 = vld [vmem:[%s238 + $0x440] sm:$0xff]
      %v419 = vld [vmem:[%s238 + $0x448] sm:$0xff]
      %v420 = vld [vmem:[%s238 + $0x450] sm:$0xff]
      %v421 = vld [vmem:[%s238 + $0x458] sm:$0xff]
      %v422 = vld [vmem:[%s238 + $0x460] sm:$0xff]
      %v423 = vld [vmem:[%s238 + $0x468] sm:$0xff]
      %v424 = vld [vmem:[%s238 + $0x470] sm:$0xff]
      %v425 = vld [vmem:[%s238 + $0x478] sm:$0xff]
      %v426 = vld [vmem:[%s238 + $0x480] sm:$0xff]
      %v427 = vld [vmem:[%s238 + $0x488] sm:$0xff]
      %v428 = vld [vmem:[%s238 + $0x490] sm:$0xff]
      %v429 = vld [vmem:[%s238 + $0x498] sm:$0xff]
      %v430 = vld [vmem:[%s238 + $0x4a0] sm:$0xff]
      %v431 = vld [vmem:[%s238 + $0x4a8] sm:$0xff]
      %v432 = vld [vmem:[%s238 + $0x4b0] sm:$0xff]
      %v433 = vld [vmem:[%s238 + $0x4b8] sm:$0xff]
      %v434 = vld [vmem:[%s238 + $0x4c0] sm:$0xff]
      %v435 = vld [vmem:[%s238 + $0x4c8] sm:$0xff]
      %v436 = vld [vmem:[%s238 + $0x4d0] sm:$0xff]
      %v437 = vld [vmem:[%s238 + $0x4d8] sm:$0xff]
      %v438 = vld [vmem:[%s238 + $0x4e0] sm:$0xff]
      %v439 = vld [vmem:[%s238 + $0x4e8] sm:$0xff]
      %v440 = vld [vmem:[%s238 + $0x4f0] sm:$0xff]
      %v441 = vld [vmem:[%s238 + $0x4f8] sm:$0xff]
      %v442 = vld [vmem:[%s238 + $0x500] sm:$0xff]
      %v443 = vld [vmem:[%s238 + $0x508] sm:$0xff]
      %v444 = vld [vmem:[%s238 + $0x510] sm:$0xff]
      %v445 = vld [vmem:[%s238 + $0x518] sm:$0xff]
      %v446 = vld [vmem:[%s238 + $0x520] sm:$0xff]
      %v447 = vld [vmem:[%s238 + $0x528] sm:$0xff]
      %v448 = vld [vmem:[%s238 + $0x530] sm:$0xff]
      %v449 = vld [vmem:[%s238 + $0x538] sm:$0xff]
      %v450 = vld [vmem:[%s238 + $0x540] sm:$0xff]
      %v451 = vld [vmem:[%s238 + $0x548] sm:$0xff]
      %v452 = vld [vmem:[%s238 + $0x550] sm:$0xff]
      %v453 = vld [vmem:[%s238 + $0x558] sm:$0xff]
      %v454 = vld [vmem:[%s238 + $0x560] sm:$0xff]
      %v455 = vld [vmem:[%s238 + $0x568] sm:$0xff]
      %v456 = vld [vmem:[%s238 + $0x570] sm:$0xff]
      %v457 = vld [vmem:[%s238 + $0x578] sm:$0xff]
      %v458 = vld [vmem:[%s238 + $0x580] sm:$0xff]
      %v459 = vld [vmem:[%s238 + $0x588] sm:$0xff]
      %v460 = vld [vmem:[%s238 + $0x590] sm:$0xff]
      %v461 = vld [vmem:[%s238 + $0x598] sm:$0xff]
      %v462 = vld [vmem:[%s238 + $0x5a0] sm:$0xff]
      %v463 = vld [vmem:[%s238 + $0x5a8] sm:$0xff]
      %v464 = vld [vmem:[%s238 + $0x5b0] sm:$0xff]
      %v465 = vld [vmem:[%s238 + $0x5b8] sm:$0xff]
      %v466 = vld [vmem:[%s238 + $0x5c0] sm:$0xff]
      %v467 = vld [vmem:[%s238 + $0x5c8] sm:$0xff]
      %v468 = vld [vmem:[%s238 + $0x5d0] sm:$0xff]
      %v469 = vld [vmem:[%s238 + $0x5d8] sm:$0xff]
      %v470 = vld [vmem:[%s238 + $0x5e0] sm:$0xff]
      %v471 = vld [vmem:[%s238 + $0x5e8] sm:$0xff]
      %v472 = vld [vmem:[%s238 + $0x5f0] sm:$0xff]
      %v473 = vld [vmem:[%s238 + $0x5f8] sm:$0xff]
      %v474 = vld [vmem:[%s238 + $0x600] sm:$0xff]
      %v475 = vld [vmem:[%s238 + $0x608] sm:$0xff]
      %v476 = vld [vmem:[%s238 + $0x610] sm:$0xff]
      %v477 = vld [vmem:[%s238 + $0x618] sm:$0xff]
      %v478 = vld [vmem:[%s238 + $0x620] sm:$0xff]
      %v479 = vld [vmem:[%s238 + $0x628] sm:$0xff]
      %v480 = vld [vmem:[%s238 + $0x630] sm:$0xff]
      %v481 = vld [vmem:[%s238 + $0x638] sm:$0xff]
      %v482 = vld [vmem:[%s238 + $0x640] sm:$0xff]
      %v483 = vld [vmem:[%s238 + $0x648] sm:$0xff]
      %v484 = vld [vmem:[%s238 + $0x650] sm:$0xff]
      %v485 = vld [vmem:[%s238 + $0x658] sm:$0xff]
      %v486 = vld [vmem:[%s238 + $0x660] sm:$0xff]
      %v487 = vld [vmem:[%s238 + $0x668] sm:$0xff]
      %v488 = vld [vmem:[%s238 + $0x670] sm:$0xff]
      %v489 = vld [vmem:[%s238 + $0x678] sm:$0xff]
      %v490 = vld [vmem:[%s238 + $0x680] sm:$0xff]
      %v491 = vld [vmem:[%s238 + $0x688] sm:$0xff]
      %v492 = vld [vmem:[%s238 + $0x690] sm:$0xff]
      %v493 = vld [vmem:[%s238 + $0x698] sm:$0xff]
      %v494 = vld [vmem:[%s238 + $0x6a0] sm:$0xff]
      %v495 = vld [vmem:[%s238 + $0x6a8] sm:$0xff]
      %v496 = vld [vmem:[%s238 + $0x6b0] sm:$0xff]
      %v497 = vld [vmem:[%s238 + $0x6b8] sm:$0xff]
      %v498 = vld [vmem:[%s238 + $0x6c0] sm:$0xff]
      %v499 = vld [vmem:[%s238 + $0x6c8] sm:$0xff]
      %v500 = vld [vmem:[%s238 + $0x6d0] sm:$0xff]
      %v501 = vld [vmem:[%s238 + $0x6d8] sm:$0xff]
      %v502 = vld [vmem:[%s238 + $0x6e0] sm:$0xff]
      %v503 = vld [vmem:[%s238 + $0x6e8] sm:$0xff]
      %v504 = vld [vmem:[%s238 + $0x6f0] sm:$0xff]
      %v505 = vld [vmem:[%s238 + $0x6f8] sm:$0xff]
      %v506 = vld [vmem:[%s238 + $0x700] sm:$0xff]
      %v507 = vld [vmem:[%s238 + $0x708] sm:$0xff]
      %v508 = vld [vmem:[%s238 + $0x710] sm:$0xff]
      %v509 = vld [vmem:[%s238 + $0x718] sm:$0xff]
      %v510 = vld [vmem:[%s238 + $0x720] sm:$0xff]
      %v511 = vld [vmem:[%s238 + $0x728] sm:$0xff]
      %v512 = vld [vmem:[%s238 + $0x730] sm:$0xff]
      %v513 = vld [vmem:[%s238 + $0x738] sm:$0xff]
      %v514 = vld [vmem:[%s238 + $0x740] sm:$0xff]
      %v515 = vld [vmem:[%s238 + $0x748] sm:$0xff]
      %v516 = vld [vmem:[%s238 + $0x750] sm:$0xff]
      %v517 = vld [vmem:[%s238 + $0x758] sm:$0xff]
      %v518 = vld [vmem:[%s238 + $0x760] sm:$0xff]
      %v519 = vld [vmem:[%s238 + $0x768] sm:$0xff]
      %v520 = vld [vmem:[%s238 + $0x770] sm:$0xff]
      %v521 = vld [vmem:[%s238 + $0x778] sm:$0xff]
      %v522 = vld [vmem:[%s238 + $0x780] sm:$0xff]
      %v523 = vld [vmem:[%s238 + $0x788] sm:$0xff]
      %v524 = vld [vmem:[%s238 + $0x790] sm:$0xff]
      %v525 = vld [vmem:[%s238 + $0x798] sm:$0xff]
      %v526 = vld [vmem:[%s238 + $0x7a0] sm:$0xff]
      %v527 = vld [vmem:[%s238 + $0x7a8] sm:$0xff]
      %v528 = vld [vmem:[%s238 + $0x7b0] sm:$0xff]
      %v529 = vld [vmem:[%s238 + $0x7b8] sm:$0xff]
      %v530 = vld [vmem:[%s238 + $0x7c0] sm:$0xff]
      %v531 = vld [vmem:[%s238 + $0x7c8] sm:$0xff]
      %v532 = vld [vmem:[%s238 + $0x7d0] sm:$0xff]
      %v533 = vld [vmem:[%s238 + $0x7d8] sm:$0xff]
      %v534 = vld [vmem:[%s238 + $0x7e0] sm:$0xff]
      %v535 = vld [vmem:[%s238 + $0x7e8] sm:$0xff]
      %v536 = vld [vmem:[%s238 + $0x7f0] sm:$0xff]
      %v537 = vld [vmem:[%s238 + $0x7f8] sm:$0xff]
      %v538 = vld [vmem:[%s260] sm:$0xff]
      %v539 = vld [vmem:[%s260 + $0x8] sm:$0xff]
      %v540 = vld [vmem:[%s260 + $0x10] sm:$0xff]
      %v541 = vld [vmem:[%s260 + $0x18] sm:$0xff]
      %v542 = vld [vmem:[%s260 + $0x20] sm:$0xff]
      %v543 = vld [vmem:[%s260 + $0x28] sm:$0xff]
      %v544 = vld [vmem:[%s260 + $0x30] sm:$0xff]
      %v545 = vld [vmem:[%s260 + $0x38] sm:$0xff]
      %v546 = vld [vmem:[%s260 + $0x40] sm:$0xff]
      %v547 = vld [vmem:[%s260 + $0x48] sm:$0xff]
      %v548 = vld [vmem:[%s260 + $0x50] sm:$0xff]
      %v549 = vld [vmem:[%s260 + $0x58] sm:$0xff]
      %v550 = vld [vmem:[%s260 + $0x60] sm:$0xff]
      %v551 = vld [vmem:[%s260 + $0x68] sm:$0xff]
      %v552 = vld [vmem:[%s260 + $0x70] sm:$0xff]
      %v553 = vld [vmem:[%s260 + $0x78] sm:$0xff]
      %v554 = vld [vmem:[%s260 + $0x80] sm:$0xff]
      %v555 = vld [vmem:[%s260 + $0x88] sm:$0xff]
      %v556 = vld [vmem:[%s260 + $0x90] sm:$0xff]
      %v557 = vld [vmem:[%s260 + $0x98] sm:$0xff]
      %v558 = vld [vmem:[%s260 + $0xa0] sm:$0xff]
      %v559 = vld [vmem:[%s260 + $0xa8] sm:$0xff]
      %v560 = vld [vmem:[%s260 + $0xb0] sm:$0xff]
      %v561 = vld [vmem:[%s260 + $0xb8] sm:$0xff]
      %v562 = vld [vmem:[%s260 + $0xc0] sm:$0xff]
      %v563 = vld [vmem:[%s260 + $0xc8] sm:$0xff]
      %v564 = vld [vmem:[%s260 + $0xd0] sm:$0xff]
      %v565 = vld [vmem:[%s260 + $0xd8] sm:$0xff]
      %v566 = vld [vmem:[%s260 + $0xe0] sm:$0xff]
      %v567 = vld [vmem:[%s260 + $0xe8] sm:$0xff]
      %v568 = vld [vmem:[%s260 + $0xf0] sm:$0xff]
      %v569 = vld [vmem:[%s260 + $0xf8] sm:$0xff]
      %v570 = vld [vmem:[%s260 + $0x100] sm:$0xff]
      %v571 = vld [vmem:[%s260 + $0x108] sm:$0xff]
      %v572 = vld [vmem:[%s260 + $0x110] sm:$0xff]
      %v573 = vld [vmem:[%s260 + $0x118] sm:$0xff]
      %v574 = vld [vmem:[%s260 + $0x120] sm:$0xff]
      %v575 = vld [vmem:[%s260 + $0x128] sm:$0xff]
      %v576 = vld [vmem:[%s260 + $0x130] sm:$0xff]
      %v577 = vld [vmem:[%s260 + $0x138] sm:$0xff]
      %v578 = vld [vmem:[%s260 + $0x140] sm:$0xff]
      %v579 = vld [vmem:[%s260 + $0x148] sm:$0xff]
      %v580 = vld [vmem:[%s260 + $0x150] sm:$0xff]
      %v581 = vld [vmem:[%s260 + $0x158] sm:$0xff]
      %v582 = vld [vmem:[%s260 + $0x160] sm:$0xff]
      %v583 = vld [vmem:[%s260 + $0x168] sm:$0xff]
      %v584 = vld [vmem:[%s260 + $0x170] sm:$0xff]
      %v585 = vld [vmem:[%s260 + $0x178] sm:$0xff]
      %v586 = vld [vmem:[%s260 + $0x180] sm:$0xff]
      %v587 = vld [vmem:[%s260 + $0x188] sm:$0xff]
      %v588 = vld [vmem:[%s260 + $0x190] sm:$0xff]
      %v589 = vld [vmem:[%s260 + $0x198] sm:$0xff]
      %v590 = vld [vmem:[%s260 + $0x1a0] sm:$0xff]
      %v591 = vld [vmem:[%s260 + $0x1a8] sm:$0xff]
      %v592 = vld [vmem:[%s260 + $0x1b0] sm:$0xff]
      %v593 = vld [vmem:[%s260 + $0x1b8] sm:$0xff]
      %v594 = vld [vmem:[%s260 + $0x1c0] sm:$0xff]
      %v595 = vld [vmem:[%s260 + $0x1c8] sm:$0xff]
      %v596 = vld [vmem:[%s260 + $0x1d0] sm:$0xff]
      %v597 = vld [vmem:[%s260 + $0x1d8] sm:$0xff]
      %v598 = vld [vmem:[%s260 + $0x1e0] sm:$0xff]
      %v599 = vld [vmem:[%s260 + $0x1e8] sm:$0xff]
      %v600 = vld [vmem:[%s260 + $0x1f0] sm:$0xff]
      %v601 = vld [vmem:[%s260 + $0x1f8] sm:$0xff]
      %v602 = vld [vmem:[%s260 + $0x200] sm:$0xff]
      %v603 = vld [vmem:[%s260 + $0x208] sm:$0xff]
      %v604 = vld [vmem:[%s260 + $0x210] sm:$0xff]
      %v605 = vld [vmem:[%s260 + $0x218] sm:$0xff]
      %v606 = vld [vmem:[%s260 + $0x220] sm:$0xff]
      %v607 = vld [vmem:[%s260 + $0x228] sm:$0xff]
      %v608 = vld [vmem:[%s260 + $0x230] sm:$0xff]
      %v609 = vld [vmem:[%s260 + $0x238] sm:$0xff]
      %v610 = vld [vmem:[%s260 + $0x240] sm:$0xff]
      %v611 = vld [vmem:[%s260 + $0x248] sm:$0xff]
      %v612 = vld [vmem:[%s260 + $0x250] sm:$0xff]
      %v613 = vld [vmem:[%s260 + $0x258] sm:$0xff]
      %v614 = vld [vmem:[%s260 + $0x260] sm:$0xff]
      %v615 = vld [vmem:[%s260 + $0x268] sm:$0xff]
      %v616 = vld [vmem:[%s260 + $0x270] sm:$0xff]
      %v617 = vld [vmem:[%s260 + $0x278] sm:$0xff]
      %v618 = vld [vmem:[%s260 + $0x280] sm:$0xff]
      %v619 = vld [vmem:[%s260 + $0x288] sm:$0xff]
      %v620 = vld [vmem:[%s260 + $0x290] sm:$0xff]
      %v621 = vld [vmem:[%s260 + $0x298] sm:$0xff]
      %v622 = vld [vmem:[%s260 + $0x2a0] sm:$0xff]
      %v623 = vld [vmem:[%s260 + $0x2a8] sm:$0xff]
      %v624 = vld [vmem:[%s260 + $0x2b0] sm:$0xff]
      %v625 = vld [vmem:[%s260 + $0x2b8] sm:$0xff]
      %v626 = vld [vmem:[%s260 + $0x2c0] sm:$0xff]
      %v627 = vld [vmem:[%s260 + $0x2c8] sm:$0xff]
      %v628 = vld [vmem:[%s260 + $0x2d0] sm:$0xff]
      %v629 = vld [vmem:[%s260 + $0x2d8] sm:$0xff]
      %v630 = vld [vmem:[%s260 + $0x2e0] sm:$0xff]
      %v631 = vld [vmem:[%s260 + $0x2e8] sm:$0xff]
      %v632 = vld [vmem:[%s260 + $0x2f0] sm:$0xff]
      %v633 = vld [vmem:[%s260 + $0x2f8] sm:$0xff]
      %v634 = vld [vmem:[%s260 + $0x300] sm:$0xff]
      %v635 = vld [vmem:[%s260 + $0x308] sm:$0xff]
      %v636 = vld [vmem:[%s260 + $0x310] sm:$0xff]
      %v637 = vld [vmem:[%s260 + $0x318] sm:$0xff]
      %v638 = vld [vmem:[%s260 + $0x320] sm:$0xff]
      %v639 = vld [vmem:[%s260 + $0x328] sm:$0xff]
      %v640 = vld [vmem:[%s260 + $0x330] sm:$0xff]
      %v641 = vld [vmem:[%s260 + $0x338] sm:$0xff]
      %v642 = vld [vmem:[%s260 + $0x340] sm:$0xff]
      %v643 = vld [vmem:[%s260 + $0x348] sm:$0xff]
      %v644 = vld [vmem:[%s260 + $0x350] sm:$0xff]
      %v645 = vld [vmem:[%s260 + $0x358] sm:$0xff]
      %v646 = vld [vmem:[%s260 + $0x360] sm:$0xff]
      %v647 = vld [vmem:[%s260 + $0x368] sm:$0xff]
      %v648 = vld [vmem:[%s260 + $0x370] sm:$0xff]
      %v649 = vld [vmem:[%s260 + $0x378] sm:$0xff]
      %v650 = vld [vmem:[%s260 + $0x380] sm:$0xff]
      %v651 = vld [vmem:[%s260 + $0x388] sm:$0xff]
      %v652 = vld [vmem:[%s260 + $0x390] sm:$0xff]
      %v653 = vld [vmem:[%s260 + $0x398] sm:$0xff]
      %v654 = vld [vmem:[%s260 + $0x3a0] sm:$0xff]
      %v655 = vld [vmem:[%s260 + $0x3a8] sm:$0xff]
      %v656 = vld [vmem:[%s260 + $0x3b0] sm:$0xff]
      %v657 = vld [vmem:[%s260 + $0x3b8] sm:$0xff]
      %v658 = vld [vmem:[%s260 + $0x3c0] sm:$0xff]
      %v659 = vld [vmem:[%s260 + $0x3c8] sm:$0xff]
      %v660 = vld [vmem:[%s260 + $0x3d0] sm:$0xff]
      %v661 = vld [vmem:[%s260 + $0x3d8] sm:$0xff]
      %v662 = vld [vmem:[%s260 + $0x3e0] sm:$0xff]
      %v663 = vld [vmem:[%s260 + $0x3e8] sm:$0xff]
      %v664 = vld [vmem:[%s260 + $0x3f0] sm:$0xff]
      %v665 = vld [vmem:[%s260 + $0x3f8] sm:$0xff]
      %v666 = vld [vmem:[%s260 + $0x400] sm:$0xff]
      %v667 = vld [vmem:[%s260 + $0x408] sm:$0xff]
      %v668 = vld [vmem:[%s260 + $0x410] sm:$0xff]
      %v669 = vld [vmem:[%s260 + $0x418] sm:$0xff]
      %v670 = vld [vmem:[%s260 + $0x420] sm:$0xff]
      %v671 = vld [vmem:[%s260 + $0x428] sm:$0xff]
      %v672 = vld [vmem:[%s260 + $0x430] sm:$0xff]
      %v673 = vld [vmem:[%s260 + $0x438] sm:$0xff]
      %v674 = vld [vmem:[%s260 + $0x440] sm:$0xff]
      %v675 = vld [vmem:[%s260 + $0x448] sm:$0xff]
      %v676 = vld [vmem:[%s260 + $0x450] sm:$0xff]
      %v677 = vld [vmem:[%s260 + $0x458] sm:$0xff]
      %v678 = vld [vmem:[%s260 + $0x460] sm:$0xff]
      %v679 = vld [vmem:[%s260 + $0x468] sm:$0xff]
      %v680 = vld [vmem:[%s260 + $0x470] sm:$0xff]
      %v681 = vld [vmem:[%s260 + $0x478] sm:$0xff]
      %v682 = vld [vmem:[%s260 + $0x480] sm:$0xff]
      %v683 = vld [vmem:[%s260 + $0x488] sm:$0xff]
      %v684 = vld [vmem:[%s260 + $0x490] sm:$0xff]
      %v685 = vld [vmem:[%s260 + $0x498] sm:$0xff]
      %v686 = vld [vmem:[%s260 + $0x4a0] sm:$0xff]
      %v687 = vld [vmem:[%s260 + $0x4a8] sm:$0xff]
      %v688 = vld [vmem:[%s260 + $0x4b0] sm:$0xff]
      %v689 = vld [vmem:[%s260 + $0x4b8] sm:$0xff]
      %v690 = vld [vmem:[%s260 + $0x4c0] sm:$0xff]
      %v691 = vld [vmem:[%s260 + $0x4c8] sm:$0xff]
      %v692 = vld [vmem:[%s260 + $0x4d0] sm:$0xff]
      %v693 = vld [vmem:[%s260 + $0x4d8] sm:$0xff]
      %v694 = vld [vmem:[%s260 + $0x4e0] sm:$0xff]
      %v695 = vld [vmem:[%s260 + $0x4e8] sm:$0xff]
      %v696 = vld [vmem:[%s260 + $0x4f0] sm:$0xff]
      %v697 = vld [vmem:[%s260 + $0x4f8] sm:$0xff]
      %v698 = vld [vmem:[%s260 + $0x500] sm:$0xff]
      %v699 = vld [vmem:[%s260 + $0x508] sm:$0xff]
      %v700 = vld [vmem:[%s260 + $0x510] sm:$0xff]
      %v701 = vld [vmem:[%s260 + $0x518] sm:$0xff]
      %v702 = vld [vmem:[%s260 + $0x520] sm:$0xff]
      %v703 = vld [vmem:[%s260 + $0x528] sm:$0xff]
      %v704 = vld [vmem:[%s260 + $0x530] sm:$0xff]
      %v705 = vld [vmem:[%s260 + $0x538] sm:$0xff]
      %v706 = vld [vmem:[%s260 + $0x540] sm:$0xff]
      %v707 = vld [vmem:[%s260 + $0x548] sm:$0xff]
      %v708 = vld [vmem:[%s260 + $0x550] sm:$0xff]
      %v709 = vld [vmem:[%s260 + $0x558] sm:$0xff]
      %v710 = vld [vmem:[%s260 + $0x560] sm:$0xff]
      %v711 = vld [vmem:[%s260 + $0x568] sm:$0xff]
      %v712 = vld [vmem:[%s260 + $0x570] sm:$0xff]
      %v713 = vld [vmem:[%s260 + $0x578] sm:$0xff]
      %v714 = vld [vmem:[%s260 + $0x580] sm:$0xff]
      %v715 = vld [vmem:[%s260 + $0x588] sm:$0xff]
      %v716 = vld [vmem:[%s260 + $0x590] sm:$0xff]
      %v717 = vld [vmem:[%s260 + $0x598] sm:$0xff]
      %v718 = vld [vmem:[%s260 + $0x5a0] sm:$0xff]
      %v719 = vld [vmem:[%s260 + $0x5a8] sm:$0xff]
      %v720 = vld [vmem:[%s260 + $0x5b0] sm:$0xff]
      %v721 = vld [vmem:[%s260 + $0x5b8] sm:$0xff]
      %v722 = vld [vmem:[%s260 + $0x5c0] sm:$0xff]
      %v723 = vld [vmem:[%s260 + $0x5c8] sm:$0xff]
      %v724 = vld [vmem:[%s260 + $0x5d0] sm:$0xff]
      %v725 = vld [vmem:[%s260 + $0x5d8] sm:$0xff]
      %v726 = vld [vmem:[%s260 + $0x5e0] sm:$0xff]
      %v727 = vld [vmem:[%s260 + $0x5e8] sm:$0xff]
      %v728 = vld [vmem:[%s260 + $0x5f0] sm:$0xff]
      %v729 = vld [vmem:[%s260 + $0x5f8] sm:$0xff]
      %v730 = vld [vmem:[%s260 + $0x600] sm:$0xff]
      %v731 = vld [vmem:[%s260 + $0x608] sm:$0xff]
      %v732 = vld [vmem:[%s260 + $0x610] sm:$0xff]
      %v733 = vld [vmem:[%s260 + $0x618] sm:$0xff]
      %v734 = vld [vmem:[%s260 + $0x620] sm:$0xff]
      %v735 = vld [vmem:[%s260 + $0x628] sm:$0xff]
      %v736 = vld [vmem:[%s260 + $0x630] sm:$0xff]
      %v737 = vld [vmem:[%s260 + $0x638] sm:$0xff]
      %v738 = vld [vmem:[%s260 + $0x640] sm:$0xff]
      %v739 = vld [vmem:[%s260 + $0x648] sm:$0xff]
      %v740 = vld [vmem:[%s260 + $0x650] sm:$0xff]
      %v741 = vld [vmem:[%s260 + $0x658] sm:$0xff]
      %v742 = vld [vmem:[%s260 + $0x660] sm:$0xff]
      %v743 = vld [vmem:[%s260 + $0x668] sm:$0xff]
      %v744 = vld [vmem:[%s260 + $0x670] sm:$0xff]
      %v745 = vld [vmem:[%s260 + $0x678] sm:$0xff]
      %v746 = vld [vmem:[%s260 + $0x680] sm:$0xff]
      %v747 = vld [vmem:[%s260 + $0x688] sm:$0xff]
      %v748 = vld [vmem:[%s260 + $0x690] sm:$0xff]
      %v749 = vld [vmem:[%s260 + $0x698] sm:$0xff]
      %v750 = vld [vmem:[%s260 + $0x6a0] sm:$0xff]
      %v751 = vld [vmem:[%s260 + $0x6a8] sm:$0xff]
      %v752 = vld [vmem:[%s260 + $0x6b0] sm:$0xff]
      %v753 = vld [vmem:[%s260 + $0x6b8] sm:$0xff]
      %v754 = vld [vmem:[%s260 + $0x6c0] sm:$0xff]
      %v755 = vld [vmem:[%s260 + $0x6c8] sm:$0xff]
      %v756 = vld [vmem:[%s260 + $0x6d0] sm:$0xff]
      %v757 = vld [vmem:[%s260 + $0x6d8] sm:$0xff]
      %v758 = vld [vmem:[%s260 + $0x6e0] sm:$0xff]
      %v759 = vld [vmem:[%s260 + $0x6e8] sm:$0xff]
      %v760 = vld [vmem:[%s260 + $0x6f0] sm:$0xff]
      %v761 = vld [vmem:[%s260 + $0x6f8] sm:$0xff]
      %v762 = vld [vmem:[%s260 + $0x700] sm:$0xff]
      %v763 = vld [vmem:[%s260 + $0x708] sm:$0xff]
      %v764 = vld [vmem:[%s260 + $0x710] sm:$0xff]
      %v765 = vld [vmem:[%s260 + $0x718] sm:$0xff]
      %v766 = vld [vmem:[%s260 + $0x720] sm:$0xff]
      %v767 = vld [vmem:[%s260 + $0x728] sm:$0xff]
      %v768 = vld [vmem:[%s260 + $0x730] sm:$0xff]
      %v769 = vld [vmem:[%s260 + $0x738] sm:$0xff]
      %v770 = vld [vmem:[%s260 + $0x740] sm:$0xff]
      %v771 = vld [vmem:[%s260 + $0x748] sm:$0xff]
      %v772 = vld [vmem:[%s260 + $0x750] sm:$0xff]
      %v773 = vld [vmem:[%s260 + $0x758] sm:$0xff]
      %v774 = vld [vmem:[%s260 + $0x760] sm:$0xff]
      %v775 = vld [vmem:[%s260 + $0x768] sm:$0xff]
      %v776 = vld [vmem:[%s260 + $0x770] sm:$0xff]
      %v777 = vld [vmem:[%s260 + $0x778] sm:$0xff]
      %v778 = vld [vmem:[%s260 + $0x780] sm:$0xff]
      %v779 = vld [vmem:[%s260 + $0x788] sm:$0xff]
      %v780 = vld [vmem:[%s260 + $0x790] sm:$0xff]
      %v781 = vld [vmem:[%s260 + $0x798] sm:$0xff]
      %v782 = vld [vmem:[%s260 + $0x7a0] sm:$0xff]
      %v783 = vld [vmem:[%s260 + $0x7a8] sm:$0xff]
      %v784 = vld [vmem:[%s260 + $0x7b0] sm:$0xff]
      %v785 = vld [vmem:[%s260 + $0x7b8] sm:$0xff]
      %v786 = vld [vmem:[%s260 + $0x7c0] sm:$0xff]
      %v787 = vld [vmem:[%s260 + $0x7c8] sm:$0xff]
      %v788 = vld [vmem:[%s260 + $0x7d0] sm:$0xff]
      %v789 = vld [vmem:[%s260 + $0x7d8] sm:$0xff]
      %v790 = vld [vmem:[%s260 + $0x7e0] sm:$0xff]
      %v791 = vld [vmem:[%s260 + $0x7e8] sm:$0xff]
      %v792 = vld [vmem:[%s260 + $0x7f0] sm:$0xff]
      %v793 = vld [vmem:[%s260 + $0x7f8] sm:$0xff]
      %v794 = vlaneseq
      %v795 = vshrl.u32 %v794, 7
      %v796 = vadd.s32 %v795, 8
      %v797 = vadd.s32 %v795, 16
      %v798 = vadd.s32 %v795, 24
      %v799 = vadd.s32 %v795, 32
      %v800 = vadd.s32 %v795, 40
      %v801 = vadd.s32 %v795, 48
      %v802 = vadd.s32 %v795, 56
      %v803 = vadd.s32 %v795, 64
      %v804 = vadd.s32 %v795, 72
      %v805 = vadd.s32 %v795, 80
      %v806 = vadd.s32 %v795, 88
      %v807 = vadd.s32 %v795, 96
      %v808 = vadd.s32 %v795, 104
      %v809 = vadd.s32 %v795, 112
      %v810 = vadd.s32 %v795, 120
      %v811 = vadd.s32 %v795, 128
      %v812 = vadd.s32 %v795, 136
      %v813 = vadd.s32 %v795, 144
      %v814 = vadd.s32 %v795, 152
      %v815 = vadd.s32 %v795, 160
      %v816 = vadd.s32 %v795, 168
      %v817 = vadd.s32 %v795, 176
      %v818 = vadd.s32 %v795, 184
      %v819 = vadd.s32 %v795, 192
      %v820 = vadd.s32 %v795, 200
      %v821 = vadd.s32 %v795, 208
      %v822 = vadd.s32 %v795, 216
      %v823 = vadd.s32 %v795, 224
      %v824 = vadd.s32 %v795, 232
      %v825 = vadd.s32 %v795, 240
      %v826 = vadd.s32 %v795, 248
      %v827 = vadd.s32 %v795, 256
      %v828 = vadd.s32 %v795, 264
      %v829 = vadd.s32 %v795, 272
      %v830 = vadd.s32 %v795, 280
      %v831 = vadd.s32 %v795, 288
      %v832 = vadd.s32 %v795, 296
      %v833 = vadd.s32 %v795, 304
      %v834 = vadd.s32 %v795, 312
      %v835 = vadd.s32 %v795, 320
      %v836 = vadd.s32 %v795, 328
      %v837 = vadd.s32 %v795, 336
      %v838 = vadd.s32 %v795, 344
      %v839 = vadd.s32 %v795, 352
      %v840 = vadd.s32 %v795, 360
      %v841 = vadd.s32 %v795, 368
      %v842 = vadd.s32 %v795, 376
      %v843 = vadd.s32 %v795, 384
      %v844 = vadd.s32 %v795, 392
      %v845 = vadd.s32 %v795, 400
      %v846 = vadd.s32 %v795, 408
      %v847 = vadd.s32 %v795, 416
      %v848 = vadd.s32 %v795, 424
      %v849 = vadd.s32 %v795, 432
      %v850 = vadd.s32 %v795, 440
      %v851 = vadd.s32 %v795, 448
      %v852 = vadd.s32 %v795, 456
      %v853 = vadd.s32 %v795, 464
      %v854 = vadd.s32 %v795, 472
      %v855 = vadd.s32 %v795, 480
      %v856 = vadd.s32 %v795, 488
      %v857 = vadd.s32 %v795, 496
      %v858 = vadd.s32 %v795, 504
      %v859 = vadd.s32 %v795, 512
      %v860 = vadd.s32 %v795, 520
      %v861 = vadd.s32 %v795, 528
      %v862 = vadd.s32 %v795, 536
      %v863 = vadd.s32 %v795, 544
      %v864 = vadd.s32 %v795, 552
      %v865 = vadd.s32 %v795, 560
      %v866 = vadd.s32 %v795, 568
      %v867 = vadd.s32 %v795, 576
      %v868 = vadd.s32 %v795, 584
      %v869 = vadd.s32 %v795, 592
      %v870 = vadd.s32 %v795, 600
      %v871 = vadd.s32 %v795, 608
      %v872 = vadd.s32 %v795, 616
      %v873 = vadd.s32 %v795, 624
      %v874 = vadd.s32 %v795, 632
      %v875 = vadd.s32 %v795, 640
      %v876 = vadd.s32 %v795, 648
      %v877 = vadd.s32 %v795, 656
      %v878 = vadd.s32 %v795, 664
      %v879 = vadd.s32 %v795, 672
      %v880 = vadd.s32 %v795, 680
      %v881 = vadd.s32 %v795, 688
      %v882 = vadd.s32 %v795, 696
      %v883 = vadd.s32 %v795, 704
      %v884 = vadd.s32 %v795, 712
      %v885 = vadd.s32 %v795, 720
      %v886 = vadd.s32 %v795, 728
      %v887 = vadd.s32 %v795, 736
      %v888 = vadd.s32 %v795, 744
      %v889 = vadd.s32 %v795, 752
      %v890 = vadd.s32 %v795, 760
      %v891 = vadd.s32 %v795, 768
      %v892 = vadd.s32 %v795, 776
      %v893 = vadd.s32 %v795, 784
      %v894 = vadd.s32 %v795, 792
      %v895 = vadd.s32 %v795, 800
      %v896 = vadd.s32 %v795, 808
      %v897 = vadd.s32 %v795, 816
      %v898 = vadd.s32 %v795, 824
      %v899 = vadd.s32 %v795, 832
      %v900 = vadd.s32 %v795, 840
      %v901 = vadd.s32 %v795, 848
      %v902 = vadd.s32 %v795, 856
      %v903 = vadd.s32 %v795, 864
      %v904 = vadd.s32 %v795, 872
      %v905 = vadd.s32 %v795, 880
      %v906 = vadd.s32 %v795, 888
      %v907 = vadd.s32 %v795, 896
      %v908 = vadd.s32 %v795, 904
      %v909 = vadd.s32 %v795, 912
      %v910 = vadd.s32 %v795, 920
      %v911 = vadd.s32 %v795, 928
      %v912 = vadd.s32 %v795, 936
      %v913 = vadd.s32 %v795, 944
      %v914 = vadd.s32 %v795, 952
      %v915 = vadd.s32 %v795, 960
      %v916 = vadd.s32 %v795, 968
      %v917 = vadd.s32 %v795, 976
      %v918 = vadd.s32 %v795, 984
      %v919 = vadd.s32 %v795, 992
      %v920 = vadd.s32 %v795, 1000
      %v921 = vadd.s32 %v795, 1008
      %v922 = vadd.s32 %v795, 1016
      %v923 = vadd.s32 %v795, 1024
      %v924 = vadd.s32 %v795, 1032
      %v925 = vadd.s32 %v795, 1040
      %v926 = vadd.s32 %v795, 1048
      %v927 = vadd.s32 %v795, 1056
      %v928 = vadd.s32 %v795, 1064
      %v929 = vadd.s32 %v795, 1072
      %v930 = vadd.s32 %v795, 1080
      %v931 = vadd.s32 %v795, 1088
      %v932 = vadd.s32 %v795, 1096
      %v933 = vadd.s32 %v795, 1104
      %v934 = vadd.s32 %v795, 1112
      %v935 = vadd.s32 %v795, 1120
      %v936 = vadd.s32 %v795, 1128
      %v937 = vadd.s32 %v795, 1136
      %v938 = vadd.s32 %v795, 1144
      %v939 = vadd.s32 %v795, 1152
      %v940 = vadd.s32 %v795, 1160
      %v941 = vadd.s32 %v795, 1168
      %v942 = vadd.s32 %v795, 1176
      %v943 = vadd.s32 %v795, 1184
      %v944 = vadd.s32 %v795, 1192
      %v945 = vadd.s32 %v795, 1200
      %v946 = vadd.s32 %v795, 1208
      %v947 = vadd.s32 %v795, 1216
      %v948 = vadd.s32 %v795, 1224
      %v949 = vadd.s32 %v795, 1232
      %v950 = vadd.s32 %v795, 1240
      %v951 = vadd.s32 %v795, 1248
      %v952 = vadd.s32 %v795, 1256
      %v953 = vadd.s32 %v795, 1264
      %v954 = vadd.s32 %v795, 1272
      %v955 = vadd.s32 %v795, 1280
      %v956 = vadd.s32 %v795, 1288
      %v957 = vadd.s32 %v795, 1296
      %v958 = vadd.s32 %v795, 1304
      %v959 = vadd.s32 %v795, 1312
      %v960 = vadd.s32 %v795, 1320
      %v961 = vadd.s32 %v795, 1328
      %v962 = vadd.s32 %v795, 1336
      %v963 = vadd.s32 %v795, 1344
      %v964 = vadd.s32 %v795, 1352
      %v965 = vadd.s32 %v795, 1360
      %v966 = vadd.s32 %v795, 1368
      %v967 = vadd.s32 %v795, 1376
      %v968 = vadd.s32 %v795, 1384
      %v969 = vadd.s32 %v795, 1392
      %v970 = vadd.s32 %v795, 1400
      %v971 = vadd.s32 %v795, 1408
      %v972 = vadd.s32 %v795, 1416
      %v973 = vadd.s32 %v795, 1424
      %v974 = vadd.s32 %v795, 1432
      %v975 = vadd.s32 %v795, 1440
      %v976 = vadd.s32 %v795, 1448
      %v977 = vadd.s32 %v795, 1456
      %v978 = vadd.s32 %v795, 1464
      %v979 = vadd.s32 %v795, 1472
      %v980 = vadd.s32 %v795, 1480
      %v981 = vadd.s32 %v795, 1488
      %v982 = vadd.s32 %v795, 1496
      %v983 = vadd.s32 %v795, 1504
      %v984 = vadd.s32 %v795, 1512
      %v985 = vadd.s32 %v795, 1520
      %v986 = vadd.s32 %v795, 1528
      %v987 = vadd.s32 %v795, 1536
      %v988 = vadd.s32 %v795, 1544
      %v989 = vadd.s32 %v795, 1552
      %v990 = vadd.s32 %v795, 1560
      %v991 = vadd.s32 %v795, 1568
      %v992 = vadd.s32 %v795, 1576
      %v993 = vadd.s32 %v795, 1584
      %v994 = vadd.s32 %v795, 1592
      %v995 = vadd.s32 %v795, 1600
      %v996 = vadd.s32 %v795, 1608
      %v997 = vadd.s32 %v795, 1616
      %v998 = vadd.s32 %v795, 1624
      %v999 = vadd.s32 %v795, 1632
      %v1000 = vadd.s32 %v795, 1640
      %v1001 = vadd.s32 %v795, 1648
      %v1002 = vadd.s32 %v795, 1656
      %v1003 = vadd.s32 %v795, 1664
      %v1004 = vadd.s32 %v795, 1672
      %v1005 = vadd.s32 %v795, 1680
      %v1006 = vadd.s32 %v795, 1688
      %v1007 = vadd.s32 %v795, 1696
      %v1008 = vadd.s32 %v795, 1704
      %v1009 = vadd.s32 %v795, 1712
      %v1010 = vadd.s32 %v795, 1720
      %v1011 = vadd.s32 %v795, 1728
      %v1012 = vadd.s32 %v795, 1736
      %v1013 = vadd.s32 %v795, 1744
      %v1014 = vadd.s32 %v795, 1752
      %v1015 = vadd.s32 %v795, 1760
      %v1016 = vadd.s32 %v795, 1768
      %v1017 = vadd.s32 %v795, 1776
      %v1018 = vadd.s32 %v795, 1784
      %v1019 = vadd.s32 %v795, 1792
      %v1020 = vadd.s32 %v795, 1800
      %v1021 = vadd.s32 %v795, 1808
      %v1022 = vadd.s32 %v795, 1816
      %v1023 = vadd.s32 %v795, 1824
      %v1024 = vadd.s32 %v795, 1832
      %v1025 = vadd.s32 %v795, 1840
      %v1026 = vadd.s32 %v795, 1848
      %v1027 = vadd.s32 %v795, 1856
      %v1028 = vadd.s32 %v795, 1864
      %v1029 = vadd.s32 %v795, 1872
      %v1030 = vadd.s32 %v795, 1880
      %v1031 = vadd.s32 %v795, 1888
      %v1032 = vadd.s32 %v795, 1896
      %v1033 = vadd.s32 %v795, 1904
      %v1034 = vadd.s32 %v795, 1912
      %v1035 = vadd.s32 %v795, 1920
      %v1036 = vadd.s32 %v795, 1928
      %v1037 = vadd.s32 %v795, 1936
      %v1038 = vadd.s32 %v795, 1944
      %v1039 = vadd.s32 %v795, 1952
      %v1040 = vadd.s32 %v795, 1960
      %v1041 = vadd.s32 %v795, 1968
      %v1042 = vadd.s32 %v795, 1976
      %v1043 = vadd.s32 %v795, 1984
      %v1044 = vadd.s32 %v795, 1992
      %v1045 = vadd.s32 %v795, 2000
      %v1046 = vadd.s32 %v795, 2008
      %v1047 = vadd.s32 %v795, 2016
      %v1048 = vadd.s32 %v795, 2024
      %v1049 = vadd.s32 %v795, 2032
      %v1050 = vadd.s32 %v795, 2040
      %v1051 = vstv %s281
      %v1052 = vadd.s32 %v1051, %v795
      %v1053 = vadd.s32 %v1051, %v796
      %v1054 = vadd.s32 %v1051, %v797
      %v1055 = vadd.s32 %v1051, %v798
      %v1056 = vadd.s32 %v1051, %v799
      %v1057 = vadd.s32 %v1051, %v800
      %v1058 = vadd.s32 %v1051, %v801
      %v1059 = vadd.s32 %v1051, %v802
      %v1060 = vadd.s32 %v1051, %v803
      %v1061 = vadd.s32 %v1051, %v804
      %v1062 = vadd.s32 %v1051, %v805
      %v1063 = vadd.s32 %v1051, %v806
      %v1064 = vadd.s32 %v1051, %v807
      %v1065 = vadd.s32 %v1051, %v808
      %v1066 = vadd.s32 %v1051, %v809
      %v1067 = vadd.s32 %v1051, %v810
      %v1068 = vadd.s32 %v1051, %v811
      %v1069 = vadd.s32 %v1051, %v812
      %v1070 = vadd.s32 %v1051, %v813
      %v1071 = vadd.s32 %v1051, %v814
      %v1072 = vadd.s32 %v1051, %v815
      %v1073 = vadd.s32 %v1051, %v816
      %v1074 = vadd.s32 %v1051, %v817
      %v1075 = vadd.s32 %v1051, %v818
      %v1076 = vadd.s32 %v1051, %v819
      %v1077 = vadd.s32 %v1051, %v820
      %v1078 = vadd.s32 %v1051, %v821
      %v1079 = vadd.s32 %v1051, %v822
      %v1080 = vadd.s32 %v1051, %v823
      %v1081 = vadd.s32 %v1051, %v824
      %v1082 = vadd.s32 %v1051, %v825
      %v1083 = vadd.s32 %v1051, %v826
      %v1084 = vadd.s32 %v1051, %v827
      %v1085 = vadd.s32 %v1051, %v828
      %v1086 = vadd.s32 %v1051, %v829
      %v1087 = vadd.s32 %v1051, %v830
      %v1088 = vadd.s32 %v1051, %v831
      %v1089 = vadd.s32 %v1051, %v832
      %v1090 = vadd.s32 %v1051, %v833
      %v1091 = vadd.s32 %v1051, %v834
      %v1092 = vadd.s32 %v1051, %v835
      %v1093 = vadd.s32 %v1051, %v836
      %v1094 = vadd.s32 %v1051, %v837
      %v1095 = vadd.s32 %v1051, %v838
      %v1096 = vadd.s32 %v1051, %v839
      %v1097 = vadd.s32 %v1051, %v840
      %v1098 = vadd.s32 %v1051, %v841
      %v1099 = vadd.s32 %v1051, %v842
      %v1100 = vadd.s32 %v1051, %v843
      %v1101 = vadd.s32 %v1051, %v844
      %v1102 = vadd.s32 %v1051, %v845
      %v1103 = vadd.s32 %v1051, %v846
      %v1104 = vadd.s32 %v1051, %v847
      %v1105 = vadd.s32 %v1051, %v848
      %v1106 = vadd.s32 %v1051, %v849
      %v1107 = vadd.s32 %v1051, %v850
      %v1108 = vadd.s32 %v1051, %v851
      %v1109 = vadd.s32 %v1051, %v852
      %v1110 = vadd.s32 %v1051, %v853
      %v1111 = vadd.s32 %v1051, %v854
      %v1112 = vadd.s32 %v1051, %v855
      %v1113 = vadd.s32 %v1051, %v856
      %v1114 = vadd.s32 %v1051, %v857
      %v1115 = vadd.s32 %v1051, %v858
      %v1116 = vadd.s32 %v1051, %v859
      %v1117 = vadd.s32 %v1051, %v860
      %v1118 = vadd.s32 %v1051, %v861
      %v1119 = vadd.s32 %v1051, %v862
      %v1120 = vadd.s32 %v1051, %v863
      %v1121 = vadd.s32 %v1051, %v864
      %v1122 = vadd.s32 %v1051, %v865
      %v1123 = vadd.s32 %v1051, %v866
      %v1124 = vadd.s32 %v1051, %v867
      %v1125 = vadd.s32 %v1051, %v868
      %v1126 = vadd.s32 %v1051, %v869
      %v1127 = vadd.s32 %v1051, %v870
      %v1128 = vadd.s32 %v1051, %v871
      %v1129 = vadd.s32 %v1051, %v872
      %v1130 = vadd.s32 %v1051, %v873
      %v1131 = vadd.s32 %v1051, %v874
      %v1132 = vadd.s32 %v1051, %v875
      %v1133 = vadd.s32 %v1051, %v876
      %v1134 = vadd.s32 %v1051, %v877
      %v1135 = vadd.s32 %v1051, %v878
      %v1136 = vadd.s32 %v1051, %v879
      %v1137 = vadd.s32 %v1051, %v880
      %v1138 = vadd.s32 %v1051, %v881
      %v1139 = vadd.s32 %v1051, %v882
      %v1140 = vadd.s32 %v1051, %v883
      %v1141 = vadd.s32 %v1051, %v884
      %v1142 = vadd.s32 %v1051, %v885
      %v1143 = vadd.s32 %v1051, %v886
      %v1144 = vadd.s32 %v1051, %v887
      %v1145 = vadd.s32 %v1051, %v888
      %v1146 = vadd.s32 %v1051, %v889
      %v1147 = vadd.s32 %v1051, %v890
      %v1148 = vadd.s32 %v1051, %v891
      %v1149 = vadd.s32 %v1051, %v892
      %v1150 = vadd.s32 %v1051, %v893
      %v1151 = vadd.s32 %v1051, %v894
      %v1152 = vadd.s32 %v1051, %v895
      %v1153 = vadd.s32 %v1051, %v896
      %v1154 = vadd.s32 %v1051, %v897
      %v1155 = vadd.s32 %v1051, %v898
      %v1156 = vadd.s32 %v1051, %v899
      %v1157 = vadd.s32 %v1051, %v900
      %v1158 = vadd.s32 %v1051, %v901
      %v1159 = vadd.s32 %v1051, %v902
      %v1160 = vadd.s32 %v1051, %v903
      %v1161 = vadd.s32 %v1051, %v904
      %v1162 = vadd.s32 %v1051, %v905
      %v1163 = vadd.s32 %v1051, %v906
      %v1164 = vadd.s32 %v1051, %v907
      %v1165 = vadd.s32 %v1051, %v908
      %v1166 = vadd.s32 %v1051, %v909
      %v1167 = vadd.s32 %v1051, %v910
      %v1168 = vadd.s32 %v1051, %v911
      %v1169 = vadd.s32 %v1051, %v912
      %v1170 = vadd.s32 %v1051, %v913
      %v1171 = vadd.s32 %v1051, %v914
      %v1172 = vadd.s32 %v1051, %v915
      %v1173 = vadd.s32 %v1051, %v916
      %v1174 = vadd.s32 %v1051, %v917
      %v1175 = vadd.s32 %v1051, %v918
      %v1176 = vadd.s32 %v1051, %v919
      %v1177 = vadd.s32 %v1051, %v920
      %v1178 = vadd.s32 %v1051, %v921
      %v1179 = vadd.s32 %v1051, %v922
      %v1180 = vadd.s32 %v1051, %v923
      %v1181 = vadd.s32 %v1051, %v924
      %v1182 = vadd.s32 %v1051, %v925
      %v1183 = vadd.s32 %v1051, %v926
      %v1184 = vadd.s32 %v1051, %v927
      %v1185 = vadd.s32 %v1051, %v928
      %v1186 = vadd.s32 %v1051, %v929
      %v1187 = vadd.s32 %v1051, %v930
      %v1188 = vadd.s32 %v1051, %v931
      %v1189 = vadd.s32 %v1051, %v932
      %v1190 = vadd.s32 %v1051, %v933
      %v1191 = vadd.s32 %v1051, %v934
      %v1192 = vadd.s32 %v1051, %v935
      %v1193 = vadd.s32 %v1051, %v936
      %v1194 = vadd.s32 %v1051, %v937
      %v1195 = vadd.s32 %v1051, %v938
      %v1196 = vadd.s32 %v1051, %v939
      %v1197 = vadd.s32 %v1051, %v940
      %v1198 = vadd.s32 %v1051, %v941
      %v1199 = vadd.s32 %v1051, %v942
      %v1200 = vadd.s32 %v1051, %v943
      %v1201 = vadd.s32 %v1051, %v944
      %v1202 = vadd.s32 %v1051, %v945
      %v1203 = vadd.s32 %v1051, %v946
      %v1204 = vadd.s32 %v1051, %v947
      %v1205 = vadd.s32 %v1051, %v948
      %v1206 = vadd.s32 %v1051, %v949
      %v1207 = vadd.s32 %v1051, %v950
      %v1208 = vadd.s32 %v1051, %v951
      %v1209 = vadd.s32 %v1051, %v952
      %v1210 = vadd.s32 %v1051, %v953
      %v1211 = vadd.s32 %v1051, %v954
      %v1212 = vadd.s32 %v1051, %v955
      %v1213 = vadd.s32 %v1051, %v956
      %v1214 = vadd.s32 %v1051, %v957
      %v1215 = vadd.s32 %v1051, %v958
      %v1216 = vadd.s32 %v1051, %v959
      %v1217 = vadd.s32 %v1051, %v960
      %v1218 = vadd.s32 %v1051, %v961
      %v1219 = vadd.s32 %v1051, %v962
      %v1220 = vadd.s32 %v1051, %v963
      %v1221 = vadd.s32 %v1051, %v964
      %v1222 = vadd.s32 %v1051, %v965
      %v1223 = vadd.s32 %v1051, %v966
      %v1224 = vadd.s32 %v1051, %v967
      %v1225 = vadd.s32 %v1051, %v968
      %v1226 = vadd.s32 %v1051, %v969
      %v1227 = vadd.s32 %v1051, %v970
      %v1228 = vadd.s32 %v1051, %v971
      %v1229 = vadd.s32 %v1051, %v972
      %v1230 = vadd.s32 %v1051, %v973
      %v1231 = vadd.s32 %v1051, %v974
      %v1232 = vadd.s32 %v1051, %v975
      %v1233 = vadd.s32 %v1051, %v976
      %v1234 = vadd.s32 %v1051, %v977
      %v1235 = vadd.s32 %v1051, %v978
      %v1236 = vadd.s32 %v1051, %v979
      %v1237 = vadd.s32 %v1051, %v980
      %v1238 = vadd.s32 %v1051, %v981
      %v1239 = vadd.s32 %v1051, %v982
      %v1240 = vadd.s32 %v1051, %v983
      %v1241 = vadd.s32 %v1051, %v984
      %v1242 = vadd.s32 %v1051, %v985
      %v1243 = vadd.s32 %v1051, %v986
      %v1244 = vadd.s32 %v1051, %v987
      %v1245 = vadd.s32 %v1051, %v988
      %v1246 = vadd.s32 %v1051, %v989
      %v1247 = vadd.s32 %v1051, %v990
      %v1248 = vadd.s32 %v1051, %v991
      %v1249 = vadd.s32 %v1051, %v992
      %v1250 = vadd.s32 %v1051, %v993
      %v1251 = vadd.s32 %v1051, %v994
      %v1252 = vadd.s32 %v1051, %v995
      %v1253 = vadd.s32 %v1051, %v996
      %v1254 = vadd.s32 %v1051, %v997
      %v1255 = vadd.s32 %v1051, %v998
      %v1256 = vadd.s32 %v1051, %v999
      %v1257 = vadd.s32 %v1051, %v1000
      %v1258 = vadd.s32 %v1051, %v1001
      %v1259 = vadd.s32 %v1051, %v1002
      %v1260 = vadd.s32 %v1051, %v1003
      %v1261 = vadd.s32 %v1051, %v1004
      %v1262 = vadd.s32 %v1051, %v1005
      %v1263 = vadd.s32 %v1051, %v1006
      %v1264 = vadd.s32 %v1051, %v1007
      %v1265 = vadd.s32 %v1051, %v1008
      %v1266 = vadd.s32 %v1051, %v1009
      %v1267 = vadd.s32 %v1051, %v1010
      %v1268 = vadd.s32 %v1051, %v1011
      %v1269 = vadd.s32 %v1051, %v1012
      %v1270 = vadd.s32 %v1051, %v1013
      %v1271 = vadd.s32 %v1051, %v1014
      %v1272 = vadd.s32 %v1051, %v1015
      %v1273 = vadd.s32 %v1051, %v1016
      %v1274 = vadd.s32 %v1051, %v1017
      %v1275 = vadd.s32 %v1051, %v1018
      %v1276 = vadd.s32 %v1051, %v1019
      %v1277 = vadd.s32 %v1051, %v1020
      %v1278 = vadd.s32 %v1051, %v1021
      %v1279 = vadd.s32 %v1051, %v1022
      %v1280 = vadd.s32 %v1051, %v1023
      %v1281 = vadd.s32 %v1051, %v1024
      %v1282 = vadd.s32 %v1051, %v1025
      %v1283 = vadd.s32 %v1051, %v1026
      %v1284 = vadd.s32 %v1051, %v1027
      %v1285 = vadd.s32 %v1051, %v1028
      %v1286 = vadd.s32 %v1051, %v1029
      %v1287 = vadd.s32 %v1051, %v1030
      %v1288 = vadd.s32 %v1051, %v1031
      %v1289 = vadd.s32 %v1051, %v1032
      %v1290 = vadd.s32 %v1051, %v1033
      %v1291 = vadd.s32 %v1051, %v1034
      %v1292 = vadd.s32 %v1051, %v1035
      %v1293 = vadd.s32 %v1051, %v1036
      %v1294 = vadd.s32 %v1051, %v1037
      %v1295 = vadd.s32 %v1051, %v1038
      %v1296 = vadd.s32 %v1051, %v1039
      %v1297 = vadd.s32 %v1051, %v1040
      %v1298 = vadd.s32 %v1051, %v1041
      %v1299 = vadd.s32 %v1051, %v1042
      %v1300 = vadd.s32 %v1051, %v1043
      %v1301 = vadd.s32 %v1051, %v1044
      %v1302 = vadd.s32 %v1051, %v1045
      %v1303 = vadd.s32 %v1051, %v1046
      %v1304 = vadd.s32 %v1051, %v1047
      %v1305 = vadd.s32 %v1051, %v1048
      %v1306 = vadd.s32 %v1051, %v1049
      %v1307 = vadd.s32 %v1051, %v1050
      %vm1308 = vcmp.lt.s32.totalorder %v1052, 8320
      %vm1309 = vcmp.lt.s32.totalorder %v1053, 8320
      %vm1310 = vcmp.lt.s32.totalorder %v1054, 8320
      %vm1311 = vcmp.lt.s32.totalorder %v1055, 8320
      %vm1312 = vcmp.lt.s32.totalorder %v1056, 8320
      %vm1313 = vcmp.lt.s32.totalorder %v1057, 8320
      %vm1314 = vcmp.lt.s32.totalorder %v1058, 8320
      %vm1315 = vcmp.lt.s32.totalorder %v1059, 8320
      %vm1316 = vcmp.lt.s32.totalorder %v1060, 8320
      %vm1317 = vcmp.lt.s32.totalorder %v1061, 8320
      %vm1318 = vcmp.lt.s32.totalorder %v1062, 8320
      %vm1319 = vcmp.lt.s32.totalorder %v1063, 8320
      %vm1320 = vcmp.lt.s32.totalorder %v1064, 8320
      %vm1321 = vcmp.lt.s32.totalorder %v1065, 8320
      %vm1322 = vcmp.lt.s32.totalorder %v1066, 8320
      %vm1323 = vcmp.lt.s32.totalorder %v1067, 8320
      %vm1324 = vcmp.lt.s32.totalorder %v1068, 8320
      %vm1325 = vcmp.lt.s32.totalorder %v1069, 8320
      %vm1326 = vcmp.lt.s32.totalorder %v1070, 8320
      %vm1327 = vcmp.lt.s32.totalorder %v1071, 8320
      %vm1328 = vcmp.lt.s32.totalorder %v1072, 8320
      %vm1329 = vcmp.lt.s32.totalorder %v1073, 8320
      %vm1330 = vcmp.lt.s32.totalorder %v1074, 8320
      %vm1331 = vcmp.lt.s32.totalorder %v1075, 8320
      %vm1332 = vcmp.lt.s32.totalorder %v1076, 8320
      %vm1333 = vcmp.lt.s32.totalorder %v1077, 8320
      %vm1334 = vcmp.lt.s32.totalorder %v1078, 8320
      %vm1335 = vcmp.lt.s32.totalorder %v1079, 8320
      %vm1336 = vcmp.lt.s32.totalorder %v1080, 8320
      %vm1337 = vcmp.lt.s32.totalorder %v1081, 8320
      %vm1338 = vcmp.lt.s32.totalorder %v1082, 8320
      %vm1339 = vcmp.lt.s32.totalorder %v1083, 8320
      %vm1340 = vcmp.lt.s32.totalorder %v1084, 8320
      %vm1341 = vcmp.lt.s32.totalorder %v1085, 8320
      %vm1342 = vcmp.lt.s32.totalorder %v1086, 8320
      %vm1343 = vcmp.lt.s32.totalorder %v1087, 8320
      %vm1344 = vcmp.lt.s32.totalorder %v1088, 8320
      %vm1345 = vcmp.lt.s32.totalorder %v1089, 8320
      %vm1346 = vcmp.lt.s32.totalorder %v1090, 8320
      %vm1347 = vcmp.lt.s32.totalorder %v1091, 8320
      %vm1348 = vcmp.lt.s32.totalorder %v1092, 8320
      %vm1349 = vcmp.lt.s32.totalorder %v1093, 8320
      %vm1350 = vcmp.lt.s32.totalorder %v1094, 8320
      %vm1351 = vcmp.lt.s32.totalorder %v1095, 8320
      %vm1352 = vcmp.lt.s32.totalorder %v1096, 8320
      %vm1353 = vcmp.lt.s32.totalorder %v1097, 8320
      %vm1354 = vcmp.lt.s32.totalorder %v1098, 8320
      %vm1355 = vcmp.lt.s32.totalorder %v1099, 8320
      %vm1356 = vcmp.lt.s32.totalorder %v1100, 8320
      %vm1357 = vcmp.lt.s32.totalorder %v1101, 8320
      %vm1358 = vcmp.lt.s32.totalorder %v1102, 8320
      %vm1359 = vcmp.lt.s32.totalorder %v1103, 8320
      %vm1360 = vcmp.lt.s32.totalorder %v1104, 8320
      %vm1361 = vcmp.lt.s32.totalorder %v1105, 8320
      %vm1362 = vcmp.lt.s32.totalorder %v1106, 8320
      %vm1363 = vcmp.lt.s32.totalorder %v1107, 8320
      %vm1364 = vcmp.lt.s32.totalorder %v1108, 8320
      %vm1365 = vcmp.lt.s32.totalorder %v1109, 8320
      %vm1366 = vcmp.lt.s32.totalorder %v1110, 8320
      %vm1367 = vcmp.lt.s32.totalorder %v1111, 8320
      %vm1368 = vcmp.lt.s32.totalorder %v1112, 8320
      %vm1369 = vcmp.lt.s32.totalorder %v1113, 8320
      %vm1370 = vcmp.lt.s32.totalorder %v1114, 8320
      %vm1371 = vcmp.lt.s32.totalorder %v1115, 8320
      %vm1372 = vcmp.lt.s32.totalorder %v1116, 8320
      %vm1373 = vcmp.lt.s32.totalorder %v1117, 8320
      %vm1374 = vcmp.lt.s32.totalorder %v1118, 8320
      %vm1375 = vcmp.lt.s32.totalorder %v1119, 8320
      %vm1376 = vcmp.lt.s32.totalorder %v1120, 8320
      %vm1377 = vcmp.lt.s32.totalorder %v1121, 8320
      %vm1378 = vcmp.lt.s32.totalorder %v1122, 8320
      %vm1379 = vcmp.lt.s32.totalorder %v1123, 8320
      %vm1380 = vcmp.lt.s32.totalorder %v1124, 8320
      %vm1381 = vcmp.lt.s32.totalorder %v1125, 8320
      %vm1382 = vcmp.lt.s32.totalorder %v1126, 8320
      %vm1383 = vcmp.lt.s32.totalorder %v1127, 8320
      %vm1384 = vcmp.lt.s32.totalorder %v1128, 8320
      %vm1385 = vcmp.lt.s32.totalorder %v1129, 8320
      %vm1386 = vcmp.lt.s32.totalorder %v1130, 8320
      %vm1387 = vcmp.lt.s32.totalorder %v1131, 8320
      %vm1388 = vcmp.lt.s32.totalorder %v1132, 8320
      %vm1389 = vcmp.lt.s32.totalorder %v1133, 8320
      %vm1390 = vcmp.lt.s32.totalorder %v1134, 8320
      %vm1391 = vcmp.lt.s32.totalorder %v1135, 8320
      %vm1392 = vcmp.lt.s32.totalorder %v1136, 8320
      %vm1393 = vcmp.lt.s32.totalorder %v1137, 8320
      %vm1394 = vcmp.lt.s32.totalorder %v1138, 8320
      %vm1395 = vcmp.lt.s32.totalorder %v1139, 8320
      %vm1396 = vcmp.lt.s32.totalorder %v1140, 8320
      %vm1397 = vcmp.lt.s32.totalorder %v1141, 8320
      %vm1398 = vcmp.lt.s32.totalorder %v1142, 8320
      %vm1399 = vcmp.lt.s32.totalorder %v1143, 8320
      %vm1400 = vcmp.lt.s32.totalorder %v1144, 8320
      %vm1401 = vcmp.lt.s32.totalorder %v1145, 8320
      %vm1402 = vcmp.lt.s32.totalorder %v1146, 8320
      %vm1403 = vcmp.lt.s32.totalorder %v1147, 8320
      %vm1404 = vcmp.lt.s32.totalorder %v1148, 8320
      %vm1405 = vcmp.lt.s32.totalorder %v1149, 8320
      %vm1406 = vcmp.lt.s32.totalorder %v1150, 8320
      %vm1407 = vcmp.lt.s32.totalorder %v1151, 8320
      %vm1408 = vcmp.lt.s32.totalorder %v1152, 8320
      %vm1409 = vcmp.lt.s32.totalorder %v1153, 8320
      %vm1410 = vcmp.lt.s32.totalorder %v1154, 8320
      %vm1411 = vcmp.lt.s32.totalorder %v1155, 8320
      %vm1412 = vcmp.lt.s32.totalorder %v1156, 8320
      %vm1413 = vcmp.lt.s32.totalorder %v1157, 8320
      %vm1414 = vcmp.lt.s32.totalorder %v1158, 8320
      %vm1415 = vcmp.lt.s32.totalorder %v1159, 8320
      %vm1416 = vcmp.lt.s32.totalorder %v1160, 8320
      %vm1417 = vcmp.lt.s32.totalorder %v1161, 8320
      %vm1418 = vcmp.lt.s32.totalorder %v1162, 8320
      %vm1419 = vcmp.lt.s32.totalorder %v1163, 8320
      %vm1420 = vcmp.lt.s32.totalorder %v1164, 8320
      %vm1421 = vcmp.lt.s32.totalorder %v1165, 8320
      %vm1422 = vcmp.lt.s32.totalorder %v1166, 8320
      %vm1423 = vcmp.lt.s32.totalorder %v1167, 8320
      %vm1424 = vcmp.lt.s32.totalorder %v1168, 8320
      %vm1425 = vcmp.lt.s32.totalorder %v1169, 8320
      %vm1426 = vcmp.lt.s32.totalorder %v1170, 8320
      %vm1427 = vcmp.lt.s32.totalorder %v1171, 8320
      %vm1428 = vcmp.lt.s32.totalorder %v1172, 8320
      %vm1429 = vcmp.lt.s32.totalorder %v1173, 8320
      %vm1430 = vcmp.lt.s32.totalorder %v1174, 8320
      %vm1431 = vcmp.lt.s32.totalorder %v1175, 8320
      %vm1432 = vcmp.lt.s32.totalorder %v1176, 8320
      %vm1433 = vcmp.lt.s32.totalorder %v1177, 8320
      %vm1434 = vcmp.lt.s32.totalorder %v1178, 8320
      %vm1435 = vcmp.lt.s32.totalorder %v1179, 8320
      %vm1436 = vcmp.lt.s32.totalorder %v1180, 8320
      %vm1437 = vcmp.lt.s32.totalorder %v1181, 8320
      %vm1438 = vcmp.lt.s32.totalorder %v1182, 8320
      %vm1439 = vcmp.lt.s32.totalorder %v1183, 8320
      %vm1440 = vcmp.lt.s32.totalorder %v1184, 8320
      %vm1441 = vcmp.lt.s32.totalorder %v1185, 8320
      %vm1442 = vcmp.lt.s32.totalorder %v1186, 8320
      %vm1443 = vcmp.lt.s32.totalorder %v1187, 8320
      %vm1444 = vcmp.lt.s32.totalorder %v1188, 8320
      %vm1445 = vcmp.lt.s32.totalorder %v1189, 8320
      %vm1446 = vcmp.lt.s32.totalorder %v1190, 8320
      %vm1447 = vcmp.lt.s32.totalorder %v1191, 8320
      %vm1448 = vcmp.lt.s32.totalorder %v1192, 8320
      %vm1449 = vcmp.lt.s32.totalorder %v1193, 8320
      %vm1450 = vcmp.lt.s32.totalorder %v1194, 8320
      %vm1451 = vcmp.lt.s32.totalorder %v1195, 8320
      %vm1452 = vcmp.lt.s32.totalorder %v1196, 8320
      %vm1453 = vcmp.lt.s32.totalorder %v1197, 8320
      %vm1454 = vcmp.lt.s32.totalorder %v1198, 8320
      %vm1455 = vcmp.lt.s32.totalorder %v1199, 8320
      %vm1456 = vcmp.lt.s32.totalorder %v1200, 8320
      %vm1457 = vcmp.lt.s32.totalorder %v1201, 8320
      %vm1458 = vcmp.lt.s32.totalorder %v1202, 8320
      %vm1459 = vcmp.lt.s32.totalorder %v1203, 8320
      %vm1460 = vcmp.lt.s32.totalorder %v1204, 8320
      %vm1461 = vcmp.lt.s32.totalorder %v1205, 8320
      %vm1462 = vcmp.lt.s32.totalorder %v1206, 8320
      %vm1463 = vcmp.lt.s32.totalorder %v1207, 8320
      %vm1464 = vcmp.lt.s32.totalorder %v1208, 8320
      %vm1465 = vcmp.lt.s32.totalorder %v1209, 8320
      %vm1466 = vcmp.lt.s32.totalorder %v1210, 8320
      %vm1467 = vcmp.lt.s32.totalorder %v1211, 8320
      %vm1468 = vcmp.lt.s32.totalorder %v1212, 8320
      %vm1469 = vcmp.lt.s32.totalorder %v1213, 8320
      %vm1470 = vcmp.lt.s32.totalorder %v1214, 8320
      %vm1471 = vcmp.lt.s32.totalorder %v1215, 8320
      %vm1472 = vcmp.lt.s32.totalorder %v1216, 8320
      %vm1473 = vcmp.lt.s32.totalorder %v1217, 8320
      %vm1474 = vcmp.lt.s32.totalorder %v1218, 8320
      %vm1475 = vcmp.lt.s32.totalorder %v1219, 8320
      %vm1476 = vcmp.lt.s32.totalorder %v1220, 8320
      %vm1477 = vcmp.lt.s32.totalorder %v1221, 8320
      %vm1478 = vcmp.lt.s32.totalorder %v1222, 8320
      %vm1479 = vcmp.lt.s32.totalorder %v1223, 8320
      %vm1480 = vcmp.lt.s32.totalorder %v1224, 8320
      %vm1481 = vcmp.lt.s32.totalorder %v1225, 8320
      %vm1482 = vcmp.lt.s32.totalorder %v1226, 8320
      %vm1483 = vcmp.lt.s32.totalorder %v1227, 8320
      %vm1484 = vcmp.lt.s32.totalorder %v1228, 8320
      %vm1485 = vcmp.lt.s32.totalorder %v1229, 8320
      %vm1486 = vcmp.lt.s32.totalorder %v1230, 8320
      %vm1487 = vcmp.lt.s32.totalorder %v1231, 8320
      %vm1488 = vcmp.lt.s32.totalorder %v1232, 8320
      %vm1489 = vcmp.lt.s32.totalorder %v1233, 8320
      %vm1490 = vcmp.lt.s32.totalorder %v1234, 8320
      %vm1491 = vcmp.lt.s32.totalorder %v1235, 8320
      %vm1492 = vcmp.lt.s32.totalorder %v1236, 8320
      %vm1493 = vcmp.lt.s32.totalorder %v1237, 8320
      %vm1494 = vcmp.lt.s32.totalorder %v1238, 8320
      %vm1495 = vcmp.lt.s32.totalorder %v1239, 8320
      %vm1496 = vcmp.lt.s32.totalorder %v1240, 8320
      %vm1497 = vcmp.lt.s32.totalorder %v1241, 8320
      %vm1498 = vcmp.lt.s32.totalorder %v1242, 8320
      %vm1499 = vcmp.lt.s32.totalorder %v1243, 8320
      %vm1500 = vcmp.lt.s32.totalorder %v1244, 8320
      %vm1501 = vcmp.lt.s32.totalorder %v1245, 8320
      %vm1502 = vcmp.lt.s32.totalorder %v1246, 8320
      %vm1503 = vcmp.lt.s32.totalorder %v1247, 8320
      %vm1504 = vcmp.lt.s32.totalorder %v1248, 8320
      %vm1505 = vcmp.lt.s32.totalorder %v1249, 8320
      %vm1506 = vcmp.lt.s32.totalorder %v1250, 8320
      %vm1507 = vcmp.lt.s32.totalorder %v1251, 8320
      %vm1508 = vcmp.lt.s32.totalorder %v1252, 8320
      %vm1509 = vcmp.lt.s32.totalorder %v1253, 8320
      %vm1510 = vcmp.lt.s32.totalorder %v1254, 8320
      %vm1511 = vcmp.lt.s32.totalorder %v1255, 8320
      %vm1512 = vcmp.lt.s32.totalorder %v1256, 8320
      %vm1513 = vcmp.lt.s32.totalorder %v1257, 8320
      %vm1514 = vcmp.lt.s32.totalorder %v1258, 8320
      %vm1515 = vcmp.lt.s32.totalorder %v1259, 8320
      %vm1516 = vcmp.lt.s32.totalorder %v1260, 8320
      %vm1517 = vcmp.lt.s32.totalorder %v1261, 8320
      %vm1518 = vcmp.lt.s32.totalorder %v1262, 8320
      %vm1519 = vcmp.lt.s32.totalorder %v1263, 8320
      %vm1520 = vcmp.lt.s32.totalorder %v1264, 8320
      %vm1521 = vcmp.lt.s32.totalorder %v1265, 8320
      %vm1522 = vcmp.lt.s32.totalorder %v1266, 8320
      %vm1523 = vcmp.lt.s32.totalorder %v1267, 8320
      %vm1524 = vcmp.lt.s32.totalorder %v1268, 8320
      %vm1525 = vcmp.lt.s32.totalorder %v1269, 8320
      %vm1526 = vcmp.lt.s32.totalorder %v1270, 8320
      %vm1527 = vcmp.lt.s32.totalorder %v1271, 8320
      %vm1528 = vcmp.lt.s32.totalorder %v1272, 8320
      %vm1529 = vcmp.lt.s32.totalorder %v1273, 8320
      %vm1530 = vcmp.lt.s32.totalorder %v1274, 8320
      %vm1531 = vcmp.lt.s32.totalorder %v1275, 8320
      %vm1532 = vcmp.lt.s32.totalorder %v1276, 8320
      %vm1533 = vcmp.lt.s32.totalorder %v1277, 8320
      %vm1534 = vcmp.lt.s32.totalorder %v1278, 8320
      %vm1535 = vcmp.lt.s32.totalorder %v1279, 8320
      %vm1536 = vcmp.lt.s32.totalorder %v1280, 8320
      %vm1537 = vcmp.lt.s32.totalorder %v1281, 8320
      %vm1538 = vcmp.lt.s32.totalorder %v1282, 8320
      %vm1539 = vcmp.lt.s32.totalorder %v1283, 8320
      %vm1540 = vcmp.lt.s32.totalorder %v1284, 8320
      %vm1541 = vcmp.lt.s32.totalorder %v1285, 8320
      %vm1542 = vcmp.lt.s32.totalorder %v1286, 8320
      %vm1543 = vcmp.lt.s32.totalorder %v1287, 8320
      %vm1544 = vcmp.lt.s32.totalorder %v1288, 8320
      %vm1545 = vcmp.lt.s32.totalorder %v1289, 8320
      %vm1546 = vcmp.lt.s32.totalorder %v1290, 8320
      %vm1547 = vcmp.lt.s32.totalorder %v1291, 8320
      %vm1548 = vcmp.lt.s32.totalorder %v1292, 8320
      %vm1549 = vcmp.lt.s32.totalorder %v1293, 8320
      %vm1550 = vcmp.lt.s32.totalorder %v1294, 8320
      %vm1551 = vcmp.lt.s32.totalorder %v1295, 8320
      %vm1552 = vcmp.lt.s32.totalorder %v1296, 8320
      %vm1553 = vcmp.lt.s32.totalorder %v1297, 8320
      %vm1554 = vcmp.lt.s32.totalorder %v1298, 8320
      %vm1555 = vcmp.lt.s32.totalorder %v1299, 8320
      %vm1556 = vcmp.lt.s32.totalorder %v1300, 8320
      %vm1557 = vcmp.lt.s32.totalorder %v1301, 8320
      %vm1558 = vcmp.lt.s32.totalorder %v1302, 8320
      %vm1559 = vcmp.lt.s32.totalorder %v1303, 8320
      %vm1560 = vcmp.lt.s32.totalorder %v1304, 8320
      %vm1561 = vcmp.lt.s32.totalorder %v1305, 8320
      %vm1562 = vcmp.lt.s32.totalorder %v1306, 8320
      %vm1563 = vcmp.lt.s32.totalorder %v1307, 8320
      %vm1564 = vcmp.ge.s32.totalorder %v538, 0
      %vm1565 = vcmp.ge.s32.totalorder %v539, 0
      %vm1566 = vcmp.ge.s32.totalorder %v540, 0
      %vm1567 = vcmp.ge.s32.totalorder %v541, 0
      %vm1568 = vcmp.ge.s32.totalorder %v542, 0
      %vm1569 = vcmp.ge.s32.totalorder %v543, 0
      %vm1570 = vcmp.ge.s32.totalorder %v544, 0
      %vm1571 = vcmp.ge.s32.totalorder %v545, 0
      %vm1572 = vcmp.ge.s32.totalorder %v546, 0
      %vm1573 = vcmp.ge.s32.totalorder %v547, 0
      %vm1574 = vcmp.ge.s32.totalorder %v548, 0
      %vm1575 = vcmp.ge.s32.totalorder %v549, 0
      %vm1576 = vcmp.ge.s32.totalorder %v550, 0
      %vm1577 = vcmp.ge.s32.totalorder %v551, 0
      %vm1578 = vcmp.ge.s32.totalorder %v552, 0
      %vm1579 = vcmp.ge.s32.totalorder %v553, 0
      %vm1580 = vcmp.ge.s32.totalorder %v554, 0
      %vm1581 = vcmp.ge.s32.totalorder %v555, 0
      %vm1582 = vcmp.ge.s32.totalorder %v556, 0
      %vm1583 = vcmp.ge.s32.totalorder %v557, 0
      %vm1584 = vcmp.ge.s32.totalorder %v558, 0
      %vm1585 = vcmp.ge.s32.totalorder %v559, 0
      %vm1586 = vcmp.ge.s32.totalorder %v560, 0
      %vm1587 = vcmp.ge.s32.totalorder %v561, 0
      %vm1588 = vcmp.ge.s32.totalorder %v562, 0
      %vm1589 = vcmp.ge.s32.totalorder %v563, 0
      %vm1590 = vcmp.ge.s32.totalorder %v564, 0
      %vm1591 = vcmp.ge.s32.totalorder %v565, 0
      %vm1592 = vcmp.ge.s32.totalorder %v566, 0
      %vm1593 = vcmp.ge.s32.totalorder %v567, 0
      %vm1594 = vcmp.ge.s32.totalorder %v568, 0
      %vm1595 = vcmp.ge.s32.totalorder %v569, 0
      %vm1596 = vcmp.ge.s32.totalorder %v570, 0
      %vm1597 = vcmp.ge.s32.totalorder %v571, 0
      %vm1598 = vcmp.ge.s32.totalorder %v572, 0
      %vm1599 = vcmp.ge.s32.totalorder %v573, 0
      %vm1600 = vcmp.ge.s32.totalorder %v574, 0
      %vm1601 = vcmp.ge.s32.totalorder %v575, 0
      %vm1602 = vcmp.ge.s32.totalorder %v576, 0
      %vm1603 = vcmp.ge.s32.totalorder %v577, 0
      %vm1604 = vcmp.ge.s32.totalorder %v578, 0
      %vm1605 = vcmp.ge.s32.totalorder %v579, 0
      %vm1606 = vcmp.ge.s32.totalorder %v580, 0
      %vm1607 = vcmp.ge.s32.totalorder %v581, 0
      %vm1608 = vcmp.ge.s32.totalorder %v582, 0
      %vm1609 = vcmp.ge.s32.totalorder %v583, 0
      %vm1610 = vcmp.ge.s32.totalorder %v584, 0
      %vm1611 = vcmp.ge.s32.totalorder %v585, 0
      %vm1612 = vcmp.ge.s32.totalorder %v586, 0
      %vm1613 = vcmp.ge.s32.totalorder %v587, 0
      %vm1614 = vcmp.ge.s32.totalorder %v588, 0
      %vm1615 = vcmp.ge.s32.totalorder %v589, 0
      %vm1616 = vcmp.ge.s32.totalorder %v590, 0
      %vm1617 = vcmp.ge.s32.totalorder %v591, 0
      %vm1618 = vcmp.ge.s32.totalorder %v592, 0
      %vm1619 = vcmp.ge.s32.totalorder %v593, 0
      %vm1620 = vcmp.ge.s32.totalorder %v594, 0
      %vm1621 = vcmp.ge.s32.totalorder %v595, 0
      %vm1622 = vcmp.ge.s32.totalorder %v596, 0
      %vm1623 = vcmp.ge.s32.totalorder %v597, 0
      %vm1624 = vcmp.ge.s32.totalorder %v598, 0
      %vm1625 = vcmp.ge.s32.totalorder %v599, 0
      %vm1626 = vcmp.ge.s32.totalorder %v600, 0
      %vm1627 = vcmp.ge.s32.totalorder %v601, 0
      %vm1628 = vcmp.ge.s32.totalorder %v602, 0
      %vm1629 = vcmp.ge.s32.totalorder %v603, 0
      %vm1630 = vcmp.ge.s32.totalorder %v604, 0
      %vm1631 = vcmp.ge.s32.totalorder %v605, 0
      %vm1632 = vcmp.ge.s32.totalorder %v606, 0
      %vm1633 = vcmp.ge.s32.totalorder %v607, 0
      %vm1634 = vcmp.ge.s32.totalorder %v608, 0
      %vm1635 = vcmp.ge.s32.totalorder %v609, 0
      %vm1636 = vcmp.ge.s32.totalorder %v610, 0
      %vm1637 = vcmp.ge.s32.totalorder %v611, 0
      %vm1638 = vcmp.ge.s32.totalorder %v612, 0
      %vm1639 = vcmp.ge.s32.totalorder %v613, 0
      %vm1640 = vcmp.ge.s32.totalorder %v614, 0
      %vm1641 = vcmp.ge.s32.totalorder %v615, 0
      %vm1642 = vcmp.ge.s32.totalorder %v616, 0
      %vm1643 = vcmp.ge.s32.totalorder %v617, 0
      %vm1644 = vcmp.ge.s32.totalorder %v618, 0
      %vm1645 = vcmp.ge.s32.totalorder %v619, 0
      %vm1646 = vcmp.ge.s32.totalorder %v620, 0
      %vm1647 = vcmp.ge.s32.totalorder %v621, 0
      %vm1648 = vcmp.ge.s32.totalorder %v622, 0
      %vm1649 = vcmp.ge.s32.totalorder %v623, 0
      %vm1650 = vcmp.ge.s32.totalorder %v624, 0
      %vm1651 = vcmp.ge.s32.totalorder %v625, 0
      %vm1652 = vcmp.ge.s32.totalorder %v626, 0
      %vm1653 = vcmp.ge.s32.totalorder %v627, 0
      %vm1654 = vcmp.ge.s32.totalorder %v628, 0
      %vm1655 = vcmp.ge.s32.totalorder %v629, 0
      %vm1656 = vcmp.ge.s32.totalorder %v630, 0
      %vm1657 = vcmp.ge.s32.totalorder %v631, 0
      %vm1658 = vcmp.ge.s32.totalorder %v632, 0
      %vm1659 = vcmp.ge.s32.totalorder %v633, 0
      %vm1660 = vcmp.ge.s32.totalorder %v634, 0
      %vm1661 = vcmp.ge.s32.totalorder %v635, 0
      %vm1662 = vcmp.ge.s32.totalorder %v636, 0
      %vm1663 = vcmp.ge.s32.totalorder %v637, 0
      %vm1664 = vcmp.ge.s32.totalorder %v638, 0
      %vm1665 = vcmp.ge.s32.totalorder %v639, 0
      %vm1666 = vcmp.ge.s32.totalorder %v640, 0
      %vm1667 = vcmp.ge.s32.totalorder %v641, 0
      %vm1668 = vcmp.ge.s32.totalorder %v642, 0
      %vm1669 = vcmp.ge.s32.totalorder %v643, 0
      %vm1670 = vcmp.ge.s32.totalorder %v644, 0
      %vm1671 = vcmp.ge.s32.totalorder %v645, 0
      %vm1672 = vcmp.ge.s32.totalorder %v646, 0
      %vm1673 = vcmp.ge.s32.totalorder %v647, 0
      %vm1674 = vcmp.ge.s32.totalorder %v648, 0
      %vm1675 = vcmp.ge.s32.totalorder %v649, 0
      %vm1676 = vcmp.ge.s32.totalorder %v650, 0
      %vm1677 = vcmp.ge.s32.totalorder %v651, 0
      %vm1678 = vcmp.ge.s32.totalorder %v652, 0
      %vm1679 = vcmp.ge.s32.totalorder %v653, 0
      %vm1680 = vcmp.ge.s32.totalorder %v654, 0
      %vm1681 = vcmp.ge.s32.totalorder %v655, 0
      %vm1682 = vcmp.ge.s32.totalorder %v656, 0
      %vm1683 = vcmp.ge.s32.totalorder %v657, 0
      %vm1684 = vcmp.ge.s32.totalorder %v658, 0
      %vm1685 = vcmp.ge.s32.totalorder %v659, 0
      %vm1686 = vcmp.ge.s32.totalorder %v660, 0
      %vm1687 = vcmp.ge.s32.totalorder %v661, 0
      %vm1688 = vcmp.ge.s32.totalorder %v662, 0
      %vm1689 = vcmp.ge.s32.totalorder %v663, 0
      %vm1690 = vcmp.ge.s32.totalorder %v664, 0
      %vm1691 = vcmp.ge.s32.totalorder %v665, 0
      %vm1692 = vcmp.ge.s32.totalorder %v666, 0
      %vm1693 = vcmp.ge.s32.totalorder %v667, 0
      %vm1694 = vcmp.ge.s32.totalorder %v668, 0
      %vm1695 = vcmp.ge.s32.totalorder %v669, 0
      %vm1696 = vcmp.ge.s32.totalorder %v670, 0
      %vm1697 = vcmp.ge.s32.totalorder %v671, 0
      %vm1698 = vcmp.ge.s32.totalorder %v672, 0
      %vm1699 = vcmp.ge.s32.totalorder %v673, 0
      %vm1700 = vcmp.ge.s32.totalorder %v674, 0
      %vm1701 = vcmp.ge.s32.totalorder %v675, 0
      %vm1702 = vcmp.ge.s32.totalorder %v676, 0
      %vm1703 = vcmp.ge.s32.totalorder %v677, 0
      %vm1704 = vcmp.ge.s32.totalorder %v678, 0
      %vm1705 = vcmp.ge.s32.totalorder %v679, 0
      %vm1706 = vcmp.ge.s32.totalorder %v680, 0
      %vm1707 = vcmp.ge.s32.totalorder %v681, 0
      %vm1708 = vcmp.ge.s32.totalorder %v682, 0
      %vm1709 = vcmp.ge.s32.totalorder %v683, 0
      %vm1710 = vcmp.ge.s32.totalorder %v684, 0
      %vm1711 = vcmp.ge.s32.totalorder %v685, 0
      %vm1712 = vcmp.ge.s32.totalorder %v686, 0
      %vm1713 = vcmp.ge.s32.totalorder %v687, 0
      %vm1714 = vcmp.ge.s32.totalorder %v688, 0
      %vm1715 = vcmp.ge.s32.totalorder %v689, 0
      %vm1716 = vcmp.ge.s32.totalorder %v690, 0
      %vm1717 = vcmp.ge.s32.totalorder %v691, 0
      %vm1718 = vcmp.ge.s32.totalorder %v692, 0
      %vm1719 = vcmp.ge.s32.totalorder %v693, 0
      %vm1720 = vcmp.ge.s32.totalorder %v694, 0
      %vm1721 = vcmp.ge.s32.totalorder %v695, 0
      %vm1722 = vcmp.ge.s32.totalorder %v696, 0
      %vm1723 = vcmp.ge.s32.totalorder %v697, 0
      %vm1724 = vcmp.ge.s32.totalorder %v698, 0
      %vm1725 = vcmp.ge.s32.totalorder %v699, 0
      %vm1726 = vcmp.ge.s32.totalorder %v700, 0
      %vm1727 = vcmp.ge.s32.totalorder %v701, 0
      %vm1728 = vcmp.ge.s32.totalorder %v702, 0
      %vm1729 = vcmp.ge.s32.totalorder %v703, 0
      %vm1730 = vcmp.ge.s32.totalorder %v704, 0
      %vm1731 = vcmp.ge.s32.totalorder %v705, 0
      %vm1732 = vcmp.ge.s32.totalorder %v706, 0
      %vm1733 = vcmp.ge.s32.totalorder %v707, 0
      %vm1734 = vcmp.ge.s32.totalorder %v708, 0
      %vm1735 = vcmp.ge.s32.totalorder %v709, 0
      %vm1736 = vcmp.ge.s32.totalorder %v710, 0
      %vm1737 = vcmp.ge.s32.totalorder %v711, 0
      %vm1738 = vcmp.ge.s32.totalorder %v712, 0
      %vm1739 = vcmp.ge.s32.totalorder %v713, 0
      %vm1740 = vcmp.ge.s32.totalorder %v714, 0
      %vm1741 = vcmp.ge.s32.totalorder %v715, 0
      %vm1742 = vcmp.ge.s32.totalorder %v716, 0
      %vm1743 = vcmp.ge.s32.totalorder %v717, 0
      %vm1744 = vcmp.ge.s32.totalorder %v718, 0
      %vm1745 = vcmp.ge.s32.totalorder %v719, 0
      %vm1746 = vcmp.ge.s32.totalorder %v720, 0
      %vm1747 = vcmp.ge.s32.totalorder %v721, 0
      %vm1748 = vcmp.ge.s32.totalorder %v722, 0
      %vm1749 = vcmp.ge.s32.totalorder %v723, 0
      %vm1750 = vcmp.ge.s32.totalorder %v724, 0
      %vm1751 = vcmp.ge.s32.totalorder %v725, 0
      %vm1752 = vcmp.ge.s32.totalorder %v726, 0
      %vm1753 = vcmp.ge.s32.totalorder %v727, 0
      %vm1754 = vcmp.ge.s32.totalorder %v728, 0
      %vm1755 = vcmp.ge.s32.totalorder %v729, 0
      %vm1756 = vcmp.ge.s32.totalorder %v730, 0
      %vm1757 = vcmp.ge.s32.totalorder %v731, 0
      %vm1758 = vcmp.ge.s32.totalorder %v732, 0
      %vm1759 = vcmp.ge.s32.totalorder %v733, 0
      %vm1760 = vcmp.ge.s32.totalorder %v734, 0
      %vm1761 = vcmp.ge.s32.totalorder %v735, 0
      %vm1762 = vcmp.ge.s32.totalorder %v736, 0
      %vm1763 = vcmp.ge.s32.totalorder %v737, 0
      %vm1764 = vcmp.ge.s32.totalorder %v738, 0
      %vm1765 = vcmp.ge.s32.totalorder %v739, 0
      %vm1766 = vcmp.ge.s32.totalorder %v740, 0
      %vm1767 = vcmp.ge.s32.totalorder %v741, 0
      %vm1768 = vcmp.ge.s32.totalorder %v742, 0
      %vm1769 = vcmp.ge.s32.totalorder %v743, 0
      %vm1770 = vcmp.ge.s32.totalorder %v744, 0
      %vm1771 = vcmp.ge.s32.totalorder %v745, 0
      %vm1772 = vcmp.ge.s32.totalorder %v746, 0
      %vm1773 = vcmp.ge.s32.totalorder %v747, 0
      %vm1774 = vcmp.ge.s32.totalorder %v748, 0
      %vm1775 = vcmp.ge.s32.totalorder %v749, 0
      %vm1776 = vcmp.ge.s32.totalorder %v750, 0
      %vm1777 = vcmp.ge.s32.totalorder %v751, 0
      %vm1778 = vcmp.ge.s32.totalorder %v752, 0
      %vm1779 = vcmp.ge.s32.totalorder %v753, 0
      %vm1780 = vcmp.ge.s32.totalorder %v754, 0
      %vm1781 = vcmp.ge.s32.totalorder %v755, 0
      %vm1782 = vcmp.ge.s32.totalorder %v756, 0
      %vm1783 = vcmp.ge.s32.totalorder %v757, 0
      %vm1784 = vcmp.ge.s32.totalorder %v758, 0
      %vm1785 = vcmp.ge.s32.totalorder %v759, 0
      %vm1786 = vcmp.ge.s32.totalorder %v760, 0
      %vm1787 = vcmp.ge.s32.totalorder %v761, 0
      %vm1788 = vcmp.ge.s32.totalorder %v762, 0
      %vm1789 = vcmp.ge.s32.totalorder %v763, 0
      %vm1790 = vcmp.ge.s32.totalorder %v764, 0
      %vm1791 = vcmp.ge.s32.totalorder %v765, 0
      %vm1792 = vcmp.ge.s32.totalorder %v766, 0
      %vm1793 = vcmp.ge.s32.totalorder %v767, 0
      %vm1794 = vcmp.ge.s32.totalorder %v768, 0
      %vm1795 = vcmp.ge.s32.totalorder %v769, 0
      %vm1796 = vcmp.ge.s32.totalorder %v770, 0
      %vm1797 = vcmp.ge.s32.totalorder %v771, 0
      %vm1798 = vcmp.ge.s32.totalorder %v772, 0
      %vm1799 = vcmp.ge.s32.totalorder %v773, 0
      %vm1800 = vcmp.ge.s32.totalorder %v774, 0
      %vm1801 = vcmp.ge.s32.totalorder %v775, 0
      %vm1802 = vcmp.ge.s32.totalorder %v776, 0
      %vm1803 = vcmp.ge.s32.totalorder %v777, 0
      %vm1804 = vcmp.ge.s32.totalorder %v778, 0
      %vm1805 = vcmp.ge.s32.totalorder %v779, 0
      %vm1806 = vcmp.ge.s32.totalorder %v780, 0
      %vm1807 = vcmp.ge.s32.totalorder %v781, 0
      %vm1808 = vcmp.ge.s32.totalorder %v782, 0
      %vm1809 = vcmp.ge.s32.totalorder %v783, 0
      %vm1810 = vcmp.ge.s32.totalorder %v784, 0
      %vm1811 = vcmp.ge.s32.totalorder %v785, 0
      %vm1812 = vcmp.ge.s32.totalorder %v786, 0
      %vm1813 = vcmp.ge.s32.totalorder %v787, 0
      %vm1814 = vcmp.ge.s32.totalorder %v788, 0
      %vm1815 = vcmp.ge.s32.totalorder %v789, 0
      %vm1816 = vcmp.ge.s32.totalorder %v790, 0
      %vm1817 = vcmp.ge.s32.totalorder %v791, 0
      %vm1818 = vcmp.ge.s32.totalorder %v792, 0
      %vm1819 = vcmp.ge.s32.totalorder %v793, 0
      %vm1820 = vmand %vm1308, %vm1564
      %vm1821 = vmand %vm1309, %vm1565
      %vm1822 = vmand %vm1310, %vm1566
      %vm1823 = vmand %vm1311, %vm1567
      %vm1824 = vmand %vm1312, %vm1568
      %vm1825 = vmand %vm1313, %vm1569
      %vm1826 = vmand %vm1314, %vm1570
      %vm1827 = vmand %vm1315, %vm1571
      %vm1828 = vmand %vm1316, %vm1572
      %vm1829 = vmand %vm1317, %vm1573
      %vm1830 = vmand %vm1318, %vm1574
      %vm1831 = vmand %vm1319, %vm1575
      %vm1832 = vmand %vm1320, %vm1576
      %vm1833 = vmand %vm1321, %vm1577
      %vm1834 = vmand %vm1322, %vm1578
      %vm1835 = vmand %vm1323, %vm1579
      %vm1836 = vmand %vm1324, %vm1580
      %vm1837 = vmand %vm1325, %vm1581
      %vm1838 = vmand %vm1326, %vm1582
      %vm1839 = vmand %vm1327, %vm1583
      %vm1840 = vmand %vm1328, %vm1584
      %vm1841 = vmand %vm1329, %vm1585
      %vm1842 = vmand %vm1330, %vm1586
      %vm1843 = vmand %vm1331, %vm1587
      %vm1844 = vmand %vm1332, %vm1588
      %vm1845 = vmand %vm1333, %vm1589
      %vm1846 = vmand %vm1334, %vm1590
      %vm1847 = vmand %vm1335, %vm1591
      %vm1848 = vmand %vm1336, %vm1592
      %vm1849 = vmand %vm1337, %vm1593
      %vm1850 = vmand %vm1338, %vm1594
      %vm1851 = vmand %vm1339, %vm1595
      %vm1852 = vmand %vm1340, %vm1596
      %vm1853 = vmand %vm1341, %vm1597
      %vm1854 = vmand %vm1342, %vm1598
      %vm1855 = vmand %vm1343, %vm1599
      %vm1856 = vmand %vm1344, %vm1600
      %vm1857 = vmand %vm1345, %vm1601
      %vm1858 = vmand %vm1346, %vm1602
      %vm1859 = vmand %vm1347, %vm1603
      %vm1860 = vmand %vm1348, %vm1604
      %vm1861 = vmand %vm1349, %vm1605
      %vm1862 = vmand %vm1350, %vm1606
      %vm1863 = vmand %vm1351, %vm1607
      %vm1864 = vmand %vm1352, %vm1608
      %vm1865 = vmand %vm1353, %vm1609
      %vm1866 = vmand %vm1354, %vm1610
      %vm1867 = vmand %vm1355, %vm1611
      %vm1868 = vmand %vm1356, %vm1612
      %vm1869 = vmand %vm1357, %vm1613
      %vm1870 = vmand %vm1358, %vm1614
      %vm1871 = vmand %vm1359, %vm1615
      %vm1872 = vmand %vm1360, %vm1616
      %vm1873 = vmand %vm1361, %vm1617
      %vm1874 = vmand %vm1362, %vm1618
      %vm1875 = vmand %vm1363, %vm1619
      %vm1876 = vmand %vm1364, %vm1620
      %vm1877 = vmand %vm1365, %vm1621
      %vm1878 = vmand %vm1366, %vm1622
      %vm1879 = vmand %vm1367, %vm1623
      %vm1880 = vmand %vm1368, %vm1624
      %vm1881 = vmand %vm1369, %vm1625
      %vm1882 = vmand %vm1370, %vm1626
      %vm1883 = vmand %vm1371, %vm1627
      %vm1884 = vmand %vm1372, %vm1628
      %vm1885 = vmand %vm1373, %vm1629
      %vm1886 = vmand %vm1374, %vm1630
      %vm1887 = vmand %vm1375, %vm1631
      %vm1888 = vmand %vm1376, %vm1632
      %vm1889 = vmand %vm1377, %vm1633
      %vm1890 = vmand %vm1378, %vm1634
      %vm1891 = vmand %vm1379, %vm1635
      %vm1892 = vmand %vm1380, %vm1636
      %vm1893 = vmand %vm1381, %vm1637
      %vm1894 = vmand %vm1382, %vm1638
      %vm1895 = vmand %vm1383, %vm1639
      %vm1896 = vmand %vm1384, %vm1640
      %vm1897 = vmand %vm1385, %vm1641
      %vm1898 = vmand %vm1386, %vm1642
      %vm1899 = vmand %vm1387, %vm1643
      %vm1900 = vmand %vm1388, %vm1644
      %vm1901 = vmand %vm1389, %vm1645
      %vm1902 = vmand %vm1390, %vm1646
      %vm1903 = vmand %vm1391, %vm1647
      %vm1904 = vmand %vm1392, %vm1648
      %vm1905 = vmand %vm1393, %vm1649
      %vm1906 = vmand %vm1394, %vm1650
      %vm1907 = vmand %vm1395, %vm1651
      %vm1908 = vmand %vm1396, %vm1652
      %vm1909 = vmand %vm1397, %vm1653
      %vm1910 = vmand %vm1398, %vm1654
      %vm1911 = vmand %vm1399, %vm1655
      %vm1912 = vmand %vm1400, %vm1656
      %vm1913 = vmand %vm1401, %vm1657
      %vm1914 = vmand %vm1402, %vm1658
      %vm1915 = vmand %vm1403, %vm1659
      %vm1916 = vmand %vm1404, %vm1660
      %vm1917 = vmand %vm1405, %vm1661
      %vm1918 = vmand %vm1406, %vm1662
      %vm1919 = vmand %vm1407, %vm1663
      %vm1920 = vmand %vm1408, %vm1664
      %vm1921 = vmand %vm1409, %vm1665
      %vm1922 = vmand %vm1410, %vm1666
      %vm1923 = vmand %vm1411, %vm1667
      %vm1924 = vmand %vm1412, %vm1668
      %vm1925 = vmand %vm1413, %vm1669
      %vm1926 = vmand %vm1414, %vm1670
      %vm1927 = vmand %vm1415, %vm1671
      %vm1928 = vmand %vm1416, %vm1672
      %vm1929 = vmand %vm1417, %vm1673
      %vm1930 = vmand %vm1418, %vm1674
      %vm1931 = vmand %vm1419, %vm1675
      %vm1932 = vmand %vm1420, %vm1676
      %vm1933 = vmand %vm1421, %vm1677
      %vm1934 = vmand %vm1422, %vm1678
      %vm1935 = vmand %vm1423, %vm1679
      %vm1936 = vmand %vm1424, %vm1680
      %vm1937 = vmand %vm1425, %vm1681
      %vm1938 = vmand %vm1426, %vm1682
      %vm1939 = vmand %vm1427, %vm1683
      %vm1940 = vmand %vm1428, %vm1684
      %vm1941 = vmand %vm1429, %vm1685
      %vm1942 = vmand %vm1430, %vm1686
      %vm1943 = vmand %vm1431, %vm1687
      %vm1944 = vmand %vm1432, %vm1688
      %vm1945 = vmand %vm1433, %vm1689
      %vm1946 = vmand %vm1434, %vm1690
      %vm1947 = vmand %vm1435, %vm1691
      %vm1948 = vmand %vm1436, %vm1692
      %vm1949 = vmand %vm1437, %vm1693
      %vm1950 = vmand %vm1438, %vm1694
      %vm1951 = vmand %vm1439, %vm1695
      %vm1952 = vmand %vm1440, %vm1696
      %vm1953 = vmand %vm1441, %vm1697
      %vm1954 = vmand %vm1442, %vm1698
      %vm1955 = vmand %vm1443, %vm1699
      %vm1956 = vmand %vm1444, %vm1700
      %vm1957 = vmand %vm1445, %vm1701
      %vm1958 = vmand %vm1446, %vm1702
      %vm1959 = vmand %vm1447, %vm1703
      %vm1960 = vmand %vm1448, %vm1704
      %vm1961 = vmand %vm1449, %vm1705
      %vm1962 = vmand %vm1450, %vm1706
      %vm1963 = vmand %vm1451, %vm1707
      %vm1964 = vmand %vm1452, %vm1708
      %vm1965 = vmand %vm1453, %vm1709
      %vm1966 = vmand %vm1454, %vm1710
      %vm1967 = vmand %vm1455, %vm1711
      %vm1968 = vmand %vm1456, %vm1712
      %vm1969 = vmand %vm1457, %vm1713
      %vm1970 = vmand %vm1458, %vm1714
      %vm1971 = vmand %vm1459, %vm1715
      %vm1972 = vmand %vm1460, %vm1716
      %vm1973 = vmand %vm1461, %vm1717
      %vm1974 = vmand %vm1462, %vm1718
      %vm1975 = vmand %vm1463, %vm1719
      %vm1976 = vmand %vm1464, %vm1720
      %vm1977 = vmand %vm1465, %vm1721
      %vm1978 = vmand %vm1466, %vm1722
      %vm1979 = vmand %vm1467, %vm1723
      %vm1980 = vmand %vm1468, %vm1724
      %vm1981 = vmand %vm1469, %vm1725
      %vm1982 = vmand %vm1470, %vm1726
      %vm1983 = vmand %vm1471, %vm1727
      %vm1984 = vmand %vm1472, %vm1728
      %vm1985 = vmand %vm1473, %vm1729
      %vm1986 = vmand %vm1474, %vm1730
      %vm1987 = vmand %vm1475, %vm1731
      %vm1988 = vmand %vm1476, %vm1732
      %vm1989 = vmand %vm1477, %vm1733
      %vm1990 = vmand %vm1478, %vm1734
      %vm1991 = vmand %vm1479, %vm1735
      %vm1992 = vmand %vm1480, %vm1736
      %vm1993 = vmand %vm1481, %vm1737
      %vm1994 = vmand %vm1482, %vm1738
      %vm1995 = vmand %vm1483, %vm1739
      %vm1996 = vmand %vm1484, %vm1740
      %vm1997 = vmand %vm1485, %vm1741
      %vm1998 = vmand %vm1486, %vm1742
      %vm1999 = vmand %vm1487, %vm1743
      %vm2000 = vmand %vm1488, %vm1744
      %vm2001 = vmand %vm1489, %vm1745
      %vm2002 = vmand %vm1490, %vm1746
      %vm2003 = vmand %vm1491, %vm1747
      %vm2004 = vmand %vm1492, %vm1748
      %vm2005 = vmand %vm1493, %vm1749
      %vm2006 = vmand %vm1494, %vm1750
      %vm2007 = vmand %vm1495, %vm1751
      %vm2008 = vmand %vm1496, %vm1752
      %vm2009 = vmand %vm1497, %vm1753
      %vm2010 = vmand %vm1498, %vm1754
      %vm2011 = vmand %vm1499, %vm1755
      %vm2012 = vmand %vm1500, %vm1756
      %vm2013 = vmand %vm1501, %vm1757
      %vm2014 = vmand %vm1502, %vm1758
      %vm2015 = vmand %vm1503, %vm1759
      %vm2016 = vmand %vm1504, %vm1760
      %vm2017 = vmand %vm1505, %vm1761
      %vm2018 = vmand %vm1506, %vm1762
      %vm2019 = vmand %vm1507, %vm1763
      %vm2020 = vmand %vm1508, %vm1764
      %vm2021 = vmand %vm1509, %vm1765
      %vm2022 = vmand %vm1510, %vm1766
      %vm2023 = vmand %vm1511, %vm1767
      %vm2024 = vmand %vm1512, %vm1768
      %vm2025 = vmand %vm1513, %vm1769
      %vm2026 = vmand %vm1514, %vm1770
      %vm2027 = vmand %vm1515, %vm1771
      %vm2028 = vmand %vm1516, %vm1772
      %vm2029 = vmand %vm1517, %vm1773
      %vm2030 = vmand %vm1518, %vm1774
      %vm2031 = vmand %vm1519, %vm1775
      %vm2032 = vmand %vm1520, %vm1776
      %vm2033 = vmand %vm1521, %vm1777
      %vm2034 = vmand %vm1522, %vm1778
      %vm2035 = vmand %vm1523, %vm1779
      %vm2036 = vmand %vm1524, %vm1780
      %vm2037 = vmand %vm1525, %vm1781
      %vm2038 = vmand %vm1526, %vm1782
      %vm2039 = vmand %vm1527, %vm1783
      %vm2040 = vmand %vm1528, %vm1784
      %vm2041 = vmand %vm1529, %vm1785
      %vm2042 = vmand %vm1530, %vm1786
      %vm2043 = vmand %vm1531, %vm1787
      %vm2044 = vmand %vm1532, %vm1788
      %vm2045 = vmand %vm1533, %vm1789
      %vm2046 = vmand %vm1534, %vm1790
      %vm2047 = vmand %vm1535, %vm1791
      %vm2048 = vmand %vm1536, %vm1792
      %vm2049 = vmand %vm1537, %vm1793
      %vm2050 = vmand %vm1538, %vm1794
      %vm2051 = vmand %vm1539, %vm1795
      %vm2052 = vmand %vm1540, %vm1796
      %vm2053 = vmand %vm1541, %vm1797
      %vm2054 = vmand %vm1542, %vm1798
      %vm2055 = vmand %vm1543, %vm1799
      %vm2056 = vmand %vm1544, %vm1800
      %vm2057 = vmand %vm1545, %vm1801
      %vm2058 = vmand %vm1546, %vm1802
      %vm2059 = vmand %vm1547, %vm1803
      %vm2060 = vmand %vm1548, %vm1804
      %vm2061 = vmand %vm1549, %vm1805
      %vm2062 = vmand %vm1550, %vm1806
      %vm2063 = vmand %vm1551, %vm1807
      %vm2064 = vmand %vm1552, %vm1808
      %vm2065 = vmand %vm1553, %vm1809
      %vm2066 = vmand %vm1554, %vm1810
      %vm2067 = vmand %vm1555, %vm1811
      %vm2068 = vmand %vm1556, %vm1812
      %vm2069 = vmand %vm1557, %vm1813
      %vm2070 = vmand %vm1558, %vm1814
      %vm2071 = vmand %vm1559, %vm1815
      %vm2072 = vmand %vm1560, %vm1816
      %vm2073 = vmand %vm1561, %vm1817
      %vm2074 = vmand %vm1562, %vm1818
      %vm2075 = vmand %vm1563, %vm1819
      %v2076 = vsel %vm1820, 1.0, 0.0
      %v2077 = vsel %vm1821, 1.0, 0.0
      %v2078 = vsel %vm1822, 1.0, 0.0
      %v2079 = vsel %vm1823, 1.0, 0.0
      %v2080 = vsel %vm1824, 1.0, 0.0
      %v2081 = vsel %vm1825, 1.0, 0.0
      %v2082 = vsel %vm1826, 1.0, 0.0
      %v2083 = vsel %vm1827, 1.0, 0.0
      %v2084 = vsel %vm1828, 1.0, 0.0
      %v2085 = vsel %vm1829, 1.0, 0.0
      %v2086 = vsel %vm1830, 1.0, 0.0
      %v2087 = vsel %vm1831, 1.0, 0.0
      %v2088 = vsel %vm1832, 1.0, 0.0
      %v2089 = vsel %vm1833, 1.0, 0.0
      %v2090 = vsel %vm1834, 1.0, 0.0
      %v2091 = vsel %vm1835, 1.0, 0.0
      %v2092 = vsel %vm1836, 1.0, 0.0
      %v2093 = vsel %vm1837, 1.0, 0.0
      %v2094 = vsel %vm1838, 1.0, 0.0
      %v2095 = vsel %vm1839, 1.0, 0.0
      %v2096 = vsel %vm1840, 1.0, 0.0
      %v2097 = vsel %vm1841, 1.0, 0.0
      %v2098 = vsel %vm1842, 1.0, 0.0
      %v2099 = vsel %vm1843, 1.0, 0.0
      %v2100 = vsel %vm1844, 1.0, 0.0
      %v2101 = vsel %vm1845, 1.0, 0.0
      %v2102 = vsel %vm1846, 1.0, 0.0
      %v2103 = vsel %vm1847, 1.0, 0.0
      %v2104 = vsel %vm1848, 1.0, 0.0
      %v2105 = vsel %vm1849, 1.0, 0.0
      %v2106 = vsel %vm1850, 1.0, 0.0
      %v2107 = vsel %vm1851, 1.0, 0.0
      %v2108 = vsel %vm1852, 1.0, 0.0
      %v2109 = vsel %vm1853, 1.0, 0.0
      %v2110 = vsel %vm1854, 1.0, 0.0
      %v2111 = vsel %vm1855, 1.0, 0.0
      %v2112 = vsel %vm1856, 1.0, 0.0
      %v2113 = vsel %vm1857, 1.0, 0.0
      %v2114 = vsel %vm1858, 1.0, 0.0
      %v2115 = vsel %vm1859, 1.0, 0.0
      %v2116 = vsel %vm1860, 1.0, 0.0
      %v2117 = vsel %vm1861, 1.0, 0.0
      %v2118 = vsel %vm1862, 1.0, 0.0
      %v2119 = vsel %vm1863, 1.0, 0.0
      %v2120 = vsel %vm1864, 1.0, 0.0
      %v2121 = vsel %vm1865, 1.0, 0.0
      %v2122 = vsel %vm1866, 1.0, 0.0
      %v2123 = vsel %vm1867, 1.0, 0.0
      %v2124 = vsel %vm1868, 1.0, 0.0
      %v2125 = vsel %vm1869, 1.0, 0.0
      %v2126 = vsel %vm1870, 1.0, 0.0
      %v2127 = vsel %vm1871, 1.0, 0.0
      %v2128 = vsel %vm1872, 1.0, 0.0
      %v2129 = vsel %vm1873, 1.0, 0.0
      %v2130 = vsel %vm1874, 1.0, 0.0
      %v2131 = vsel %vm1875, 1.0, 0.0
      %v2132 = vsel %vm1876, 1.0, 0.0
      %v2133 = vsel %vm1877, 1.0, 0.0
      %v2134 = vsel %vm1878, 1.0, 0.0
      %v2135 = vsel %vm1879, 1.0, 0.0
      %v2136 = vsel %vm1880, 1.0, 0.0
      %v2137 = vsel %vm1881, 1.0, 0.0
      %v2138 = vsel %vm1882, 1.0, 0.0
      %v2139 = vsel %vm1883, 1.0, 0.0
      %v2140 = vsel %vm1884, 1.0, 0.0
      %v2141 = vsel %vm1885, 1.0, 0.0
      %v2142 = vsel %vm1886, 1.0, 0.0
      %v2143 = vsel %vm1887, 1.0, 0.0
      %v2144 = vsel %vm1888, 1.0, 0.0
      %v2145 = vsel %vm1889, 1.0, 0.0
      %v2146 = vsel %vm1890, 1.0, 0.0
      %v2147 = vsel %vm1891, 1.0, 0.0
      %v2148 = vsel %vm1892, 1.0, 0.0
      %v2149 = vsel %vm1893, 1.0, 0.0
      %v2150 = vsel %vm1894, 1.0, 0.0
      %v2151 = vsel %vm1895, 1.0, 0.0
      %v2152 = vsel %vm1896, 1.0, 0.0
      %v2153 = vsel %vm1897, 1.0, 0.0
      %v2154 = vsel %vm1898, 1.0, 0.0
      %v2155 = vsel %vm1899, 1.0, 0.0
      %v2156 = vsel %vm1900, 1.0, 0.0
      %v2157 = vsel %vm1901, 1.0, 0.0
      %v2158 = vsel %vm1902, 1.0, 0.0
      %v2159 = vsel %vm1903, 1.0, 0.0
      %v2160 = vsel %vm1904, 1.0, 0.0
      %v2161 = vsel %vm1905, 1.0, 0.0
      %v2162 = vsel %vm1906, 1.0, 0.0
      %v2163 = vsel %vm1907, 1.0, 0.0
      %v2164 = vsel %vm1908, 1.0, 0.0
      %v2165 = vsel %vm1909, 1.0, 0.0
      %v2166 = vsel %vm1910, 1.0, 0.0
      %v2167 = vsel %vm1911, 1.0, 0.0
      %v2168 = vsel %vm1912, 1.0, 0.0
      %v2169 = vsel %vm1913, 1.0, 0.0
      %v2170 = vsel %vm1914, 1.0, 0.0
      %v2171 = vsel %vm1915, 1.0, 0.0
      %v2172 = vsel %vm1916, 1.0, 0.0
      %v2173 = vsel %vm1917, 1.0, 0.0
      %v2174 = vsel %vm1918, 1.0, 0.0
      %v2175 = vsel %vm1919, 1.0, 0.0
      %v2176 = vsel %vm1920, 1.0, 0.0
      %v2177 = vsel %vm1921, 1.0, 0.0
      %v2178 = vsel %vm1922, 1.0, 0.0
      %v2179 = vsel %vm1923, 1.0, 0.0
      %v2180 = vsel %vm1924, 1.0, 0.0
      %v2181 = vsel %vm1925, 1.0, 0.0
      %v2182 = vsel %vm1926, 1.0, 0.0
      %v2183 = vsel %vm1927, 1.0, 0.0
      %v2184 = vsel %vm1928, 1.0, 0.0
      %v2185 = vsel %vm1929, 1.0, 0.0
      %v2186 = vsel %vm1930, 1.0, 0.0
      %v2187 = vsel %vm1931, 1.0, 0.0
      %v2188 = vsel %vm1932, 1.0, 0.0
      %v2189 = vsel %vm1933, 1.0, 0.0
      %v2190 = vsel %vm1934, 1.0, 0.0
      %v2191 = vsel %vm1935, 1.0, 0.0
      %v2192 = vsel %vm1936, 1.0, 0.0
      %v2193 = vsel %vm1937, 1.0, 0.0
      %v2194 = vsel %vm1938, 1.0, 0.0
      %v2195 = vsel %vm1939, 1.0, 0.0
      %v2196 = vsel %vm1940, 1.0, 0.0
      %v2197 = vsel %vm1941, 1.0, 0.0
      %v2198 = vsel %vm1942, 1.0, 0.0
      %v2199 = vsel %vm1943, 1.0, 0.0
      %v2200 = vsel %vm1944, 1.0, 0.0
      %v2201 = vsel %vm1945, 1.0, 0.0
      %v2202 = vsel %vm1946, 1.0, 0.0
      %v2203 = vsel %vm1947, 1.0, 0.0
      %v2204 = vsel %vm1948, 1.0, 0.0
      %v2205 = vsel %vm1949, 1.0, 0.0
      %v2206 = vsel %vm1950, 1.0, 0.0
      %v2207 = vsel %vm1951, 1.0, 0.0
      %v2208 = vsel %vm1952, 1.0, 0.0
      %v2209 = vsel %vm1953, 1.0, 0.0
      %v2210 = vsel %vm1954, 1.0, 0.0
      %v2211 = vsel %vm1955, 1.0, 0.0
      %v2212 = vsel %vm1956, 1.0, 0.0
      %v2213 = vsel %vm1957, 1.0, 0.0
      %v2214 = vsel %vm1958, 1.0, 0.0
      %v2215 = vsel %vm1959, 1.0, 0.0
      %v2216 = vsel %vm1960, 1.0, 0.0
      %v2217 = vsel %vm1961, 1.0, 0.0
      %v2218 = vsel %vm1962, 1.0, 0.0
      %v2219 = vsel %vm1963, 1.0, 0.0
      %v2220 = vsel %vm1964, 1.0, 0.0
      %v2221 = vsel %vm1965, 1.0, 0.0
      %v2222 = vsel %vm1966, 1.0, 0.0
      %v2223 = vsel %vm1967, 1.0, 0.0
      %v2224 = vsel %vm1968, 1.0, 0.0
      %v2225 = vsel %vm1969, 1.0, 0.0
      %v2226 = vsel %vm1970, 1.0, 0.0
      %v2227 = vsel %vm1971, 1.0, 0.0
      %v2228 = vsel %vm1972, 1.0, 0.0
      %v2229 = vsel %vm1973, 1.0, 0.0
      %v2230 = vsel %vm1974, 1.0, 0.0
      %v2231 = vsel %vm1975, 1.0, 0.0
      %v2232 = vsel %vm1976, 1.0, 0.0
      %v2233 = vsel %vm1977, 1.0, 0.0
      %v2234 = vsel %vm1978, 1.0, 0.0
      %v2235 = vsel %vm1979, 1.0, 0.0
      %v2236 = vsel %vm1980, 1.0, 0.0
      %v2237 = vsel %vm1981, 1.0, 0.0
      %v2238 = vsel %vm1982, 1.0, 0.0
      %v2239 = vsel %vm1983, 1.0, 0.0
      %v2240 = vsel %vm1984, 1.0, 0.0
      %v2241 = vsel %vm1985, 1.0, 0.0
      %v2242 = vsel %vm1986, 1.0, 0.0
      %v2243 = vsel %vm1987, 1.0, 0.0
      %v2244 = vsel %vm1988, 1.0, 0.0
      %v2245 = vsel %vm1989, 1.0, 0.0
      %v2246 = vsel %vm1990, 1.0, 0.0
      %v2247 = vsel %vm1991, 1.0, 0.0
      %v2248 = vsel %vm1992, 1.0, 0.0
      %v2249 = vsel %vm1993, 1.0, 0.0
      %v2250 = vsel %vm1994, 1.0, 0.0
      %v2251 = vsel %vm1995, 1.0, 0.0
      %v2252 = vsel %vm1996, 1.0, 0.0
      %v2253 = vsel %vm1997, 1.0, 0.0
      %v2254 = vsel %vm1998, 1.0, 0.0
      %v2255 = vsel %vm1999, 1.0, 0.0
      %v2256 = vsel %vm2000, 1.0, 0.0
      %v2257 = vsel %vm2001, 1.0, 0.0
      %v2258 = vsel %vm2002, 1.0, 0.0
      %v2259 = vsel %vm2003, 1.0, 0.0
      %v2260 = vsel %vm2004, 1.0, 0.0
      %v2261 = vsel %vm2005, 1.0, 0.0
      %v2262 = vsel %vm2006, 1.0, 0.0
      %v2263 = vsel %vm2007, 1.0, 0.0
      %v2264 = vsel %vm2008, 1.0, 0.0
      %v2265 = vsel %vm2009, 1.0, 0.0
      %v2266 = vsel %vm2010, 1.0, 0.0
      %v2267 = vsel %vm2011, 1.0, 0.0
      %v2268 = vsel %vm2012, 1.0, 0.0
      %v2269 = vsel %vm2013, 1.0, 0.0
      %v2270 = vsel %vm2014, 1.0, 0.0
      %v2271 = vsel %vm2015, 1.0, 0.0
      %v2272 = vsel %vm2016, 1.0, 0.0
      %v2273 = vsel %vm2017, 1.0, 0.0
      %v2274 = vsel %vm2018, 1.0, 0.0
      %v2275 = vsel %vm2019, 1.0, 0.0
      %v2276 = vsel %vm2020, 1.0, 0.0
      %v2277 = vsel %vm2021, 1.0, 0.0
      %v2278 = vsel %vm2022, 1.0, 0.0
      %v2279 = vsel %vm2023, 1.0, 0.0
      %v2280 = vsel %vm2024, 1.0, 0.0
      %v2281 = vsel %vm2025, 1.0, 0.0
      %v2282 = vsel %vm2026, 1.0, 0.0
      %v2283 = vsel %vm2027, 1.0, 0.0
      %v2284 = vsel %vm2028, 1.0, 0.0
      %v2285 = vsel %vm2029, 1.0, 0.0
      %v2286 = vsel %vm2030, 1.0, 0.0
      %v2287 = vsel %vm2031, 1.0, 0.0
      %v2288 = vsel %vm2032, 1.0, 0.0
      %v2289 = vsel %vm2033, 1.0, 0.0
      %v2290 = vsel %vm2034, 1.0, 0.0
      %v2291 = vsel %vm2035, 1.0, 0.0
      %v2292 = vsel %vm2036, 1.0, 0.0
      %v2293 = vsel %vm2037, 1.0, 0.0
      %v2294 = vsel %vm2038, 1.0, 0.0
      %v2295 = vsel %vm2039, 1.0, 0.0
      %v2296 = vsel %vm2040, 1.0, 0.0
      %v2297 = vsel %vm2041, 1.0, 0.0
      %v2298 = vsel %vm2042, 1.0, 0.0
      %v2299 = vsel %vm2043, 1.0, 0.0
      %v2300 = vsel %vm2044, 1.0, 0.0
      %v2301 = vsel %vm2045, 1.0, 0.0
      %v2302 = vsel %vm2046, 1.0, 0.0
      %v2303 = vsel %vm2047, 1.0, 0.0
      %v2304 = vsel %vm2048, 1.0, 0.0
      %v2305 = vsel %vm2049, 1.0, 0.0
      %v2306 = vsel %vm2050, 1.0, 0.0
      %v2307 = vsel %vm2051, 1.0, 0.0
      %v2308 = vsel %vm2052, 1.0, 0.0
      %v2309 = vsel %vm2053, 1.0, 0.0
      %v2310 = vsel %vm2054, 1.0, 0.0
      %v2311 = vsel %vm2055, 1.0, 0.0
      %v2312 = vsel %vm2056, 1.0, 0.0
      %v2313 = vsel %vm2057, 1.0, 0.0
      %v2314 = vsel %vm2058, 1.0, 0.0
      %v2315 = vsel %vm2059, 1.0, 0.0
      %v2316 = vsel %vm2060, 1.0, 0.0
      %v2317 = vsel %vm2061, 1.0, 0.0
      %v2318 = vsel %vm2062, 1.0, 0.0
      %v2319 = vsel %vm2063, 1.0, 0.0
      %v2320 = vsel %vm2064, 1.0, 0.0
      %v2321 = vsel %vm2065, 1.0, 0.0
      %v2322 = vsel %vm2066, 1.0, 0.0
      %v2323 = vsel %vm2067, 1.0, 0.0
      %v2324 = vsel %vm2068, 1.0, 0.0
      %v2325 = vsel %vm2069, 1.0, 0.0
      %v2326 = vsel %vm2070, 1.0, 0.0
      %v2327 = vsel %vm2071, 1.0, 0.0
      %v2328 = vsel %vm2072, 1.0, 0.0
      %v2329 = vsel %vm2073, 1.0, 0.0
      %v2330 = vsel %vm2074, 1.0, 0.0
      %v2331 = vsel %vm2075, 1.0, 0.0
      %v2332 = vsel %vm1308, 1, 0
      %v2333 = vsel %vm1309, 1, 0
      %v2334 = vsel %vm1310, 1, 0
      %v2335 = vsel %vm1311, 1, 0
      %v2336 = vsel %vm1312, 1, 0
      %v2337 = vsel %vm1313, 1, 0
      %v2338 = vsel %vm1314, 1, 0
      %v2339 = vsel %vm1315, 1, 0
      %v2340 = vsel %vm1316, 1, 0
      %v2341 = vsel %vm1317, 1, 0
      %v2342 = vsel %vm1318, 1, 0
      %v2343 = vsel %vm1319, 1, 0
      %v2344 = vsel %vm1320, 1, 0
      %v2345 = vsel %vm1321, 1, 0
      %v2346 = vsel %vm1322, 1, 0
      %v2347 = vsel %vm1323, 1, 0
      %v2348 = vsel %vm1324, 1, 0
      %v2349 = vsel %vm1325, 1, 0
      %v2350 = vsel %vm1326, 1, 0
      %v2351 = vsel %vm1327, 1, 0
      %v2352 = vsel %vm1328, 1, 0
      %v2353 = vsel %vm1329, 1, 0
      %v2354 = vsel %vm1330, 1, 0
      %v2355 = vsel %vm1331, 1, 0
      %v2356 = vsel %vm1332, 1, 0
      %v2357 = vsel %vm1333, 1, 0
      %v2358 = vsel %vm1334, 1, 0
      %v2359 = vsel %vm1335, 1, 0
      %v2360 = vsel %vm1336, 1, 0
      %v2361 = vsel %vm1337, 1, 0
      %v2362 = vsel %vm1338, 1, 0
      %v2363 = vsel %vm1339, 1, 0
      %v2364 = vsel %vm1340, 1, 0
      %v2365 = vsel %vm1341, 1, 0
      %v2366 = vsel %vm1342, 1, 0
      %v2367 = vsel %vm1343, 1, 0
      %v2368 = vsel %vm1344, 1, 0
      %v2369 = vsel %vm1345, 1, 0
      %v2370 = vsel %vm1346, 1, 0
      %v2371 = vsel %vm1347, 1, 0
      %v2372 = vsel %vm1348, 1, 0
      %v2373 = vsel %vm1349, 1, 0
      %v2374 = vsel %vm1350, 1, 0
      %v2375 = vsel %vm1351, 1, 0
      %v2376 = vsel %vm1352, 1, 0
      %v2377 = vsel %vm1353, 1, 0
      %v2378 = vsel %vm1354, 1, 0
      %v2379 = vsel %vm1355, 1, 0
      %v2380 = vsel %vm1356, 1, 0
      %v2381 = vsel %vm1357, 1, 0
      %v2382 = vsel %vm1358, 1, 0
      %v2383 = vsel %vm1359, 1, 0
      %v2384 = vsel %vm1360, 1, 0
      %v2385 = vsel %vm1361, 1, 0
      %v2386 = vsel %vm1362, 1, 0
      %v2387 = vsel %vm1363, 1, 0
      %v2388 = vsel %vm1364, 1, 0
      %v2389 = vsel %vm1365, 1, 0
      %v2390 = vsel %vm1366, 1, 0
      %v2391 = vsel %vm1367, 1, 0
      %v2392 = vsel %vm1368, 1, 0
      %v2393 = vsel %vm1369, 1, 0
      %v2394 = vsel %vm1370, 1, 0
      %v2395 = vsel %vm1371, 1, 0
      %v2396 = vsel %vm1372, 1, 0
      %v2397 = vsel %vm1373, 1, 0
      %v2398 = vsel %vm1374, 1, 0
      %v2399 = vsel %vm1375, 1, 0
      %v2400 = vsel %vm1376, 1, 0
      %v2401 = vsel %vm1377, 1, 0
      %v2402 = vsel %vm1378, 1, 0
      %v2403 = vsel %vm1379, 1, 0
      %v2404 = vsel %vm1380, 1, 0
      %v2405 = vsel %vm1381, 1, 0
      %v2406 = vsel %vm1382, 1, 0
      %v2407 = vsel %vm1383, 1, 0
      %v2408 = vsel %vm1384, 1, 0
      %v2409 = vsel %vm1385, 1, 0
      %v2410 = vsel %vm1386, 1, 0
      %v2411 = vsel %vm1387, 1, 0
      %v2412 = vsel %vm1388, 1, 0
      %v2413 = vsel %vm1389, 1, 0
      %v2414 = vsel %vm1390, 1, 0
      %v2415 = vsel %vm1391, 1, 0
      %v2416 = vsel %vm1392, 1, 0
      %v2417 = vsel %vm1393, 1, 0
      %v2418 = vsel %vm1394, 1, 0
      %v2419 = vsel %vm1395, 1, 0
      %v2420 = vsel %vm1396, 1, 0
      %v2421 = vsel %vm1397, 1, 0
      %v2422 = vsel %vm1398, 1, 0
      %v2423 = vsel %vm1399, 1, 0
      %v2424 = vsel %vm1400, 1, 0
      %v2425 = vsel %vm1401, 1, 0
      %v2426 = vsel %vm1402, 1, 0
      %v2427 = vsel %vm1403, 1, 0
      %v2428 = vsel %vm1404, 1, 0
      %v2429 = vsel %vm1405, 1, 0
      %v2430 = vsel %vm1406, 1, 0
      %v2431 = vsel %vm1407, 1, 0
      %v2432 = vsel %vm1408, 1, 0
      %v2433 = vsel %vm1409, 1, 0
      %v2434 = vsel %vm1410, 1, 0
      %v2435 = vsel %vm1411, 1, 0
      %v2436 = vsel %vm1412, 1, 0
      %v2437 = vsel %vm1413, 1, 0
      %v2438 = vsel %vm1414, 1, 0
      %v2439 = vsel %vm1415, 1, 0
      %v2440 = vsel %vm1416, 1, 0
      %v2441 = vsel %vm1417, 1, 0
      %v2442 = vsel %vm1418, 1, 0
      %v2443 = vsel %vm1419, 1, 0
      %v2444 = vsel %vm1420, 1, 0
      %v2445 = vsel %vm1421, 1, 0
      %v2446 = vsel %vm1422, 1, 0
      %v2447 = vsel %vm1423, 1, 0
      %v2448 = vsel %vm1424, 1, 0
      %v2449 = vsel %vm1425, 1, 0
      %v2450 = vsel %vm1426, 1, 0
      %v2451 = vsel %vm1427, 1, 0
      %v2452 = vsel %vm1428, 1, 0
      %v2453 = vsel %vm1429, 1, 0
      %v2454 = vsel %vm1430, 1, 0
      %v2455 = vsel %vm1431, 1, 0
      %v2456 = vsel %vm1432, 1, 0
      %v2457 = vsel %vm1433, 1, 0
      %v2458 = vsel %vm1434, 1, 0
      %v2459 = vsel %vm1435, 1, 0
      %v2460 = vsel %vm1436, 1, 0
      %v2461 = vsel %vm1437, 1, 0
      %v2462 = vsel %vm1438, 1, 0
      %v2463 = vsel %vm1439, 1, 0
      %v2464 = vsel %vm1440, 1, 0
      %v2465 = vsel %vm1441, 1, 0
      %v2466 = vsel %vm1442, 1, 0
      %v2467 = vsel %vm1443, 1, 0
      %v2468 = vsel %vm1444, 1, 0
      %v2469 = vsel %vm1445, 1, 0
      %v2470 = vsel %vm1446, 1, 0
      %v2471 = vsel %vm1447, 1, 0
      %v2472 = vsel %vm1448, 1, 0
      %v2473 = vsel %vm1449, 1, 0
      %v2474 = vsel %vm1450, 1, 0
      %v2475 = vsel %vm1451, 1, 0
      %v2476 = vsel %vm1452, 1, 0
      %v2477 = vsel %vm1453, 1, 0
      %v2478 = vsel %vm1454, 1, 0
      %v2479 = vsel %vm1455, 1, 0
      %v2480 = vsel %vm1456, 1, 0
      %v2481 = vsel %vm1457, 1, 0
      %v2482 = vsel %vm1458, 1, 0
      %v2483 = vsel %vm1459, 1, 0
      %v2484 = vsel %vm1460, 1, 0
      %v2485 = vsel %vm1461, 1, 0
      %v2486 = vsel %vm1462, 1, 0
      %v2487 = vsel %vm1463, 1, 0
      %v2488 = vsel %vm1464, 1, 0
      %v2489 = vsel %vm1465, 1, 0
      %v2490 = vsel %vm1466, 1, 0
      %v2491 = vsel %vm1467, 1, 0
      %v2492 = vsel %vm1468, 1, 0
      %v2493 = vsel %vm1469, 1, 0
      %v2494 = vsel %vm1470, 1, 0
      %v2495 = vsel %vm1471, 1, 0
      %v2496 = vsel %vm1472, 1, 0
      %v2497 = vsel %vm1473, 1, 0
      %v2498 = vsel %vm1474, 1, 0
      %v2499 = vsel %vm1475, 1, 0
      %v2500 = vsel %vm1476, 1, 0
      %v2501 = vsel %vm1477, 1, 0
      %v2502 = vsel %vm1478, 1, 0
      %v2503 = vsel %vm1479, 1, 0
      %v2504 = vsel %vm1480, 1, 0
      %v2505 = vsel %vm1481, 1, 0
      %v2506 = vsel %vm1482, 1, 0
      %v2507 = vsel %vm1483, 1, 0
      %v2508 = vsel %vm1484, 1, 0
      %v2509 = vsel %vm1485, 1, 0
      %v2510 = vsel %vm1486, 1, 0
      %v2511 = vsel %vm1487, 1, 0
      %v2512 = vsel %vm1488, 1, 0
      %v2513 = vsel %vm1489, 1, 0
      %v2514 = vsel %vm1490, 1, 0
      %v2515 = vsel %vm1491, 1, 0
      %v2516 = vsel %vm1492, 1, 0
      %v2517 = vsel %vm1493, 1, 0
      %v2518 = vsel %vm1494, 1, 0
      %v2519 = vsel %vm1495, 1, 0
      %v2520 = vsel %vm1496, 1, 0
      %v2521 = vsel %vm1497, 1, 0
      %v2522 = vsel %vm1498, 1, 0
      %v2523 = vsel %vm1499, 1, 0
      %v2524 = vsel %vm1500, 1, 0
      %v2525 = vsel %vm1501, 1, 0
      %v2526 = vsel %vm1502, 1, 0
      %v2527 = vsel %vm1503, 1, 0
      %v2528 = vsel %vm1504, 1, 0
      %v2529 = vsel %vm1505, 1, 0
      %v2530 = vsel %vm1506, 1, 0
      %v2531 = vsel %vm1507, 1, 0
      %v2532 = vsel %vm1508, 1, 0
      %v2533 = vsel %vm1509, 1, 0
      %v2534 = vsel %vm1510, 1, 0
      %v2535 = vsel %vm1511, 1, 0
      %v2536 = vsel %vm1512, 1, 0
      %v2537 = vsel %vm1513, 1, 0
      %v2538 = vsel %vm1514, 1, 0
      %v2539 = vsel %vm1515, 1, 0
      %v2540 = vsel %vm1516, 1, 0
      %v2541 = vsel %vm1517, 1, 0
      %v2542 = vsel %vm1518, 1, 0
      %v2543 = vsel %vm1519, 1, 0
      %v2544 = vsel %vm1520, 1, 0
      %v2545 = vsel %vm1521, 1, 0
      %v2546 = vsel %vm1522, 1, 0
      %v2547 = vsel %vm1523, 1, 0
      %v2548 = vsel %vm1524, 1, 0
      %v2549 = vsel %vm1525, 1, 0
      %v2550 = vsel %vm1526, 1, 0
      %v2551 = vsel %vm1527, 1, 0
      %v2552 = vsel %vm1528, 1, 0
      %v2553 = vsel %vm1529, 1, 0
      %v2554 = vsel %vm1530, 1, 0
      %v2555 = vsel %vm1531, 1, 0
      %v2556 = vsel %vm1532, 1, 0
      %v2557 = vsel %vm1533, 1, 0
      %v2558 = vsel %vm1534, 1, 0
      %v2559 = vsel %vm1535, 1, 0
      %v2560 = vsel %vm1536, 1, 0
      %v2561 = vsel %vm1537, 1, 0
      %v2562 = vsel %vm1538, 1, 0
      %v2563 = vsel %vm1539, 1, 0
      %v2564 = vsel %vm1540, 1, 0
      %v2565 = vsel %vm1541, 1, 0
      %v2566 = vsel %vm1542, 1, 0
      %v2567 = vsel %vm1543, 1, 0
      %v2568 = vsel %vm1544, 1, 0
      %v2569 = vsel %vm1545, 1, 0
      %v2570 = vsel %vm1546, 1, 0
      %v2571 = vsel %vm1547, 1, 0
      %v2572 = vsel %vm1548, 1, 0
      %v2573 = vsel %vm1549, 1, 0
      %v2574 = vsel %vm1550, 1, 0
      %v2575 = vsel %vm1551, 1, 0
      %v2576 = vsel %vm1552, 1, 0
      %v2577 = vsel %vm1553, 1, 0
      %v2578 = vsel %vm1554, 1, 0
      %v2579 = vsel %vm1555, 1, 0
      %v2580 = vsel %vm1556, 1, 0
      %v2581 = vsel %vm1557, 1, 0
      %v2582 = vsel %vm1558, 1, 0
      %v2583 = vsel %vm1559, 1, 0
      %v2584 = vsel %vm1560, 1, 0
      %v2585 = vsel %vm1561, 1, 0
      %v2586 = vsel %vm1562, 1, 0
      %v2587 = vsel %vm1563, 1, 0
      %vm2588 = vcmp.eq.s32.totalorder %v2332, 1
      %vm2589 = vcmp.eq.s32.totalorder %v2333, 1
      %vm2590 = vcmp.eq.s32.totalorder %v2334, 1
      %vm2591 = vcmp.eq.s32.totalorder %v2335, 1
      %vm2592 = vcmp.eq.s32.totalorder %v2336, 1
      %vm2593 = vcmp.eq.s32.totalorder %v2337, 1
      %vm2594 = vcmp.eq.s32.totalorder %v2338, 1
      %vm2595 = vcmp.eq.s32.totalorder %v2339, 1
      %vm2596 = vcmp.eq.s32.totalorder %v2340, 1
      %vm2597 = vcmp.eq.s32.totalorder %v2341, 1
      %vm2598 = vcmp.eq.s32.totalorder %v2342, 1
      %vm2599 = vcmp.eq.s32.totalorder %v2343, 1
      %vm2600 = vcmp.eq.s32.totalorder %v2344, 1
      %vm2601 = vcmp.eq.s32.totalorder %v2345, 1
      %vm2602 = vcmp.eq.s32.totalorder %v2346, 1
      %vm2603 = vcmp.eq.s32.totalorder %v2347, 1
      %vm2604 = vcmp.eq.s32.totalorder %v2348, 1
      %vm2605 = vcmp.eq.s32.totalorder %v2349, 1
      %vm2606 = vcmp.eq.s32.totalorder %v2350, 1
      %vm2607 = vcmp.eq.s32.totalorder %v2351, 1
      %vm2608 = vcmp.eq.s32.totalorder %v2352, 1
      %vm2609 = vcmp.eq.s32.totalorder %v2353, 1
      %vm2610 = vcmp.eq.s32.totalorder %v2354, 1
      %vm2611 = vcmp.eq.s32.totalorder %v2355, 1
      %vm2612 = vcmp.eq.s32.totalorder %v2356, 1
      %vm2613 = vcmp.eq.s32.totalorder %v2357, 1
      %vm2614 = vcmp.eq.s32.totalorder %v2358, 1
      %vm2615 = vcmp.eq.s32.totalorder %v2359, 1
      %vm2616 = vcmp.eq.s32.totalorder %v2360, 1
      %vm2617 = vcmp.eq.s32.totalorder %v2361, 1
      %vm2618 = vcmp.eq.s32.totalorder %v2362, 1
      %vm2619 = vcmp.eq.s32.totalorder %v2363, 1
      %vm2620 = vcmp.eq.s32.totalorder %v2364, 1
      %vm2621 = vcmp.eq.s32.totalorder %v2365, 1
      %vm2622 = vcmp.eq.s32.totalorder %v2366, 1
      %vm2623 = vcmp.eq.s32.totalorder %v2367, 1
      %vm2624 = vcmp.eq.s32.totalorder %v2368, 1
      %vm2625 = vcmp.eq.s32.totalorder %v2369, 1
      %vm2626 = vcmp.eq.s32.totalorder %v2370, 1
      %vm2627 = vcmp.eq.s32.totalorder %v2371, 1
      %vm2628 = vcmp.eq.s32.totalorder %v2372, 1
      %vm2629 = vcmp.eq.s32.totalorder %v2373, 1
      %vm2630 = vcmp.eq.s32.totalorder %v2374, 1
      %vm2631 = vcmp.eq.s32.totalorder %v2375, 1
      %vm2632 = vcmp.eq.s32.totalorder %v2376, 1
      %vm2633 = vcmp.eq.s32.totalorder %v2377, 1
      %vm2634 = vcmp.eq.s32.totalorder %v2378, 1
      %vm2635 = vcmp.eq.s32.totalorder %v2379, 1
      %vm2636 = vcmp.eq.s32.totalorder %v2380, 1
      %vm2637 = vcmp.eq.s32.totalorder %v2381, 1
      %vm2638 = vcmp.eq.s32.totalorder %v2382, 1
      %vm2639 = vcmp.eq.s32.totalorder %v2383, 1
      %vm2640 = vcmp.eq.s32.totalorder %v2384, 1
      %vm2641 = vcmp.eq.s32.totalorder %v2385, 1
      %vm2642 = vcmp.eq.s32.totalorder %v2386, 1
      %vm2643 = vcmp.eq.s32.totalorder %v2387, 1
      %vm2644 = vcmp.eq.s32.totalorder %v2388, 1
      %vm2645 = vcmp.eq.s32.totalorder %v2389, 1
      %vm2646 = vcmp.eq.s32.totalorder %v2390, 1
      %vm2647 = vcmp.eq.s32.totalorder %v2391, 1
      %vm2648 = vcmp.eq.s32.totalorder %v2392, 1
      %vm2649 = vcmp.eq.s32.totalorder %v2393, 1
      %vm2650 = vcmp.eq.s32.totalorder %v2394, 1
      %vm2651 = vcmp.eq.s32.totalorder %v2395, 1
      %vm2652 = vcmp.eq.s32.totalorder %v2396, 1
      %vm2653 = vcmp.eq.s32.totalorder %v2397, 1
      %vm2654 = vcmp.eq.s32.totalorder %v2398, 1
      %vm2655 = vcmp.eq.s32.totalorder %v2399, 1
      %vm2656 = vcmp.eq.s32.totalorder %v2400, 1
      %vm2657 = vcmp.eq.s32.totalorder %v2401, 1
      %vm2658 = vcmp.eq.s32.totalorder %v2402, 1
      %vm2659 = vcmp.eq.s32.totalorder %v2403, 1
      %vm2660 = vcmp.eq.s32.totalorder %v2404, 1
      %vm2661 = vcmp.eq.s32.totalorder %v2405, 1
      %vm2662 = vcmp.eq.s32.totalorder %v2406, 1
      %vm2663 = vcmp.eq.s32.totalorder %v2407, 1
      %vm2664 = vcmp.eq.s32.totalorder %v2408, 1
      %vm2665 = vcmp.eq.s32.totalorder %v2409, 1
      %vm2666 = vcmp.eq.s32.totalorder %v2410, 1
      %vm2667 = vcmp.eq.s32.totalorder %v2411, 1
      %vm2668 = vcmp.eq.s32.totalorder %v2412, 1
      %vm2669 = vcmp.eq.s32.totalorder %v2413, 1
      %vm2670 = vcmp.eq.s32.totalorder %v2414, 1
      %vm2671 = vcmp.eq.s32.totalorder %v2415, 1
      %vm2672 = vcmp.eq.s32.totalorder %v2416, 1
      %vm2673 = vcmp.eq.s32.totalorder %v2417, 1
      %vm2674 = vcmp.eq.s32.totalorder %v2418, 1
      %vm2675 = vcmp.eq.s32.totalorder %v2419, 1
      %vm2676 = vcmp.eq.s32.totalorder %v2420, 1
      %vm2677 = vcmp.eq.s32.totalorder %v2421, 1
      %vm2678 = vcmp.eq.s32.totalorder %v2422, 1
      %vm2679 = vcmp.eq.s32.totalorder %v2423, 1
      %vm2680 = vcmp.eq.s32.totalorder %v2424, 1
      %vm2681 = vcmp.eq.s32.totalorder %v2425, 1
      %vm2682 = vcmp.eq.s32.totalorder %v2426, 1
      %vm2683 = vcmp.eq.s32.totalorder %v2427, 1
      %vm2684 = vcmp.eq.s32.totalorder %v2428, 1
      %vm2685 = vcmp.eq.s32.totalorder %v2429, 1
      %vm2686 = vcmp.eq.s32.totalorder %v2430, 1
      %vm2687 = vcmp.eq.s32.totalorder %v2431, 1
      %vm2688 = vcmp.eq.s32.totalorder %v2432, 1
      %vm2689 = vcmp.eq.s32.totalorder %v2433, 1
      %vm2690 = vcmp.eq.s32.totalorder %v2434, 1
      %vm2691 = vcmp.eq.s32.totalorder %v2435, 1
      %vm2692 = vcmp.eq.s32.totalorder %v2436, 1
      %vm2693 = vcmp.eq.s32.totalorder %v2437, 1
      %vm2694 = vcmp.eq.s32.totalorder %v2438, 1
      %vm2695 = vcmp.eq.s32.totalorder %v2439, 1
      %vm2696 = vcmp.eq.s32.totalorder %v2440, 1
      %vm2697 = vcmp.eq.s32.totalorder %v2441, 1
      %vm2698 = vcmp.eq.s32.totalorder %v2442, 1
      %vm2699 = vcmp.eq.s32.totalorder %v2443, 1
      %vm2700 = vcmp.eq.s32.totalorder %v2444, 1
      %vm2701 = vcmp.eq.s32.totalorder %v2445, 1
      %vm2702 = vcmp.eq.s32.totalorder %v2446, 1
      %vm2703 = vcmp.eq.s32.totalorder %v2447, 1
      %vm2704 = vcmp.eq.s32.totalorder %v2448, 1
      %vm2705 = vcmp.eq.s32.totalorder %v2449, 1
      %vm2706 = vcmp.eq.s32.totalorder %v2450, 1
      %vm2707 = vcmp.eq.s32.totalorder %v2451, 1
      %vm2708 = vcmp.eq.s32.totalorder %v2452, 1
      %vm2709 = vcmp.eq.s32.totalorder %v2453, 1
      %vm2710 = vcmp.eq.s32.totalorder %v2454, 1
      %vm2711 = vcmp.eq.s32.totalorder %v2455, 1
      %vm2712 = vcmp.eq.s32.totalorder %v2456, 1
      %vm2713 = vcmp.eq.s32.totalorder %v2457, 1
      %vm2714 = vcmp.eq.s32.totalorder %v2458, 1
      %vm2715 = vcmp.eq.s32.totalorder %v2459, 1
      %vm2716 = vcmp.eq.s32.totalorder %v2460, 1
      %vm2717 = vcmp.eq.s32.totalorder %v2461, 1
      %vm2718 = vcmp.eq.s32.totalorder %v2462, 1
      %vm2719 = vcmp.eq.s32.totalorder %v2463, 1
      %vm2720 = vcmp.eq.s32.totalorder %v2464, 1
      %vm2721 = vcmp.eq.s32.totalorder %v2465, 1
      %vm2722 = vcmp.eq.s32.totalorder %v2466, 1
      %vm2723 = vcmp.eq.s32.totalorder %v2467, 1
      %vm2724 = vcmp.eq.s32.totalorder %v2468, 1
      %vm2725 = vcmp.eq.s32.totalorder %v2469, 1
      %vm2726 = vcmp.eq.s32.totalorder %v2470, 1
      %vm2727 = vcmp.eq.s32.totalorder %v2471, 1
      %vm2728 = vcmp.eq.s32.totalorder %v2472, 1
      %vm2729 = vcmp.eq.s32.totalorder %v2473, 1
      %vm2730 = vcmp.eq.s32.totalorder %v2474, 1
      %vm2731 = vcmp.eq.s32.totalorder %v2475, 1
      %vm2732 = vcmp.eq.s32.totalorder %v2476, 1
      %vm2733 = vcmp.eq.s32.totalorder %v2477, 1
      %vm2734 = vcmp.eq.s32.totalorder %v2478, 1
      %vm2735 = vcmp.eq.s32.totalorder %v2479, 1
      %vm2736 = vcmp.eq.s32.totalorder %v2480, 1
      %vm2737 = vcmp.eq.s32.totalorder %v2481, 1
      %vm2738 = vcmp.eq.s32.totalorder %v2482, 1
      %vm2739 = vcmp.eq.s32.totalorder %v2483, 1
      %vm2740 = vcmp.eq.s32.totalorder %v2484, 1
      %vm2741 = vcmp.eq.s32.totalorder %v2485, 1
      %vm2742 = vcmp.eq.s32.totalorder %v2486, 1
      %vm2743 = vcmp.eq.s32.totalorder %v2487, 1
      %vm2744 = vcmp.eq.s32.totalorder %v2488, 1
      %vm2745 = vcmp.eq.s32.totalorder %v2489, 1
      %vm2746 = vcmp.eq.s32.totalorder %v2490, 1
      %vm2747 = vcmp.eq.s32.totalorder %v2491, 1
      %vm2748 = vcmp.eq.s32.totalorder %v2492, 1
      %vm2749 = vcmp.eq.s32.totalorder %v2493, 1
      %vm2750 = vcmp.eq.s32.totalorder %v2494, 1
      %vm2751 = vcmp.eq.s32.totalorder %v2495, 1
      %vm2752 = vcmp.eq.s32.totalorder %v2496, 1
      %vm2753 = vcmp.eq.s32.totalorder %v2497, 1
      %vm2754 = vcmp.eq.s32.totalorder %v2498, 1
      %vm2755 = vcmp.eq.s32.totalorder %v2499, 1
      %vm2756 = vcmp.eq.s32.totalorder %v2500, 1
      %vm2757 = vcmp.eq.s32.totalorder %v2501, 1
      %vm2758 = vcmp.eq.s32.totalorder %v2502, 1
      %vm2759 = vcmp.eq.s32.totalorder %v2503, 1
      %vm2760 = vcmp.eq.s32.totalorder %v2504, 1
      %vm2761 = vcmp.eq.s32.totalorder %v2505, 1
      %vm2762 = vcmp.eq.s32.totalorder %v2506, 1
      %vm2763 = vcmp.eq.s32.totalorder %v2507, 1
      %vm2764 = vcmp.eq.s32.totalorder %v2508, 1
      %vm2765 = vcmp.eq.s32.totalorder %v2509, 1
      %vm2766 = vcmp.eq.s32.totalorder %v2510, 1
      %vm2767 = vcmp.eq.s32.totalorder %v2511, 1
      %vm2768 = vcmp.eq.s32.totalorder %v2512, 1
      %vm2769 = vcmp.eq.s32.totalorder %v2513, 1
      %vm2770 = vcmp.eq.s32.totalorder %v2514, 1
      %vm2771 = vcmp.eq.s32.totalorder %v2515, 1
      %vm2772 = vcmp.eq.s32.totalorder %v2516, 1
      %vm2773 = vcmp.eq.s32.totalorder %v2517, 1
      %vm2774 = vcmp.eq.s32.totalorder %v2518, 1
      %vm2775 = vcmp.eq.s32.totalorder %v2519, 1
      %vm2776 = vcmp.eq.s32.totalorder %v2520, 1
      %vm2777 = vcmp.eq.s32.totalorder %v2521, 1
      %vm2778 = vcmp.eq.s32.totalorder %v2522, 1
      %vm2779 = vcmp.eq.s32.totalorder %v2523, 1
      %vm2780 = vcmp.eq.s32.totalorder %v2524, 1
      %vm2781 = vcmp.eq.s32.totalorder %v2525, 1
      %vm2782 = vcmp.eq.s32.totalorder %v2526, 1
      %vm2783 = vcmp.eq.s32.totalorder %v2527, 1
      %vm2784 = vcmp.eq.s32.totalorder %v2528, 1
      %vm2785 = vcmp.eq.s32.totalorder %v2529, 1
      %vm2786 = vcmp.eq.s32.totalorder %v2530, 1
      %vm2787 = vcmp.eq.s32.totalorder %v2531, 1
      %vm2788 = vcmp.eq.s32.totalorder %v2532, 1
      %vm2789 = vcmp.eq.s32.totalorder %v2533, 1
      %vm2790 = vcmp.eq.s32.totalorder %v2534, 1
      %vm2791 = vcmp.eq.s32.totalorder %v2535, 1
      %vm2792 = vcmp.eq.s32.totalorder %v2536, 1
      %vm2793 = vcmp.eq.s32.totalorder %v2537, 1
      %vm2794 = vcmp.eq.s32.totalorder %v2538, 1
      %vm2795 = vcmp.eq.s32.totalorder %v2539, 1
      %vm2796 = vcmp.eq.s32.totalorder %v2540, 1
      %vm2797 = vcmp.eq.s32.totalorder %v2541, 1
      %vm2798 = vcmp.eq.s32.totalorder %v2542, 1
      %vm2799 = vcmp.eq.s32.totalorder %v2543, 1
      %vm2800 = vcmp.eq.s32.totalorder %v2544, 1
      %vm2801 = vcmp.eq.s32.totalorder %v2545, 1
      %vm2802 = vcmp.eq.s32.totalorder %v2546, 1
      %vm2803 = vcmp.eq.s32.totalorder %v2547, 1
      %vm2804 = vcmp.eq.s32.totalorder %v2548, 1
      %vm2805 = vcmp.eq.s32.totalorder %v2549, 1
      %vm2806 = vcmp.eq.s32.totalorder %v2550, 1
      %vm2807 = vcmp.eq.s32.totalorder %v2551, 1
      %vm2808 = vcmp.eq.s32.totalorder %v2552, 1
      %vm2809 = vcmp.eq.s32.totalorder %v2553, 1
      %vm2810 = vcmp.eq.s32.totalorder %v2554, 1
      %vm2811 = vcmp.eq.s32.totalorder %v2555, 1
      %vm2812 = vcmp.eq.s32.totalorder %v2556, 1
      %vm2813 = vcmp.eq.s32.totalorder %v2557, 1
      %vm2814 = vcmp.eq.s32.totalorder %v2558, 1
      %vm2815 = vcmp.eq.s32.totalorder %v2559, 1
      %vm2816 = vcmp.eq.s32.totalorder %v2560, 1
      %vm2817 = vcmp.eq.s32.totalorder %v2561, 1
      %vm2818 = vcmp.eq.s32.totalorder %v2562, 1
      %vm2819 = vcmp.eq.s32.totalorder %v2563, 1
      %vm2820 = vcmp.eq.s32.totalorder %v2564, 1
      %vm2821 = vcmp.eq.s32.totalorder %v2565, 1
      %vm2822 = vcmp.eq.s32.totalorder %v2566, 1
      %vm2823 = vcmp.eq.s32.totalorder %v2567, 1
      %vm2824 = vcmp.eq.s32.totalorder %v2568, 1
      %vm2825 = vcmp.eq.s32.totalorder %v2569, 1
      %vm2826 = vcmp.eq.s32.totalorder %v2570, 1
      %vm2827 = vcmp.eq.s32.totalorder %v2571, 1
      %vm2828 = vcmp.eq.s32.totalorder %v2572, 1
      %vm2829 = vcmp.eq.s32.totalorder %v2573, 1
      %vm2830 = vcmp.eq.s32.totalorder %v2574, 1
      %vm2831 = vcmp.eq.s32.totalorder %v2575, 1
      %vm2832 = vcmp.eq.s32.totalorder %v2576, 1
      %vm2833 = vcmp.eq.s32.totalorder %v2577, 1
      %vm2834 = vcmp.eq.s32.totalorder %v2578, 1
      %vm2835 = vcmp.eq.s32.totalorder %v2579, 1
      %vm2836 = vcmp.eq.s32.totalorder %v2580, 1
      %vm2837 = vcmp.eq.s32.totalorder %v2581, 1
      %vm2838 = vcmp.eq.s32.totalorder %v2582, 1
      %vm2839 = vcmp.eq.s32.totalorder %v2583, 1
      %vm2840 = vcmp.eq.s32.totalorder %v2584, 1
      %vm2841 = vcmp.eq.s32.totalorder %v2585, 1
      %vm2842 = vcmp.eq.s32.totalorder %v2586, 1
      %vm2843 = vcmp.eq.s32.totalorder %v2587, 1
      %v2844 = vsel %vm2588, %v282, 0.0
      %v2845 = vsel %vm2589, %v283, 0.0
      %v2846 = vsel %vm2590, %v284, 0.0
      %v2847 = vsel %vm2591, %v285, 0.0
      %v2848 = vsel %vm2592, %v286, 0.0
      %v2849 = vsel %vm2593, %v287, 0.0
      %v2850 = vsel %vm2594, %v288, 0.0
      %v2851 = vsel %vm2595, %v289, 0.0
      %v2852 = vsel %vm2596, %v290, 0.0
      %v2853 = vsel %vm2597, %v291, 0.0
      %v2854 = vsel %vm2598, %v292, 0.0
      %v2855 = vsel %vm2599, %v293, 0.0
      %v2856 = vsel %vm2600, %v294, 0.0
      %v2857 = vsel %vm2601, %v295, 0.0
      %v2858 = vsel %vm2602, %v296, 0.0
      %v2859 = vsel %vm2603, %v297, 0.0
      %v2860 = vsel %vm2604, %v298, 0.0
      %v2861 = vsel %vm2605, %v299, 0.0
      %v2862 = vsel %vm2606, %v300, 0.0
      %v2863 = vsel %vm2607, %v301, 0.0
      %v2864 = vsel %vm2608, %v302, 0.0
      %v2865 = vsel %vm2609, %v303, 0.0
      %v2866 = vsel %vm2610, %v304, 0.0
      %v2867 = vsel %vm2611, %v305, 0.0
      %v2868 = vsel %vm2612, %v306, 0.0
      %v2869 = vsel %vm2613, %v307, 0.0
      %v2870 = vsel %vm2614, %v308, 0.0
      %v2871 = vsel %vm2615, %v309, 0.0
      %v2872 = vsel %vm2616, %v310, 0.0
      %v2873 = vsel %vm2617, %v311, 0.0
      %v2874 = vsel %vm2618, %v312, 0.0
      %v2875 = vsel %vm2619, %v313, 0.0
      %v2876 = vsel %vm2620, %v314, 0.0
      %v2877 = vsel %vm2621, %v315, 0.0
      %v2878 = vsel %vm2622, %v316, 0.0
      %v2879 = vsel %vm2623, %v317, 0.0
      %v2880 = vsel %vm2624, %v318, 0.0
      %v2881 = vsel %vm2625, %v319, 0.0
      %v2882 = vsel %vm2626, %v320, 0.0
      %v2883 = vsel %vm2627, %v321, 0.0
      %v2884 = vsel %vm2628, %v322, 0.0
      %v2885 = vsel %vm2629, %v323, 0.0
      %v2886 = vsel %vm2630, %v324, 0.0
      %v2887 = vsel %vm2631, %v325, 0.0
      %v2888 = vsel %vm2632, %v326, 0.0
      %v2889 = vsel %vm2633, %v327, 0.0
      %v2890 = vsel %vm2634, %v328, 0.0
      %v2891 = vsel %vm2635, %v329, 0.0
      %v2892 = vsel %vm2636, %v330, 0.0
      %v2893 = vsel %vm2637, %v331, 0.0
      %v2894 = vsel %vm2638, %v332, 0.0
      %v2895 = vsel %vm2639, %v333, 0.0
      %v2896 = vsel %vm2640, %v334, 0.0
      %v2897 = vsel %vm2641, %v335, 0.0
      %v2898 = vsel %vm2642, %v336, 0.0
      %v2899 = vsel %vm2643, %v337, 0.0
      %v2900 = vsel %vm2644, %v338, 0.0
      %v2901 = vsel %vm2645, %v339, 0.0
      %v2902 = vsel %vm2646, %v340, 0.0
      %v2903 = vsel %vm2647, %v341, 0.0
      %v2904 = vsel %vm2648, %v342, 0.0
      %v2905 = vsel %vm2649, %v343, 0.0
      %v2906 = vsel %vm2650, %v344, 0.0
      %v2907 = vsel %vm2651, %v345, 0.0
      %v2908 = vsel %vm2652, %v346, 0.0
      %v2909 = vsel %vm2653, %v347, 0.0
      %v2910 = vsel %vm2654, %v348, 0.0
      %v2911 = vsel %vm2655, %v349, 0.0
      %v2912 = vsel %vm2656, %v350, 0.0
      %v2913 = vsel %vm2657, %v351, 0.0
      %v2914 = vsel %vm2658, %v352, 0.0
      %v2915 = vsel %vm2659, %v353, 0.0
      %v2916 = vsel %vm2660, %v354, 0.0
      %v2917 = vsel %vm2661, %v355, 0.0
      %v2918 = vsel %vm2662, %v356, 0.0
      %v2919 = vsel %vm2663, %v357, 0.0
      %v2920 = vsel %vm2664, %v358, 0.0
      %v2921 = vsel %vm2665, %v359, 0.0
      %v2922 = vsel %vm2666, %v360, 0.0
      %v2923 = vsel %vm2667, %v361, 0.0
      %v2924 = vsel %vm2668, %v362, 0.0
      %v2925 = vsel %vm2669, %v363, 0.0
      %v2926 = vsel %vm2670, %v364, 0.0
      %v2927 = vsel %vm2671, %v365, 0.0
      %v2928 = vsel %vm2672, %v366, 0.0
      %v2929 = vsel %vm2673, %v367, 0.0
      %v2930 = vsel %vm2674, %v368, 0.0
      %v2931 = vsel %vm2675, %v369, 0.0
      %v2932 = vsel %vm2676, %v370, 0.0
      %v2933 = vsel %vm2677, %v371, 0.0
      %v2934 = vsel %vm2678, %v372, 0.0
      %v2935 = vsel %vm2679, %v373, 0.0
      %v2936 = vsel %vm2680, %v374, 0.0
      %v2937 = vsel %vm2681, %v375, 0.0
      %v2938 = vsel %vm2682, %v376, 0.0
      %v2939 = vsel %vm2683, %v377, 0.0
      %v2940 = vsel %vm2684, %v378, 0.0
      %v2941 = vsel %vm2685, %v379, 0.0
      %v2942 = vsel %vm2686, %v380, 0.0
      %v2943 = vsel %vm2687, %v381, 0.0
      %v2944 = vsel %vm2688, %v382, 0.0
      %v2945 = vsel %vm2689, %v383, 0.0
      %v2946 = vsel %vm2690, %v384, 0.0
      %v2947 = vsel %vm2691, %v385, 0.0
      %v2948 = vsel %vm2692, %v386, 0.0
      %v2949 = vsel %vm2693, %v387, 0.0
      %v2950 = vsel %vm2694, %v388, 0.0
      %v2951 = vsel %vm2695, %v389, 0.0
      %v2952 = vsel %vm2696, %v390, 0.0
      %v2953 = vsel %vm2697, %v391, 0.0
      %v2954 = vsel %vm2698, %v392, 0.0
      %v2955 = vsel %vm2699, %v393, 0.0
      %v2956 = vsel %vm2700, %v394, 0.0
      %v2957 = vsel %vm2701, %v395, 0.0
      %v2958 = vsel %vm2702, %v396, 0.0
      %v2959 = vsel %vm2703, %v397, 0.0
      %v2960 = vsel %vm2704, %v398, 0.0
      %v2961 = vsel %vm2705, %v399, 0.0
      %v2962 = vsel %vm2706, %v400, 0.0
      %v2963 = vsel %vm2707, %v401, 0.0
      %v2964 = vsel %vm2708, %v402, 0.0
      %v2965 = vsel %vm2709, %v403, 0.0
      %v2966 = vsel %vm2710, %v404, 0.0
      %v2967 = vsel %vm2711, %v405, 0.0
      %v2968 = vsel %vm2712, %v406, 0.0
      %v2969 = vsel %vm2713, %v407, 0.0
      %v2970 = vsel %vm2714, %v408, 0.0
      %v2971 = vsel %vm2715, %v409, 0.0
      %v2972 = vsel %vm2716, %v410, 0.0
      %v2973 = vsel %vm2717, %v411, 0.0
      %v2974 = vsel %vm2718, %v412, 0.0
      %v2975 = vsel %vm2719, %v413, 0.0
      %v2976 = vsel %vm2720, %v414, 0.0
      %v2977 = vsel %vm2721, %v415, 0.0
      %v2978 = vsel %vm2722, %v416, 0.0
      %v2979 = vsel %vm2723, %v417, 0.0
      %v2980 = vsel %vm2724, %v418, 0.0
      %v2981 = vsel %vm2725, %v419, 0.0
      %v2982 = vsel %vm2726, %v420, 0.0
      %v2983 = vsel %vm2727, %v421, 0.0
      %v2984 = vsel %vm2728, %v422, 0.0
      %v2985 = vsel %vm2729, %v423, 0.0
      %v2986 = vsel %vm2730, %v424, 0.0
      %v2987 = vsel %vm2731, %v425, 0.0
      %v2988 = vsel %vm2732, %v426, 0.0
      %v2989 = vsel %vm2733, %v427, 0.0
      %v2990 = vsel %vm2734, %v428, 0.0
      %v2991 = vsel %vm2735, %v429, 0.0
      %v2992 = vsel %vm2736, %v430, 0.0
      %v2993 = vsel %vm2737, %v431, 0.0
      %v2994 = vsel %vm2738, %v432, 0.0
      %v2995 = vsel %vm2739, %v433, 0.0
      %v2996 = vsel %vm2740, %v434, 0.0
      %v2997 = vsel %vm2741, %v435, 0.0
      %v2998 = vsel %vm2742, %v436, 0.0
      %v2999 = vsel %vm2743, %v437, 0.0
      %v3000 = vsel %vm2744, %v438, 0.0
      %v3001 = vsel %vm2745, %v439, 0.0
      %v3002 = vsel %vm2746, %v440, 0.0
      %v3003 = vsel %vm2747, %v441, 0.0
      %v3004 = vsel %vm2748, %v442, 0.0
      %v3005 = vsel %vm2749, %v443, 0.0
      %v3006 = vsel %vm2750, %v444, 0.0
      %v3007 = vsel %vm2751, %v445, 0.0
      %v3008 = vsel %vm2752, %v446, 0.0
      %v3009 = vsel %vm2753, %v447, 0.0
      %v3010 = vsel %vm2754, %v448, 0.0
      %v3011 = vsel %vm2755, %v449, 0.0
      %v3012 = vsel %vm2756, %v450, 0.0
      %v3013 = vsel %vm2757, %v451, 0.0
      %v3014 = vsel %vm2758, %v452, 0.0
      %v3015 = vsel %vm2759, %v453, 0.0
      %v3016 = vsel %vm2760, %v454, 0.0
      %v3017 = vsel %vm2761, %v455, 0.0
      %v3018 = vsel %vm2762, %v456, 0.0
      %v3019 = vsel %vm2763, %v457, 0.0
      %v3020 = vsel %vm2764, %v458, 0.0
      %v3021 = vsel %vm2765, %v459, 0.0
      %v3022 = vsel %vm2766, %v460, 0.0
      %v3023 = vsel %vm2767, %v461, 0.0
      %v3024 = vsel %vm2768, %v462, 0.0
      %v3025 = vsel %vm2769, %v463, 0.0
      %v3026 = vsel %vm2770, %v464, 0.0
      %v3027 = vsel %vm2771, %v465, 0.0
      %v3028 = vsel %vm2772, %v466, 0.0
      %v3029 = vsel %vm2773, %v467, 0.0
      %v3030 = vsel %vm2774, %v468, 0.0
      %v3031 = vsel %vm2775, %v469, 0.0
      %v3032 = vsel %vm2776, %v470, 0.0
      %v3033 = vsel %vm2777, %v471, 0.0
      %v3034 = vsel %vm2778, %v472, 0.0
      %v3035 = vsel %vm2779, %v473, 0.0
      %v3036 = vsel %vm2780, %v474, 0.0
      %v3037 = vsel %vm2781, %v475, 0.0
      %v3038 = vsel %vm2782, %v476, 0.0
      %v3039 = vsel %vm2783, %v477, 0.0
      %v3040 = vsel %vm2784, %v478, 0.0
      %v3041 = vsel %vm2785, %v479, 0.0
      %v3042 = vsel %vm2786, %v480, 0.0
      %v3043 = vsel %vm2787, %v481, 0.0
      %v3044 = vsel %vm2788, %v482, 0.0
      %v3045 = vsel %vm2789, %v483, 0.0
      %v3046 = vsel %vm2790, %v484, 0.0
      %v3047 = vsel %vm2791, %v485, 0.0
      %v3048 = vsel %vm2792, %v486, 0.0
      %v3049 = vsel %vm2793, %v487, 0.0
      %v3050 = vsel %vm2794, %v488, 0.0
      %v3051 = vsel %vm2795, %v489, 0.0
      %v3052 = vsel %vm2796, %v490, 0.0
      %v3053 = vsel %vm2797, %v491, 0.0
      %v3054 = vsel %vm2798, %v492, 0.0
      %v3055 = vsel %vm2799, %v493, 0.0
      %v3056 = vsel %vm2800, %v494, 0.0
      %v3057 = vsel %vm2801, %v495, 0.0
      %v3058 = vsel %vm2802, %v496, 0.0
      %v3059 = vsel %vm2803, %v497, 0.0
      %v3060 = vsel %vm2804, %v498, 0.0
      %v3061 = vsel %vm2805, %v499, 0.0
      %v3062 = vsel %vm2806, %v500, 0.0
      %v3063 = vsel %vm2807, %v501, 0.0
      %v3064 = vsel %vm2808, %v502, 0.0
      %v3065 = vsel %vm2809, %v503, 0.0
      %v3066 = vsel %vm2810, %v504, 0.0
      %v3067 = vsel %vm2811, %v505, 0.0
      %v3068 = vsel %vm2812, %v506, 0.0
      %v3069 = vsel %vm2813, %v507, 0.0
      %v3070 = vsel %vm2814, %v508, 0.0
      %v3071 = vsel %vm2815, %v509, 0.0
      %v3072 = vsel %vm2816, %v510, 0.0
      %v3073 = vsel %vm2817, %v511, 0.0
      %v3074 = vsel %vm2818, %v512, 0.0
      %v3075 = vsel %vm2819, %v513, 0.0
      %v3076 = vsel %vm2820, %v514, 0.0
      %v3077 = vsel %vm2821, %v515, 0.0
      %v3078 = vsel %vm2822, %v516, 0.0
      %v3079 = vsel %vm2823, %v517, 0.0
      %v3080 = vsel %vm2824, %v518, 0.0
      %v3081 = vsel %vm2825, %v519, 0.0
      %v3082 = vsel %vm2826, %v520, 0.0
      %v3083 = vsel %vm2827, %v521, 0.0
      %v3084 = vsel %vm2828, %v522, 0.0
      %v3085 = vsel %vm2829, %v523, 0.0
      %v3086 = vsel %vm2830, %v524, 0.0
      %v3087 = vsel %vm2831, %v525, 0.0
      %v3088 = vsel %vm2832, %v526, 0.0
      %v3089 = vsel %vm2833, %v527, 0.0
      %v3090 = vsel %vm2834, %v528, 0.0
      %v3091 = vsel %vm2835, %v529, 0.0
      %v3092 = vsel %vm2836, %v530, 0.0
      %v3093 = vsel %vm2837, %v531, 0.0
      %v3094 = vsel %vm2838, %v532, 0.0
      %v3095 = vsel %vm2839, %v533, 0.0
      %v3096 = vsel %vm2840, %v534, 0.0
      %v3097 = vsel %vm2841, %v535, 0.0
      %v3098 = vsel %vm2842, %v536, 0.0
      %v3099 = vsel %vm2843, %v537, 0.0
      %vm3100 = vcmask 269312
      %v3101 = vsel %vm3100, %v2844, -inf
      %3102 = vmax.xlane.f32.xlu0 %v3101
      %v3103 = vpop.xlane.xlu0 %3102
      %v3104 = vsel %vm3100, %v2845, -inf
      %3105 = vmax.xlane.f32.xlu0 %v3104
      %v3106 = vpop.xlane.xlu0 %3105
      %v3107 = vsel %vm3100, %v2846, -inf
      %3108 = vmax.xlane.f32.xlu0 %v3107
      %v3109 = vpop.xlane.xlu0 %3108
      %v3110 = vsel %vm3100, %v2847, -inf
      %3111 = vmax.xlane.f32.xlu0 %v3110
      %v3112 = vpop.xlane.xlu0 %3111
      %v3113 = vsel %vm3100, %v2848, -inf
      %3114 = vmax.xlane.f32.xlu0 %v3113
      %v3115 = vpop.xlane.xlu0 %3114
      %v3116 = vsel %vm3100, %v2849, -inf
      %3117 = vmax.xlane.f32.xlu0 %v3116
      %v3118 = vpop.xlane.xlu0 %3117
      %v3119 = vsel %vm3100, %v2850, -inf
      %3120 = vmax.xlane.f32.xlu0 %v3119
      %v3121 = vpop.xlane.xlu0 %3120
      %v3122 = vsel %vm3100, %v2851, -inf
      %3123 = vmax.xlane.f32.xlu0 %v3122
      %v3124 = vpop.xlane.xlu0 %3123
      %v3125 = vsel %vm3100, %v2852, -inf
      %3126 = vmax.xlane.f32.xlu0 %v3125
      %v3127 = vpop.xlane.xlu0 %3126
      %v3128 = vsel %vm3100, %v2853, -inf
      %3129 = vmax.xlane.f32.xlu0 %v3128
      %v3130 = vpop.xlane.xlu0 %3129
      %v3131 = vsel %vm3100, %v2854, -inf
      %3132 = vmax.xlane.f32.xlu0 %v3131
      %v3133 = vpop.xlane.xlu0 %3132
      %v3134 = vsel %vm3100, %v2855, -inf
      %3135 = vmax.xlane.f32.xlu0 %v3134
      %v3136 = vpop.xlane.xlu0 %3135
      %v3137 = vsel %vm3100, %v2856, -inf
      %3138 = vmax.xlane.f32.xlu0 %v3137
      %v3139 = vpop.xlane.xlu0 %3138
      %v3140 = vsel %vm3100, %v2857, -inf
      %3141 = vmax.xlane.f32.xlu0 %v3140
      %v3142 = vpop.xlane.xlu0 %3141
      %v3143 = vsel %vm3100, %v2858, -inf
      %3144 = vmax.xlane.f32.xlu0 %v3143
      %v3145 = vpop.xlane.xlu0 %3144
      %v3146 = vsel %vm3100, %v2859, -inf
      %3147 = vmax.xlane.f32.xlu0 %v3146
      %v3148 = vpop.xlane.xlu0 %3147
      %v3149 = vsel %vm3100, %v2860, -inf
      %3150 = vmax.xlane.f32.xlu0 %v3149
      %v3151 = vpop.xlane.xlu0 %3150
      %v3152 = vsel %vm3100, %v2861, -inf
      %3153 = vmax.xlane.f32.xlu0 %v3152
      %v3154 = vpop.xlane.xlu0 %3153
      %v3155 = vsel %vm3100, %v2862, -inf
      %3156 = vmax.xlane.f32.xlu0 %v3155
      %v3157 = vpop.xlane.xlu0 %3156
      %v3158 = vsel %vm3100, %v2863, -inf
      %3159 = vmax.xlane.f32.xlu0 %v3158
      %v3160 = vpop.xlane.xlu0 %3159
      %v3161 = vsel %vm3100, %v2864, -inf
      %3162 = vmax.xlane.f32.xlu0 %v3161
      %v3163 = vpop.xlane.xlu0 %3162
      %v3164 = vsel %vm3100, %v2865, -inf
      %3165 = vmax.xlane.f32.xlu0 %v3164
      %v3166 = vpop.xlane.xlu0 %3165
      %v3167 = vsel %vm3100, %v2866, -inf
      %3168 = vmax.xlane.f32.xlu0 %v3167
      %v3169 = vpop.xlane.xlu0 %3168
      %v3170 = vsel %vm3100, %v2867, -inf
      %3171 = vmax.xlane.f32.xlu0 %v3170
      %v3172 = vpop.xlane.xlu0 %3171
      %v3173 = vsel %vm3100, %v2868, -inf
      %3174 = vmax.xlane.f32.xlu0 %v3173
      %v3175 = vpop.xlane.xlu0 %3174
      %v3176 = vsel %vm3100, %v2869, -inf
      %3177 = vmax.xlane.f32.xlu0 %v3176
      %v3178 = vpop.xlane.xlu0 %3177
      %v3179 = vsel %vm3100, %v2870, -inf
      %3180 = vmax.xlane.f32.xlu0 %v3179
      %v3181 = vpop.xlane.xlu0 %3180
      %v3182 = vsel %vm3100, %v2871, -inf
      %3183 = vmax.xlane.f32.xlu0 %v3182
      %v3184 = vpop.xlane.xlu0 %3183
      %v3185 = vsel %vm3100, %v2872, -inf
      %3186 = vmax.xlane.f32.xlu0 %v3185
      %v3187 = vpop.xlane.xlu0 %3186
      %v3188 = vsel %vm3100, %v2873, -inf
      %3189 = vmax.xlane.f32.xlu0 %v3188
      %v3190 = vpop.xlane.xlu0 %3189
      %v3191 = vsel %vm3100, %v2874, -inf
      %3192 = vmax.xlane.f32.xlu0 %v3191
      %v3193 = vpop.xlane.xlu0 %3192
      %v3194 = vsel %vm3100, %v2875, -inf
      %3195 = vmax.xlane.f32.xlu0 %v3194
      %v3196 = vpop.xlane.xlu0 %3195
      %v3197 = vsel %vm3100, %v2876, -inf
      %3198 = vmax.xlane.f32.xlu0 %v3197
      %v3199 = vpop.xlane.xlu0 %3198
      %v3200 = vsel %vm3100, %v2877, -inf
      %3201 = vmax.xlane.f32.xlu0 %v3200
      %v3202 = vpop.xlane.xlu0 %3201
      %v3203 = vsel %vm3100, %v2878, -inf
      %3204 = vmax.xlane.f32.xlu0 %v3203
      %v3205 = vpop.xlane.xlu0 %3204
      %v3206 = vsel %vm3100, %v2879, -inf
      %3207 = vmax.xlane.f32.xlu0 %v3206
      %v3208 = vpop.xlane.xlu0 %3207
      %v3209 = vsel %vm3100, %v2880, -inf
      %3210 = vmax.xlane.f32.xlu0 %v3209
      %v3211 = vpop.xlane.xlu0 %3210
      %v3212 = vsel %vm3100, %v2881, -inf
      %3213 = vmax.xlane.f32.xlu0 %v3212
      %v3214 = vpop.xlane.xlu0 %3213
      %v3215 = vsel %vm3100, %v2882, -inf
      %3216 = vmax.xlane.f32.xlu0 %v3215
      %v3217 = vpop.xlane.xlu0 %3216
      %v3218 = vsel %vm3100, %v2883, -inf
      %3219 = vmax.xlane.f32.xlu0 %v3218
      %v3220 = vpop.xlane.xlu0 %3219
      %v3221 = vsel %vm3100, %v2884, -inf
      %3222 = vmax.xlane.f32.xlu0 %v3221
      %v3223 = vpop.xlane.xlu0 %3222
      %v3224 = vsel %vm3100, %v2885, -inf
      %3225 = vmax.xlane.f32.xlu0 %v3224
      %v3226 = vpop.xlane.xlu0 %3225
      %v3227 = vsel %vm3100, %v2886, -inf
      %3228 = vmax.xlane.f32.xlu0 %v3227
      %v3229 = vpop.xlane.xlu0 %3228
      %v3230 = vsel %vm3100, %v2887, -inf
      %3231 = vmax.xlane.f32.xlu0 %v3230
      %v3232 = vpop.xlane.xlu0 %3231
      %v3233 = vsel %vm3100, %v2888, -inf
      %3234 = vmax.xlane.f32.xlu0 %v3233
      %v3235 = vpop.xlane.xlu0 %3234
      %v3236 = vsel %vm3100, %v2889, -inf
      %3237 = vmax.xlane.f32.xlu0 %v3236
      %v3238 = vpop.xlane.xlu0 %3237
      %v3239 = vsel %vm3100, %v2890, -inf
      %3240 = vmax.xlane.f32.xlu0 %v3239
      %v3241 = vpop.xlane.xlu0 %3240
      %v3242 = vsel %vm3100, %v2891, -inf
      %3243 = vmax.xlane.f32.xlu0 %v3242
      %v3244 = vpop.xlane.xlu0 %3243
      %v3245 = vsel %vm3100, %v2892, -inf
      %3246 = vmax.xlane.f32.xlu0 %v3245
      %v3247 = vpop.xlane.xlu0 %3246
      %v3248 = vsel %vm3100, %v2893, -inf
      %3249 = vmax.xlane.f32.xlu0 %v3248
      %v3250 = vpop.xlane.xlu0 %3249
      %v3251 = vsel %vm3100, %v2894, -inf
      %3252 = vmax.xlane.f32.xlu0 %v3251
      %v3253 = vpop.xlane.xlu0 %3252
      %v3254 = vsel %vm3100, %v2895, -inf
      %3255 = vmax.xlane.f32.xlu0 %v3254
      %v3256 = vpop.xlane.xlu0 %3255
      %v3257 = vsel %vm3100, %v2896, -inf
      %3258 = vmax.xlane.f32.xlu0 %v3257
      %v3259 = vpop.xlane.xlu0 %3258
      %v3260 = vsel %vm3100, %v2897, -inf
      %3261 = vmax.xlane.f32.xlu0 %v3260
      %v3262 = vpop.xlane.xlu0 %3261
      %v3263 = vsel %vm3100, %v2898, -inf
      %3264 = vmax.xlane.f32.xlu0 %v3263
      %v3265 = vpop.xlane.xlu0 %3264
      %v3266 = vsel %vm3100, %v2899, -inf
      %3267 = vmax.xlane.f32.xlu0 %v3266
      %v3268 = vpop.xlane.xlu0 %3267
      %v3269 = vsel %vm3100, %v2900, -inf
      %3270 = vmax.xlane.f32.xlu0 %v3269
      %v3271 = vpop.xlane.xlu0 %3270
      %v3272 = vsel %vm3100, %v2901, -inf
      %3273 = vmax.xlane.f32.xlu0 %v3272
      %v3274 = vpop.xlane.xlu0 %3273
      %v3275 = vsel %vm3100, %v2902, -inf
      %3276 = vmax.xlane.f32.xlu0 %v3275
      %v3277 = vpop.xlane.xlu0 %3276
      %v3278 = vsel %vm3100, %v2903, -inf
      %3279 = vmax.xlane.f32.xlu0 %v3278
      %v3280 = vpop.xlane.xlu0 %3279
      %v3281 = vsel %vm3100, %v2904, -inf
      %3282 = vmax.xlane.f32.xlu0 %v3281
      %v3283 = vpop.xlane.xlu0 %3282
      %v3284 = vsel %vm3100, %v2905, -inf
      %3285 = vmax.xlane.f32.xlu0 %v3284
      %v3286 = vpop.xlane.xlu0 %3285
      %v3287 = vsel %vm3100, %v2906, -inf
      %3288 = vmax.xlane.f32.xlu0 %v3287
      %v3289 = vpop.xlane.xlu0 %3288
      %v3290 = vsel %vm3100, %v2907, -inf
      %3291 = vmax.xlane.f32.xlu0 %v3290
      %v3292 = vpop.xlane.xlu0 %3291
      %v3293 = vsel %vm3100, %v2908, -inf
      %3294 = vmax.xlane.f32.xlu0 %v3293
      %v3295 = vpop.xlane.xlu0 %3294
      %v3296 = vsel %vm3100, %v2909, -inf
      %3297 = vmax.xlane.f32.xlu0 %v3296
      %v3298 = vpop.xlane.xlu0 %3297
      %v3299 = vsel %vm3100, %v2910, -inf
      %3300 = vmax.xlane.f32.xlu0 %v3299
      %v3301 = vpop.xlane.xlu0 %3300
      %v3302 = vsel %vm3100, %v2911, -inf
      %3303 = vmax.xlane.f32.xlu0 %v3302
      %v3304 = vpop.xlane.xlu0 %3303
      %v3305 = vsel %vm3100, %v2912, -inf
      %3306 = vmax.xlane.f32.xlu0 %v3305
      %v3307 = vpop.xlane.xlu0 %3306
      %v3308 = vsel %vm3100, %v2913, -inf
      %3309 = vmax.xlane.f32.xlu0 %v3308
      %v3310 = vpop.xlane.xlu0 %3309
      %v3311 = vsel %vm3100, %v2914, -inf
      %3312 = vmax.xlane.f32.xlu0 %v3311
      %v3313 = vpop.xlane.xlu0 %3312
      %v3314 = vsel %vm3100, %v2915, -inf
      %3315 = vmax.xlane.f32.xlu0 %v3314
      %v3316 = vpop.xlane.xlu0 %3315
      %v3317 = vsel %vm3100, %v2916, -inf
      %3318 = vmax.xlane.f32.xlu0 %v3317
      %v3319 = vpop.xlane.xlu0 %3318
      %v3320 = vsel %vm3100, %v2917, -inf
      %3321 = vmax.xlane.f32.xlu0 %v3320
      %v3322 = vpop.xlane.xlu0 %3321
      %v3323 = vsel %vm3100, %v2918, -inf
      %3324 = vmax.xlane.f32.xlu0 %v3323
      %v3325 = vpop.xlane.xlu0 %3324
      %v3326 = vsel %vm3100, %v2919, -inf
      %3327 = vmax.xlane.f32.xlu0 %v3326
      %v3328 = vpop.xlane.xlu0 %3327
      %v3329 = vsel %vm3100, %v2920, -inf
      %3330 = vmax.xlane.f32.xlu0 %v3329
      %v3331 = vpop.xlane.xlu0 %3330
      %v3332 = vsel %vm3100, %v2921, -inf
      %3333 = vmax.xlane.f32.xlu0 %v3332
      %v3334 = vpop.xlane.xlu0 %3333
      %v3335 = vsel %vm3100, %v2922, -inf
      %3336 = vmax.xlane.f32.xlu0 %v3335
      %v3337 = vpop.xlane.xlu0 %3336
      %v3338 = vsel %vm3100, %v2923, -inf
      %3339 = vmax.xlane.f32.xlu0 %v3338
      %v3340 = vpop.xlane.xlu0 %3339
      %v3341 = vsel %vm3100, %v2924, -inf
      %3342 = vmax.xlane.f32.xlu0 %v3341
      %v3343 = vpop.xlane.xlu0 %3342
      %v3344 = vsel %vm3100, %v2925, -inf
      %3345 = vmax.xlane.f32.xlu0 %v3344
      %v3346 = vpop.xlane.xlu0 %3345
      %v3347 = vsel %vm3100, %v2926, -inf
      %3348 = vmax.xlane.f32.xlu0 %v3347
      %v3349 = vpop.xlane.xlu0 %3348
      %v3350 = vsel %vm3100, %v2927, -inf
      %3351 = vmax.xlane.f32.xlu0 %v3350
      %v3352 = vpop.xlane.xlu0 %3351
      %v3353 = vsel %vm3100, %v2928, -inf
      %3354 = vmax.xlane.f32.xlu0 %v3353
      %v3355 = vpop.xlane.xlu0 %3354
      %v3356 = vsel %vm3100, %v2929, -inf
      %3357 = vmax.xlane.f32.xlu0 %v3356
      %v3358 = vpop.xlane.xlu0 %3357
      %v3359 = vsel %vm3100, %v2930, -inf
      %3360 = vmax.xlane.f32.xlu0 %v3359
      %v3361 = vpop.xlane.xlu0 %3360
      %v3362 = vsel %vm3100, %v2931, -inf
      %3363 = vmax.xlane.f32.xlu0 %v3362
      %v3364 = vpop.xlane.xlu0 %3363
      %v3365 = vsel %vm3100, %v2932, -inf
      %3366 = vmax.xlane.f32.xlu0 %v3365
      %v3367 = vpop.xlane.xlu0 %3366
      %v3368 = vsel %vm3100, %v2933, -inf
      %3369 = vmax.xlane.f32.xlu0 %v3368
      %v3370 = vpop.xlane.xlu0 %3369
      %v3371 = vsel %vm3100, %v2934, -inf
      %3372 = vmax.xlane.f32.xlu0 %v3371
      %v3373 = vpop.xlane.xlu0 %3372
      %v3374 = vsel %vm3100, %v2935, -inf
      %3375 = vmax.xlane.f32.xlu0 %v3374
      %v3376 = vpop.xlane.xlu0 %3375
      %v3377 = vsel %vm3100, %v2936, -inf
      %3378 = vmax.xlane.f32.xlu0 %v3377
      %v3379 = vpop.xlane.xlu0 %3378
      %v3380 = vsel %vm3100, %v2937, -inf
      %3381 = vmax.xlane.f32.xlu0 %v3380
      %v3382 = vpop.xlane.xlu0 %3381
      %v3383 = vsel %vm3100, %v2938, -inf
      %3384 = vmax.xlane.f32.xlu0 %v3383
      %v3385 = vpop.xlane.xlu0 %3384
      %v3386 = vsel %vm3100, %v2939, -inf
      %3387 = vmax.xlane.f32.xlu0 %v3386
      %v3388 = vpop.xlane.xlu0 %3387
      %v3389 = vsel %vm3100, %v2940, -inf
      %3390 = vmax.xlane.f32.xlu0 %v3389
      %v3391 = vpop.xlane.xlu0 %3390
      %v3392 = vsel %vm3100, %v2941, -inf
      %3393 = vmax.xlane.f32.xlu0 %v3392
      %v3394 = vpop.xlane.xlu0 %3393
      %v3395 = vsel %vm3100, %v2942, -inf
      %3396 = vmax.xlane.f32.xlu0 %v3395
      %v3397 = vpop.xlane.xlu0 %3396
      %v3398 = vsel %vm3100, %v2943, -inf
      %3399 = vmax.xlane.f32.xlu0 %v3398
      %v3400 = vpop.xlane.xlu0 %3399
      %v3401 = vsel %vm3100, %v2944, -inf
      %3402 = vmax.xlane.f32.xlu0 %v3401
      %v3403 = vpop.xlane.xlu0 %3402
      %v3404 = vsel %vm3100, %v2945, -inf
      %3405 = vmax.xlane.f32.xlu0 %v3404
      %v3406 = vpop.xlane.xlu0 %3405
      %v3407 = vsel %vm3100, %v2946, -inf
      %3408 = vmax.xlane.f32.xlu0 %v3407
      %v3409 = vpop.xlane.xlu0 %3408
      %v3410 = vsel %vm3100, %v2947, -inf
      %3411 = vmax.xlane.f32.xlu0 %v3410
      %v3412 = vpop.xlane.xlu0 %3411
      %v3413 = vsel %vm3100, %v2948, -inf
      %3414 = vmax.xlane.f32.xlu0 %v3413
      %v3415 = vpop.xlane.xlu0 %3414
      %v3416 = vsel %vm3100, %v2949, -inf
      %3417 = vmax.xlane.f32.xlu0 %v3416
      %v3418 = vpop.xlane.xlu0 %3417
      %v3419 = vsel %vm3100, %v2950, -inf
      %3420 = vmax.xlane.f32.xlu0 %v3419
      %v3421 = vpop.xlane.xlu0 %3420
      %v3422 = vsel %vm3100, %v2951, -inf
      %3423 = vmax.xlane.f32.xlu0 %v3422
      %v3424 = vpop.xlane.xlu0 %3423
      %v3425 = vsel %vm3100, %v2952, -inf
      %3426 = vmax.xlane.f32.xlu0 %v3425
      %v3427 = vpop.xlane.xlu0 %3426
      %v3428 = vsel %vm3100, %v2953, -inf
      %3429 = vmax.xlane.f32.xlu0 %v3428
      %v3430 = vpop.xlane.xlu0 %3429
      %v3431 = vsel %vm3100, %v2954, -inf
      %3432 = vmax.xlane.f32.xlu0 %v3431
      %v3433 = vpop.xlane.xlu0 %3432
      %v3434 = vsel %vm3100, %v2955, -inf
      %3435 = vmax.xlane.f32.xlu0 %v3434
      %v3436 = vpop.xlane.xlu0 %3435
      %v3437 = vsel %vm3100, %v2956, -inf
      %3438 = vmax.xlane.f32.xlu0 %v3437
      %v3439 = vpop.xlane.xlu0 %3438
      %v3440 = vsel %vm3100, %v2957, -inf
      %3441 = vmax.xlane.f32.xlu0 %v3440
      %v3442 = vpop.xlane.xlu0 %3441
      %v3443 = vsel %vm3100, %v2958, -inf
      %3444 = vmax.xlane.f32.xlu0 %v3443
      %v3445 = vpop.xlane.xlu0 %3444
      %v3446 = vsel %vm3100, %v2959, -inf
      %3447 = vmax.xlane.f32.xlu0 %v3446
      %v3448 = vpop.xlane.xlu0 %3447
      %v3449 = vsel %vm3100, %v2960, -inf
      %3450 = vmax.xlane.f32.xlu0 %v3449
      %v3451 = vpop.xlane.xlu0 %3450
      %v3452 = vsel %vm3100, %v2961, -inf
      %3453 = vmax.xlane.f32.xlu0 %v3452
      %v3454 = vpop.xlane.xlu0 %3453
      %v3455 = vsel %vm3100, %v2962, -inf
      %3456 = vmax.xlane.f32.xlu0 %v3455
      %v3457 = vpop.xlane.xlu0 %3456
      %v3458 = vsel %vm3100, %v2963, -inf
      %3459 = vmax.xlane.f32.xlu0 %v3458
      %v3460 = vpop.xlane.xlu0 %3459
      %v3461 = vsel %vm3100, %v2964, -inf
      %3462 = vmax.xlane.f32.xlu0 %v3461
      %v3463 = vpop.xlane.xlu0 %3462
      %v3464 = vsel %vm3100, %v2965, -inf
      %3465 = vmax.xlane.f32.xlu0 %v3464
      %v3466 = vpop.xlane.xlu0 %3465
      %v3467 = vsel %vm3100, %v2966, -inf
      %3468 = vmax.xlane.f32.xlu0 %v3467
      %v3469 = vpop.xlane.xlu0 %3468
      %v3470 = vsel %vm3100, %v2967, -inf
      %3471 = vmax.xlane.f32.xlu0 %v3470
      %v3472 = vpop.xlane.xlu0 %3471
      %v3473 = vsel %vm3100, %v2968, -inf
      %3474 = vmax.xlane.f32.xlu0 %v3473
      %v3475 = vpop.xlane.xlu0 %3474
      %v3476 = vsel %vm3100, %v2969, -inf
      %3477 = vmax.xlane.f32.xlu0 %v3476
      %v3478 = vpop.xlane.xlu0 %3477
      %v3479 = vsel %vm3100, %v2970, -inf
      %3480 = vmax.xlane.f32.xlu0 %v3479
      %v3481 = vpop.xlane.xlu0 %3480
      %v3482 = vsel %vm3100, %v2971, -inf
      %3483 = vmax.xlane.f32.xlu0 %v3482
      %v3484 = vpop.xlane.xlu0 %3483
      %v3485 = vsel %vm3100, %v2972, -inf
      %3486 = vmax.xlane.f32.xlu0 %v3485
      %v3487 = vpop.xlane.xlu0 %3486
      %v3488 = vsel %vm3100, %v2973, -inf
      %3489 = vmax.xlane.f32.xlu0 %v3488
      %v3490 = vpop.xlane.xlu0 %3489
      %v3491 = vsel %vm3100, %v2974, -inf
      %3492 = vmax.xlane.f32.xlu0 %v3491
      %v3493 = vpop.xlane.xlu0 %3492
      %v3494 = vsel %vm3100, %v2975, -inf
      %3495 = vmax.xlane.f32.xlu0 %v3494
      %v3496 = vpop.xlane.xlu0 %3495
      %v3497 = vsel %vm3100, %v2976, -inf
      %3498 = vmax.xlane.f32.xlu0 %v3497
      %v3499 = vpop.xlane.xlu0 %3498
      %v3500 = vsel %vm3100, %v2977, -inf
      %3501 = vmax.xlane.f32.xlu0 %v3500
      %v3502 = vpop.xlane.xlu0 %3501
      %v3503 = vsel %vm3100, %v2978, -inf
      %3504 = vmax.xlane.f32.xlu0 %v3503
      %v3505 = vpop.xlane.xlu0 %3504
      %v3506 = vsel %vm3100, %v2979, -inf
      %3507 = vmax.xlane.f32.xlu0 %v3506
      %v3508 = vpop.xlane.xlu0 %3507
      %v3509 = vsel %vm3100, %v2980, -inf
      %3510 = vmax.xlane.f32.xlu0 %v3509
      %v3511 = vpop.xlane.xlu0 %3510
      %v3512 = vsel %vm3100, %v2981, -inf
      %3513 = vmax.xlane.f32.xlu0 %v3512
      %v3514 = vpop.xlane.xlu0 %3513
      %v3515 = vsel %vm3100, %v2982, -inf
      %3516 = vmax.xlane.f32.xlu0 %v3515
      %v3517 = vpop.xlane.xlu0 %3516
      %v3518 = vsel %vm3100, %v2983, -inf
      %3519 = vmax.xlane.f32.xlu0 %v3518
      %v3520 = vpop.xlane.xlu0 %3519
      %v3521 = vsel %vm3100, %v2984, -inf
      %3522 = vmax.xlane.f32.xlu0 %v3521
      %v3523 = vpop.xlane.xlu0 %3522
      %v3524 = vsel %vm3100, %v2985, -inf
      %3525 = vmax.xlane.f32.xlu0 %v3524
      %v3526 = vpop.xlane.xlu0 %3525
      %v3527 = vsel %vm3100, %v2986, -inf
      %3528 = vmax.xlane.f32.xlu0 %v3527
      %v3529 = vpop.xlane.xlu0 %3528
      %v3530 = vsel %vm3100, %v2987, -inf
      %3531 = vmax.xlane.f32.xlu0 %v3530
      %v3532 = vpop.xlane.xlu0 %3531
      %v3533 = vsel %vm3100, %v2988, -inf
      %3534 = vmax.xlane.f32.xlu0 %v3533
      %v3535 = vpop.xlane.xlu0 %3534
      %v3536 = vsel %vm3100, %v2989, -inf
      %3537 = vmax.xlane.f32.xlu0 %v3536
      %v3538 = vpop.xlane.xlu0 %3537
      %v3539 = vsel %vm3100, %v2990, -inf
      %3540 = vmax.xlane.f32.xlu0 %v3539
      %v3541 = vpop.xlane.xlu0 %3540
      %v3542 = vsel %vm3100, %v2991, -inf
      %3543 = vmax.xlane.f32.xlu0 %v3542
      %v3544 = vpop.xlane.xlu0 %3543
      %v3545 = vsel %vm3100, %v2992, -inf
      %3546 = vmax.xlane.f32.xlu0 %v3545
      %v3547 = vpop.xlane.xlu0 %3546
      %v3548 = vsel %vm3100, %v2993, -inf
      %3549 = vmax.xlane.f32.xlu0 %v3548
      %v3550 = vpop.xlane.xlu0 %3549
      %v3551 = vsel %vm3100, %v2994, -inf
      %3552 = vmax.xlane.f32.xlu0 %v3551
      %v3553 = vpop.xlane.xlu0 %3552
      %v3554 = vsel %vm3100, %v2995, -inf
      %3555 = vmax.xlane.f32.xlu0 %v3554
      %v3556 = vpop.xlane.xlu0 %3555
      %v3557 = vsel %vm3100, %v2996, -inf
      %3558 = vmax.xlane.f32.xlu0 %v3557
      %v3559 = vpop.xlane.xlu0 %3558
      %v3560 = vsel %vm3100, %v2997, -inf
      %3561 = vmax.xlane.f32.xlu0 %v3560
      %v3562 = vpop.xlane.xlu0 %3561
      %v3563 = vsel %vm3100, %v2998, -inf
      %3564 = vmax.xlane.f32.xlu0 %v3563
      %v3565 = vpop.xlane.xlu0 %3564
      %v3566 = vsel %vm3100, %v2999, -inf
      %3567 = vmax.xlane.f32.xlu0 %v3566
      %v3568 = vpop.xlane.xlu0 %3567
      %v3569 = vsel %vm3100, %v3000, -inf
      %3570 = vmax.xlane.f32.xlu0 %v3569
      %v3571 = vpop.xlane.xlu0 %3570
      %v3572 = vsel %vm3100, %v3001, -inf
      %3573 = vmax.xlane.f32.xlu0 %v3572
      %v3574 = vpop.xlane.xlu0 %3573
      %v3575 = vsel %vm3100, %v3002, -inf
      %3576 = vmax.xlane.f32.xlu0 %v3575
      %v3577 = vpop.xlane.xlu0 %3576
      %v3578 = vsel %vm3100, %v3003, -inf
      %3579 = vmax.xlane.f32.xlu0 %v3578
      %v3580 = vpop.xlane.xlu0 %3579
      %v3581 = vsel %vm3100, %v3004, -inf
      %3582 = vmax.xlane.f32.xlu0 %v3581
      %v3583 = vpop.xlane.xlu0 %3582
      %v3584 = vsel %vm3100, %v3005, -inf
      %3585 = vmax.xlane.f32.xlu0 %v3584
      %v3586 = vpop.xlane.xlu0 %3585
      %v3587 = vsel %vm3100, %v3006, -inf
      %3588 = vmax.xlane.f32.xlu0 %v3587
      %v3589 = vpop.xlane.xlu0 %3588
      %v3590 = vsel %vm3100, %v3007, -inf
      %3591 = vmax.xlane.f32.xlu0 %v3590
      %v3592 = vpop.xlane.xlu0 %3591
      %v3593 = vsel %vm3100, %v3008, -inf
      %3594 = vmax.xlane.f32.xlu0 %v3593
      %v3595 = vpop.xlane.xlu0 %3594
      %v3596 = vsel %vm3100, %v3009, -inf
      %3597 = vmax.xlane.f32.xlu0 %v3596
      %v3598 = vpop.xlane.xlu0 %3597
      %v3599 = vsel %vm3100, %v3010, -inf
      %3600 = vmax.xlane.f32.xlu0 %v3599
      %v3601 = vpop.xlane.xlu0 %3600
      %v3602 = vsel %vm3100, %v3011, -inf
      %3603 = vmax.xlane.f32.xlu0 %v3602
      %v3604 = vpop.xlane.xlu0 %3603
      %v3605 = vsel %vm3100, %v3012, -inf
      %3606 = vmax.xlane.f32.xlu0 %v3605
      %v3607 = vpop.xlane.xlu0 %3606
      %v3608 = vsel %vm3100, %v3013, -inf
      %3609 = vmax.xlane.f32.xlu0 %v3608
      %v3610 = vpop.xlane.xlu0 %3609
      %v3611 = vsel %vm3100, %v3014, -inf
      %3612 = vmax.xlane.f32.xlu0 %v3611
      %v3613 = vpop.xlane.xlu0 %3612
      %v3614 = vsel %vm3100, %v3015, -inf
      %3615 = vmax.xlane.f32.xlu0 %v3614
      %v3616 = vpop.xlane.xlu0 %3615
      %v3617 = vsel %vm3100, %v3016, -inf
      %3618 = vmax.xlane.f32.xlu0 %v3617
      %v3619 = vpop.xlane.xlu0 %3618
      %v3620 = vsel %vm3100, %v3017, -inf
      %3621 = vmax.xlane.f32.xlu0 %v3620
      %v3622 = vpop.xlane.xlu0 %3621
      %v3623 = vsel %vm3100, %v3018, -inf
      %3624 = vmax.xlane.f32.xlu0 %v3623
      %v3625 = vpop.xlane.xlu0 %3624
      %v3626 = vsel %vm3100, %v3019, -inf
      %3627 = vmax.xlane.f32.xlu0 %v3626
      %v3628 = vpop.xlane.xlu0 %3627
      %v3629 = vsel %vm3100, %v3020, -inf
      %3630 = vmax.xlane.f32.xlu0 %v3629
      %v3631 = vpop.xlane.xlu0 %3630
      %v3632 = vsel %vm3100, %v3021, -inf
      %3633 = vmax.xlane.f32.xlu0 %v3632
      %v3634 = vpop.xlane.xlu0 %3633
      %v3635 = vsel %vm3100, %v3022, -inf
      %3636 = vmax.xlane.f32.xlu0 %v3635
      %v3637 = vpop.xlane.xlu0 %3636
      %v3638 = vsel %vm3100, %v3023, -inf
      %3639 = vmax.xlane.f32.xlu0 %v3638
      %v3640 = vpop.xlane.xlu0 %3639
      %v3641 = vsel %vm3100, %v3024, -inf
      %3642 = vmax.xlane.f32.xlu0 %v3641
      %v3643 = vpop.xlane.xlu0 %3642
      %v3644 = vsel %vm3100, %v3025, -inf
      %3645 = vmax.xlane.f32.xlu0 %v3644
      %v3646 = vpop.xlane.xlu0 %3645
      %v3647 = vsel %vm3100, %v3026, -inf
      %3648 = vmax.xlane.f32.xlu0 %v3647
      %v3649 = vpop.xlane.xlu0 %3648
      %v3650 = vsel %vm3100, %v3027, -inf
      %3651 = vmax.xlane.f32.xlu0 %v3650
      %v3652 = vpop.xlane.xlu0 %3651
      %v3653 = vsel %vm3100, %v3028, -inf
      %3654 = vmax.xlane.f32.xlu0 %v3653
      %v3655 = vpop.xlane.xlu0 %3654
      %v3656 = vsel %vm3100, %v3029, -inf
      %3657 = vmax.xlane.f32.xlu0 %v3656
      %v3658 = vpop.xlane.xlu0 %3657
      %v3659 = vsel %vm3100, %v3030, -inf
      %3660 = vmax.xlane.f32.xlu0 %v3659
      %v3661 = vpop.xlane.xlu0 %3660
      %v3662 = vsel %vm3100, %v3031, -inf
      %3663 = vmax.xlane.f32.xlu0 %v3662
      %v3664 = vpop.xlane.xlu0 %3663
      %v3665 = vsel %vm3100, %v3032, -inf
      %3666 = vmax.xlane.f32.xlu0 %v3665
      %v3667 = vpop.xlane.xlu0 %3666
      %v3668 = vsel %vm3100, %v3033, -inf
      %3669 = vmax.xlane.f32.xlu0 %v3668
      %v3670 = vpop.xlane.xlu0 %3669
      %v3671 = vsel %vm3100, %v3034, -inf
      %3672 = vmax.xlane.f32.xlu0 %v3671
      %v3673 = vpop.xlane.xlu0 %3672
      %v3674 = vsel %vm3100, %v3035, -inf
      %3675 = vmax.xlane.f32.xlu0 %v3674
      %v3676 = vpop.xlane.xlu0 %3675
      %v3677 = vsel %vm3100, %v3036, -inf
      %3678 = vmax.xlane.f32.xlu0 %v3677
      %v3679 = vpop.xlane.xlu0 %3678
      %v3680 = vsel %vm3100, %v3037, -inf
      %3681 = vmax.xlane.f32.xlu0 %v3680
      %v3682 = vpop.xlane.xlu0 %3681
      %v3683 = vsel %vm3100, %v3038, -inf
      %3684 = vmax.xlane.f32.xlu0 %v3683
      %v3685 = vpop.xlane.xlu0 %3684
      %v3686 = vsel %vm3100, %v3039, -inf
      %3687 = vmax.xlane.f32.xlu0 %v3686
      %v3688 = vpop.xlane.xlu0 %3687
      %v3689 = vsel %vm3100, %v3040, -inf
      %3690 = vmax.xlane.f32.xlu0 %v3689
      %v3691 = vpop.xlane.xlu0 %3690
      %v3692 = vsel %vm3100, %v3041, -inf
      %3693 = vmax.xlane.f32.xlu0 %v3692
      %v3694 = vpop.xlane.xlu0 %3693
      %v3695 = vsel %vm3100, %v3042, -inf
      %3696 = vmax.xlane.f32.xlu0 %v3695
      %v3697 = vpop.xlane.xlu0 %3696
      %v3698 = vsel %vm3100, %v3043, -inf
      %3699 = vmax.xlane.f32.xlu0 %v3698
      %v3700 = vpop.xlane.xlu0 %3699
      %v3701 = vsel %vm3100, %v3044, -inf
      %3702 = vmax.xlane.f32.xlu0 %v3701
      %v3703 = vpop.xlane.xlu0 %3702
      %v3704 = vsel %vm3100, %v3045, -inf
      %3705 = vmax.xlane.f32.xlu0 %v3704
      %v3706 = vpop.xlane.xlu0 %3705
      %v3707 = vsel %vm3100, %v3046, -inf
      %3708 = vmax.xlane.f32.xlu0 %v3707
      %v3709 = vpop.xlane.xlu0 %3708
      %v3710 = vsel %vm3100, %v3047, -inf
      %3711 = vmax.xlane.f32.xlu0 %v3710
      %v3712 = vpop.xlane.xlu0 %3711
      %v3713 = vsel %vm3100, %v3048, -inf
      %3714 = vmax.xlane.f32.xlu0 %v3713
      %v3715 = vpop.xlane.xlu0 %3714
      %v3716 = vsel %vm3100, %v3049, -inf
      %3717 = vmax.xlane.f32.xlu0 %v3716
      %v3718 = vpop.xlane.xlu0 %3717
      %v3719 = vsel %vm3100, %v3050, -inf
      %3720 = vmax.xlane.f32.xlu0 %v3719
      %v3721 = vpop.xlane.xlu0 %3720
      %v3722 = vsel %vm3100, %v3051, -inf
      %3723 = vmax.xlane.f32.xlu0 %v3722
      %v3724 = vpop.xlane.xlu0 %3723
      %v3725 = vsel %vm3100, %v3052, -inf
      %3726 = vmax.xlane.f32.xlu0 %v3725
      %v3727 = vpop.xlane.xlu0 %3726
      %v3728 = vsel %vm3100, %v3053, -inf
      %3729 = vmax.xlane.f32.xlu0 %v3728
      %v3730 = vpop.xlane.xlu0 %3729
      %v3731 = vsel %vm3100, %v3054, -inf
      %3732 = vmax.xlane.f32.xlu0 %v3731
      %v3733 = vpop.xlane.xlu0 %3732
      %v3734 = vsel %vm3100, %v3055, -inf
      %3735 = vmax.xlane.f32.xlu0 %v3734
      %v3736 = vpop.xlane.xlu0 %3735
      %v3737 = vsel %vm3100, %v3056, -inf
      %3738 = vmax.xlane.f32.xlu0 %v3737
      %v3739 = vpop.xlane.xlu0 %3738
      %v3740 = vsel %vm3100, %v3057, -inf
      %3741 = vmax.xlane.f32.xlu0 %v3740
      %v3742 = vpop.xlane.xlu0 %3741
      %v3743 = vsel %vm3100, %v3058, -inf
      %3744 = vmax.xlane.f32.xlu0 %v3743
      %v3745 = vpop.xlane.xlu0 %3744
      %v3746 = vsel %vm3100, %v3059, -inf
      %3747 = vmax.xlane.f32.xlu0 %v3746
      %v3748 = vpop.xlane.xlu0 %3747
      %v3749 = vsel %vm3100, %v3060, -inf
      %3750 = vmax.xlane.f32.xlu0 %v3749
      %v3751 = vpop.xlane.xlu0 %3750
      %v3752 = vsel %vm3100, %v3061, -inf
      %3753 = vmax.xlane.f32.xlu0 %v3752
      %v3754 = vpop.xlane.xlu0 %3753
      %v3755 = vsel %vm3100, %v3062, -inf
      %3756 = vmax.xlane.f32.xlu0 %v3755
      %v3757 = vpop.xlane.xlu0 %3756
      %v3758 = vsel %vm3100, %v3063, -inf
      %3759 = vmax.xlane.f32.xlu0 %v3758
      %v3760 = vpop.xlane.xlu0 %3759
      %v3761 = vsel %vm3100, %v3064, -inf
      %3762 = vmax.xlane.f32.xlu0 %v3761
      %v3763 = vpop.xlane.xlu0 %3762
      %v3764 = vsel %vm3100, %v3065, -inf
      %3765 = vmax.xlane.f32.xlu0 %v3764
      %v3766 = vpop.xlane.xlu0 %3765
      %v3767 = vsel %vm3100, %v3066, -inf
      %3768 = vmax.xlane.f32.xlu0 %v3767
      %v3769 = vpop.xlane.xlu0 %3768
      %v3770 = vsel %vm3100, %v3067, -inf
      %3771 = vmax.xlane.f32.xlu0 %v3770
      %v3772 = vpop.xlane.xlu0 %3771
      %v3773 = vsel %vm3100, %v3068, -inf
      %3774 = vmax.xlane.f32.xlu0 %v3773
      %v3775 = vpop.xlane.xlu0 %3774
      %v3776 = vsel %vm3100, %v3069, -inf
      %3777 = vmax.xlane.f32.xlu0 %v3776
      %v3778 = vpop.xlane.xlu0 %3777
      %v3779 = vsel %vm3100, %v3070, -inf
      %3780 = vmax.xlane.f32.xlu0 %v3779
      %v3781 = vpop.xlane.xlu0 %3780
      %v3782 = vsel %vm3100, %v3071, -inf
      %3783 = vmax.xlane.f32.xlu0 %v3782
      %v3784 = vpop.xlane.xlu0 %3783
      %v3785 = vsel %vm3100, %v3072, -inf
      %3786 = vmax.xlane.f32.xlu0 %v3785
      %v3787 = vpop.xlane.xlu0 %3786
      %v3788 = vsel %vm3100, %v3073, -inf
      %3789 = vmax.xlane.f32.xlu0 %v3788
      %v3790 = vpop.xlane.xlu0 %3789
      %v3791 = vsel %vm3100, %v3074, -inf
      %3792 = vmax.xlane.f32.xlu0 %v3791
      %v3793 = vpop.xlane.xlu0 %3792
      %v3794 = vsel %vm3100, %v3075, -inf
      %3795 = vmax.xlane.f32.xlu0 %v3794
      %v3796 = vpop.xlane.xlu0 %3795
      %v3797 = vsel %vm3100, %v3076, -inf
      %3798 = vmax.xlane.f32.xlu0 %v3797
      %v3799 = vpop.xlane.xlu0 %3798
      %v3800 = vsel %vm3100, %v3077, -inf
      %3801 = vmax.xlane.f32.xlu0 %v3800
      %v3802 = vpop.xlane.xlu0 %3801
      %v3803 = vsel %vm3100, %v3078, -inf
      %3804 = vmax.xlane.f32.xlu0 %v3803
      %v3805 = vpop.xlane.xlu0 %3804
      %v3806 = vsel %vm3100, %v3079, -inf
      %3807 = vmax.xlane.f32.xlu0 %v3806
      %v3808 = vpop.xlane.xlu0 %3807
      %v3809 = vsel %vm3100, %v3080, -inf
      %3810 = vmax.xlane.f32.xlu0 %v3809
      %v3811 = vpop.xlane.xlu0 %3810
      %v3812 = vsel %vm3100, %v3081, -inf
      %3813 = vmax.xlane.f32.xlu0 %v3812
      %v3814 = vpop.xlane.xlu0 %3813
      %v3815 = vsel %vm3100, %v3082, -inf
      %3816 = vmax.xlane.f32.xlu0 %v3815
      %v3817 = vpop.xlane.xlu0 %3816
      %v3818 = vsel %vm3100, %v3083, -inf
      %3819 = vmax.xlane.f32.xlu0 %v3818
      %v3820 = vpop.xlane.xlu0 %3819
      %v3821 = vsel %vm3100, %v3084, -inf
      %3822 = vmax.xlane.f32.xlu0 %v3821
      %v3823 = vpop.xlane.xlu0 %3822
      %v3824 = vsel %vm3100, %v3085, -inf
      %3825 = vmax.xlane.f32.xlu0 %v3824
      %v3826 = vpop.xlane.xlu0 %3825
      %v3827 = vsel %vm3100, %v3086, -inf
      %3828 = vmax.xlane.f32.xlu0 %v3827
      %v3829 = vpop.xlane.xlu0 %3828
      %v3830 = vsel %vm3100, %v3087, -inf
      %3831 = vmax.xlane.f32.xlu0 %v3830
      %v3832 = vpop.xlane.xlu0 %3831
      %v3833 = vsel %vm3100, %v3088, -inf
      %3834 = vmax.xlane.f32.xlu0 %v3833
      %v3835 = vpop.xlane.xlu0 %3834
      %v3836 = vsel %vm3100, %v3089, -inf
      %3837 = vmax.xlane.f32.xlu0 %v3836
      %v3838 = vpop.xlane.xlu0 %3837
      %v3839 = vsel %vm3100, %v3090, -inf
      %3840 = vmax.xlane.f32.xlu0 %v3839
      %v3841 = vpop.xlane.xlu0 %3840
      %v3842 = vsel %vm3100, %v3091, -inf
      %3843 = vmax.xlane.f32.xlu0 %v3842
      %v3844 = vpop.xlane.xlu0 %3843
      %v3845 = vsel %vm3100, %v3092, -inf
      %3846 = vmax.xlane.f32.xlu0 %v3845
      %v3847 = vpop.xlane.xlu0 %3846
      %v3848 = vsel %vm3100, %v3093, -inf
      %3849 = vmax.xlane.f32.xlu0 %v3848
      %v3850 = vpop.xlane.xlu0 %3849
      %v3851 = vsel %vm3100, %v3094, -inf
      %3852 = vmax.xlane.f32.xlu0 %v3851
      %v3853 = vpop.xlane.xlu0 %3852
      %v3854 = vsel %vm3100, %v3095, -inf
      %3855 = vmax.xlane.f32.xlu0 %v3854
      %v3856 = vpop.xlane.xlu0 %3855
      %v3857 = vsel %vm3100, %v3096, -inf
      %3858 = vmax.xlane.f32.xlu0 %v3857
      %v3859 = vpop.xlane.xlu0 %3858
      %v3860 = vsel %vm3100, %v3097, -inf
      %3861 = vmax.xlane.f32.xlu0 %v3860
      %v3862 = vpop.xlane.xlu0 %3861
      %v3863 = vsel %vm3100, %v3098, -inf
      %3864 = vmax.xlane.f32.xlu0 %v3863
      %v3865 = vpop.xlane.xlu0 %3864
      %v3866 = vsel %vm3100, %v3099, -inf
      %3867 = vmax.xlane.f32.xlu0 %v3866
      %v3868 = vpop.xlane.xlu0 %3867
      %v3869 = vsub.f32 %v2844, %v3103
      %v3870 = vsub.f32 %v2845, %v3106
      %v3871 = vsub.f32 %v2846, %v3109
      %v3872 = vsub.f32 %v2847, %v3112
      %v3873 = vsub.f32 %v2848, %v3115
      %v3874 = vsub.f32 %v2849, %v3118
      %v3875 = vsub.f32 %v2850, %v3121
      %v3876 = vsub.f32 %v2851, %v3124
      %v3877 = vsub.f32 %v2852, %v3127
      %v3878 = vsub.f32 %v2853, %v3130
      %v3879 = vsub.f32 %v2854, %v3133
      %v3880 = vsub.f32 %v2855, %v3136
      %v3881 = vsub.f32 %v2856, %v3139
      %v3882 = vsub.f32 %v2857, %v3142
      %v3883 = vsub.f32 %v2858, %v3145
      %v3884 = vsub.f32 %v2859, %v3148
      %v3885 = vsub.f32 %v2860, %v3151
      %v3886 = vsub.f32 %v2861, %v3154
      %v3887 = vsub.f32 %v2862, %v3157
      %v3888 = vsub.f32 %v2863, %v3160
      %v3889 = vsub.f32 %v2864, %v3163
      %v3890 = vsub.f32 %v2865, %v3166
      %v3891 = vsub.f32 %v2866, %v3169
      %v3892 = vsub.f32 %v2867, %v3172
      %v3893 = vsub.f32 %v2868, %v3175
      %v3894 = vsub.f32 %v2869, %v3178
      %v3895 = vsub.f32 %v2870, %v3181
      %v3896 = vsub.f32 %v2871, %v3184
      %v3897 = vsub.f32 %v2872, %v3187
      %v3898 = vsub.f32 %v2873, %v3190
      %v3899 = vsub.f32 %v2874, %v3193
      %v3900 = vsub.f32 %v2875, %v3196
      %v3901 = vsub.f32 %v2876, %v3199
      %v3902 = vsub.f32 %v2877, %v3202
      %v3903 = vsub.f32 %v2878, %v3205
      %v3904 = vsub.f32 %v2879, %v3208
      %v3905 = vsub.f32 %v2880, %v3211
      %v3906 = vsub.f32 %v2881, %v3214
      %v3907 = vsub.f32 %v2882, %v3217
      %v3908 = vsub.f32 %v2883, %v3220
      %v3909 = vsub.f32 %v2884, %v3223
      %v3910 = vsub.f32 %v2885, %v3226
      %v3911 = vsub.f32 %v2886, %v3229
      %v3912 = vsub.f32 %v2887, %v3232
      %v3913 = vsub.f32 %v2888, %v3235
      %v3914 = vsub.f32 %v2889, %v3238
      %v3915 = vsub.f32 %v2890, %v3241
      %v3916 = vsub.f32 %v2891, %v3244
      %v3917 = vsub.f32 %v2892, %v3247
      %v3918 = vsub.f32 %v2893, %v3250
      %v3919 = vsub.f32 %v2894, %v3253
      %v3920 = vsub.f32 %v2895, %v3256
      %v3921 = vsub.f32 %v2896, %v3259
      %v3922 = vsub.f32 %v2897, %v3262
      %v3923 = vsub.f32 %v2898, %v3265
      %v3924 = vsub.f32 %v2899, %v3268
      %v3925 = vsub.f32 %v2900, %v3271
      %v3926 = vsub.f32 %v2901, %v3274
      %v3927 = vsub.f32 %v2902, %v3277
      %v3928 = vsub.f32 %v2903, %v3280
      %v3929 = vsub.f32 %v2904, %v3283
      %v3930 = vsub.f32 %v2905, %v3286
      %v3931 = vsub.f32 %v2906, %v3289
      %v3932 = vsub.f32 %v2907, %v3292
      %v3933 = vsub.f32 %v2908, %v3295
      %v3934 = vsub.f32 %v2909, %v3298
      %v3935 = vsub.f32 %v2910, %v3301
      %v3936 = vsub.f32 %v2911, %v3304
      %v3937 = vsub.f32 %v2912, %v3307
      %v3938 = vsub.f32 %v2913, %v3310
      %v3939 = vsub.f32 %v2914, %v3313
      %v3940 = vsub.f32 %v2915, %v3316
      %v3941 = vsub.f32 %v2916, %v3319
      %v3942 = vsub.f32 %v2917, %v3322
      %v3943 = vsub.f32 %v2918, %v3325
      %v3944 = vsub.f32 %v2919, %v3328
      %v3945 = vsub.f32 %v2920, %v3331
      %v3946 = vsub.f32 %v2921, %v3334
      %v3947 = vsub.f32 %v2922, %v3337
      %v3948 = vsub.f32 %v2923, %v3340
      %v3949 = vsub.f32 %v2924, %v3343
      %v3950 = vsub.f32 %v2925, %v3346
      %v3951 = vsub.f32 %v2926, %v3349
      %v3952 = vsub.f32 %v2927, %v3352
      %v3953 = vsub.f32 %v2928, %v3355
      %v3954 = vsub.f32 %v2929, %v3358
      %v3955 = vsub.f32 %v2930, %v3361
      %v3956 = vsub.f32 %v2931, %v3364
      %v3957 = vsub.f32 %v2932, %v3367
      %v3958 = vsub.f32 %v2933, %v3370
      %v3959 = vsub.f32 %v2934, %v3373
      %v3960 = vsub.f32 %v2935, %v3376
      %v3961 = vsub.f32 %v2936, %v3379
      %v3962 = vsub.f32 %v2937, %v3382
      %v3963 = vsub.f32 %v2938, %v3385
      %v3964 = vsub.f32 %v2939, %v3388
      %v3965 = vsub.f32 %v2940, %v3391
      %v3966 = vsub.f32 %v2941, %v3394
      %v3967 = vsub.f32 %v2942, %v3397
      %v3968 = vsub.f32 %v2943, %v3400
      %v3969 = vsub.f32 %v2944, %v3403
      %v3970 = vsub.f32 %v2945, %v3406
      %v3971 = vsub.f32 %v2946, %v3409
      %v3972 = vsub.f32 %v2947, %v3412
      %v3973 = vsub.f32 %v2948, %v3415
      %v3974 = vsub.f32 %v2949, %v3418
      %v3975 = vsub.f32 %v2950, %v3421
      %v3976 = vsub.f32 %v2951, %v3424
      %v3977 = vsub.f32 %v2952, %v3427
      %v3978 = vsub.f32 %v2953, %v3430
      %v3979 = vsub.f32 %v2954, %v3433
      %v3980 = vsub.f32 %v2955, %v3436
      %v3981 = vsub.f32 %v2956, %v3439
      %v3982 = vsub.f32 %v2957, %v3442
      %v3983 = vsub.f32 %v2958, %v3445
      %v3984 = vsub.f32 %v2959, %v3448
      %v3985 = vsub.f32 %v2960, %v3451
      %v3986 = vsub.f32 %v2961, %v3454
      %v3987 = vsub.f32 %v2962, %v3457
      %v3988 = vsub.f32 %v2963, %v3460
      %v3989 = vsub.f32 %v2964, %v3463
      %v3990 = vsub.f32 %v2965, %v3466
      %v3991 = vsub.f32 %v2966, %v3469
      %v3992 = vsub.f32 %v2967, %v3472
      %v3993 = vsub.f32 %v2968, %v3475
      %v3994 = vsub.f32 %v2969, %v3478
      %v3995 = vsub.f32 %v2970, %v3481
      %v3996 = vsub.f32 %v2971, %v3484
      %v3997 = vsub.f32 %v2972, %v3487
      %v3998 = vsub.f32 %v2973, %v3490
      %v3999 = vsub.f32 %v2974, %v3493
      %v4000 = vsub.f32 %v2975, %v3496
      %v4001 = vsub.f32 %v2976, %v3499
      %v4002 = vsub.f32 %v2977, %v3502
      %v4003 = vsub.f32 %v2978, %v3505
      %v4004 = vsub.f32 %v2979, %v3508
      %v4005 = vsub.f32 %v2980, %v3511
      %v4006 = vsub.f32 %v2981, %v3514
      %v4007 = vsub.f32 %v2982, %v3517
      %v4008 = vsub.f32 %v2983, %v3520
      %v4009 = vsub.f32 %v2984, %v3523
      %v4010 = vsub.f32 %v2985, %v3526
      %v4011 = vsub.f32 %v2986, %v3529
      %v4012 = vsub.f32 %v2987, %v3532
      %v4013 = vsub.f32 %v2988, %v3535
      %v4014 = vsub.f32 %v2989, %v3538
      %v4015 = vsub.f32 %v2990, %v3541
      %v4016 = vsub.f32 %v2991, %v3544
      %v4017 = vsub.f32 %v2992, %v3547
      %v4018 = vsub.f32 %v2993, %v3550
      %v4019 = vsub.f32 %v2994, %v3553
      %v4020 = vsub.f32 %v2995, %v3556
      %v4021 = vsub.f32 %v2996, %v3559
      %v4022 = vsub.f32 %v2997, %v3562
      %v4023 = vsub.f32 %v2998, %v3565
      %v4024 = vsub.f32 %v2999, %v3568
      %v4025 = vsub.f32 %v3000, %v3571
      %v4026 = vsub.f32 %v3001, %v3574
      %v4027 = vsub.f32 %v3002, %v3577
      %v4028 = vsub.f32 %v3003, %v3580
      %v4029 = vsub.f32 %v3004, %v3583
      %v4030 = vsub.f32 %v3005, %v3586
      %v4031 = vsub.f32 %v3006, %v3589
      %v4032 = vsub.f32 %v3007, %v3592
      %v4033 = vsub.f32 %v3008, %v3595
      %v4034 = vsub.f32 %v3009, %v3598
      %v4035 = vsub.f32 %v3010, %v3601
      %v4036 = vsub.f32 %v3011, %v3604
      %v4037 = vsub.f32 %v3012, %v3607
      %v4038 = vsub.f32 %v3013, %v3610
      %v4039 = vsub.f32 %v3014, %v3613
      %v4040 = vsub.f32 %v3015, %v3616
      %v4041 = vsub.f32 %v3016, %v3619
      %v4042 = vsub.f32 %v3017, %v3622
      %v4043 = vsub.f32 %v3018, %v3625
      %v4044 = vsub.f32 %v3019, %v3628
      %v4045 = vsub.f32 %v3020, %v3631
      %v4046 = vsub.f32 %v3021, %v3634
      %v4047 = vsub.f32 %v3022, %v3637
      %v4048 = vsub.f32 %v3023, %v3640
      %v4049 = vsub.f32 %v3024, %v3643
      %v4050 = vsub.f32 %v3025, %v3646
      %v4051 = vsub.f32 %v3026, %v3649
      %v4052 = vsub.f32 %v3027, %v3652
      %v4053 = vsub.f32 %v3028, %v3655
      %v4054 = vsub.f32 %v3029, %v3658
      %v4055 = vsub.f32 %v3030, %v3661
      %v4056 = vsub.f32 %v3031, %v3664
      %v4057 = vsub.f32 %v3032, %v3667
      %v4058 = vsub.f32 %v3033, %v3670
      %v4059 = vsub.f32 %v3034, %v3673
      %v4060 = vsub.f32 %v3035, %v3676
      %v4061 = vsub.f32 %v3036, %v3679
      %v4062 = vsub.f32 %v3037, %v3682
      %v4063 = vsub.f32 %v3038, %v3685
      %v4064 = vsub.f32 %v3039, %v3688
      %v4065 = vsub.f32 %v3040, %v3691
      %v4066 = vsub.f32 %v3041, %v3694
      %v4067 = vsub.f32 %v3042, %v3697
      %v4068 = vsub.f32 %v3043, %v3700
      %v4069 = vsub.f32 %v3044, %v3703
      %v4070 = vsub.f32 %v3045, %v3706
      %v4071 = vsub.f32 %v3046, %v3709
      %v4072 = vsub.f32 %v3047, %v3712
      %v4073 = vsub.f32 %v3048, %v3715
      %v4074 = vsub.f32 %v3049, %v3718
      %v4075 = vsub.f32 %v3050, %v3721
      %v4076 = vsub.f32 %v3051, %v3724
      %v4077 = vsub.f32 %v3052, %v3727
      %v4078 = vsub.f32 %v3053, %v3730
      %v4079 = vsub.f32 %v3054, %v3733
      %v4080 = vsub.f32 %v3055, %v3736
      %v4081 = vsub.f32 %v3056, %v3739
      %v4082 = vsub.f32 %v3057, %v3742
      %v4083 = vsub.f32 %v3058, %v3745
      %v4084 = vsub.f32 %v3059, %v3748
      %v4085 = vsub.f32 %v3060, %v3751
      %v4086 = vsub.f32 %v3061, %v3754
      %v4087 = vsub.f32 %v3062, %v3757
      %v4088 = vsub.f32 %v3063, %v3760
      %v4089 = vsub.f32 %v3064, %v3763
      %v4090 = vsub.f32 %v3065, %v3766
      %v4091 = vsub.f32 %v3066, %v3769
      %v4092 = vsub.f32 %v3067, %v3772
      %v4093 = vsub.f32 %v3068, %v3775
      %v4094 = vsub.f32 %v3069, %v3778
      %v4095 = vsub.f32 %v3070, %v3781
      %v4096 = vsub.f32 %v3071, %v3784
      %v4097 = vsub.f32 %v3072, %v3787
      %v4098 = vsub.f32 %v3073, %v3790
      %v4099 = vsub.f32 %v3074, %v3793
      %v4100 = vsub.f32 %v3075, %v3796
      %v4101 = vsub.f32 %v3076, %v3799
      %v4102 = vsub.f32 %v3077, %v3802
      %v4103 = vsub.f32 %v3078, %v3805
      %v4104 = vsub.f32 %v3079, %v3808
      %v4105 = vsub.f32 %v3080, %v3811
      %v4106 = vsub.f32 %v3081, %v3814
      %v4107 = vsub.f32 %v3082, %v3817
      %v4108 = vsub.f32 %v3083, %v3820
      %v4109 = vsub.f32 %v3084, %v3823
      %v4110 = vsub.f32 %v3085, %v3826
      %v4111 = vsub.f32 %v3086, %v3829
      %v4112 = vsub.f32 %v3087, %v3832
      %v4113 = vsub.f32 %v3088, %v3835
      %v4114 = vsub.f32 %v3089, %v3838
      %v4115 = vsub.f32 %v3090, %v3841
      %v4116 = vsub.f32 %v3091, %v3844
      %v4117 = vsub.f32 %v3092, %v3847
      %v4118 = vsub.f32 %v3093, %v3850
      %v4119 = vsub.f32 %v3094, %v3853
      %v4120 = vsub.f32 %v3095, %v3856
      %v4121 = vsub.f32 %v3096, %v3859
      %v4122 = vsub.f32 %v3097, %v3862
      %v4123 = vsub.f32 %v3098, %v3865
      %v4124 = vsub.f32 %v3099, %v3868
      %v4125 = vmul.f32 %v3869, 1.442695
      %v4126 = vpow.pop %v4125
      %v4127 = vmul.f32 %v3870, 1.442695
      %v4128 = vpow.pop %v4127
      %v4129 = vmul.f32 %v3871, 1.442695
      %v4130 = vpow.pop %v4129
      %v4131 = vmul.f32 %v3872, 1.442695
      %v4132 = vpow.pop %v4131
      %v4133 = vmul.f32 %v3873, 1.442695
      %v4134 = vpow.pop %v4133
      %v4135 = vmul.f32 %v3874, 1.442695
      %v4136 = vpow.pop %v4135
      %v4137 = vmul.f32 %v3875, 1.442695
      %v4138 = vpow.pop %v4137
      %v4139 = vmul.f32 %v3876, 1.442695
      %v4140 = vpow.pop %v4139
      %v4141 = vmul.f32 %v3877, 1.442695
      %v4142 = vpow.pop %v4141
      %v4143 = vmul.f32 %v3878, 1.442695
      %v4144 = vpow.pop %v4143
      %v4145 = vmul.f32 %v3879, 1.442695
      %v4146 = vpow.pop %v4145
      %v4147 = vmul.f32 %v3880, 1.442695
      %v4148 = vpow.pop %v4147
      %v4149 = vmul.f32 %v3881, 1.442695
      %v4150 = vpow.pop %v4149
      %v4151 = vmul.f32 %v3882, 1.442695
      %v4152 = vpow.pop %v4151
      %v4153 = vmul.f32 %v3883, 1.442695
      %v4154 = vpow.pop %v4153
      %v4155 = vmul.f32 %v3884, 1.442695
      %v4156 = vpow.pop %v4155
      %v4157 = vmul.f32 %v3885, 1.442695
      %v4158 = vpow.pop %v4157
      %v4159 = vmul.f32 %v3886, 1.442695
      %v4160 = vpow.pop %v4159
      %v4161 = vmul.f32 %v3887, 1.442695
      %v4162 = vpow.pop %v4161
      %v4163 = vmul.f32 %v3888, 1.442695
      %v4164 = vpow.pop %v4163
      %v4165 = vmul.f32 %v3889, 1.442695
      %v4166 = vpow.pop %v4165
      %v4167 = vmul.f32 %v3890, 1.442695
      %v4168 = vpow.pop %v4167
      %v4169 = vmul.f32 %v3891, 1.442695
      %v4170 = vpow.pop %v4169
      %v4171 = vmul.f32 %v3892, 1.442695
      %v4172 = vpow.pop %v4171
      %v4173 = vmul.f32 %v3893, 1.442695
      %v4174 = vpow.pop %v4173
      %v4175 = vmul.f32 %v3894, 1.442695
      %v4176 = vpow.pop %v4175
      %v4177 = vmul.f32 %v3895, 1.442695
      %v4178 = vpow.pop %v4177
      %v4179 = vmul.f32 %v3896, 1.442695
      %v4180 = vpow.pop %v4179
      %v4181 = vmul.f32 %v3897, 1.442695
      %v4182 = vpow.pop %v4181
      %v4183 = vmul.f32 %v3898, 1.442695
      %v4184 = vpow.pop %v4183
      %v4185 = vmul.f32 %v3899, 1.442695
      %v4186 = vpow.pop %v4185
      %v4187 = vmul.f32 %v3900, 1.442695
      %v4188 = vpow.pop %v4187
      %v4189 = vmul.f32 %v3901, 1.442695
      %v4190 = vpow.pop %v4189
      %v4191 = vmul.f32 %v3902, 1.442695
      %v4192 = vpow.pop %v4191
      %v4193 = vmul.f32 %v3903, 1.442695
      %v4194 = vpow.pop %v4193
      %v4195 = vmul.f32 %v3904, 1.442695
      %v4196 = vpow.pop %v4195
      %v4197 = vmul.f32 %v3905, 1.442695
      %v4198 = vpow.pop %v4197
      %v4199 = vmul.f32 %v3906, 1.442695
      %v4200 = vpow.pop %v4199
      %v4201 = vmul.f32 %v3907, 1.442695
      %v4202 = vpow.pop %v4201
      %v4203 = vmul.f32 %v3908, 1.442695
      %v4204 = vpow.pop %v4203
      %v4205 = vmul.f32 %v3909, 1.442695
      %v4206 = vpow.pop %v4205
      %v4207 = vmul.f32 %v3910, 1.442695
      %v4208 = vpow.pop %v4207
      %v4209 = vmul.f32 %v3911, 1.442695
      %v4210 = vpow.pop %v4209
      %v4211 = vmul.f32 %v3912, 1.442695
      %v4212 = vpow.pop %v4211
      %v4213 = vmul.f32 %v3913, 1.442695
      %v4214 = vpow.pop %v4213
      %v4215 = vmul.f32 %v3914, 1.442695
      %v4216 = vpow.pop %v4215
      %v4217 = vmul.f32 %v3915, 1.442695
      %v4218 = vpow.pop %v4217
      %v4219 = vmul.f32 %v3916, 1.442695
      %v4220 = vpow.pop %v4219
      %v4221 = vmul.f32 %v3917, 1.442695
      %v4222 = vpow.pop %v4221
      %v4223 = vmul.f32 %v3918, 1.442695
      %v4224 = vpow.pop %v4223
      %v4225 = vmul.f32 %v3919, 1.442695
      %v4226 = vpow.pop %v4225
      %v4227 = vmul.f32 %v3920, 1.442695
      %v4228 = vpow.pop %v4227
      %v4229 = vmul.f32 %v3921, 1.442695
      %v4230 = vpow.pop %v4229
      %v4231 = vmul.f32 %v3922, 1.442695
      %v4232 = vpow.pop %v4231
      %v4233 = vmul.f32 %v3923, 1.442695
      %v4234 = vpow.pop %v4233
      %v4235 = vmul.f32 %v3924, 1.442695
      %v4236 = vpow.pop %v4235
      %v4237 = vmul.f32 %v3925, 1.442695
      %v4238 = vpow.pop %v4237
      %v4239 = vmul.f32 %v3926, 1.442695
      %v4240 = vpow.pop %v4239
      %v4241 = vmul.f32 %v3927, 1.442695
      %v4242 = vpow.pop %v4241
      %v4243 = vmul.f32 %v3928, 1.442695
      %v4244 = vpow.pop %v4243
      %v4245 = vmul.f32 %v3929, 1.442695
      %v4246 = vpow.pop %v4245
      %v4247 = vmul.f32 %v3930, 1.442695
      %v4248 = vpow.pop %v4247
      %v4249 = vmul.f32 %v3931, 1.442695
      %v4250 = vpow.pop %v4249
      %v4251 = vmul.f32 %v3932, 1.442695
      %v4252 = vpow.pop %v4251
      %v4253 = vmul.f32 %v3933, 1.442695
      %v4254 = vpow.pop %v4253
      %v4255 = vmul.f32 %v3934, 1.442695
      %v4256 = vpow.pop %v4255
      %v4257 = vmul.f32 %v3935, 1.442695
      %v4258 = vpow.pop %v4257
      %v4259 = vmul.f32 %v3936, 1.442695
      %v4260 = vpow.pop %v4259
      %v4261 = vmul.f32 %v3937, 1.442695
      %v4262 = vpow.pop %v4261
      %v4263 = vmul.f32 %v3938, 1.442695
      %v4264 = vpow.pop %v4263
      %v4265 = vmul.f32 %v3939, 1.442695
      %v4266 = vpow.pop %v4265
      %v4267 = vmul.f32 %v3940, 1.442695
      %v4268 = vpow.pop %v4267
      %v4269 = vmul.f32 %v3941, 1.442695
      %v4270 = vpow.pop %v4269
      %v4271 = vmul.f32 %v3942, 1.442695
      %v4272 = vpow.pop %v4271
      %v4273 = vmul.f32 %v3943, 1.442695
      %v4274 = vpow.pop %v4273
      %v4275 = vmul.f32 %v3944, 1.442695
      %v4276 = vpow.pop %v4275
      %v4277 = vmul.f32 %v3945, 1.442695
      %v4278 = vpow.pop %v4277
      %v4279 = vmul.f32 %v3946, 1.442695
      %v4280 = vpow.pop %v4279
      %v4281 = vmul.f32 %v3947, 1.442695
      %v4282 = vpow.pop %v4281
      %v4283 = vmul.f32 %v3948, 1.442695
      %v4284 = vpow.pop %v4283
      %v4285 = vmul.f32 %v3949, 1.442695
      %v4286 = vpow.pop %v4285
      %v4287 = vmul.f32 %v3950, 1.442695
      %v4288 = vpow.pop %v4287
      %v4289 = vmul.f32 %v3951, 1.442695
      %v4290 = vpow.pop %v4289
      %v4291 = vmul.f32 %v3952, 1.442695
      %v4292 = vpow.pop %v4291
      %v4293 = vmul.f32 %v3953, 1.442695
      %v4294 = vpow.pop %v4293
      %v4295 = vmul.f32 %v3954, 1.442695
      %v4296 = vpow.pop %v4295
      %v4297 = vmul.f32 %v3955, 1.442695
      %v4298 = vpow.pop %v4297
      %v4299 = vmul.f32 %v3956, 1.442695
      %v4300 = vpow.pop %v4299
      %v4301 = vmul.f32 %v3957, 1.442695
      %v4302 = vpow.pop %v4301
      %v4303 = vmul.f32 %v3958, 1.442695
      %v4304 = vpow.pop %v4303
      %v4305 = vmul.f32 %v3959, 1.442695
      %v4306 = vpow.pop %v4305
      %v4307 = vmul.f32 %v3960, 1.442695
      %v4308 = vpow.pop %v4307
      %v4309 = vmul.f32 %v3961, 1.442695
      %v4310 = vpow.pop %v4309
      %v4311 = vmul.f32 %v3962, 1.442695
      %v4312 = vpow.pop %v4311
      %v4313 = vmul.f32 %v3963, 1.442695
      %v4314 = vpow.pop %v4313
      %v4315 = vmul.f32 %v3964, 1.442695
      %v4316 = vpow.pop %v4315
      %v4317 = vmul.f32 %v3965, 1.442695
      %v4318 = vpow.pop %v4317
      %v4319 = vmul.f32 %v3966, 1.442695
      %v4320 = vpow.pop %v4319
      %v4321 = vmul.f32 %v3967, 1.442695
      %v4322 = vpow.pop %v4321
      %v4323 = vmul.f32 %v3968, 1.442695
      %v4324 = vpow.pop %v4323
      %v4325 = vmul.f32 %v3969, 1.442695
      %v4326 = vpow.pop %v4325
      %v4327 = vmul.f32 %v3970, 1.442695
      %v4328 = vpow.pop %v4327
      %v4329 = vmul.f32 %v3971, 1.442695
      %v4330 = vpow.pop %v4329
      %v4331 = vmul.f32 %v3972, 1.442695
      %v4332 = vpow.pop %v4331
      %v4333 = vmul.f32 %v3973, 1.442695
      %v4334 = vpow.pop %v4333
      %v4335 = vmul.f32 %v3974, 1.442695
      %v4336 = vpow.pop %v4335
      %v4337 = vmul.f32 %v3975, 1.442695
      %v4338 = vpow.pop %v4337
      %v4339 = vmul.f32 %v3976, 1.442695
      %v4340 = vpow.pop %v4339
      %v4341 = vmul.f32 %v3977, 1.442695
      %v4342 = vpow.pop %v4341
      %v4343 = vmul.f32 %v3978, 1.442695
      %v4344 = vpow.pop %v4343
      %v4345 = vmul.f32 %v3979, 1.442695
      %v4346 = vpow.pop %v4345
      %v4347 = vmul.f32 %v3980, 1.442695
      %v4348 = vpow.pop %v4347
      %v4349 = vmul.f32 %v3981, 1.442695
      %v4350 = vpow.pop %v4349
      %v4351 = vmul.f32 %v3982, 1.442695
      %v4352 = vpow.pop %v4351
      %v4353 = vmul.f32 %v3983, 1.442695
      %v4354 = vpow.pop %v4353
      %v4355 = vmul.f32 %v3984, 1.442695
      %v4356 = vpow.pop %v4355
      %v4357 = vmul.f32 %v3985, 1.442695
      %v4358 = vpow.pop %v4357
      %v4359 = vmul.f32 %v3986, 1.442695
      %v4360 = vpow.pop %v4359
      %v4361 = vmul.f32 %v3987, 1.442695
      %v4362 = vpow.pop %v4361
      %v4363 = vmul.f32 %v3988, 1.442695
      %v4364 = vpow.pop %v4363
      %v4365 = vmul.f32 %v3989, 1.442695
      %v4366 = vpow.pop %v4365
      %v4367 = vmul.f32 %v3990, 1.442695
      %v4368 = vpow.pop %v4367
      %v4369 = vmul.f32 %v3991, 1.442695
      %v4370 = vpow.pop %v4369
      %v4371 = vmul.f32 %v3992, 1.442695
      %v4372 = vpow.pop %v4371
      %v4373 = vmul.f32 %v3993, 1.442695
      %v4374 = vpow.pop %v4373
      %v4375 = vmul.f32 %v3994, 1.442695
      %v4376 = vpow.pop %v4375
      %v4377 = vmul.f32 %v3995, 1.442695
      %v4378 = vpow.pop %v4377
      %v4379 = vmul.f32 %v3996, 1.442695
      %v4380 = vpow.pop %v4379
      %v4381 = vmul.f32 %v3997, 1.442695
      %v4382 = vpow.pop %v4381
      %v4383 = vmul.f32 %v3998, 1.442695
      %v4384 = vpow.pop %v4383
      %v4385 = vmul.f32 %v3999, 1.442695
      %v4386 = vpow.pop %v4385
      %v4387 = vmul.f32 %v4000, 1.442695
      %v4388 = vpow.pop %v4387
      %v4389 = vmul.f32 %v4001, 1.442695
      %v4390 = vpow.pop %v4389
      %v4391 = vmul.f32 %v4002, 1.442695
      %v4392 = vpow.pop %v4391
      %v4393 = vmul.f32 %v4003, 1.442695
      %v4394 = vpow.pop %v4393
      %v4395 = vmul.f32 %v4004, 1.442695
      %v4396 = vpow.pop %v4395
      %v4397 = vmul.f32 %v4005, 1.442695
      %v4398 = vpow.pop %v4397
      %v4399 = vmul.f32 %v4006, 1.442695
      %v4400 = vpow.pop %v4399
      %v4401 = vmul.f32 %v4007, 1.442695
      %v4402 = vpow.pop %v4401
      %v4403 = vmul.f32 %v4008, 1.442695
      %v4404 = vpow.pop %v4403
      %v4405 = vmul.f32 %v4009, 1.442695
      %v4406 = vpow.pop %v4405
      %v4407 = vmul.f32 %v4010, 1.442695
      %v4408 = vpow.pop %v4407
      %v4409 = vmul.f32 %v4011, 1.442695
      %v4410 = vpow.pop %v4409
      %v4411 = vmul.f32 %v4012, 1.442695
      %v4412 = vpow.pop %v4411
      %v4413 = vmul.f32 %v4013, 1.442695
      %v4414 = vpow.pop %v4413
      %v4415 = vmul.f32 %v4014, 1.442695
      %v4416 = vpow.pop %v4415
      %v4417 = vmul.f32 %v4015, 1.442695
      %v4418 = vpow.pop %v4417
      %v4419 = vmul.f32 %v4016, 1.442695
      %v4420 = vpow.pop %v4419
      %v4421 = vmul.f32 %v4017, 1.442695
      %v4422 = vpow.pop %v4421
      %v4423 = vmul.f32 %v4018, 1.442695
      %v4424 = vpow.pop %v4423
      %v4425 = vmul.f32 %v4019, 1.442695
      %v4426 = vpow.pop %v4425
      %v4427 = vmul.f32 %v4020, 1.442695
      %v4428 = vpow.pop %v4427
      %v4429 = vmul.f32 %v4021, 1.442695
      %v4430 = vpow.pop %v4429
      %v4431 = vmul.f32 %v4022, 1.442695
      %v4432 = vpow.pop %v4431
      %v4433 = vmul.f32 %v4023, 1.442695
      %v4434 = vpow.pop %v4433
      %v4435 = vmul.f32 %v4024, 1.442695
      %v4436 = vpow.pop %v4435
      %v4437 = vmul.f32 %v4025, 1.442695
      %v4438 = vpow.pop %v4437
      %v4439 = vmul.f32 %v4026, 1.442695
      %v4440 = vpow.pop %v4439
      %v4441 = vmul.f32 %v4027, 1.442695
      %v4442 = vpow.pop %v4441
      %v4443 = vmul.f32 %v4028, 1.442695
      %v4444 = vpow.pop %v4443
      %v4445 = vmul.f32 %v4029, 1.442695
      %v4446 = vpow.pop %v4445
      %v4447 = vmul.f32 %v4030, 1.442695
      %v4448 = vpow.pop %v4447
      %v4449 = vmul.f32 %v4031, 1.442695
      %v4450 = vpow.pop %v4449
      %v4451 = vmul.f32 %v4032, 1.442695
      %v4452 = vpow.pop %v4451
      %v4453 = vmul.f32 %v4033, 1.442695
      %v4454 = vpow.pop %v4453
      %v4455 = vmul.f32 %v4034, 1.442695
      %v4456 = vpow.pop %v4455
      %v4457 = vmul.f32 %v4035, 1.442695
      %v4458 = vpow.pop %v4457
      %v4459 = vmul.f32 %v4036, 1.442695
      %v4460 = vpow.pop %v4459
      %v4461 = vmul.f32 %v4037, 1.442695
      %v4462 = vpow.pop %v4461
      %v4463 = vmul.f32 %v4038, 1.442695
      %v4464 = vpow.pop %v4463
      %v4465 = vmul.f32 %v4039, 1.442695
      %v4466 = vpow.pop %v4465
      %v4467 = vmul.f32 %v4040, 1.442695
      %v4468 = vpow.pop %v4467
      %v4469 = vmul.f32 %v4041, 1.442695
      %v4470 = vpow.pop %v4469
      %v4471 = vmul.f32 %v4042, 1.442695
      %v4472 = vpow.pop %v4471
      %v4473 = vmul.f32 %v4043, 1.442695
      %v4474 = vpow.pop %v4473
      %v4475 = vmul.f32 %v4044, 1.442695
      %v4476 = vpow.pop %v4475
      %v4477 = vmul.f32 %v4045, 1.442695
      %v4478 = vpow.pop %v4477
      %v4479 = vmul.f32 %v4046, 1.442695
      %v4480 = vpow.pop %v4479
      %v4481 = vmul.f32 %v4047, 1.442695
      %v4482 = vpow.pop %v4481
      %v4483 = vmul.f32 %v4048, 1.442695
      %v4484 = vpow.pop %v4483
      %v4485 = vmul.f32 %v4049, 1.442695
      %v4486 = vpow.pop %v4485
      %v4487 = vmul.f32 %v4050, 1.442695
      %v4488 = vpow.pop %v4487
      %v4489 = vmul.f32 %v4051, 1.442695
      %v4490 = vpow.pop %v4489
      %v4491 = vmul.f32 %v4052, 1.442695
      %v4492 = vpow.pop %v4491
      %v4493 = vmul.f32 %v4053, 1.442695
      %v4494 = vpow.pop %v4493
      %v4495 = vmul.f32 %v4054, 1.442695
      %v4496 = vpow.pop %v4495
      %v4497 = vmul.f32 %v4055, 1.442695
      %v4498 = vpow.pop %v4497
      %v4499 = vmul.f32 %v4056, 1.442695
      %v4500 = vpow.pop %v4499
      %v4501 = vmul.f32 %v4057, 1.442695
      %v4502 = vpow.pop %v4501
      %v4503 = vmul.f32 %v4058, 1.442695
      %v4504 = vpow.pop %v4503
      %v4505 = vmul.f32 %v4059, 1.442695
      %v4506 = vpow.pop %v4505
      %v4507 = vmul.f32 %v4060, 1.442695
      %v4508 = vpow.pop %v4507
      %v4509 = vmul.f32 %v4061, 1.442695
      %v4510 = vpow.pop %v4509
      %v4511 = vmul.f32 %v4062, 1.442695
      %v4512 = vpow.pop %v4511
      %v4513 = vmul.f32 %v4063, 1.442695
      %v4514 = vpow.pop %v4513
      %v4515 = vmul.f32 %v4064, 1.442695
      %v4516 = vpow.pop %v4515
      %v4517 = vmul.f32 %v4065, 1.442695
      %v4518 = vpow.pop %v4517
      %v4519 = vmul.f32 %v4066, 1.442695
      %v4520 = vpow.pop %v4519
      %v4521 = vmul.f32 %v4067, 1.442695
      %v4522 = vpow.pop %v4521
      %v4523 = vmul.f32 %v4068, 1.442695
      %v4524 = vpow.pop %v4523
      %v4525 = vmul.f32 %v4069, 1.442695
      %v4526 = vpow.pop %v4525
      %v4527 = vmul.f32 %v4070, 1.442695
      %v4528 = vpow.pop %v4527
      %v4529 = vmul.f32 %v4071, 1.442695
      %v4530 = vpow.pop %v4529
      %v4531 = vmul.f32 %v4072, 1.442695
      %v4532 = vpow.pop %v4531
      %v4533 = vmul.f32 %v4073, 1.442695
      %v4534 = vpow.pop %v4533
      %v4535 = vmul.f32 %v4074, 1.442695
      %v4536 = vpow.pop %v4535
      %v4537 = vmul.f32 %v4075, 1.442695
      %v4538 = vpow.pop %v4537
      %v4539 = vmul.f32 %v4076, 1.442695
      %v4540 = vpow.pop %v4539
      %v4541 = vmul.f32 %v4077, 1.442695
      %v4542 = vpow.pop %v4541
      %v4543 = vmul.f32 %v4078, 1.442695
      %v4544 = vpow.pop %v4543
      %v4545 = vmul.f32 %v4079, 1.442695
      %v4546 = vpow.pop %v4545
      %v4547 = vmul.f32 %v4080, 1.442695
      %v4548 = vpow.pop %v4547
      %v4549 = vmul.f32 %v4081, 1.442695
      %v4550 = vpow.pop %v4549
      %v4551 = vmul.f32 %v4082, 1.442695
      %v4552 = vpow.pop %v4551
      %v4553 = vmul.f32 %v4083, 1.442695
      %v4554 = vpow.pop %v4553
      %v4555 = vmul.f32 %v4084, 1.442695
      %v4556 = vpow.pop %v4555
      %v4557 = vmul.f32 %v4085, 1.442695
      %v4558 = vpow.pop %v4557
      %v4559 = vmul.f32 %v4086, 1.442695
      %v4560 = vpow.pop %v4559
      %v4561 = vmul.f32 %v4087, 1.442695
      %v4562 = vpow.pop %v4561
      %v4563 = vmul.f32 %v4088, 1.442695
      %v4564 = vpow.pop %v4563
      %v4565 = vmul.f32 %v4089, 1.442695
      %v4566 = vpow.pop %v4565
      %v4567 = vmul.f32 %v4090, 1.442695
      %v4568 = vpow.pop %v4567
      %v4569 = vmul.f32 %v4091, 1.442695
      %v4570 = vpow.pop %v4569
      %v4571 = vmul.f32 %v4092, 1.442695
      %v4572 = vpow.pop %v4571
      %v4573 = vmul.f32 %v4093, 1.442695
      %v4574 = vpow.pop %v4573
      %v4575 = vmul.f32 %v4094, 1.442695
      %v4576 = vpow.pop %v4575
      %v4577 = vmul.f32 %v4095, 1.442695
      %v4578 = vpow.pop %v4577
      %v4579 = vmul.f32 %v4096, 1.442695
      %v4580 = vpow.pop %v4579
      %v4581 = vmul.f32 %v4097, 1.442695
      %v4582 = vpow.pop %v4581
      %v4583 = vmul.f32 %v4098, 1.442695
      %v4584 = vpow.pop %v4583
      %v4585 = vmul.f32 %v4099, 1.442695
      %v4586 = vpow.pop %v4585
      %v4587 = vmul.f32 %v4100, 1.442695
      %v4588 = vpow.pop %v4587
      %v4589 = vmul.f32 %v4101, 1.442695
      %v4590 = vpow.pop %v4589
      %v4591 = vmul.f32 %v4102, 1.442695
      %v4592 = vpow.pop %v4591
      %v4593 = vmul.f32 %v4103, 1.442695
      %v4594 = vpow.pop %v4593
      %v4595 = vmul.f32 %v4104, 1.442695
      %v4596 = vpow.pop %v4595
      %v4597 = vmul.f32 %v4105, 1.442695
      %v4598 = vpow.pop %v4597
      %v4599 = vmul.f32 %v4106, 1.442695
      %v4600 = vpow.pop %v4599
      %v4601 = vmul.f32 %v4107, 1.442695
      %v4602 = vpow.pop %v4601
      %v4603 = vmul.f32 %v4108, 1.442695
      %v4604 = vpow.pop %v4603
      %v4605 = vmul.f32 %v4109, 1.442695
      %v4606 = vpow.pop %v4605
      %v4607 = vmul.f32 %v4110, 1.442695
      %v4608 = vpow.pop %v4607
      %v4609 = vmul.f32 %v4111, 1.442695
      %v4610 = vpow.pop %v4609
      %v4611 = vmul.f32 %v4112, 1.442695
      %v4612 = vpow.pop %v4611
      %v4613 = vmul.f32 %v4113, 1.442695
      %v4614 = vpow.pop %v4613
      %v4615 = vmul.f32 %v4114, 1.442695
      %v4616 = vpow.pop %v4615
      %v4617 = vmul.f32 %v4115, 1.442695
      %v4618 = vpow.pop %v4617
      %v4619 = vmul.f32 %v4116, 1.442695
      %v4620 = vpow.pop %v4619
      %v4621 = vmul.f32 %v4117, 1.442695
      %v4622 = vpow.pop %v4621
      %v4623 = vmul.f32 %v4118, 1.442695
      %v4624 = vpow.pop %v4623
      %v4625 = vmul.f32 %v4119, 1.442695
      %v4626 = vpow.pop %v4625
      %v4627 = vmul.f32 %v4120, 1.442695
      %v4628 = vpow.pop %v4627
      %v4629 = vmul.f32 %v4121, 1.442695
      %v4630 = vpow.pop %v4629
      %v4631 = vmul.f32 %v4122, 1.442695
      %v4632 = vpow.pop %v4631
      %v4633 = vmul.f32 %v4123, 1.442695
      %v4634 = vpow.pop %v4633
      %v4635 = vmul.f32 %v4124, 1.442695
      %v4636 = vpow.pop %v4635
      %v4637 = vsel %vm3100, %v4126, 0.0
      %4638 = vadd.xlane.f32.xlu0 %v4637
      %v4639 = vpop.xlane.xlu0 %4638
      %v4640 = vsel %vm3100, %v4128, 0.0
      %4641 = vadd.xlane.f32.xlu0 %v4640
      %v4642 = vpop.xlane.xlu0 %4641
      %v4643 = vsel %vm3100, %v4130, 0.0
      %4644 = vadd.xlane.f32.xlu0 %v4643
      %v4645 = vpop.xlane.xlu0 %4644
      %v4646 = vsel %vm3100, %v4132, 0.0
      %4647 = vadd.xlane.f32.xlu0 %v4646
      %v4648 = vpop.xlane.xlu0 %4647
      %v4649 = vsel %vm3100, %v4134, 0.0
      %4650 = vadd.xlane.f32.xlu0 %v4649
      %v4651 = vpop.xlane.xlu0 %4650
      %v4652 = vsel %vm3100, %v4136, 0.0
      %4653 = vadd.xlane.f32.xlu0 %v4652
      %v4654 = vpop.xlane.xlu0 %4653
      %v4655 = vsel %vm3100, %v4138, 0.0
      %4656 = vadd.xlane.f32.xlu0 %v4655
      %v4657 = vpop.xlane.xlu0 %4656
      %v4658 = vsel %vm3100, %v4140, 0.0
      %4659 = vadd.xlane.f32.xlu0 %v4658
      %v4660 = vpop.xlane.xlu0 %4659
      %v4661 = vsel %vm3100, %v4142, 0.0
      %4662 = vadd.xlane.f32.xlu0 %v4661
      %v4663 = vpop.xlane.xlu0 %4662
      %v4664 = vsel %vm3100, %v4144, 0.0
      %4665 = vadd.xlane.f32.xlu0 %v4664
      %v4666 = vpop.xlane.xlu0 %4665
      %v4667 = vsel %vm3100, %v4146, 0.0
      %4668 = vadd.xlane.f32.xlu0 %v4667
      %v4669 = vpop.xlane.xlu0 %4668
      %v4670 = vsel %vm3100, %v4148, 0.0
      %4671 = vadd.xlane.f32.xlu0 %v4670
      %v4672 = vpop.xlane.xlu0 %4671
      %v4673 = vsel %vm3100, %v4150, 0.0
      %4674 = vadd.xlane.f32.xlu0 %v4673
      %v4675 = vpop.xlane.xlu0 %4674
      %v4676 = vsel %vm3100, %v4152, 0.0
      %4677 = vadd.xlane.f32.xlu0 %v4676
      %v4678 = vpop.xlane.xlu0 %4677
      %v4679 = vsel %vm3100, %v4154, 0.0
      %4680 = vadd.xlane.f32.xlu0 %v4679
      %v4681 = vpop.xlane.xlu0 %4680
      %v4682 = vsel %vm3100, %v4156, 0.0
      %4683 = vadd.xlane.f32.xlu0 %v4682
      %v4684 = vpop.xlane.xlu0 %4683
      %v4685 = vsel %vm3100, %v4158, 0.0
      %4686 = vadd.xlane.f32.xlu0 %v4685
      %v4687 = vpop.xlane.xlu0 %4686
      %v4688 = vsel %vm3100, %v4160, 0.0
      %4689 = vadd.xlane.f32.xlu0 %v4688
      %v4690 = vpop.xlane.xlu0 %4689
      %v4691 = vsel %vm3100, %v4162, 0.0
      %4692 = vadd.xlane.f32.xlu0 %v4691
      %v4693 = vpop.xlane.xlu0 %4692
      %v4694 = vsel %vm3100, %v4164, 0.0
      %4695 = vadd.xlane.f32.xlu0 %v4694
      %v4696 = vpop.xlane.xlu0 %4695
      %v4697 = vsel %vm3100, %v4166, 0.0
      %4698 = vadd.xlane.f32.xlu0 %v4697
      %v4699 = vpop.xlane.xlu0 %4698
      %v4700 = vsel %vm3100, %v4168, 0.0
      %4701 = vadd.xlane.f32.xlu0 %v4700
      %v4702 = vpop.xlane.xlu0 %4701
      %v4703 = vsel %vm3100, %v4170, 0.0
      %4704 = vadd.xlane.f32.xlu0 %v4703
      %v4705 = vpop.xlane.xlu0 %4704
      %v4706 = vsel %vm3100, %v4172, 0.0
      %4707 = vadd.xlane.f32.xlu0 %v4706
      %v4708 = vpop.xlane.xlu0 %4707
      %v4709 = vsel %vm3100, %v4174, 0.0
      %4710 = vadd.xlane.f32.xlu0 %v4709
      %v4711 = vpop.xlane.xlu0 %4710
      %v4712 = vsel %vm3100, %v4176, 0.0
      %4713 = vadd.xlane.f32.xlu0 %v4712
      %v4714 = vpop.xlane.xlu0 %4713
      %v4715 = vsel %vm3100, %v4178, 0.0
      %4716 = vadd.xlane.f32.xlu0 %v4715
      %v4717 = vpop.xlane.xlu0 %4716
      %v4718 = vsel %vm3100, %v4180, 0.0
      %4719 = vadd.xlane.f32.xlu0 %v4718
      %v4720 = vpop.xlane.xlu0 %4719
      %v4721 = vsel %vm3100, %v4182, 0.0
      %4722 = vadd.xlane.f32.xlu0 %v4721
      %v4723 = vpop.xlane.xlu0 %4722
      %v4724 = vsel %vm3100, %v4184, 0.0
      %4725 = vadd.xlane.f32.xlu0 %v4724
      %v4726 = vpop.xlane.xlu0 %4725
      %v4727 = vsel %vm3100, %v4186, 0.0
      %4728 = vadd.xlane.f32.xlu0 %v4727
      %v4729 = vpop.xlane.xlu0 %4728
      %v4730 = vsel %vm3100, %v4188, 0.0
      %4731 = vadd.xlane.f32.xlu0 %v4730
      %v4732 = vpop.xlane.xlu0 %4731
      %v4733 = vsel %vm3100, %v4190, 0.0
      %4734 = vadd.xlane.f32.xlu0 %v4733
      %v4735 = vpop.xlane.xlu0 %4734
      %v4736 = vsel %vm3100, %v4192, 0.0
      %4737 = vadd.xlane.f32.xlu0 %v4736
      %v4738 = vpop.xlane.xlu0 %4737
      %v4739 = vsel %vm3100, %v4194, 0.0
      %4740 = vadd.xlane.f32.xlu0 %v4739
      %v4741 = vpop.xlane.xlu0 %4740
      %v4742 = vsel %vm3100, %v4196, 0.0
      %4743 = vadd.xlane.f32.xlu0 %v4742
      %v4744 = vpop.xlane.xlu0 %4743
      %v4745 = vsel %vm3100, %v4198, 0.0
      %4746 = vadd.xlane.f32.xlu0 %v4745
      %v4747 = vpop.xlane.xlu0 %4746
      %v4748 = vsel %vm3100, %v4200, 0.0
      %4749 = vadd.xlane.f32.xlu0 %v4748
      %v4750 = vpop.xlane.xlu0 %4749
      %v4751 = vsel %vm3100, %v4202, 0.0
      %4752 = vadd.xlane.f32.xlu0 %v4751
      %v4753 = vpop.xlane.xlu0 %4752
      %v4754 = vsel %vm3100, %v4204, 0.0
      %4755 = vadd.xlane.f32.xlu0 %v4754
      %v4756 = vpop.xlane.xlu0 %4755
      %v4757 = vsel %vm3100, %v4206, 0.0
      %4758 = vadd.xlane.f32.xlu0 %v4757
      %v4759 = vpop.xlane.xlu0 %4758
      %v4760 = vsel %vm3100, %v4208, 0.0
      %4761 = vadd.xlane.f32.xlu0 %v4760
      %v4762 = vpop.xlane.xlu0 %4761
      %v4763 = vsel %vm3100, %v4210, 0.0
      %4764 = vadd.xlane.f32.xlu0 %v4763
      %v4765 = vpop.xlane.xlu0 %4764
      %v4766 = vsel %vm3100, %v4212, 0.0
      %4767 = vadd.xlane.f32.xlu0 %v4766
      %v4768 = vpop.xlane.xlu0 %4767
      %v4769 = vsel %vm3100, %v4214, 0.0
      %4770 = vadd.xlane.f32.xlu0 %v4769
      %v4771 = vpop.xlane.xlu0 %4770
      %v4772 = vsel %vm3100, %v4216, 0.0
      %4773 = vadd.xlane.f32.xlu0 %v4772
      %v4774 = vpop.xlane.xlu0 %4773
      %v4775 = vsel %vm3100, %v4218, 0.0
      %4776 = vadd.xlane.f32.xlu0 %v4775
      %v4777 = vpop.xlane.xlu0 %4776
      %v4778 = vsel %vm3100, %v4220, 0.0
      %4779 = vadd.xlane.f32.xlu0 %v4778
      %v4780 = vpop.xlane.xlu0 %4779
      %v4781 = vsel %vm3100, %v4222, 0.0
      %4782 = vadd.xlane.f32.xlu0 %v4781
      %v4783 = vpop.xlane.xlu0 %4782
      %v4784 = vsel %vm3100, %v4224, 0.0
      %4785 = vadd.xlane.f32.xlu0 %v4784
      %v4786 = vpop.xlane.xlu0 %4785
      %v4787 = vsel %vm3100, %v4226, 0.0
      %4788 = vadd.xlane.f32.xlu0 %v4787
      %v4789 = vpop.xlane.xlu0 %4788
      %v4790 = vsel %vm3100, %v4228, 0.0
      %4791 = vadd.xlane.f32.xlu0 %v4790
      %v4792 = vpop.xlane.xlu0 %4791
      %v4793 = vsel %vm3100, %v4230, 0.0
      %4794 = vadd.xlane.f32.xlu0 %v4793
      %v4795 = vpop.xlane.xlu0 %4794
      %v4796 = vsel %vm3100, %v4232, 0.0
      %4797 = vadd.xlane.f32.xlu0 %v4796
      %v4798 = vpop.xlane.xlu0 %4797
      %v4799 = vsel %vm3100, %v4234, 0.0
      %4800 = vadd.xlane.f32.xlu0 %v4799
      %v4801 = vpop.xlane.xlu0 %4800
      %v4802 = vsel %vm3100, %v4236, 0.0
      %4803 = vadd.xlane.f32.xlu0 %v4802
      %v4804 = vpop.xlane.xlu0 %4803
      %v4805 = vsel %vm3100, %v4238, 0.0
      %4806 = vadd.xlane.f32.xlu0 %v4805
      %v4807 = vpop.xlane.xlu0 %4806
      %v4808 = vsel %vm3100, %v4240, 0.0
      %4809 = vadd.xlane.f32.xlu0 %v4808
      %v4810 = vpop.xlane.xlu0 %4809
      %v4811 = vsel %vm3100, %v4242, 0.0
      %4812 = vadd.xlane.f32.xlu0 %v4811
      %v4813 = vpop.xlane.xlu0 %4812
      %v4814 = vsel %vm3100, %v4244, 0.0
      %4815 = vadd.xlane.f32.xlu0 %v4814
      %v4816 = vpop.xlane.xlu0 %4815
      %v4817 = vsel %vm3100, %v4246, 0.0
      %4818 = vadd.xlane.f32.xlu0 %v4817
      %v4819 = vpop.xlane.xlu0 %4818
      %v4820 = vsel %vm3100, %v4248, 0.0
      %4821 = vadd.xlane.f32.xlu0 %v4820
      %v4822 = vpop.xlane.xlu0 %4821
      %v4823 = vsel %vm3100, %v4250, 0.0
      %4824 = vadd.xlane.f32.xlu0 %v4823
      %v4825 = vpop.xlane.xlu0 %4824
      %v4826 = vsel %vm3100, %v4252, 0.0
      %4827 = vadd.xlane.f32.xlu0 %v4826
      %v4828 = vpop.xlane.xlu0 %4827
      %v4829 = vsel %vm3100, %v4254, 0.0
      %4830 = vadd.xlane.f32.xlu0 %v4829
      %v4831 = vpop.xlane.xlu0 %4830
      %v4832 = vsel %vm3100, %v4256, 0.0
      %4833 = vadd.xlane.f32.xlu0 %v4832
      %v4834 = vpop.xlane.xlu0 %4833
      %v4835 = vsel %vm3100, %v4258, 0.0
      %4836 = vadd.xlane.f32.xlu0 %v4835
      %v4837 = vpop.xlane.xlu0 %4836
      %v4838 = vsel %vm3100, %v4260, 0.0
      %4839 = vadd.xlane.f32.xlu0 %v4838
      %v4840 = vpop.xlane.xlu0 %4839
      %v4841 = vsel %vm3100, %v4262, 0.0
      %4842 = vadd.xlane.f32.xlu0 %v4841
      %v4843 = vpop.xlane.xlu0 %4842
      %v4844 = vsel %vm3100, %v4264, 0.0
      %4845 = vadd.xlane.f32.xlu0 %v4844
      %v4846 = vpop.xlane.xlu0 %4845
      %v4847 = vsel %vm3100, %v4266, 0.0
      %4848 = vadd.xlane.f32.xlu0 %v4847
      %v4849 = vpop.xlane.xlu0 %4848
      %v4850 = vsel %vm3100, %v4268, 0.0
      %4851 = vadd.xlane.f32.xlu0 %v4850
      %v4852 = vpop.xlane.xlu0 %4851
      %v4853 = vsel %vm3100, %v4270, 0.0
      %4854 = vadd.xlane.f32.xlu0 %v4853
      %v4855 = vpop.xlane.xlu0 %4854
      %v4856 = vsel %vm3100, %v4272, 0.0
      %4857 = vadd.xlane.f32.xlu0 %v4856
      %v4858 = vpop.xlane.xlu0 %4857
      %v4859 = vsel %vm3100, %v4274, 0.0
      %4860 = vadd.xlane.f32.xlu0 %v4859
      %v4861 = vpop.xlane.xlu0 %4860
      %v4862 = vsel %vm3100, %v4276, 0.0
      %4863 = vadd.xlane.f32.xlu0 %v4862
      %v4864 = vpop.xlane.xlu0 %4863
      %v4865 = vsel %vm3100, %v4278, 0.0
      %4866 = vadd.xlane.f32.xlu0 %v4865
      %v4867 = vpop.xlane.xlu0 %4866
      %v4868 = vsel %vm3100, %v4280, 0.0
      %4869 = vadd.xlane.f32.xlu0 %v4868
      %v4870 = vpop.xlane.xlu0 %4869
      %v4871 = vsel %vm3100, %v4282, 0.0
      %4872 = vadd.xlane.f32.xlu0 %v4871
      %v4873 = vpop.xlane.xlu0 %4872
      %v4874 = vsel %vm3100, %v4284, 0.0
      %4875 = vadd.xlane.f32.xlu0 %v4874
      %v4876 = vpop.xlane.xlu0 %4875
      %v4877 = vsel %vm3100, %v4286, 0.0
      %4878 = vadd.xlane.f32.xlu0 %v4877
      %v4879 = vpop.xlane.xlu0 %4878
      %v4880 = vsel %vm3100, %v4288, 0.0
      %4881 = vadd.xlane.f32.xlu0 %v4880
      %v4882 = vpop.xlane.xlu0 %4881
      %v4883 = vsel %vm3100, %v4290, 0.0
      %4884 = vadd.xlane.f32.xlu0 %v4883
      %v4885 = vpop.xlane.xlu0 %4884
      %v4886 = vsel %vm3100, %v4292, 0.0
      %4887 = vadd.xlane.f32.xlu0 %v4886
      %v4888 = vpop.xlane.xlu0 %4887
      %v4889 = vsel %vm3100, %v4294, 0.0
      %4890 = vadd.xlane.f32.xlu0 %v4889
      %v4891 = vpop.xlane.xlu0 %4890
      %v4892 = vsel %vm3100, %v4296, 0.0
      %4893 = vadd.xlane.f32.xlu0 %v4892
      %v4894 = vpop.xlane.xlu0 %4893
      %v4895 = vsel %vm3100, %v4298, 0.0
      %4896 = vadd.xlane.f32.xlu0 %v4895
      %v4897 = vpop.xlane.xlu0 %4896
      %v4898 = vsel %vm3100, %v4300, 0.0
      %4899 = vadd.xlane.f32.xlu0 %v4898
      %v4900 = vpop.xlane.xlu0 %4899
      %v4901 = vsel %vm3100, %v4302, 0.0
      %4902 = vadd.xlane.f32.xlu0 %v4901
      %v4903 = vpop.xlane.xlu0 %4902
      %v4904 = vsel %vm3100, %v4304, 0.0
      %4905 = vadd.xlane.f32.xlu0 %v4904
      %v4906 = vpop.xlane.xlu0 %4905
      %v4907 = vsel %vm3100, %v4306, 0.0
      %4908 = vadd.xlane.f32.xlu0 %v4907
      %v4909 = vpop.xlane.xlu0 %4908
      %v4910 = vsel %vm3100, %v4308, 0.0
      %4911 = vadd.xlane.f32.xlu0 %v4910
      %v4912 = vpop.xlane.xlu0 %4911
      %v4913 = vsel %vm3100, %v4310, 0.0
      %4914 = vadd.xlane.f32.xlu0 %v4913
      %v4915 = vpop.xlane.xlu0 %4914
      %v4916 = vsel %vm3100, %v4312, 0.0
      %4917 = vadd.xlane.f32.xlu0 %v4916
      %v4918 = vpop.xlane.xlu0 %4917
      %v4919 = vsel %vm3100, %v4314, 0.0
      %4920 = vadd.xlane.f32.xlu0 %v4919
      %v4921 = vpop.xlane.xlu0 %4920
      %v4922 = vsel %vm3100, %v4316, 0.0
      %4923 = vadd.xlane.f32.xlu0 %v4922
      %v4924 = vpop.xlane.xlu0 %4923
      %v4925 = vsel %vm3100, %v4318, 0.0
      %4926 = vadd.xlane.f32.xlu0 %v4925
      %v4927 = vpop.xlane.xlu0 %4926
      %v4928 = vsel %vm3100, %v4320, 0.0
      %4929 = vadd.xlane.f32.xlu0 %v4928
      %v4930 = vpop.xlane.xlu0 %4929
      %v4931 = vsel %vm3100, %v4322, 0.0
      %4932 = vadd.xlane.f32.xlu0 %v4931
      %v4933 = vpop.xlane.xlu0 %4932
      %v4934 = vsel %vm3100, %v4324, 0.0
      %4935 = vadd.xlane.f32.xlu0 %v4934
      %v4936 = vpop.xlane.xlu0 %4935
      %v4937 = vsel %vm3100, %v4326, 0.0
      %4938 = vadd.xlane.f32.xlu0 %v4937
      %v4939 = vpop.xlane.xlu0 %4938
      %v4940 = vsel %vm3100, %v4328, 0.0
      %4941 = vadd.xlane.f32.xlu0 %v4940
      %v4942 = vpop.xlane.xlu0 %4941
      %v4943 = vsel %vm3100, %v4330, 0.0
      %4944 = vadd.xlane.f32.xlu0 %v4943
      %v4945 = vpop.xlane.xlu0 %4944
      %v4946 = vsel %vm3100, %v4332, 0.0
      %4947 = vadd.xlane.f32.xlu0 %v4946
      %v4948 = vpop.xlane.xlu0 %4947
      %v4949 = vsel %vm3100, %v4334, 0.0
      %4950 = vadd.xlane.f32.xlu0 %v4949
      %v4951 = vpop.xlane.xlu0 %4950
      %v4952 = vsel %vm3100, %v4336, 0.0
      %4953 = vadd.xlane.f32.xlu0 %v4952
      %v4954 = vpop.xlane.xlu0 %4953
      %v4955 = vsel %vm3100, %v4338, 0.0
      %4956 = vadd.xlane.f32.xlu0 %v4955
      %v4957 = vpop.xlane.xlu0 %4956
      %v4958 = vsel %vm3100, %v4340, 0.0
      %4959 = vadd.xlane.f32.xlu0 %v4958
      %v4960 = vpop.xlane.xlu0 %4959
      %v4961 = vsel %vm3100, %v4342, 0.0
      %4962 = vadd.xlane.f32.xlu0 %v4961
      %v4963 = vpop.xlane.xlu0 %4962
      %v4964 = vsel %vm3100, %v4344, 0.0
      %4965 = vadd.xlane.f32.xlu0 %v4964
      %v4966 = vpop.xlane.xlu0 %4965
      %v4967 = vsel %vm3100, %v4346, 0.0
      %4968 = vadd.xlane.f32.xlu0 %v4967
      %v4969 = vpop.xlane.xlu0 %4968
      %v4970 = vsel %vm3100, %v4348, 0.0
      %4971 = vadd.xlane.f32.xlu0 %v4970
      %v4972 = vpop.xlane.xlu0 %4971
      %v4973 = vsel %vm3100, %v4350, 0.0
      %4974 = vadd.xlane.f32.xlu0 %v4973
      %v4975 = vpop.xlane.xlu0 %4974
      %v4976 = vsel %vm3100, %v4352, 0.0
      %4977 = vadd.xlane.f32.xlu0 %v4976
      %v4978 = vpop.xlane.xlu0 %4977
      %v4979 = vsel %vm3100, %v4354, 0.0
      %4980 = vadd.xlane.f32.xlu0 %v4979
      %v4981 = vpop.xlane.xlu0 %4980
      %v4982 = vsel %vm3100, %v4356, 0.0
      %4983 = vadd.xlane.f32.xlu0 %v4982
      %v4984 = vpop.xlane.xlu0 %4983
      %v4985 = vsel %vm3100, %v4358, 0.0
      %4986 = vadd.xlane.f32.xlu0 %v4985
      %v4987 = vpop.xlane.xlu0 %4986
      %v4988 = vsel %vm3100, %v4360, 0.0
      %4989 = vadd.xlane.f32.xlu0 %v4988
      %v4990 = vpop.xlane.xlu0 %4989
      %v4991 = vsel %vm3100, %v4362, 0.0
      %4992 = vadd.xlane.f32.xlu0 %v4991
      %v4993 = vpop.xlane.xlu0 %4992
      %v4994 = vsel %vm3100, %v4364, 0.0
      %4995 = vadd.xlane.f32.xlu0 %v4994
      %v4996 = vpop.xlane.xlu0 %4995
      %v4997 = vsel %vm3100, %v4366, 0.0
      %4998 = vadd.xlane.f32.xlu0 %v4997
      %v4999 = vpop.xlane.xlu0 %4998
      %v5000 = vsel %vm3100, %v4368, 0.0
      %5001 = vadd.xlane.f32.xlu0 %v5000
      %v5002 = vpop.xlane.xlu0 %5001
      %v5003 = vsel %vm3100, %v4370, 0.0
      %5004 = vadd.xlane.f32.xlu0 %v5003
      %v5005 = vpop.xlane.xlu0 %5004
      %v5006 = vsel %vm3100, %v4372, 0.0
      %5007 = vadd.xlane.f32.xlu0 %v5006
      %v5008 = vpop.xlane.xlu0 %5007
      %v5009 = vsel %vm3100, %v4374, 0.0
      %5010 = vadd.xlane.f32.xlu0 %v5009
      %v5011 = vpop.xlane.xlu0 %5010
      %v5012 = vsel %vm3100, %v4376, 0.0
      %5013 = vadd.xlane.f32.xlu0 %v5012
      %v5014 = vpop.xlane.xlu0 %5013
      %v5015 = vsel %vm3100, %v4378, 0.0
      %5016 = vadd.xlane.f32.xlu0 %v5015
      %v5017 = vpop.xlane.xlu0 %5016
      %v5018 = vsel %vm3100, %v4380, 0.0
      %5019 = vadd.xlane.f32.xlu0 %v5018
      %v5020 = vpop.xlane.xlu0 %5019
      %v5021 = vsel %vm3100, %v4382, 0.0
      %5022 = vadd.xlane.f32.xlu0 %v5021
      %v5023 = vpop.xlane.xlu0 %5022
      %v5024 = vsel %vm3100, %v4384, 0.0
      %5025 = vadd.xlane.f32.xlu0 %v5024
      %v5026 = vpop.xlane.xlu0 %5025
      %v5027 = vsel %vm3100, %v4386, 0.0
      %5028 = vadd.xlane.f32.xlu0 %v5027
      %v5029 = vpop.xlane.xlu0 %5028
      %v5030 = vsel %vm3100, %v4388, 0.0
      %5031 = vadd.xlane.f32.xlu0 %v5030
      %v5032 = vpop.xlane.xlu0 %5031
      %v5033 = vsel %vm3100, %v4390, 0.0
      %5034 = vadd.xlane.f32.xlu0 %v5033
      %v5035 = vpop.xlane.xlu0 %5034
      %v5036 = vsel %vm3100, %v4392, 0.0
      %5037 = vadd.xlane.f32.xlu0 %v5036
      %v5038 = vpop.xlane.xlu0 %5037
      %v5039 = vsel %vm3100, %v4394, 0.0
      %5040 = vadd.xlane.f32.xlu0 %v5039
      %v5041 = vpop.xlane.xlu0 %5040
      %v5042 = vsel %vm3100, %v4396, 0.0
      %5043 = vadd.xlane.f32.xlu0 %v5042
      %v5044 = vpop.xlane.xlu0 %5043
      %v5045 = vsel %vm3100, %v4398, 0.0
      %5046 = vadd.xlane.f32.xlu0 %v5045
      %v5047 = vpop.xlane.xlu0 %5046
      %v5048 = vsel %vm3100, %v4400, 0.0
      %5049 = vadd.xlane.f32.xlu0 %v5048
      %v5050 = vpop.xlane.xlu0 %5049
      %v5051 = vsel %vm3100, %v4402, 0.0
      %5052 = vadd.xlane.f32.xlu0 %v5051
      %v5053 = vpop.xlane.xlu0 %5052
      %v5054 = vsel %vm3100, %v4404, 0.0
      %5055 = vadd.xlane.f32.xlu0 %v5054
      %v5056 = vpop.xlane.xlu0 %5055
      %v5057 = vsel %vm3100, %v4406, 0.0
      %5058 = vadd.xlane.f32.xlu0 %v5057
      %v5059 = vpop.xlane.xlu0 %5058
      %v5060 = vsel %vm3100, %v4408, 0.0
      %5061 = vadd.xlane.f32.xlu0 %v5060
      %v5062 = vpop.xlane.xlu0 %5061
      %v5063 = vsel %vm3100, %v4410, 0.0
      %5064 = vadd.xlane.f32.xlu0 %v5063
      %v5065 = vpop.xlane.xlu0 %5064
      %v5066 = vsel %vm3100, %v4412, 0.0
      %5067 = vadd.xlane.f32.xlu0 %v5066
      %v5068 = vpop.xlane.xlu0 %5067
      %v5069 = vsel %vm3100, %v4414, 0.0
      %5070 = vadd.xlane.f32.xlu0 %v5069
      %v5071 = vpop.xlane.xlu0 %5070
      %v5072 = vsel %vm3100, %v4416, 0.0
      %5073 = vadd.xlane.f32.xlu0 %v5072
      %v5074 = vpop.xlane.xlu0 %5073
      %v5075 = vsel %vm3100, %v4418, 0.0
      %5076 = vadd.xlane.f32.xlu0 %v5075
      %v5077 = vpop.xlane.xlu0 %5076
      %v5078 = vsel %vm3100, %v4420, 0.0
      %5079 = vadd.xlane.f32.xlu0 %v5078
      %v5080 = vpop.xlane.xlu0 %5079
      %v5081 = vsel %vm3100, %v4422, 0.0
      %5082 = vadd.xlane.f32.xlu0 %v5081
      %v5083 = vpop.xlane.xlu0 %5082
      %v5084 = vsel %vm3100, %v4424, 0.0
      %5085 = vadd.xlane.f32.xlu0 %v5084
      %v5086 = vpop.xlane.xlu0 %5085
      %v5087 = vsel %vm3100, %v4426, 0.0
      %5088 = vadd.xlane.f32.xlu0 %v5087
      %v5089 = vpop.xlane.xlu0 %5088
      %v5090 = vsel %vm3100, %v4428, 0.0
      %5091 = vadd.xlane.f32.xlu0 %v5090
      %v5092 = vpop.xlane.xlu0 %5091
      %v5093 = vsel %vm3100, %v4430, 0.0
      %5094 = vadd.xlane.f32.xlu0 %v5093
      %v5095 = vpop.xlane.xlu0 %5094
      %v5096 = vsel %vm3100, %v4432, 0.0
      %5097 = vadd.xlane.f32.xlu0 %v5096
      %v5098 = vpop.xlane.xlu0 %5097
      %v5099 = vsel %vm3100, %v4434, 0.0
      %5100 = vadd.xlane.f32.xlu0 %v5099
      %v5101 = vpop.xlane.xlu0 %5100
      %v5102 = vsel %vm3100, %v4436, 0.0
      %5103 = vadd.xlane.f32.xlu0 %v5102
      %v5104 = vpop.xlane.xlu0 %5103
      %v5105 = vsel %vm3100, %v4438, 0.0
      %5106 = vadd.xlane.f32.xlu0 %v5105
      %v5107 = vpop.xlane.xlu0 %5106
      %v5108 = vsel %vm3100, %v4440, 0.0
      %5109 = vadd.xlane.f32.xlu0 %v5108
      %v5110 = vpop.xlane.xlu0 %5109
      %v5111 = vsel %vm3100, %v4442, 0.0
      %5112 = vadd.xlane.f32.xlu0 %v5111
      %v5113 = vpop.xlane.xlu0 %5112
      %v5114 = vsel %vm3100, %v4444, 0.0
      %5115 = vadd.xlane.f32.xlu0 %v5114
      %v5116 = vpop.xlane.xlu0 %5115
      %v5117 = vsel %vm3100, %v4446, 0.0
      %5118 = vadd.xlane.f32.xlu0 %v5117
      %v5119 = vpop.xlane.xlu0 %5118
      %v5120 = vsel %vm3100, %v4448, 0.0
      %5121 = vadd.xlane.f32.xlu0 %v5120
      %v5122 = vpop.xlane.xlu0 %5121
      %v5123 = vsel %vm3100, %v4450, 0.0
      %5124 = vadd.xlane.f32.xlu0 %v5123
      %v5125 = vpop.xlane.xlu0 %5124
      %v5126 = vsel %vm3100, %v4452, 0.0
      %5127 = vadd.xlane.f32.xlu0 %v5126
      %v5128 = vpop.xlane.xlu0 %5127
      %v5129 = vsel %vm3100, %v4454, 0.0
      %5130 = vadd.xlane.f32.xlu0 %v5129
      %v5131 = vpop.xlane.xlu0 %5130
      %v5132 = vsel %vm3100, %v4456, 0.0
      %5133 = vadd.xlane.f32.xlu0 %v5132
      %v5134 = vpop.xlane.xlu0 %5133
      %v5135 = vsel %vm3100, %v4458, 0.0
      %5136 = vadd.xlane.f32.xlu0 %v5135
      %v5137 = vpop.xlane.xlu0 %5136
      %v5138 = vsel %vm3100, %v4460, 0.0
      %5139 = vadd.xlane.f32.xlu0 %v5138
      %v5140 = vpop.xlane.xlu0 %5139
      %v5141 = vsel %vm3100, %v4462, 0.0
      %5142 = vadd.xlane.f32.xlu0 %v5141
      %v5143 = vpop.xlane.xlu0 %5142
      %v5144 = vsel %vm3100, %v4464, 0.0
      %5145 = vadd.xlane.f32.xlu0 %v5144
      %v5146 = vpop.xlane.xlu0 %5145
      %v5147 = vsel %vm3100, %v4466, 0.0
      %5148 = vadd.xlane.f32.xlu0 %v5147
      %v5149 = vpop.xlane.xlu0 %5148
      %v5150 = vsel %vm3100, %v4468, 0.0
      %5151 = vadd.xlane.f32.xlu0 %v5150
      %v5152 = vpop.xlane.xlu0 %5151
      %v5153 = vsel %vm3100, %v4470, 0.0
      %5154 = vadd.xlane.f32.xlu0 %v5153
      %v5155 = vpop.xlane.xlu0 %5154
      %v5156 = vsel %vm3100, %v4472, 0.0
      %5157 = vadd.xlane.f32.xlu0 %v5156
      %v5158 = vpop.xlane.xlu0 %5157
      %v5159 = vsel %vm3100, %v4474, 0.0
      %5160 = vadd.xlane.f32.xlu0 %v5159
      %v5161 = vpop.xlane.xlu0 %5160
      %v5162 = vsel %vm3100, %v4476, 0.0
      %5163 = vadd.xlane.f32.xlu0 %v5162
      %v5164 = vpop.xlane.xlu0 %5163
      %v5165 = vsel %vm3100, %v4478, 0.0
      %5166 = vadd.xlane.f32.xlu0 %v5165
      %v5167 = vpop.xlane.xlu0 %5166
      %v5168 = vsel %vm3100, %v4480, 0.0
      %5169 = vadd.xlane.f32.xlu0 %v5168
      %v5170 = vpop.xlane.xlu0 %5169
      %v5171 = vsel %vm3100, %v4482, 0.0
      %5172 = vadd.xlane.f32.xlu0 %v5171
      %v5173 = vpop.xlane.xlu0 %5172
      %v5174 = vsel %vm3100, %v4484, 0.0
      %5175 = vadd.xlane.f32.xlu0 %v5174
      %v5176 = vpop.xlane.xlu0 %5175
      %v5177 = vsel %vm3100, %v4486, 0.0
      %5178 = vadd.xlane.f32.xlu0 %v5177
      %v5179 = vpop.xlane.xlu0 %5178
      %v5180 = vsel %vm3100, %v4488, 0.0
      %5181 = vadd.xlane.f32.xlu0 %v5180
      %v5182 = vpop.xlane.xlu0 %5181
      %v5183 = vsel %vm3100, %v4490, 0.0
      %5184 = vadd.xlane.f32.xlu0 %v5183
      %v5185 = vpop.xlane.xlu0 %5184
      %v5186 = vsel %vm3100, %v4492, 0.0
      %5187 = vadd.xlane.f32.xlu0 %v5186
      %v5188 = vpop.xlane.xlu0 %5187
      %v5189 = vsel %vm3100, %v4494, 0.0
      %5190 = vadd.xlane.f32.xlu0 %v5189
      %v5191 = vpop.xlane.xlu0 %5190
      %v5192 = vsel %vm3100, %v4496, 0.0
      %5193 = vadd.xlane.f32.xlu0 %v5192
      %v5194 = vpop.xlane.xlu0 %5193
      %v5195 = vsel %vm3100, %v4498, 0.0
      %5196 = vadd.xlane.f32.xlu0 %v5195
      %v5197 = vpop.xlane.xlu0 %5196
      %v5198 = vsel %vm3100, %v4500, 0.0
      %5199 = vadd.xlane.f32.xlu0 %v5198
      %v5200 = vpop.xlane.xlu0 %5199
      %v5201 = vsel %vm3100, %v4502, 0.0
      %5202 = vadd.xlane.f32.xlu0 %v5201
      %v5203 = vpop.xlane.xlu0 %5202
      %v5204 = vsel %vm3100, %v4504, 0.0
      %5205 = vadd.xlane.f32.xlu0 %v5204
      %v5206 = vpop.xlane.xlu0 %5205
      %v5207 = vsel %vm3100, %v4506, 0.0
      %5208 = vadd.xlane.f32.xlu0 %v5207
      %v5209 = vpop.xlane.xlu0 %5208
      %v5210 = vsel %vm3100, %v4508, 0.0
      %5211 = vadd.xlane.f32.xlu0 %v5210
      %v5212 = vpop.xlane.xlu0 %5211
      %v5213 = vsel %vm3100, %v4510, 0.0
      %5214 = vadd.xlane.f32.xlu0 %v5213
      %v5215 = vpop.xlane.xlu0 %5214
      %v5216 = vsel %vm3100, %v4512, 0.0
      %5217 = vadd.xlane.f32.xlu0 %v5216
      %v5218 = vpop.xlane.xlu0 %5217
      %v5219 = vsel %vm3100, %v4514, 0.0
      %5220 = vadd.xlane.f32.xlu0 %v5219
      %v5221 = vpop.xlane.xlu0 %5220
      %v5222 = vsel %vm3100, %v4516, 0.0
      %5223 = vadd.xlane.f32.xlu0 %v5222
      %v5224 = vpop.xlane.xlu0 %5223
      %v5225 = vsel %vm3100, %v4518, 0.0
      %5226 = vadd.xlane.f32.xlu0 %v5225
      %v5227 = vpop.xlane.xlu0 %5226
      %v5228 = vsel %vm3100, %v4520, 0.0
      %5229 = vadd.xlane.f32.xlu0 %v5228
      %v5230 = vpop.xlane.xlu0 %5229
      %v5231 = vsel %vm3100, %v4522, 0.0
      %5232 = vadd.xlane.f32.xlu0 %v5231
      %v5233 = vpop.xlane.xlu0 %5232
      %v5234 = vsel %vm3100, %v4524, 0.0
      %5235 = vadd.xlane.f32.xlu0 %v5234
      %v5236 = vpop.xlane.xlu0 %5235
      %v5237 = vsel %vm3100, %v4526, 0.0
      %5238 = vadd.xlane.f32.xlu0 %v5237
      %v5239 = vpop.xlane.xlu0 %5238
      %v5240 = vsel %vm3100, %v4528, 0.0
      %5241 = vadd.xlane.f32.xlu0 %v5240
      %v5242 = vpop.xlane.xlu0 %5241
      %v5243 = vsel %vm3100, %v4530, 0.0
      %5244 = vadd.xlane.f32.xlu0 %v5243
      %v5245 = vpop.xlane.xlu0 %5244
      %v5246 = vsel %vm3100, %v4532, 0.0
      %5247 = vadd.xlane.f32.xlu0 %v5246
      %v5248 = vpop.xlane.xlu0 %5247
      %v5249 = vsel %vm3100, %v4534, 0.0
      %5250 = vadd.xlane.f32.xlu0 %v5249
      %v5251 = vpop.xlane.xlu0 %5250
      %v5252 = vsel %vm3100, %v4536, 0.0
      %5253 = vadd.xlane.f32.xlu0 %v5252
      %v5254 = vpop.xlane.xlu0 %5253
      %v5255 = vsel %vm3100, %v4538, 0.0
      %5256 = vadd.xlane.f32.xlu0 %v5255
      %v5257 = vpop.xlane.xlu0 %5256
      %v5258 = vsel %vm3100, %v4540, 0.0
      %5259 = vadd.xlane.f32.xlu0 %v5258
      %v5260 = vpop.xlane.xlu0 %5259
      %v5261 = vsel %vm3100, %v4542, 0.0
      %5262 = vadd.xlane.f32.xlu0 %v5261
      %v5263 = vpop.xlane.xlu0 %5262
      %v5264 = vsel %vm3100, %v4544, 0.0
      %5265 = vadd.xlane.f32.xlu0 %v5264
      %v5266 = vpop.xlane.xlu0 %5265
      %v5267 = vsel %vm3100, %v4546, 0.0
      %5268 = vadd.xlane.f32.xlu0 %v5267
      %v5269 = vpop.xlane.xlu0 %5268
      %v5270 = vsel %vm3100, %v4548, 0.0
      %5271 = vadd.xlane.f32.xlu0 %v5270
      %v5272 = vpop.xlane.xlu0 %5271
      %v5273 = vsel %vm3100, %v4550, 0.0
      %5274 = vadd.xlane.f32.xlu0 %v5273
      %v5275 = vpop.xlane.xlu0 %5274
      %v5276 = vsel %vm3100, %v4552, 0.0
      %5277 = vadd.xlane.f32.xlu0 %v5276
      %v5278 = vpop.xlane.xlu0 %5277
      %v5279 = vsel %vm3100, %v4554, 0.0
      %5280 = vadd.xlane.f32.xlu0 %v5279
      %v5281 = vpop.xlane.xlu0 %5280
      %v5282 = vsel %vm3100, %v4556, 0.0
      %5283 = vadd.xlane.f32.xlu0 %v5282
      %v5284 = vpop.xlane.xlu0 %5283
      %v5285 = vsel %vm3100, %v4558, 0.0
      %5286 = vadd.xlane.f32.xlu0 %v5285
      %v5287 = vpop.xlane.xlu0 %5286
      %v5288 = vsel %vm3100, %v4560, 0.0
      %5289 = vadd.xlane.f32.xlu0 %v5288
      %v5290 = vpop.xlane.xlu0 %5289
      %v5291 = vsel %vm3100, %v4562, 0.0
      %5292 = vadd.xlane.f32.xlu0 %v5291
      %v5293 = vpop.xlane.xlu0 %5292
      %v5294 = vsel %vm3100, %v4564, 0.0
      %5295 = vadd.xlane.f32.xlu0 %v5294
      %v5296 = vpop.xlane.xlu0 %5295
      %v5297 = vsel %vm3100, %v4566, 0.0
      %5298 = vadd.xlane.f32.xlu0 %v5297
      %v5299 = vpop.xlane.xlu0 %5298
      %v5300 = vsel %vm3100, %v4568, 0.0
      %5301 = vadd.xlane.f32.xlu0 %v5300
      %v5302 = vpop.xlane.xlu0 %5301
      %v5303 = vsel %vm3100, %v4570, 0.0
      %5304 = vadd.xlane.f32.xlu0 %v5303
      %v5305 = vpop.xlane.xlu0 %5304
      %v5306 = vsel %vm3100, %v4572, 0.0
      %5307 = vadd.xlane.f32.xlu0 %v5306
      %v5308 = vpop.xlane.xlu0 %5307
      %v5309 = vsel %vm3100, %v4574, 0.0
      %5310 = vadd.xlane.f32.xlu0 %v5309
      %v5311 = vpop.xlane.xlu0 %5310
      %v5312 = vsel %vm3100, %v4576, 0.0
      %5313 = vadd.xlane.f32.xlu0 %v5312
      %v5314 = vpop.xlane.xlu0 %5313
      %v5315 = vsel %vm3100, %v4578, 0.0
      %5316 = vadd.xlane.f32.xlu0 %v5315
      %v5317 = vpop.xlane.xlu0 %5316
      %v5318 = vsel %vm3100, %v4580, 0.0
      %5319 = vadd.xlane.f32.xlu0 %v5318
      %v5320 = vpop.xlane.xlu0 %5319
      %v5321 = vsel %vm3100, %v4582, 0.0
      %5322 = vadd.xlane.f32.xlu0 %v5321
      %v5323 = vpop.xlane.xlu0 %5322
      %v5324 = vsel %vm3100, %v4584, 0.0
      %5325 = vadd.xlane.f32.xlu0 %v5324
      %v5326 = vpop.xlane.xlu0 %5325
      %v5327 = vsel %vm3100, %v4586, 0.0
      %5328 = vadd.xlane.f32.xlu0 %v5327
      %v5329 = vpop.xlane.xlu0 %5328
      %v5330 = vsel %vm3100, %v4588, 0.0
      %5331 = vadd.xlane.f32.xlu0 %v5330
      %v5332 = vpop.xlane.xlu0 %5331
      %v5333 = vsel %vm3100, %v4590, 0.0
      %5334 = vadd.xlane.f32.xlu0 %v5333
      %v5335 = vpop.xlane.xlu0 %5334
      %v5336 = vsel %vm3100, %v4592, 0.0
      %5337 = vadd.xlane.f32.xlu0 %v5336
      %v5338 = vpop.xlane.xlu0 %5337
      %v5339 = vsel %vm3100, %v4594, 0.0
      %5340 = vadd.xlane.f32.xlu0 %v5339
      %v5341 = vpop.xlane.xlu0 %5340
      %v5342 = vsel %vm3100, %v4596, 0.0
      %5343 = vadd.xlane.f32.xlu0 %v5342
      %v5344 = vpop.xlane.xlu0 %5343
      %v5345 = vsel %vm3100, %v4598, 0.0
      %5346 = vadd.xlane.f32.xlu0 %v5345
      %v5347 = vpop.xlane.xlu0 %5346
      %v5348 = vsel %vm3100, %v4600, 0.0
      %5349 = vadd.xlane.f32.xlu0 %v5348
      %v5350 = vpop.xlane.xlu0 %5349
      %v5351 = vsel %vm3100, %v4602, 0.0
      %5352 = vadd.xlane.f32.xlu0 %v5351
      %v5353 = vpop.xlane.xlu0 %5352
      %v5354 = vsel %vm3100, %v4604, 0.0
      %5355 = vadd.xlane.f32.xlu0 %v5354
      %v5356 = vpop.xlane.xlu0 %5355
      %v5357 = vsel %vm3100, %v4606, 0.0
      %5358 = vadd.xlane.f32.xlu0 %v5357
      %v5359 = vpop.xlane.xlu0 %5358
      %v5360 = vsel %vm3100, %v4608, 0.0
      %5361 = vadd.xlane.f32.xlu0 %v5360
      %v5362 = vpop.xlane.xlu0 %5361
      %v5363 = vsel %vm3100, %v4610, 0.0
      %5364 = vadd.xlane.f32.xlu0 %v5363
      %v5365 = vpop.xlane.xlu0 %5364
      %v5366 = vsel %vm3100, %v4612, 0.0
      %5367 = vadd.xlane.f32.xlu0 %v5366
      %v5368 = vpop.xlane.xlu0 %5367
      %v5369 = vsel %vm3100, %v4614, 0.0
      %5370 = vadd.xlane.f32.xlu0 %v5369
      %v5371 = vpop.xlane.xlu0 %5370
      %v5372 = vsel %vm3100, %v4616, 0.0
      %5373 = vadd.xlane.f32.xlu0 %v5372
      %v5374 = vpop.xlane.xlu0 %5373
      %v5375 = vsel %vm3100, %v4618, 0.0
      %5376 = vadd.xlane.f32.xlu0 %v5375
      %v5377 = vpop.xlane.xlu0 %5376
      %v5378 = vsel %vm3100, %v4620, 0.0
      %5379 = vadd.xlane.f32.xlu0 %v5378
      %v5380 = vpop.xlane.xlu0 %5379
      %v5381 = vsel %vm3100, %v4622, 0.0
      %5382 = vadd.xlane.f32.xlu0 %v5381
      %v5383 = vpop.xlane.xlu0 %5382
      %v5384 = vsel %vm3100, %v4624, 0.0
      %5385 = vadd.xlane.f32.xlu0 %v5384
      %v5386 = vpop.xlane.xlu0 %5385
      %v5387 = vsel %vm3100, %v4626, 0.0
      %5388 = vadd.xlane.f32.xlu0 %v5387
      %v5389 = vpop.xlane.xlu0 %5388
      %v5390 = vsel %vm3100, %v4628, 0.0
      %5391 = vadd.xlane.f32.xlu0 %v5390
      %v5392 = vpop.xlane.xlu0 %5391
      %v5393 = vsel %vm3100, %v4630, 0.0
      %5394 = vadd.xlane.f32.xlu0 %v5393
      %v5395 = vpop.xlane.xlu0 %5394
      %v5396 = vsel %vm3100, %v4632, 0.0
      %5397 = vadd.xlane.f32.xlu0 %v5396
      %v5398 = vpop.xlane.xlu0 %5397
      %v5399 = vsel %vm3100, %v4634, 0.0
      %5400 = vadd.xlane.f32.xlu0 %v5399
      %v5401 = vpop.xlane.xlu0 %5400
      %v5402 = vsel %vm3100, %v4636, 0.0
      %5403 = vadd.xlane.f32.xlu0 %v5402
      %v5404 = vpop.xlane.xlu0 %5403
      %v5405 = vlog2.pop %v4639
      %v5406 = vmul.f32 %v5405, 0.6931472
      %v5407 = vlog2.pop %v4642
      %v5408 = vmul.f32 %v5407, 0.6931472
      %v5409 = vlog2.pop %v4645
      %v5410 = vmul.f32 %v5409, 0.6931472
      %v5411 = vlog2.pop %v4648
      %v5412 = vmul.f32 %v5411, 0.6931472
      %v5413 = vlog2.pop %v4651
      %v5414 = vmul.f32 %v5413, 0.6931472
      %v5415 = vlog2.pop %v4654
      %v5416 = vmul.f32 %v5415, 0.6931472
      %v5417 = vlog2.pop %v4657
      %v5418 = vmul.f32 %v5417, 0.6931472
      %v5419 = vlog2.pop %v4660
      %v5420 = vmul.f32 %v5419, 0.6931472
      %v5421 = vlog2.pop %v4663
      %v5422 = vmul.f32 %v5421, 0.6931472
      %v5423 = vlog2.pop %v4666
      %v5424 = vmul.f32 %v5423, 0.6931472
      %v5425 = vlog2.pop %v4669
      %v5426 = vmul.f32 %v5425, 0.6931472
      %v5427 = vlog2.pop %v4672
      %v5428 = vmul.f32 %v5427, 0.6931472
      %v5429 = vlog2.pop %v4675
      %v5430 = vmul.f32 %v5429, 0.6931472
      %v5431 = vlog2.pop %v4678
      %v5432 = vmul.f32 %v5431, 0.6931472
      %v5433 = vlog2.pop %v4681
      %v5434 = vmul.f32 %v5433, 0.6931472
      %v5435 = vlog2.pop %v4684
      %v5436 = vmul.f32 %v5435, 0.6931472
      %v5437 = vlog2.pop %v4687
      %v5438 = vmul.f32 %v5437, 0.6931472
      %v5439 = vlog2.pop %v4690
      %v5440 = vmul.f32 %v5439, 0.6931472
      %v5441 = vlog2.pop %v4693
      %v5442 = vmul.f32 %v5441, 0.6931472
      %v5443 = vlog2.pop %v4696
      %v5444 = vmul.f32 %v5443, 0.6931472
      %v5445 = vlog2.pop %v4699
      %v5446 = vmul.f32 %v5445, 0.6931472
      %v5447 = vlog2.pop %v4702
      %v5448 = vmul.f32 %v5447, 0.6931472
      %v5449 = vlog2.pop %v4705
      %v5450 = vmul.f32 %v5449, 0.6931472
      %v5451 = vlog2.pop %v4708
      %v5452 = vmul.f32 %v5451, 0.6931472
      %v5453 = vlog2.pop %v4711
      %v5454 = vmul.f32 %v5453, 0.6931472
      %v5455 = vlog2.pop %v4714
      %v5456 = vmul.f32 %v5455, 0.6931472
      %v5457 = vlog2.pop %v4717
      %v5458 = vmul.f32 %v5457, 0.6931472
      %v5459 = vlog2.pop %v4720
      %v5460 = vmul.f32 %v5459, 0.6931472
      %v5461 = vlog2.pop %v4723
      %v5462 = vmul.f32 %v5461, 0.6931472
      %v5463 = vlog2.pop %v4726
      %v5464 = vmul.f32 %v5463, 0.6931472
      %v5465 = vlog2.pop %v4729
      %v5466 = vmul.f32 %v5465, 0.6931472
      %v5467 = vlog2.pop %v4732
      %v5468 = vmul.f32 %v5467, 0.6931472
      %v5469 = vlog2.pop %v4735
      %v5470 = vmul.f32 %v5469, 0.6931472
      %v5471 = vlog2.pop %v4738
      %v5472 = vmul.f32 %v5471, 0.6931472
      %v5473 = vlog2.pop %v4741
      %v5474 = vmul.f32 %v5473, 0.6931472
      %v5475 = vlog2.pop %v4744
      %v5476 = vmul.f32 %v5475, 0.6931472
      %v5477 = vlog2.pop %v4747
      %v5478 = vmul.f32 %v5477, 0.6931472
      %v5479 = vlog2.pop %v4750
      %v5480 = vmul.f32 %v5479, 0.6931472
      %v5481 = vlog2.pop %v4753
      %v5482 = vmul.f32 %v5481, 0.6931472
      %v5483 = vlog2.pop %v4756
      %v5484 = vmul.f32 %v5483, 0.6931472
      %v5485 = vlog2.pop %v4759
      %v5486 = vmul.f32 %v5485, 0.6931472
      %v5487 = vlog2.pop %v4762
      %v5488 = vmul.f32 %v5487, 0.6931472
      %v5489 = vlog2.pop %v4765
      %v5490 = vmul.f32 %v5489, 0.6931472
      %v5491 = vlog2.pop %v4768
      %v5492 = vmul.f32 %v5491, 0.6931472
      %v5493 = vlog2.pop %v4771
      %v5494 = vmul.f32 %v5493, 0.6931472
      %v5495 = vlog2.pop %v4774
      %v5496 = vmul.f32 %v5495, 0.6931472
      %v5497 = vlog2.pop %v4777
      %v5498 = vmul.f32 %v5497, 0.6931472
      %v5499 = vlog2.pop %v4780
      %v5500 = vmul.f32 %v5499, 0.6931472
      %v5501 = vlog2.pop %v4783
      %v5502 = vmul.f32 %v5501, 0.6931472
      %v5503 = vlog2.pop %v4786
      %v5504 = vmul.f32 %v5503, 0.6931472
      %v5505 = vlog2.pop %v4789
      %v5506 = vmul.f32 %v5505, 0.6931472
      %v5507 = vlog2.pop %v4792
      %v5508 = vmul.f32 %v5507, 0.6931472
      %v5509 = vlog2.pop %v4795
      %v5510 = vmul.f32 %v5509, 0.6931472
      %v5511 = vlog2.pop %v4798
      %v5512 = vmul.f32 %v5511, 0.6931472
      %v5513 = vlog2.pop %v4801
      %v5514 = vmul.f32 %v5513, 0.6931472
      %v5515 = vlog2.pop %v4804
      %v5516 = vmul.f32 %v5515, 0.6931472
      %v5517 = vlog2.pop %v4807
      %v5518 = vmul.f32 %v5517, 0.6931472
      %v5519 = vlog2.pop %v4810
      %v5520 = vmul.f32 %v5519, 0.6931472
      %v5521 = vlog2.pop %v4813
      %v5522 = vmul.f32 %v5521, 0.6931472
      %v5523 = vlog2.pop %v4816
      %v5524 = vmul.f32 %v5523, 0.6931472
      %v5525 = vlog2.pop %v4819
      %v5526 = vmul.f32 %v5525, 0.6931472
      %v5527 = vlog2.pop %v4822
      %v5528 = vmul.f32 %v5527, 0.6931472
      %v5529 = vlog2.pop %v4825
      %v5530 = vmul.f32 %v5529, 0.6931472
      %v5531 = vlog2.pop %v4828
      %v5532 = vmul.f32 %v5531, 0.6931472
      %v5533 = vlog2.pop %v4831
      %v5534 = vmul.f32 %v5533, 0.6931472
      %v5535 = vlog2.pop %v4834
      %v5536 = vmul.f32 %v5535, 0.6931472
      %v5537 = vlog2.pop %v4837
      %v5538 = vmul.f32 %v5537, 0.6931472
      %v5539 = vlog2.pop %v4840
      %v5540 = vmul.f32 %v5539, 0.6931472
      %v5541 = vlog2.pop %v4843
      %v5542 = vmul.f32 %v5541, 0.6931472
      %v5543 = vlog2.pop %v4846
      %v5544 = vmul.f32 %v5543, 0.6931472
      %v5545 = vlog2.pop %v4849
      %v5546 = vmul.f32 %v5545, 0.6931472
      %v5547 = vlog2.pop %v4852
      %v5548 = vmul.f32 %v5547, 0.6931472
      %v5549 = vlog2.pop %v4855
      %v5550 = vmul.f32 %v5549, 0.6931472
      %v5551 = vlog2.pop %v4858
      %v5552 = vmul.f32 %v5551, 0.6931472
      %v5553 = vlog2.pop %v4861
      %v5554 = vmul.f32 %v5553, 0.6931472
      %v5555 = vlog2.pop %v4864
      %v5556 = vmul.f32 %v5555, 0.6931472
      %v5557 = vlog2.pop %v4867
      %v5558 = vmul.f32 %v5557, 0.6931472
      %v5559 = vlog2.pop %v4870
      %v5560 = vmul.f32 %v5559, 0.6931472
      %v5561 = vlog2.pop %v4873
      %v5562 = vmul.f32 %v5561, 0.6931472
      %v5563 = vlog2.pop %v4876
      %v5564 = vmul.f32 %v5563, 0.6931472
      %v5565 = vlog2.pop %v4879
      %v5566 = vmul.f32 %v5565, 0.6931472
      %v5567 = vlog2.pop %v4882
      %v5568 = vmul.f32 %v5567, 0.6931472
      %v5569 = vlog2.pop %v4885
      %v5570 = vmul.f32 %v5569, 0.6931472
      %v5571 = vlog2.pop %v4888
      %v5572 = vmul.f32 %v5571, 0.6931472
      %v5573 = vlog2.pop %v4891
      %v5574 = vmul.f32 %v5573, 0.6931472
      %v5575 = vlog2.pop %v4894
      %v5576 = vmul.f32 %v5575, 0.6931472
      %v5577 = vlog2.pop %v4897
      %v5578 = vmul.f32 %v5577, 0.6931472
      %v5579 = vlog2.pop %v4900
      %v5580 = vmul.f32 %v5579, 0.6931472
      %v5581 = vlog2.pop %v4903
      %v5582 = vmul.f32 %v5581, 0.6931472
      %v5583 = vlog2.pop %v4906
      %v5584 = vmul.f32 %v5583, 0.6931472
      %v5585 = vlog2.pop %v4909
      %v5586 = vmul.f32 %v5585, 0.6931472
      %v5587 = vlog2.pop %v4912
      %v5588 = vmul.f32 %v5587, 0.6931472
      %v5589 = vlog2.pop %v4915
      %v5590 = vmul.f32 %v5589, 0.6931472
      %v5591 = vlog2.pop %v4918
      %v5592 = vmul.f32 %v5591, 0.6931472
      %v5593 = vlog2.pop %v4921
      %v5594 = vmul.f32 %v5593, 0.6931472
      %v5595 = vlog2.pop %v4924
      %v5596 = vmul.f32 %v5595, 0.6931472
      %v5597 = vlog2.pop %v4927
      %v5598 = vmul.f32 %v5597, 0.6931472
      %v5599 = vlog2.pop %v4930
      %v5600 = vmul.f32 %v5599, 0.6931472
      %v5601 = vlog2.pop %v4933
      %v5602 = vmul.f32 %v5601, 0.6931472
      %v5603 = vlog2.pop %v4936
      %v5604 = vmul.f32 %v5603, 0.6931472
      %v5605 = vlog2.pop %v4939
      %v5606 = vmul.f32 %v5605, 0.6931472
      %v5607 = vlog2.pop %v4942
      %v5608 = vmul.f32 %v5607, 0.6931472
      %v5609 = vlog2.pop %v4945
      %v5610 = vmul.f32 %v5609, 0.6931472
      %v5611 = vlog2.pop %v4948
      %v5612 = vmul.f32 %v5611, 0.6931472
      %v5613 = vlog2.pop %v4951
      %v5614 = vmul.f32 %v5613, 0.6931472
      %v5615 = vlog2.pop %v4954
      %v5616 = vmul.f32 %v5615, 0.6931472
      %v5617 = vlog2.pop %v4957
      %v5618 = vmul.f32 %v5617, 0.6931472
      %v5619 = vlog2.pop %v4960
      %v5620 = vmul.f32 %v5619, 0.6931472
      %v5621 = vlog2.pop %v4963
      %v5622 = vmul.f32 %v5621, 0.6931472
      %v5623 = vlog2.pop %v4966
      %v5624 = vmul.f32 %v5623, 0.6931472
      %v5625 = vlog2.pop %v4969
      %v5626 = vmul.f32 %v5625, 0.6931472
      %v5627 = vlog2.pop %v4972
      %v5628 = vmul.f32 %v5627, 0.6931472
      %v5629 = vlog2.pop %v4975
      %v5630 = vmul.f32 %v5629, 0.6931472
      %v5631 = vlog2.pop %v4978
      %v5632 = vmul.f32 %v5631, 0.6931472
      %v5633 = vlog2.pop %v4981
      %v5634 = vmul.f32 %v5633, 0.6931472
      %v5635 = vlog2.pop %v4984
      %v5636 = vmul.f32 %v5635, 0.6931472
      %v5637 = vlog2.pop %v4987
      %v5638 = vmul.f32 %v5637, 0.6931472
      %v5639 = vlog2.pop %v4990
      %v5640 = vmul.f32 %v5639, 0.6931472
      %v5641 = vlog2.pop %v4993
      %v5642 = vmul.f32 %v5641, 0.6931472
      %v5643 = vlog2.pop %v4996
      %v5644 = vmul.f32 %v5643, 0.6931472
      %v5645 = vlog2.pop %v4999
      %v5646 = vmul.f32 %v5645, 0.6931472
      %v5647 = vlog2.pop %v5002
      %v5648 = vmul.f32 %v5647, 0.6931472
      %v5649 = vlog2.pop %v5005
      %v5650 = vmul.f32 %v5649, 0.6931472
      %v5651 = vlog2.pop %v5008
      %v5652 = vmul.f32 %v5651, 0.6931472
      %v5653 = vlog2.pop %v5011
      %v5654 = vmul.f32 %v5653, 0.6931472
      %v5655 = vlog2.pop %v5014
      %v5656 = vmul.f32 %v5655, 0.6931472
      %v5657 = vlog2.pop %v5017
      %v5658 = vmul.f32 %v5657, 0.6931472
      %v5659 = vlog2.pop %v5020
      %v5660 = vmul.f32 %v5659, 0.6931472
      %v5661 = vlog2.pop %v5023
      %v5662 = vmul.f32 %v5661, 0.6931472
      %v5663 = vlog2.pop %v5026
      %v5664 = vmul.f32 %v5663, 0.6931472
      %v5665 = vlog2.pop %v5029
      %v5666 = vmul.f32 %v5665, 0.6931472
      %v5667 = vlog2.pop %v5032
      %v5668 = vmul.f32 %v5667, 0.6931472
      %v5669 = vlog2.pop %v5035
      %v5670 = vmul.f32 %v5669, 0.6931472
      %v5671 = vlog2.pop %v5038
      %v5672 = vmul.f32 %v5671, 0.6931472
      %v5673 = vlog2.pop %v5041
      %v5674 = vmul.f32 %v5673, 0.6931472
      %v5675 = vlog2.pop %v5044
      %v5676 = vmul.f32 %v5675, 0.6931472
      %v5677 = vlog2.pop %v5047
      %v5678 = vmul.f32 %v5677, 0.6931472
      %v5679 = vlog2.pop %v5050
      %v5680 = vmul.f32 %v5679, 0.6931472
      %v5681 = vlog2.pop %v5053
      %v5682 = vmul.f32 %v5681, 0.6931472
      %v5683 = vlog2.pop %v5056
      %v5684 = vmul.f32 %v5683, 0.6931472
      %v5685 = vlog2.pop %v5059
      %v5686 = vmul.f32 %v5685, 0.6931472
      %v5687 = vlog2.pop %v5062
      %v5688 = vmul.f32 %v5687, 0.6931472
      %v5689 = vlog2.pop %v5065
      %v5690 = vmul.f32 %v5689, 0.6931472
      %v5691 = vlog2.pop %v5068
      %v5692 = vmul.f32 %v5691, 0.6931472
      %v5693 = vlog2.pop %v5071
      %v5694 = vmul.f32 %v5693, 0.6931472
      %v5695 = vlog2.pop %v5074
      %v5696 = vmul.f32 %v5695, 0.6931472
      %v5697 = vlog2.pop %v5077
      %v5698 = vmul.f32 %v5697, 0.6931472
      %v5699 = vlog2.pop %v5080
      %v5700 = vmul.f32 %v5699, 0.6931472
      %v5701 = vlog2.pop %v5083
      %v5702 = vmul.f32 %v5701, 0.6931472
      %v5703 = vlog2.pop %v5086
      %v5704 = vmul.f32 %v5703, 0.6931472
      %v5705 = vlog2.pop %v5089
      %v5706 = vmul.f32 %v5705, 0.6931472
      %v5707 = vlog2.pop %v5092
      %v5708 = vmul.f32 %v5707, 0.6931472
      %v5709 = vlog2.pop %v5095
      %v5710 = vmul.f32 %v5709, 0.6931472
      %v5711 = vlog2.pop %v5098
      %v5712 = vmul.f32 %v5711, 0.6931472
      %v5713 = vlog2.pop %v5101
      %v5714 = vmul.f32 %v5713, 0.6931472
      %v5715 = vlog2.pop %v5104
      %v5716 = vmul.f32 %v5715, 0.6931472
      %v5717 = vlog2.pop %v5107
      %v5718 = vmul.f32 %v5717, 0.6931472
      %v5719 = vlog2.pop %v5110
      %v5720 = vmul.f32 %v5719, 0.6931472
      %v5721 = vlog2.pop %v5113
      %v5722 = vmul.f32 %v5721, 0.6931472
      %v5723 = vlog2.pop %v5116
      %v5724 = vmul.f32 %v5723, 0.6931472
      %v5725 = vlog2.pop %v5119
      %v5726 = vmul.f32 %v5725, 0.6931472
      %v5727 = vlog2.pop %v5122
      %v5728 = vmul.f32 %v5727, 0.6931472
      %v5729 = vlog2.pop %v5125
      %v5730 = vmul.f32 %v5729, 0.6931472
      %v5731 = vlog2.pop %v5128
      %v5732 = vmul.f32 %v5731, 0.6931472
      %v5733 = vlog2.pop %v5131
      %v5734 = vmul.f32 %v5733, 0.6931472
      %v5735 = vlog2.pop %v5134
      %v5736 = vmul.f32 %v5735, 0.6931472
      %v5737 = vlog2.pop %v5137
      %v5738 = vmul.f32 %v5737, 0.6931472
      %v5739 = vlog2.pop %v5140
      %v5740 = vmul.f32 %v5739, 0.6931472
      %v5741 = vlog2.pop %v5143
      %v5742 = vmul.f32 %v5741, 0.6931472
      %v5743 = vlog2.pop %v5146
      %v5744 = vmul.f32 %v5743, 0.6931472
      %v5745 = vlog2.pop %v5149
      %v5746 = vmul.f32 %v5745, 0.6931472
      %v5747 = vlog2.pop %v5152
      %v5748 = vmul.f32 %v5747, 0.6931472
      %v5749 = vlog2.pop %v5155
      %v5750 = vmul.f32 %v5749, 0.6931472
      %v5751 = vlog2.pop %v5158
      %v5752 = vmul.f32 %v5751, 0.6931472
      %v5753 = vlog2.pop %v5161
      %v5754 = vmul.f32 %v5753, 0.6931472
      %v5755 = vlog2.pop %v5164
      %v5756 = vmul.f32 %v5755, 0.6931472
      %v5757 = vlog2.pop %v5167
      %v5758 = vmul.f32 %v5757, 0.6931472
      %v5759 = vlog2.pop %v5170
      %v5760 = vmul.f32 %v5759, 0.6931472
      %v5761 = vlog2.pop %v5173
      %v5762 = vmul.f32 %v5761, 0.6931472
      %v5763 = vlog2.pop %v5176
      %v5764 = vmul.f32 %v5763, 0.6931472
      %v5765 = vlog2.pop %v5179
      %v5766 = vmul.f32 %v5765, 0.6931472
      %v5767 = vlog2.pop %v5182
      %v5768 = vmul.f32 %v5767, 0.6931472
      %v5769 = vlog2.pop %v5185
      %v5770 = vmul.f32 %v5769, 0.6931472
      %v5771 = vlog2.pop %v5188
      %v5772 = vmul.f32 %v5771, 0.6931472
      %v5773 = vlog2.pop %v5191
      %v5774 = vmul.f32 %v5773, 0.6931472
      %v5775 = vlog2.pop %v5194
      %v5776 = vmul.f32 %v5775, 0.6931472
      %v5777 = vlog2.pop %v5197
      %v5778 = vmul.f32 %v5777, 0.6931472
      %v5779 = vlog2.pop %v5200
      %v5780 = vmul.f32 %v5779, 0.6931472
      %v5781 = vlog2.pop %v5203
      %v5782 = vmul.f32 %v5781, 0.6931472
      %v5783 = vlog2.pop %v5206
      %v5784 = vmul.f32 %v5783, 0.6931472
      %v5785 = vlog2.pop %v5209
      %v5786 = vmul.f32 %v5785, 0.6931472
      %v5787 = vlog2.pop %v5212
      %v5788 = vmul.f32 %v5787, 0.6931472
      %v5789 = vlog2.pop %v5215
      %v5790 = vmul.f32 %v5789, 0.6931472
      %v5791 = vlog2.pop %v5218
      %v5792 = vmul.f32 %v5791, 0.6931472
      %v5793 = vlog2.pop %v5221
      %v5794 = vmul.f32 %v5793, 0.6931472
      %v5795 = vlog2.pop %v5224
      %v5796 = vmul.f32 %v5795, 0.6931472
      %v5797 = vlog2.pop %v5227
      %v5798 = vmul.f32 %v5797, 0.6931472
      %v5799 = vlog2.pop %v5230
      %v5800 = vmul.f32 %v5799, 0.6931472
      %v5801 = vlog2.pop %v5233
      %v5802 = vmul.f32 %v5801, 0.6931472
      %v5803 = vlog2.pop %v5236
      %v5804 = vmul.f32 %v5803, 0.6931472
      %v5805 = vlog2.pop %v5239
      %v5806 = vmul.f32 %v5805, 0.6931472
      %v5807 = vlog2.pop %v5242
      %v5808 = vmul.f32 %v5807, 0.6931472
      %v5809 = vlog2.pop %v5245
      %v5810 = vmul.f32 %v5809, 0.6931472
      %v5811 = vlog2.pop %v5248
      %v5812 = vmul.f32 %v5811, 0.6931472
      %v5813 = vlog2.pop %v5251
      %v5814 = vmul.f32 %v5813, 0.6931472
      %v5815 = vlog2.pop %v5254
      %v5816 = vmul.f32 %v5815, 0.6931472
      %v5817 = vlog2.pop %v5257
      %v5818 = vmul.f32 %v5817, 0.6931472
      %v5819 = vlog2.pop %v5260
      %v5820 = vmul.f32 %v5819, 0.6931472
      %v5821 = vlog2.pop %v5263
      %v5822 = vmul.f32 %v5821, 0.6931472
      %v5823 = vlog2.pop %v5266
      %v5824 = vmul.f32 %v5823, 0.6931472
      %v5825 = vlog2.pop %v5269
      %v5826 = vmul.f32 %v5825, 0.6931472
      %v5827 = vlog2.pop %v5272
      %v5828 = vmul.f32 %v5827, 0.6931472
      %v5829 = vlog2.pop %v5275
      %v5830 = vmul.f32 %v5829, 0.6931472
      %v5831 = vlog2.pop %v5278
      %v5832 = vmul.f32 %v5831, 0.6931472
      %v5833 = vlog2.pop %v5281
      %v5834 = vmul.f32 %v5833, 0.6931472
      %v5835 = vlog2.pop %v5284
      %v5836 = vmul.f32 %v5835, 0.6931472
      %v5837 = vlog2.pop %v5287
      %v5838 = vmul.f32 %v5837, 0.6931472
      %v5839 = vlog2.pop %v5290
      %v5840 = vmul.f32 %v5839, 0.6931472
      %v5841 = vlog2.pop %v5293
      %v5842 = vmul.f32 %v5841, 0.6931472
      %v5843 = vlog2.pop %v5296
      %v5844 = vmul.f32 %v5843, 0.6931472
      %v5845 = vlog2.pop %v5299
      %v5846 = vmul.f32 %v5845, 0.6931472
      %v5847 = vlog2.pop %v5302
      %v5848 = vmul.f32 %v5847, 0.6931472
      %v5849 = vlog2.pop %v5305
      %v5850 = vmul.f32 %v5849, 0.6931472
      %v5851 = vlog2.pop %v5308
      %v5852 = vmul.f32 %v5851, 0.6931472
      %v5853 = vlog2.pop %v5311
      %v5854 = vmul.f32 %v5853, 0.6931472
      %v5855 = vlog2.pop %v5314
      %v5856 = vmul.f32 %v5855, 0.6931472
      %v5857 = vlog2.pop %v5317
      %v5858 = vmul.f32 %v5857, 0.6931472
      %v5859 = vlog2.pop %v5320
      %v5860 = vmul.f32 %v5859, 0.6931472
      %v5861 = vlog2.pop %v5323
      %v5862 = vmul.f32 %v5861, 0.6931472
      %v5863 = vlog2.pop %v5326
      %v5864 = vmul.f32 %v5863, 0.6931472
      %v5865 = vlog2.pop %v5329
      %v5866 = vmul.f32 %v5865, 0.6931472
      %v5867 = vlog2.pop %v5332
      %v5868 = vmul.f32 %v5867, 0.6931472
      %v5869 = vlog2.pop %v5335
      %v5870 = vmul.f32 %v5869, 0.6931472
      %v5871 = vlog2.pop %v5338
      %v5872 = vmul.f32 %v5871, 0.6931472
      %v5873 = vlog2.pop %v5341
      %v5874 = vmul.f32 %v5873, 0.6931472
      %v5875 = vlog2.pop %v5344
      %v5876 = vmul.f32 %v5875, 0.6931472
      %v5877 = vlog2.pop %v5347
      %v5878 = vmul.f32 %v5877, 0.6931472
      %v5879 = vlog2.pop %v5350
      %v5880 = vmul.f32 %v5879, 0.6931472
      %v5881 = vlog2.pop %v5353
      %v5882 = vmul.f32 %v5881, 0.6931472
      %v5883 = vlog2.pop %v5356
      %v5884 = vmul.f32 %v5883, 0.6931472
      %v5885 = vlog2.pop %v5359
      %v5886 = vmul.f32 %v5885, 0.6931472
      %v5887 = vlog2.pop %v5362
      %v5888 = vmul.f32 %v5887, 0.6931472
      %v5889 = vlog2.pop %v5365
      %v5890 = vmul.f32 %v5889, 0.6931472
      %v5891 = vlog2.pop %v5368
      %v5892 = vmul.f32 %v5891, 0.6931472
      %v5893 = vlog2.pop %v5371
      %v5894 = vmul.f32 %v5893, 0.6931472
      %v5895 = vlog2.pop %v5374
      %v5896 = vmul.f32 %v5895, 0.6931472
      %v5897 = vlog2.pop %v5377
      %v5898 = vmul.f32 %v5897, 0.6931472
      %v5899 = vlog2.pop %v5380
      %v5900 = vmul.f32 %v5899, 0.6931472
      %v5901 = vlog2.pop %v5383
      %v5902 = vmul.f32 %v5901, 0.6931472
      %v5903 = vlog2.pop %v5386
      %v5904 = vmul.f32 %v5903, 0.6931472
      %v5905 = vlog2.pop %v5389
      %v5906 = vmul.f32 %v5905, 0.6931472
      %v5907 = vlog2.pop %v5392
      %v5908 = vmul.f32 %v5907, 0.6931472
      %v5909 = vlog2.pop %v5395
      %v5910 = vmul.f32 %v5909, 0.6931472
      %v5911 = vlog2.pop %v5398
      %v5912 = vmul.f32 %v5911, 0.6931472
      %v5913 = vlog2.pop %v5401
      %v5914 = vmul.f32 %v5913, 0.6931472
      %v5915 = vlog2.pop %v5404
      %v5916 = vmul.f32 %v5915, 0.6931472
      %v5917 = vadd.f32 %v3103, %v5406
      %v5918 = vadd.f32 %v3106, %v5408
      %v5919 = vadd.f32 %v3109, %v5410
      %v5920 = vadd.f32 %v3112, %v5412
      %v5921 = vadd.f32 %v3115, %v5414
      %v5922 = vadd.f32 %v3118, %v5416
      %v5923 = vadd.f32 %v3121, %v5418
      %v5924 = vadd.f32 %v3124, %v5420
      %v5925 = vadd.f32 %v3127, %v5422
      %v5926 = vadd.f32 %v3130, %v5424
      %v5927 = vadd.f32 %v3133, %v5426
      %v5928 = vadd.f32 %v3136, %v5428
      %v5929 = vadd.f32 %v3139, %v5430
      %v5930 = vadd.f32 %v3142, %v5432
      %v5931 = vadd.f32 %v3145, %v5434
      %v5932 = vadd.f32 %v3148, %v5436
      %v5933 = vadd.f32 %v3151, %v5438
      %v5934 = vadd.f32 %v3154, %v5440
      %v5935 = vadd.f32 %v3157, %v5442
      %v5936 = vadd.f32 %v3160, %v5444
      %v5937 = vadd.f32 %v3163, %v5446
      %v5938 = vadd.f32 %v3166, %v5448
      %v5939 = vadd.f32 %v3169, %v5450
      %v5940 = vadd.f32 %v3172, %v5452
      %v5941 = vadd.f32 %v3175, %v5454
      %v5942 = vadd.f32 %v3178, %v5456
      %v5943 = vadd.f32 %v3181, %v5458
      %v5944 = vadd.f32 %v3184, %v5460
      %v5945 = vadd.f32 %v3187, %v5462
      %v5946 = vadd.f32 %v3190, %v5464
      %v5947 = vadd.f32 %v3193, %v5466
      %v5948 = vadd.f32 %v3196, %v5468
      %v5949 = vadd.f32 %v3199, %v5470
      %v5950 = vadd.f32 %v3202, %v5472
      %v5951 = vadd.f32 %v3205, %v5474
      %v5952 = vadd.f32 %v3208, %v5476
      %v5953 = vadd.f32 %v3211, %v5478
      %v5954 = vadd.f32 %v3214, %v5480
      %v5955 = vadd.f32 %v3217, %v5482
      %v5956 = vadd.f32 %v3220, %v5484
      %v5957 = vadd.f32 %v3223, %v5486
      %v5958 = vadd.f32 %v3226, %v5488
      %v5959 = vadd.f32 %v3229, %v5490
      %v5960 = vadd.f32 %v3232, %v5492
      %v5961 = vadd.f32 %v3235, %v5494
      %v5962 = vadd.f32 %v3238, %v5496
      %v5963 = vadd.f32 %v3241, %v5498
      %v5964 = vadd.f32 %v3244, %v5500
      %v5965 = vadd.f32 %v3247, %v5502
      %v5966 = vadd.f32 %v3250, %v5504
      %v5967 = vadd.f32 %v3253, %v5506
      %v5968 = vadd.f32 %v3256, %v5508
      %v5969 = vadd.f32 %v3259, %v5510
      %v5970 = vadd.f32 %v3262, %v5512
      %v5971 = vadd.f32 %v3265, %v5514
      %v5972 = vadd.f32 %v3268, %v5516
      %v5973 = vadd.f32 %v3271, %v5518
      %v5974 = vadd.f32 %v3274, %v5520
      %v5975 = vadd.f32 %v3277, %v5522
      %v5976 = vadd.f32 %v3280, %v5524
      %v5977 = vadd.f32 %v3283, %v5526
      %v5978 = vadd.f32 %v3286, %v5528
      %v5979 = vadd.f32 %v3289, %v5530
      %v5980 = vadd.f32 %v3292, %v5532
      %v5981 = vadd.f32 %v3295, %v5534
      %v5982 = vadd.f32 %v3298, %v5536
      %v5983 = vadd.f32 %v3301, %v5538
      %v5984 = vadd.f32 %v3304, %v5540
      %v5985 = vadd.f32 %v3307, %v5542
      %v5986 = vadd.f32 %v3310, %v5544
      %v5987 = vadd.f32 %v3313, %v5546
      %v5988 = vadd.f32 %v3316, %v5548
      %v5989 = vadd.f32 %v3319, %v5550
      %v5990 = vadd.f32 %v3322, %v5552
      %v5991 = vadd.f32 %v3325, %v5554
      %v5992 = vadd.f32 %v3328, %v5556
      %v5993 = vadd.f32 %v3331, %v5558
      %v5994 = vadd.f32 %v3334, %v5560
      %v5995 = vadd.f32 %v3337, %v5562
      %v5996 = vadd.f32 %v3340, %v5564
      %v5997 = vadd.f32 %v3343, %v5566
      %v5998 = vadd.f32 %v3346, %v5568
      %v5999 = vadd.f32 %v3349, %v5570
      %v6000 = vadd.f32 %v3352, %v5572
      %v6001 = vadd.f32 %v3355, %v5574
      %v6002 = vadd.f32 %v3358, %v5576
      %v6003 = vadd.f32 %v3361, %v5578
      %v6004 = vadd.f32 %v3364, %v5580
      %v6005 = vadd.f32 %v3367, %v5582
      %v6006 = vadd.f32 %v3370, %v5584
      %v6007 = vadd.f32 %v3373, %v5586
      %v6008 = vadd.f32 %v3376, %v5588
      %v6009 = vadd.f32 %v3379, %v5590
      %v6010 = vadd.f32 %v3382, %v5592
      %v6011 = vadd.f32 %v3385, %v5594
      %v6012 = vadd.f32 %v3388, %v5596
      %v6013 = vadd.f32 %v3391, %v5598
      %v6014 = vadd.f32 %v3394, %v5600
      %v6015 = vadd.f32 %v3397, %v5602
      %v6016 = vadd.f32 %v3400, %v5604
      %v6017 = vadd.f32 %v3403, %v5606
      %v6018 = vadd.f32 %v3406, %v5608
      %v6019 = vadd.f32 %v3409, %v5610
      %v6020 = vadd.f32 %v3412, %v5612
      %v6021 = vadd.f32 %v3415, %v5614
      %v6022 = vadd.f32 %v3418, %v5616
      %v6023 = vadd.f32 %v3421, %v5618
      %v6024 = vadd.f32 %v3424, %v5620
      %v6025 = vadd.f32 %v3427, %v5622
      %v6026 = vadd.f32 %v3430, %v5624
      %v6027 = vadd.f32 %v3433, %v5626
      %v6028 = vadd.f32 %v3436, %v5628
      %v6029 = vadd.f32 %v3439, %v5630
      %v6030 = vadd.f32 %v3442, %v5632
      %v6031 = vadd.f32 %v3445, %v5634
      %v6032 = vadd.f32 %v3448, %v5636
      %v6033 = vadd.f32 %v3451, %v5638
      %v6034 = vadd.f32 %v3454, %v5640
      %v6035 = vadd.f32 %v3457, %v5642
      %v6036 = vadd.f32 %v3460, %v5644
      %v6037 = vadd.f32 %v3463, %v5646
      %v6038 = vadd.f32 %v3466, %v5648
      %v6039 = vadd.f32 %v3469, %v5650
      %v6040 = vadd.f32 %v3472, %v5652
      %v6041 = vadd.f32 %v3475, %v5654
      %v6042 = vadd.f32 %v3478, %v5656
      %v6043 = vadd.f32 %v3481, %v5658
      %v6044 = vadd.f32 %v3484, %v5660
      %v6045 = vadd.f32 %v3487, %v5662
      %v6046 = vadd.f32 %v3490, %v5664
      %v6047 = vadd.f32 %v3493, %v5666
      %v6048 = vadd.f32 %v3496, %v5668
      %v6049 = vadd.f32 %v3499, %v5670
      %v6050 = vadd.f32 %v3502, %v5672
      %v6051 = vadd.f32 %v3505, %v5674
      %v6052 = vadd.f32 %v3508, %v5676
      %v6053 = vadd.f32 %v3511, %v5678
      %v6054 = vadd.f32 %v3514, %v5680
      %v6055 = vadd.f32 %v3517, %v5682
      %v6056 = vadd.f32 %v3520, %v5684
      %v6057 = vadd.f32 %v3523, %v5686
      %v6058 = vadd.f32 %v3526, %v5688
      %v6059 = vadd.f32 %v3529, %v5690
      %v6060 = vadd.f32 %v3532, %v5692
      %v6061 = vadd.f32 %v3535, %v5694
      %v6062 = vadd.f32 %v3538, %v5696
      %v6063 = vadd.f32 %v3541, %v5698
      %v6064 = vadd.f32 %v3544, %v5700
      %v6065 = vadd.f32 %v3547, %v5702
      %v6066 = vadd.f32 %v3550, %v5704
      %v6067 = vadd.f32 %v3553, %v5706
      %v6068 = vadd.f32 %v3556, %v5708
      %v6069 = vadd.f32 %v3559, %v5710
      %v6070 = vadd.f32 %v3562, %v5712
      %v6071 = vadd.f32 %v3565, %v5714
      %v6072 = vadd.f32 %v3568, %v5716
      %v6073 = vadd.f32 %v3571, %v5718
      %v6074 = vadd.f32 %v3574, %v5720
      %v6075 = vadd.f32 %v3577, %v5722
      %v6076 = vadd.f32 %v3580, %v5724
      %v6077 = vadd.f32 %v3583, %v5726
      %v6078 = vadd.f32 %v3586, %v5728
      %v6079 = vadd.f32 %v3589, %v5730
      %v6080 = vadd.f32 %v3592, %v5732
      %v6081 = vadd.f32 %v3595, %v5734
      %v6082 = vadd.f32 %v3598, %v5736
      %v6083 = vadd.f32 %v3601, %v5738
      %v6084 = vadd.f32 %v3604, %v5740
      %v6085 = vadd.f32 %v3607, %v5742
      %v6086 = vadd.f32 %v3610, %v5744
      %v6087 = vadd.f32 %v3613, %v5746
      %v6088 = vadd.f32 %v3616, %v5748
      %v6089 = vadd.f32 %v3619, %v5750
      %v6090 = vadd.f32 %v3622, %v5752
      %v6091 = vadd.f32 %v3625, %v5754
      %v6092 = vadd.f32 %v3628, %v5756
      %v6093 = vadd.f32 %v3631, %v5758
      %v6094 = vadd.f32 %v3634, %v5760
      %v6095 = vadd.f32 %v3637, %v5762
      %v6096 = vadd.f32 %v3640, %v5764
      %v6097 = vadd.f32 %v3643, %v5766
      %v6098 = vadd.f32 %v3646, %v5768
      %v6099 = vadd.f32 %v3649, %v5770
      %v6100 = vadd.f32 %v3652, %v5772
      %v6101 = vadd.f32 %v3655, %v5774
      %v6102 = vadd.f32 %v3658, %v5776
      %v6103 = vadd.f32 %v3661, %v5778
      %v6104 = vadd.f32 %v3664, %v5780
      %v6105 = vadd.f32 %v3667, %v5782
      %v6106 = vadd.f32 %v3670, %v5784
      %v6107 = vadd.f32 %v3673, %v5786
      %v6108 = vadd.f32 %v3676, %v5788
      %v6109 = vadd.f32 %v3679, %v5790
      %v6110 = vadd.f32 %v3682, %v5792
      %v6111 = vadd.f32 %v3685, %v5794
      %v6112 = vadd.f32 %v3688, %v5796
      %v6113 = vadd.f32 %v3691, %v5798
      %v6114 = vadd.f32 %v3694, %v5800
      %v6115 = vadd.f32 %v3697, %v5802
      %v6116 = vadd.f32 %v3700, %v5804
      %v6117 = vadd.f32 %v3703, %v5806
      %v6118 = vadd.f32 %v3706, %v5808
      %v6119 = vadd.f32 %v3709, %v5810
      %v6120 = vadd.f32 %v3712, %v5812
      %v6121 = vadd.f32 %v3715, %v5814
      %v6122 = vadd.f32 %v3718, %v5816
      %v6123 = vadd.f32 %v3721, %v5818
      %v6124 = vadd.f32 %v3724, %v5820
      %v6125 = vadd.f32 %v3727, %v5822
      %v6126 = vadd.f32 %v3730, %v5824
      %v6127 = vadd.f32 %v3733, %v5826
      %v6128 = vadd.f32 %v3736, %v5828
      %v6129 = vadd.f32 %v3739, %v5830
      %v6130 = vadd.f32 %v3742, %v5832
      %v6131 = vadd.f32 %v3745, %v5834
      %v6132 = vadd.f32 %v3748, %v5836
      %v6133 = vadd.f32 %v3751, %v5838
      %v6134 = vadd.f32 %v3754, %v5840
      %v6135 = vadd.f32 %v3757, %v5842
      %v6136 = vadd.f32 %v3760, %v5844
      %v6137 = vadd.f32 %v3763, %v5846
      %v6138 = vadd.f32 %v3766, %v5848
      %v6139 = vadd.f32 %v3769, %v5850
      %v6140 = vadd.f32 %v3772, %v5852
      %v6141 = vadd.f32 %v3775, %v5854
      %v6142 = vadd.f32 %v3778, %v5856
      %v6143 = vadd.f32 %v3781, %v5858
      %v6144 = vadd.f32 %v3784, %v5860
      %v6145 = vadd.f32 %v3787, %v5862
      %v6146 = vadd.f32 %v3790, %v5864
      %v6147 = vadd.f32 %v3793, %v5866
      %v6148 = vadd.f32 %v3796, %v5868
      %v6149 = vadd.f32 %v3799, %v5870
      %v6150 = vadd.f32 %v3802, %v5872
      %v6151 = vadd.f32 %v3805, %v5874
      %v6152 = vadd.f32 %v3808, %v5876
      %v6153 = vadd.f32 %v3811, %v5878
      %v6154 = vadd.f32 %v3814, %v5880
      %v6155 = vadd.f32 %v3817, %v5882
      %v6156 = vadd.f32 %v3820, %v5884
      %v6157 = vadd.f32 %v3823, %v5886
      %v6158 = vadd.f32 %v3826, %v5888
      %v6159 = vadd.f32 %v3829, %v5890
      %v6160 = vadd.f32 %v3832, %v5892
      %v6161 = vadd.f32 %v3835, %v5894
      %v6162 = vadd.f32 %v3838, %v5896
      %v6163 = vadd.f32 %v3841, %v5898
      %v6164 = vadd.f32 %v3844, %v5900
      %v6165 = vadd.f32 %v3847, %v5902
      %v6166 = vadd.f32 %v3850, %v5904
      %v6167 = vadd.f32 %v3853, %v5906
      %v6168 = vadd.f32 %v3856, %v5908
      %v6169 = vadd.f32 %v3859, %v5910
      %v6170 = vadd.f32 %v3862, %v5912
      %v6171 = vadd.f32 %v3865, %v5914
      %v6172 = vadd.f32 %v3868, %v5916
      %v6173 = vlaneseq
      %v6174 = vand.u32 %v6173, 127
      %6175 = vset.pattern.permute.xlu0 0
      %6176 = vperm.xlu0 %6175, %v538
      %v6177 = vpop.permute.xlu0 %6176
      %6178 = vset.pattern.permute.xlu0 0
      %6179 = vperm.xlu0 %6178, %v539
      %v6180 = vpop.permute.xlu0 %6179
      %6181 = vset.pattern.permute.xlu0 0
      %6182 = vperm.xlu0 %6181, %v540
      %v6183 = vpop.permute.xlu0 %6182
      %6184 = vset.pattern.permute.xlu0 0
      %6185 = vperm.xlu0 %6184, %v541
      %v6186 = vpop.permute.xlu0 %6185
      %6187 = vset.pattern.permute.xlu0 0
      %6188 = vperm.xlu0 %6187, %v542
      %v6189 = vpop.permute.xlu0 %6188
      %6190 = vset.pattern.permute.xlu0 0
      %6191 = vperm.xlu0 %6190, %v543
      %v6192 = vpop.permute.xlu0 %6191
      %6193 = vset.pattern.permute.xlu0 0
      %6194 = vperm.xlu0 %6193, %v544
      %v6195 = vpop.permute.xlu0 %6194
      %6196 = vset.pattern.permute.xlu0 0
      %6197 = vperm.xlu0 %6196, %v545
      %v6198 = vpop.permute.xlu0 %6197
      %6199 = vset.pattern.permute.xlu0 0
      %6200 = vperm.xlu0 %6199, %v546
      %v6201 = vpop.permute.xlu0 %6200
      %6202 = vset.pattern.permute.xlu0 0
      %6203 = vperm.xlu0 %6202, %v547
      %v6204 = vpop.permute.xlu0 %6203
      %6205 = vset.pattern.permute.xlu0 0
      %6206 = vperm.xlu0 %6205, %v548
      %v6207 = vpop.permute.xlu0 %6206
      %6208 = vset.pattern.permute.xlu0 0
      %6209 = vperm.xlu0 %6208, %v549
      %v6210 = vpop.permute.xlu0 %6209
      %6211 = vset.pattern.permute.xlu0 0
      %6212 = vperm.xlu0 %6211, %v550
      %v6213 = vpop.permute.xlu0 %6212
      %6214 = vset.pattern.permute.xlu0 0
      %6215 = vperm.xlu0 %6214, %v551
      %v6216 = vpop.permute.xlu0 %6215
      %6217 = vset.pattern.permute.xlu0 0
      %6218 = vperm.xlu0 %6217, %v552
      %v6219 = vpop.permute.xlu0 %6218
      %6220 = vset.pattern.permute.xlu0 0
      %6221 = vperm.xlu0 %6220, %v553
      %v6222 = vpop.permute.xlu0 %6221
      %6223 = vset.pattern.permute.xlu0 0
      %6224 = vperm.xlu0 %6223, %v554
      %v6225 = vpop.permute.xlu0 %6224
      %6226 = vset.pattern.permute.xlu0 0
      %6227 = vperm.xlu0 %6226, %v555
      %v6228 = vpop.permute.xlu0 %6227
      %6229 = vset.pattern.permute.xlu0 0
      %6230 = vperm.xlu0 %6229, %v556
      %v6231 = vpop.permute.xlu0 %6230
      %6232 = vset.pattern.permute.xlu0 0
      %6233 = vperm.xlu0 %6232, %v557
      %v6234 = vpop.permute.xlu0 %6233
      %6235 = vset.pattern.permute.xlu0 0
      %6236 = vperm.xlu0 %6235, %v558
      %v6237 = vpop.permute.xlu0 %6236
      %6238 = vset.pattern.permute.xlu0 0
      %6239 = vperm.xlu0 %6238, %v559
      %v6240 = vpop.permute.xlu0 %6239
      %6241 = vset.pattern.permute.xlu0 0
      %6242 = vperm.xlu0 %6241, %v560
      %v6243 = vpop.permute.xlu0 %6242
      %6244 = vset.pattern.permute.xlu0 0
      %6245 = vperm.xlu0 %6244, %v561
      %v6246 = vpop.permute.xlu0 %6245
      %6247 = vset.pattern.permute.xlu0 0
      %6248 = vperm.xlu0 %6247, %v562
      %v6249 = vpop.permute.xlu0 %6248
      %6250 = vset.pattern.permute.xlu0 0
      %6251 = vperm.xlu0 %6250, %v563
      %v6252 = vpop.permute.xlu0 %6251
      %6253 = vset.pattern.permute.xlu0 0
      %6254 = vperm.xlu0 %6253, %v564
      %v6255 = vpop.permute.xlu0 %6254
      %6256 = vset.pattern.permute.xlu0 0
      %6257 = vperm.xlu0 %6256, %v565
      %v6258 = vpop.permute.xlu0 %6257
      %6259 = vset.pattern.permute.xlu0 0
      %6260 = vperm.xlu0 %6259, %v566
      %v6261 = vpop.permute.xlu0 %6260
      %6262 = vset.pattern.permute.xlu0 0
      %6263 = vperm.xlu0 %6262, %v567
      %v6264 = vpop.permute.xlu0 %6263
      %6265 = vset.pattern.permute.xlu0 0
      %6266 = vperm.xlu0 %6265, %v568
      %v6267 = vpop.permute.xlu0 %6266
      %6268 = vset.pattern.permute.xlu0 0
      %6269 = vperm.xlu0 %6268, %v569
      %v6270 = vpop.permute.xlu0 %6269
      %6271 = vset.pattern.permute.xlu0 0
      %6272 = vperm.xlu0 %6271, %v570
      %v6273 = vpop.permute.xlu0 %6272
      %6274 = vset.pattern.permute.xlu0 0
      %6275 = vperm.xlu0 %6274, %v571
      %v6276 = vpop.permute.xlu0 %6275
      %6277 = vset.pattern.permute.xlu0 0
      %6278 = vperm.xlu0 %6277, %v572
      %v6279 = vpop.permute.xlu0 %6278
      %6280 = vset.pattern.permute.xlu0 0
      %6281 = vperm.xlu0 %6280, %v573
      %v6282 = vpop.permute.xlu0 %6281
      %6283 = vset.pattern.permute.xlu0 0
      %6284 = vperm.xlu0 %6283, %v574
      %v6285 = vpop.permute.xlu0 %6284
      %6286 = vset.pattern.permute.xlu0 0
      %6287 = vperm.xlu0 %6286, %v575
      %v6288 = vpop.permute.xlu0 %6287
      %6289 = vset.pattern.permute.xlu0 0
      %6290 = vperm.xlu0 %6289, %v576
      %v6291 = vpop.permute.xlu0 %6290
      %6292 = vset.pattern.permute.xlu0 0
      %6293 = vperm.xlu0 %6292, %v577
      %v6294 = vpop.permute.xlu0 %6293
      %6295 = vset.pattern.permute.xlu0 0
      %6296 = vperm.xlu0 %6295, %v578
      %v6297 = vpop.permute.xlu0 %6296
      %6298 = vset.pattern.permute.xlu0 0
      %6299 = vperm.xlu0 %6298, %v579
      %v6300 = vpop.permute.xlu0 %6299
      %6301 = vset.pattern.permute.xlu0 0
      %6302 = vperm.xlu0 %6301, %v580
      %v6303 = vpop.permute.xlu0 %6302
      %6304 = vset.pattern.permute.xlu0 0
      %6305 = vperm.xlu0 %6304, %v581
      %v6306 = vpop.permute.xlu0 %6305
      %6307 = vset.pattern.permute.xlu0 0
      %6308 = vperm.xlu0 %6307, %v582
      %v6309 = vpop.permute.xlu0 %6308
      %6310 = vset.pattern.permute.xlu0 0
      %6311 = vperm.xlu0 %6310, %v583
      %v6312 = vpop.permute.xlu0 %6311
      %6313 = vset.pattern.permute.xlu0 0
      %6314 = vperm.xlu0 %6313, %v584
      %v6315 = vpop.permute.xlu0 %6314
      %6316 = vset.pattern.permute.xlu0 0
      %6317 = vperm.xlu0 %6316, %v585
      %v6318 = vpop.permute.xlu0 %6317
      %6319 = vset.pattern.permute.xlu0 0
      %6320 = vperm.xlu0 %6319, %v586
      %v6321 = vpop.permute.xlu0 %6320
      %6322 = vset.pattern.permute.xlu0 0
      %6323 = vperm.xlu0 %6322, %v587
      %v6324 = vpop.permute.xlu0 %6323
      %6325 = vset.pattern.permute.xlu0 0
      %6326 = vperm.xlu0 %6325, %v588
      %v6327 = vpop.permute.xlu0 %6326
      %6328 = vset.pattern.permute.xlu0 0
      %6329 = vperm.xlu0 %6328, %v589
      %v6330 = vpop.permute.xlu0 %6329
      %6331 = vset.pattern.permute.xlu0 0
      %6332 = vperm.xlu0 %6331, %v590
      %v6333 = vpop.permute.xlu0 %6332
      %6334 = vset.pattern.permute.xlu0 0
      %6335 = vperm.xlu0 %6334, %v591
      %v6336 = vpop.permute.xlu0 %6335
      %6337 = vset.pattern.permute.xlu0 0
      %6338 = vperm.xlu0 %6337, %v592
      %v6339 = vpop.permute.xlu0 %6338
      %6340 = vset.pattern.permute.xlu0 0
      %6341 = vperm.xlu0 %6340, %v593
      %v6342 = vpop.permute.xlu0 %6341
      %6343 = vset.pattern.permute.xlu0 0
      %6344 = vperm.xlu0 %6343, %v594
      %v6345 = vpop.permute.xlu0 %6344
      %6346 = vset.pattern.permute.xlu0 0
      %6347 = vperm.xlu0 %6346, %v595
      %v6348 = vpop.permute.xlu0 %6347
      %6349 = vset.pattern.permute.xlu0 0
      %6350 = vperm.xlu0 %6349, %v596
      %v6351 = vpop.permute.xlu0 %6350
      %6352 = vset.pattern.permute.xlu0 0
      %6353 = vperm.xlu0 %6352, %v597
      %v6354 = vpop.permute.xlu0 %6353
      %6355 = vset.pattern.permute.xlu0 0
      %6356 = vperm.xlu0 %6355, %v598
      %v6357 = vpop.permute.xlu0 %6356
      %6358 = vset.pattern.permute.xlu0 0
      %6359 = vperm.xlu0 %6358, %v599
      %v6360 = vpop.permute.xlu0 %6359
      %6361 = vset.pattern.permute.xlu0 0
      %6362 = vperm.xlu0 %6361, %v600
      %v6363 = vpop.permute.xlu0 %6362
      %6364 = vset.pattern.permute.xlu0 0
      %6365 = vperm.xlu0 %6364, %v601
      %v6366 = vpop.permute.xlu0 %6365
      %6367 = vset.pattern.permute.xlu0 0
      %6368 = vperm.xlu0 %6367, %v602
      %v6369 = vpop.permute.xlu0 %6368
      %6370 = vset.pattern.permute.xlu0 0
      %6371 = vperm.xlu0 %6370, %v603
      %v6372 = vpop.permute.xlu0 %6371
      %6373 = vset.pattern.permute.xlu0 0
      %6374 = vperm.xlu0 %6373, %v604
      %v6375 = vpop.permute.xlu0 %6374
      %6376 = vset.pattern.permute.xlu0 0
      %6377 = vperm.xlu0 %6376, %v605
      %v6378 = vpop.permute.xlu0 %6377
      %6379 = vset.pattern.permute.xlu0 0
      %6380 = vperm.xlu0 %6379, %v606
      %v6381 = vpop.permute.xlu0 %6380
      %6382 = vset.pattern.permute.xlu0 0
      %6383 = vperm.xlu0 %6382, %v607
      %v6384 = vpop.permute.xlu0 %6383
      %6385 = vset.pattern.permute.xlu0 0
      %6386 = vperm.xlu0 %6385, %v608
      %v6387 = vpop.permute.xlu0 %6386
      %6388 = vset.pattern.permute.xlu0 0
      %6389 = vperm.xlu0 %6388, %v609
      %v6390 = vpop.permute.xlu0 %6389
      %6391 = vset.pattern.permute.xlu0 0
      %6392 = vperm.xlu0 %6391, %v610
      %v6393 = vpop.permute.xlu0 %6392
      %6394 = vset.pattern.permute.xlu0 0
      %6395 = vperm.xlu0 %6394, %v611
      %v6396 = vpop.permute.xlu0 %6395
      %6397 = vset.pattern.permute.xlu0 0
      %6398 = vperm.xlu0 %6397, %v612
      %v6399 = vpop.permute.xlu0 %6398
      %6400 = vset.pattern.permute.xlu0 0
      %6401 = vperm.xlu0 %6400, %v613
      %v6402 = vpop.permute.xlu0 %6401
      %6403 = vset.pattern.permute.xlu0 0
      %6404 = vperm.xlu0 %6403, %v614
      %v6405 = vpop.permute.xlu0 %6404
      %6406 = vset.pattern.permute.xlu0 0
      %6407 = vperm.xlu0 %6406, %v615
      %v6408 = vpop.permute.xlu0 %6407
      %6409 = vset.pattern.permute.xlu0 0
      %6410 = vperm.xlu0 %6409, %v616
      %v6411 = vpop.permute.xlu0 %6410
      %6412 = vset.pattern.permute.xlu0 0
      %6413 = vperm.xlu0 %6412, %v617
      %v6414 = vpop.permute.xlu0 %6413
      %6415 = vset.pattern.permute.xlu0 0
      %6416 = vperm.xlu0 %6415, %v618
      %v6417 = vpop.permute.xlu0 %6416
      %6418 = vset.pattern.permute.xlu0 0
      %6419 = vperm.xlu0 %6418, %v619
      %v6420 = vpop.permute.xlu0 %6419
      %6421 = vset.pattern.permute.xlu0 0
      %6422 = vperm.xlu0 %6421, %v620
      %v6423 = vpop.permute.xlu0 %6422
      %6424 = vset.pattern.permute.xlu0 0
      %6425 = vperm.xlu0 %6424, %v621
      %v6426 = vpop.permute.xlu0 %6425
      %6427 = vset.pattern.permute.xlu0 0
      %6428 = vperm.xlu0 %6427, %v622
      %v6429 = vpop.permute.xlu0 %6428
      %6430 = vset.pattern.permute.xlu0 0
      %6431 = vperm.xlu0 %6430, %v623
      %v6432 = vpop.permute.xlu0 %6431
      %6433 = vset.pattern.permute.xlu0 0
      %6434 = vperm.xlu0 %6433, %v624
      %v6435 = vpop.permute.xlu0 %6434
      %6436 = vset.pattern.permute.xlu0 0
      %6437 = vperm.xlu0 %6436, %v625
      %v6438 = vpop.permute.xlu0 %6437
      %6439 = vset.pattern.permute.xlu0 0
      %6440 = vperm.xlu0 %6439, %v626
      %v6441 = vpop.permute.xlu0 %6440
      %6442 = vset.pattern.permute.xlu0 0
      %6443 = vperm.xlu0 %6442, %v627
      %v6444 = vpop.permute.xlu0 %6443
      %6445 = vset.pattern.permute.xlu0 0
      %6446 = vperm.xlu0 %6445, %v628
      %v6447 = vpop.permute.xlu0 %6446
      %6448 = vset.pattern.permute.xlu0 0
      %6449 = vperm.xlu0 %6448, %v629
      %v6450 = vpop.permute.xlu0 %6449
      %6451 = vset.pattern.permute.xlu0 0
      %6452 = vperm.xlu0 %6451, %v630
      %v6453 = vpop.permute.xlu0 %6452
      %6454 = vset.pattern.permute.xlu0 0
      %6455 = vperm.xlu0 %6454, %v631
      %v6456 = vpop.permute.xlu0 %6455
      %6457 = vset.pattern.permute.xlu0 0
      %6458 = vperm.xlu0 %6457, %v632
      %v6459 = vpop.permute.xlu0 %6458
      %6460 = vset.pattern.permute.xlu0 0
      %6461 = vperm.xlu0 %6460, %v633
      %v6462 = vpop.permute.xlu0 %6461
      %6463 = vset.pattern.permute.xlu0 0
      %6464 = vperm.xlu0 %6463, %v634
      %v6465 = vpop.permute.xlu0 %6464
      %6466 = vset.pattern.permute.xlu0 0
      %6467 = vperm.xlu0 %6466, %v635
      %v6468 = vpop.permute.xlu0 %6467
      %6469 = vset.pattern.permute.xlu0 0
      %6470 = vperm.xlu0 %6469, %v636
      %v6471 = vpop.permute.xlu0 %6470
      %6472 = vset.pattern.permute.xlu0 0
      %6473 = vperm.xlu0 %6472, %v637
      %v6474 = vpop.permute.xlu0 %6473
      %6475 = vset.pattern.permute.xlu0 0
      %6476 = vperm.xlu0 %6475, %v638
      %v6477 = vpop.permute.xlu0 %6476
      %6478 = vset.pattern.permute.xlu0 0
      %6479 = vperm.xlu0 %6478, %v639
      %v6480 = vpop.permute.xlu0 %6479
      %6481 = vset.pattern.permute.xlu0 0
      %6482 = vperm.xlu0 %6481, %v640
      %v6483 = vpop.permute.xlu0 %6482
      %6484 = vset.pattern.permute.xlu0 0
      %6485 = vperm.xlu0 %6484, %v641
      %v6486 = vpop.permute.xlu0 %6485
      %6487 = vset.pattern.permute.xlu0 0
      %6488 = vperm.xlu0 %6487, %v642
      %v6489 = vpop.permute.xlu0 %6488
      %6490 = vset.pattern.permute.xlu0 0
      %6491 = vperm.xlu0 %6490, %v643
      %v6492 = vpop.permute.xlu0 %6491
      %6493 = vset.pattern.permute.xlu0 0
      %6494 = vperm.xlu0 %6493, %v644
      %v6495 = vpop.permute.xlu0 %6494
      %6496 = vset.pattern.permute.xlu0 0
      %6497 = vperm.xlu0 %6496, %v645
      %v6498 = vpop.permute.xlu0 %6497
      %6499 = vset.pattern.permute.xlu0 0
      %6500 = vperm.xlu0 %6499, %v646
      %v6501 = vpop.permute.xlu0 %6500
      %6502 = vset.pattern.permute.xlu0 0
      %6503 = vperm.xlu0 %6502, %v647
      %v6504 = vpop.permute.xlu0 %6503
      %6505 = vset.pattern.permute.xlu0 0
      %6506 = vperm.xlu0 %6505, %v648
      %v6507 = vpop.permute.xlu0 %6506
      %6508 = vset.pattern.permute.xlu0 0
      %6509 = vperm.xlu0 %6508, %v649
      %v6510 = vpop.permute.xlu0 %6509
      %6511 = vset.pattern.permute.xlu0 0
      %6512 = vperm.xlu0 %6511, %v650
      %v6513 = vpop.permute.xlu0 %6512
      %6514 = vset.pattern.permute.xlu0 0
      %6515 = vperm.xlu0 %6514, %v651
      %v6516 = vpop.permute.xlu0 %6515
      %6517 = vset.pattern.permute.xlu0 0
      %6518 = vperm.xlu0 %6517, %v652
      %v6519 = vpop.permute.xlu0 %6518
      %6520 = vset.pattern.permute.xlu0 0
      %6521 = vperm.xlu0 %6520, %v653
      %v6522 = vpop.permute.xlu0 %6521
      %6523 = vset.pattern.permute.xlu0 0
      %6524 = vperm.xlu0 %6523, %v654
      %v6525 = vpop.permute.xlu0 %6524
      %6526 = vset.pattern.permute.xlu0 0
      %6527 = vperm.xlu0 %6526, %v655
      %v6528 = vpop.permute.xlu0 %6527
      %6529 = vset.pattern.permute.xlu0 0
      %6530 = vperm.xlu0 %6529, %v656
      %v6531 = vpop.permute.xlu0 %6530
      %6532 = vset.pattern.permute.xlu0 0
      %6533 = vperm.xlu0 %6532, %v657
      %v6534 = vpop.permute.xlu0 %6533
      %6535 = vset.pattern.permute.xlu0 0
      %6536 = vperm.xlu0 %6535, %v658
      %v6537 = vpop.permute.xlu0 %6536
      %6538 = vset.pattern.permute.xlu0 0
      %6539 = vperm.xlu0 %6538, %v659
      %v6540 = vpop.permute.xlu0 %6539
      %6541 = vset.pattern.permute.xlu0 0
      %6542 = vperm.xlu0 %6541, %v660
      %v6543 = vpop.permute.xlu0 %6542
      %6544 = vset.pattern.permute.xlu0 0
      %6545 = vperm.xlu0 %6544, %v661
      %v6546 = vpop.permute.xlu0 %6545
      %6547 = vset.pattern.permute.xlu0 0
      %6548 = vperm.xlu0 %6547, %v662
      %v6549 = vpop.permute.xlu0 %6548
      %6550 = vset.pattern.permute.xlu0 0
      %6551 = vperm.xlu0 %6550, %v663
      %v6552 = vpop.permute.xlu0 %6551
      %6553 = vset.pattern.permute.xlu0 0
      %6554 = vperm.xlu0 %6553, %v664
      %v6555 = vpop.permute.xlu0 %6554
      %6556 = vset.pattern.permute.xlu0 0
      %6557 = vperm.xlu0 %6556, %v665
      %v6558 = vpop.permute.xlu0 %6557
      %6559 = vset.pattern.permute.xlu0 0
      %6560 = vperm.xlu0 %6559, %v666
      %v6561 = vpop.permute.xlu0 %6560
      %6562 = vset.pattern.permute.xlu0 0
      %6563 = vperm.xlu0 %6562, %v667
      %v6564 = vpop.permute.xlu0 %6563
      %6565 = vset.pattern.permute.xlu0 0
      %6566 = vperm.xlu0 %6565, %v668
      %v6567 = vpop.permute.xlu0 %6566
      %6568 = vset.pattern.permute.xlu0 0
      %6569 = vperm.xlu0 %6568, %v669
      %v6570 = vpop.permute.xlu0 %6569
      %6571 = vset.pattern.permute.xlu0 0
      %6572 = vperm.xlu0 %6571, %v670
      %v6573 = vpop.permute.xlu0 %6572
      %6574 = vset.pattern.permute.xlu0 0
      %6575 = vperm.xlu0 %6574, %v671
      %v6576 = vpop.permute.xlu0 %6575
      %6577 = vset.pattern.permute.xlu0 0
      %6578 = vperm.xlu0 %6577, %v672
      %v6579 = vpop.permute.xlu0 %6578
      %6580 = vset.pattern.permute.xlu0 0
      %6581 = vperm.xlu0 %6580, %v673
      %v6582 = vpop.permute.xlu0 %6581
      %6583 = vset.pattern.permute.xlu0 0
      %6584 = vperm.xlu0 %6583, %v674
      %v6585 = vpop.permute.xlu0 %6584
      %6586 = vset.pattern.permute.xlu0 0
      %6587 = vperm.xlu0 %6586, %v675
      %v6588 = vpop.permute.xlu0 %6587
      %6589 = vset.pattern.permute.xlu0 0
      %6590 = vperm.xlu0 %6589, %v676
      %v6591 = vpop.permute.xlu0 %6590
      %6592 = vset.pattern.permute.xlu0 0
      %6593 = vperm.xlu0 %6592, %v677
      %v6594 = vpop.permute.xlu0 %6593
      %6595 = vset.pattern.permute.xlu0 0
      %6596 = vperm.xlu0 %6595, %v678
      %v6597 = vpop.permute.xlu0 %6596
      %6598 = vset.pattern.permute.xlu0 0
      %6599 = vperm.xlu0 %6598, %v679
      %v6600 = vpop.permute.xlu0 %6599
      %6601 = vset.pattern.permute.xlu0 0
      %6602 = vperm.xlu0 %6601, %v680
      %v6603 = vpop.permute.xlu0 %6602
      %6604 = vset.pattern.permute.xlu0 0
      %6605 = vperm.xlu0 %6604, %v681
      %v6606 = vpop.permute.xlu0 %6605
      %6607 = vset.pattern.permute.xlu0 0
      %6608 = vperm.xlu0 %6607, %v682
      %v6609 = vpop.permute.xlu0 %6608
      %6610 = vset.pattern.permute.xlu0 0
      %6611 = vperm.xlu0 %6610, %v683
      %v6612 = vpop.permute.xlu0 %6611
      %6613 = vset.pattern.permute.xlu0 0
      %6614 = vperm.xlu0 %6613, %v684
      %v6615 = vpop.permute.xlu0 %6614
      %6616 = vset.pattern.permute.xlu0 0
      %6617 = vperm.xlu0 %6616, %v685
      %v6618 = vpop.permute.xlu0 %6617
      %6619 = vset.pattern.permute.xlu0 0
      %6620 = vperm.xlu0 %6619, %v686
      %v6621 = vpop.permute.xlu0 %6620
      %6622 = vset.pattern.permute.xlu0 0
      %6623 = vperm.xlu0 %6622, %v687
      %v6624 = vpop.permute.xlu0 %6623
      %6625 = vset.pattern.permute.xlu0 0
      %6626 = vperm.xlu0 %6625, %v688
      %v6627 = vpop.permute.xlu0 %6626
      %6628 = vset.pattern.permute.xlu0 0
      %6629 = vperm.xlu0 %6628, %v689
      %v6630 = vpop.permute.xlu0 %6629
      %6631 = vset.pattern.permute.xlu0 0
      %6632 = vperm.xlu0 %6631, %v690
      %v6633 = vpop.permute.xlu0 %6632
      %6634 = vset.pattern.permute.xlu0 0
      %6635 = vperm.xlu0 %6634, %v691
      %v6636 = vpop.permute.xlu0 %6635
      %6637 = vset.pattern.permute.xlu0 0
      %6638 = vperm.xlu0 %6637, %v692
      %v6639 = vpop.permute.xlu0 %6638
      %6640 = vset.pattern.permute.xlu0 0
      %6641 = vperm.xlu0 %6640, %v693
      %v6642 = vpop.permute.xlu0 %6641
      %6643 = vset.pattern.permute.xlu0 0
      %6644 = vperm.xlu0 %6643, %v694
      %v6645 = vpop.permute.xlu0 %6644
      %6646 = vset.pattern.permute.xlu0 0
      %6647 = vperm.xlu0 %6646, %v695
      %v6648 = vpop.permute.xlu0 %6647
      %6649 = vset.pattern.permute.xlu0 0
      %6650 = vperm.xlu0 %6649, %v696
      %v6651 = vpop.permute.xlu0 %6650
      %6652 = vset.pattern.permute.xlu0 0
      %6653 = vperm.xlu0 %6652, %v697
      %v6654 = vpop.permute.xlu0 %6653
      %6655 = vset.pattern.permute.xlu0 0
      %6656 = vperm.xlu0 %6655, %v698
      %v6657 = vpop.permute.xlu0 %6656
      %6658 = vset.pattern.permute.xlu0 0
      %6659 = vperm.xlu0 %6658, %v699
      %v6660 = vpop.permute.xlu0 %6659
      %6661 = vset.pattern.permute.xlu0 0
      %6662 = vperm.xlu0 %6661, %v700
      %v6663 = vpop.permute.xlu0 %6662
      %6664 = vset.pattern.permute.xlu0 0
      %6665 = vperm.xlu0 %6664, %v701
      %v6666 = vpop.permute.xlu0 %6665
      %6667 = vset.pattern.permute.xlu0 0
      %6668 = vperm.xlu0 %6667, %v702
      %v6669 = vpop.permute.xlu0 %6668
      %6670 = vset.pattern.permute.xlu0 0
      %6671 = vperm.xlu0 %6670, %v703
      %v6672 = vpop.permute.xlu0 %6671
      %6673 = vset.pattern.permute.xlu0 0
      %6674 = vperm.xlu0 %6673, %v704
      %v6675 = vpop.permute.xlu0 %6674
      %6676 = vset.pattern.permute.xlu0 0
      %6677 = vperm.xlu0 %6676, %v705
      %v6678 = vpop.permute.xlu0 %6677
      %6679 = vset.pattern.permute.xlu0 0
      %6680 = vperm.xlu0 %6679, %v706
      %v6681 = vpop.permute.xlu0 %6680
      %6682 = vset.pattern.permute.xlu0 0
      %6683 = vperm.xlu0 %6682, %v707
      %v6684 = vpop.permute.xlu0 %6683
      %6685 = vset.pattern.permute.xlu0 0
      %6686 = vperm.xlu0 %6685, %v708
      %v6687 = vpop.permute.xlu0 %6686
      %6688 = vset.pattern.permute.xlu0 0
      %6689 = vperm.xlu0 %6688, %v709
      %v6690 = vpop.permute.xlu0 %6689
      %6691 = vset.pattern.permute.xlu0 0
      %6692 = vperm.xlu0 %6691, %v710
      %v6693 = vpop.permute.xlu0 %6692
      %6694 = vset.pattern.permute.xlu0 0
      %6695 = vperm.xlu0 %6694, %v711
      %v6696 = vpop.permute.xlu0 %6695
      %6697 = vset.pattern.permute.xlu0 0
      %6698 = vperm.xlu0 %6697, %v712
      %v6699 = vpop.permute.xlu0 %6698
      %6700 = vset.pattern.permute.xlu0 0
      %6701 = vperm.xlu0 %6700, %v713
      %v6702 = vpop.permute.xlu0 %6701
      %6703 = vset.pattern.permute.xlu0 0
      %6704 = vperm.xlu0 %6703, %v714
      %v6705 = vpop.permute.xlu0 %6704
      %6706 = vset.pattern.permute.xlu0 0
      %6707 = vperm.xlu0 %6706, %v715
      %v6708 = vpop.permute.xlu0 %6707
      %6709 = vset.pattern.permute.xlu0 0
      %6710 = vperm.xlu0 %6709, %v716
      %v6711 = vpop.permute.xlu0 %6710
      %6712 = vset.pattern.permute.xlu0 0
      %6713 = vperm.xlu0 %6712, %v717
      %v6714 = vpop.permute.xlu0 %6713
      %6715 = vset.pattern.permute.xlu0 0
      %6716 = vperm.xlu0 %6715, %v718
      %v6717 = vpop.permute.xlu0 %6716
      %6718 = vset.pattern.permute.xlu0 0
      %6719 = vperm.xlu0 %6718, %v719
      %v6720 = vpop.permute.xlu0 %6719
      %6721 = vset.pattern.permute.xlu0 0
      %6722 = vperm.xlu0 %6721, %v720
      %v6723 = vpop.permute.xlu0 %6722
      %6724 = vset.pattern.permute.xlu0 0
      %6725 = vperm.xlu0 %6724, %v721
      %v6726 = vpop.permute.xlu0 %6725
      %6727 = vset.pattern.permute.xlu0 0
      %6728 = vperm.xlu0 %6727, %v722
      %v6729 = vpop.permute.xlu0 %6728
      %6730 = vset.pattern.permute.xlu0 0
      %6731 = vperm.xlu0 %6730, %v723
      %v6732 = vpop.permute.xlu0 %6731
      %6733 = vset.pattern.permute.xlu0 0
      %6734 = vperm.xlu0 %6733, %v724
      %v6735 = vpop.permute.xlu0 %6734
      %6736 = vset.pattern.permute.xlu0 0
      %6737 = vperm.xlu0 %6736, %v725
      %v6738 = vpop.permute.xlu0 %6737
      %6739 = vset.pattern.permute.xlu0 0
      %6740 = vperm.xlu0 %6739, %v726
      %v6741 = vpop.permute.xlu0 %6740
      %6742 = vset.pattern.permute.xlu0 0
      %6743 = vperm.xlu0 %6742, %v727
      %v6744 = vpop.permute.xlu0 %6743
      %6745 = vset.pattern.permute.xlu0 0
      %6746 = vperm.xlu0 %6745, %v728
      %v6747 = vpop.permute.xlu0 %6746
      %6748 = vset.pattern.permute.xlu0 0
      %6749 = vperm.xlu0 %6748, %v729
      %v6750 = vpop.permute.xlu0 %6749
      %6751 = vset.pattern.permute.xlu0 0
      %6752 = vperm.xlu0 %6751, %v730
      %v6753 = vpop.permute.xlu0 %6752
      %6754 = vset.pattern.permute.xlu0 0
      %6755 = vperm.xlu0 %6754, %v731
      %v6756 = vpop.permute.xlu0 %6755
      %6757 = vset.pattern.permute.xlu0 0
      %6758 = vperm.xlu0 %6757, %v732
      %v6759 = vpop.permute.xlu0 %6758
      %6760 = vset.pattern.permute.xlu0 0
      %6761 = vperm.xlu0 %6760, %v733
      %v6762 = vpop.permute.xlu0 %6761
      %6763 = vset.pattern.permute.xlu0 0
      %6764 = vperm.xlu0 %6763, %v734
      %v6765 = vpop.permute.xlu0 %6764
      %6766 = vset.pattern.permute.xlu0 0
      %6767 = vperm.xlu0 %6766, %v735
      %v6768 = vpop.permute.xlu0 %6767
      %6769 = vset.pattern.permute.xlu0 0
      %6770 = vperm.xlu0 %6769, %v736
      %v6771 = vpop.permute.xlu0 %6770
      %6772 = vset.pattern.permute.xlu0 0
      %6773 = vperm.xlu0 %6772, %v737
      %v6774 = vpop.permute.xlu0 %6773
      %6775 = vset.pattern.permute.xlu0 0
      %6776 = vperm.xlu0 %6775, %v738
      %v6777 = vpop.permute.xlu0 %6776
      %6778 = vset.pattern.permute.xlu0 0
      %6779 = vperm.xlu0 %6778, %v739
      %v6780 = vpop.permute.xlu0 %6779
      %6781 = vset.pattern.permute.xlu0 0
      %6782 = vperm.xlu0 %6781, %v740
      %v6783 = vpop.permute.xlu0 %6782
      %6784 = vset.pattern.permute.xlu0 0
      %6785 = vperm.xlu0 %6784, %v741
      %v6786 = vpop.permute.xlu0 %6785
      %6787 = vset.pattern.permute.xlu0 0
      %6788 = vperm.xlu0 %6787, %v742
      %v6789 = vpop.permute.xlu0 %6788
      %6790 = vset.pattern.permute.xlu0 0
      %6791 = vperm.xlu0 %6790, %v743
      %v6792 = vpop.permute.xlu0 %6791
      %6793 = vset.pattern.permute.xlu0 0
      %6794 = vperm.xlu0 %6793, %v744
      %v6795 = vpop.permute.xlu0 %6794
      %6796 = vset.pattern.permute.xlu0 0
      %6797 = vperm.xlu0 %6796, %v745
      %v6798 = vpop.permute.xlu0 %6797
      %6799 = vset.pattern.permute.xlu0 0
      %6800 = vperm.xlu0 %6799, %v746
      %v6801 = vpop.permute.xlu0 %6800
      %6802 = vset.pattern.permute.xlu0 0
      %6803 = vperm.xlu0 %6802, %v747
      %v6804 = vpop.permute.xlu0 %6803
      %6805 = vset.pattern.permute.xlu0 0
      %6806 = vperm.xlu0 %6805, %v748
      %v6807 = vpop.permute.xlu0 %6806
      %6808 = vset.pattern.permute.xlu0 0
      %6809 = vperm.xlu0 %6808, %v749
      %v6810 = vpop.permute.xlu0 %6809
      %6811 = vset.pattern.permute.xlu0 0
      %6812 = vperm.xlu0 %6811, %v750
      %v6813 = vpop.permute.xlu0 %6812
      %6814 = vset.pattern.permute.xlu0 0
      %6815 = vperm.xlu0 %6814, %v751
      %v6816 = vpop.permute.xlu0 %6815
      %6817 = vset.pattern.permute.xlu0 0
      %6818 = vperm.xlu0 %6817, %v752
      %v6819 = vpop.permute.xlu0 %6818
      %6820 = vset.pattern.permute.xlu0 0
      %6821 = vperm.xlu0 %6820, %v753
      %v6822 = vpop.permute.xlu0 %6821
      %6823 = vset.pattern.permute.xlu0 0
      %6824 = vperm.xlu0 %6823, %v754
      %v6825 = vpop.permute.xlu0 %6824
      %6826 = vset.pattern.permute.xlu0 0
      %6827 = vperm.xlu0 %6826, %v755
      %v6828 = vpop.permute.xlu0 %6827
      %6829 = vset.pattern.permute.xlu0 0
      %6830 = vperm.xlu0 %6829, %v756
      %v6831 = vpop.permute.xlu0 %6830
      %6832 = vset.pattern.permute.xlu0 0
      %6833 = vperm.xlu0 %6832, %v757
      %v6834 = vpop.permute.xlu0 %6833
      %6835 = vset.pattern.permute.xlu0 0
      %6836 = vperm.xlu0 %6835, %v758
      %v6837 = vpop.permute.xlu0 %6836
      %6838 = vset.pattern.permute.xlu0 0
      %6839 = vperm.xlu0 %6838, %v759
      %v6840 = vpop.permute.xlu0 %6839
      %6841 = vset.pattern.permute.xlu0 0
      %6842 = vperm.xlu0 %6841, %v760
      %v6843 = vpop.permute.xlu0 %6842
      %6844 = vset.pattern.permute.xlu0 0
      %6845 = vperm.xlu0 %6844, %v761
      %v6846 = vpop.permute.xlu0 %6845
      %6847 = vset.pattern.permute.xlu0 0
      %6848 = vperm.xlu0 %6847, %v762
      %v6849 = vpop.permute.xlu0 %6848
      %6850 = vset.pattern.permute.xlu0 0
      %6851 = vperm.xlu0 %6850, %v763
      %v6852 = vpop.permute.xlu0 %6851
      %6853 = vset.pattern.permute.xlu0 0
      %6854 = vperm.xlu0 %6853, %v764
      %v6855 = vpop.permute.xlu0 %6854
      %6856 = vset.pattern.permute.xlu0 0
      %6857 = vperm.xlu0 %6856, %v765
      %v6858 = vpop.permute.xlu0 %6857
      %6859 = vset.pattern.permute.xlu0 0
      %6860 = vperm.xlu0 %6859, %v766
      %v6861 = vpop.permute.xlu0 %6860
      %6862 = vset.pattern.permute.xlu0 0
      %6863 = vperm.xlu0 %6862, %v767
      %v6864 = vpop.permute.xlu0 %6863
      %6865 = vset.pattern.permute.xlu0 0
      %6866 = vperm.xlu0 %6865, %v768
      %v6867 = vpop.permute.xlu0 %6866
      %6868 = vset.pattern.permute.xlu0 0
      %6869 = vperm.xlu0 %6868, %v769
      %v6870 = vpop.permute.xlu0 %6869
      %6871 = vset.pattern.permute.xlu0 0
      %6872 = vperm.xlu0 %6871, %v770
      %v6873 = vpop.permute.xlu0 %6872
      %6874 = vset.pattern.permute.xlu0 0
      %6875 = vperm.xlu0 %6874, %v771
      %v6876 = vpop.permute.xlu0 %6875
      %6877 = vset.pattern.permute.xlu0 0
      %6878 = vperm.xlu0 %6877, %v772
      %v6879 = vpop.permute.xlu0 %6878
      %6880 = vset.pattern.permute.xlu0 0
      %6881 = vperm.xlu0 %6880, %v773
      %v6882 = vpop.permute.xlu0 %6881
      %6883 = vset.pattern.permute.xlu0 0
      %6884 = vperm.xlu0 %6883, %v774
      %v6885 = vpop.permute.xlu0 %6884
      %6886 = vset.pattern.permute.xlu0 0
      %6887 = vperm.xlu0 %6886, %v775
      %v6888 = vpop.permute.xlu0 %6887
      %6889 = vset.pattern.permute.xlu0 0
      %6890 = vperm.xlu0 %6889, %v776
      %v6891 = vpop.permute.xlu0 %6890
      %6892 = vset.pattern.permute.xlu0 0
      %6893 = vperm.xlu0 %6892, %v777
      %v6894 = vpop.permute.xlu0 %6893
      %6895 = vset.pattern.permute.xlu0 0
      %6896 = vperm.xlu0 %6895, %v778
      %v6897 = vpop.permute.xlu0 %6896
      %6898 = vset.pattern.permute.xlu0 0
      %6899 = vperm.xlu0 %6898, %v779
      %v6900 = vpop.permute.xlu0 %6899
      %6901 = vset.pattern.permute.xlu0 0
      %6902 = vperm.xlu0 %6901, %v780
      %v6903 = vpop.permute.xlu0 %6902
      %6904 = vset.pattern.permute.xlu0 0
      %6905 = vperm.xlu0 %6904, %v781
      %v6906 = vpop.permute.xlu0 %6905
      %6907 = vset.pattern.permute.xlu0 0
      %6908 = vperm.xlu0 %6907, %v782
      %v6909 = vpop.permute.xlu0 %6908
      %6910 = vset.pattern.permute.xlu0 0
      %6911 = vperm.xlu0 %6910, %v783
      %v6912 = vpop.permute.xlu0 %6911
      %6913 = vset.pattern.permute.xlu0 0
      %6914 = vperm.xlu0 %6913, %v784
      %v6915 = vpop.permute.xlu0 %6914
      %6916 = vset.pattern.permute.xlu0 0
      %6917 = vperm.xlu0 %6916, %v785
      %v6918 = vpop.permute.xlu0 %6917
      %6919 = vset.pattern.permute.xlu0 0
      %6920 = vperm.xlu0 %6919, %v786
      %v6921 = vpop.permute.xlu0 %6920
      %6922 = vset.pattern.permute.xlu0 0
      %6923 = vperm.xlu0 %6922, %v787
      %v6924 = vpop.permute.xlu0 %6923
      %6925 = vset.pattern.permute.xlu0 0
      %6926 = vperm.xlu0 %6925, %v788
      %v6927 = vpop.permute.xlu0 %6926
      %6928 = vset.pattern.permute.xlu0 0
      %6929 = vperm.xlu0 %6928, %v789
      %v6930 = vpop.permute.xlu0 %6929
      %6931 = vset.pattern.permute.xlu0 0
      %6932 = vperm.xlu0 %6931, %v790
      %v6933 = vpop.permute.xlu0 %6932
      %6934 = vset.pattern.permute.xlu0 0
      %6935 = vperm.xlu0 %6934, %v791
      %v6936 = vpop.permute.xlu0 %6935
      %6937 = vset.pattern.permute.xlu0 0
      %6938 = vperm.xlu0 %6937, %v792
      %v6939 = vpop.permute.xlu0 %6938
      %6940 = vset.pattern.permute.xlu0 0
      %6941 = vperm.xlu0 %6940, %v793
      %v6942 = vpop.permute.xlu0 %6941
      %vm6943 = vcmp.eq.s32.totalorder %v6174, %v6177
      %vm6944 = vcmp.eq.s32.totalorder %v6174, %v6180
      %vm6945 = vcmp.eq.s32.totalorder %v6174, %v6183
      %vm6946 = vcmp.eq.s32.totalorder %v6174, %v6186
      %vm6947 = vcmp.eq.s32.totalorder %v6174, %v6189
      %vm6948 = vcmp.eq.s32.totalorder %v6174, %v6192
      %vm6949 = vcmp.eq.s32.totalorder %v6174, %v6195
      %vm6950 = vcmp.eq.s32.totalorder %v6174, %v6198
      %vm6951 = vcmp.eq.s32.totalorder %v6174, %v6201
      %vm6952 = vcmp.eq.s32.totalorder %v6174, %v6204
      %vm6953 = vcmp.eq.s32.totalorder %v6174, %v6207
      %vm6954 = vcmp.eq.s32.totalorder %v6174, %v6210
      %vm6955 = vcmp.eq.s32.totalorder %v6174, %v6213
      %vm6956 = vcmp.eq.s32.totalorder %v6174, %v6216
      %vm6957 = vcmp.eq.s32.totalorder %v6174, %v6219
      %vm6958 = vcmp.eq.s32.totalorder %v6174, %v6222
      %vm6959 = vcmp.eq.s32.totalorder %v6174, %v6225
      %vm6960 = vcmp.eq.s32.totalorder %v6174, %v6228
      %vm6961 = vcmp.eq.s32.totalorder %v6174, %v6231
      %vm6962 = vcmp.eq.s32.totalorder %v6174, %v6234
      %vm6963 = vcmp.eq.s32.totalorder %v6174, %v6237
      %vm6964 = vcmp.eq.s32.totalorder %v6174, %v6240
      %vm6965 = vcmp.eq.s32.totalorder %v6174, %v6243
      %vm6966 = vcmp.eq.s32.totalorder %v6174, %v6246
      %vm6967 = vcmp.eq.s32.totalorder %v6174, %v6249
      %vm6968 = vcmp.eq.s32.totalorder %v6174, %v6252
      %vm6969 = vcmp.eq.s32.totalorder %v6174, %v6255
      %vm6970 = vcmp.eq.s32.totalorder %v6174, %v6258
      %vm6971 = vcmp.eq.s32.totalorder %v6174, %v6261
      %vm6972 = vcmp.eq.s32.totalorder %v6174, %v6264
      %vm6973 = vcmp.eq.s32.totalorder %v6174, %v6267
      %vm6974 = vcmp.eq.s32.totalorder %v6174, %v6270
      %vm6975 = vcmp.eq.s32.totalorder %v6174, %v6273
      %vm6976 = vcmp.eq.s32.totalorder %v6174, %v6276
      %vm6977 = vcmp.eq.s32.totalorder %v6174, %v6279
      %vm6978 = vcmp.eq.s32.totalorder %v6174, %v6282
      %vm6979 = vcmp.eq.s32.totalorder %v6174, %v6285
      %vm6980 = vcmp.eq.s32.totalorder %v6174, %v6288
      %vm6981 = vcmp.eq.s32.totalorder %v6174, %v6291
      %vm6982 = vcmp.eq.s32.totalorder %v6174, %v6294
      %vm6983 = vcmp.eq.s32.totalorder %v6174, %v6297
      %vm6984 = vcmp.eq.s32.totalorder %v6174, %v6300
      %vm6985 = vcmp.eq.s32.totalorder %v6174, %v6303
      %vm6986 = vcmp.eq.s32.totalorder %v6174, %v6306
      %vm6987 = vcmp.eq.s32.totalorder %v6174, %v6309
      %vm6988 = vcmp.eq.s32.totalorder %v6174, %v6312
      %vm6989 = vcmp.eq.s32.totalorder %v6174, %v6315
      %vm6990 = vcmp.eq.s32.totalorder %v6174, %v6318
      %vm6991 = vcmp.eq.s32.totalorder %v6174, %v6321
      %vm6992 = vcmp.eq.s32.totalorder %v6174, %v6324
      %vm6993 = vcmp.eq.s32.totalorder %v6174, %v6327
      %vm6994 = vcmp.eq.s32.totalorder %v6174, %v6330
      %vm6995 = vcmp.eq.s32.totalorder %v6174, %v6333
      %vm6996 = vcmp.eq.s32.totalorder %v6174, %v6336
      %vm6997 = vcmp.eq.s32.totalorder %v6174, %v6339
      %vm6998 = vcmp.eq.s32.totalorder %v6174, %v6342
      %vm6999 = vcmp.eq.s32.totalorder %v6174, %v6345
      %vm7000 = vcmp.eq.s32.totalorder %v6174, %v6348
      %vm7001 = vcmp.eq.s32.totalorder %v6174, %v6351
      %vm7002 = vcmp.eq.s32.totalorder %v6174, %v6354
      %vm7003 = vcmp.eq.s32.totalorder %v6174, %v6357
      %vm7004 = vcmp.eq.s32.totalorder %v6174, %v6360
      %vm7005 = vcmp.eq.s32.totalorder %v6174, %v6363
      %vm7006 = vcmp.eq.s32.totalorder %v6174, %v6366
      %vm7007 = vcmp.eq.s32.totalorder %v6174, %v6369
      %vm7008 = vcmp.eq.s32.totalorder %v6174, %v6372
      %vm7009 = vcmp.eq.s32.totalorder %v6174, %v6375
      %vm7010 = vcmp.eq.s32.totalorder %v6174, %v6378
      %vm7011 = vcmp.eq.s32.totalorder %v6174, %v6381
      %vm7012 = vcmp.eq.s32.totalorder %v6174, %v6384
      %vm7013 = vcmp.eq.s32.totalorder %v6174, %v6387
      %vm7014 = vcmp.eq.s32.totalorder %v6174, %v6390
      %vm7015 = vcmp.eq.s32.totalorder %v6174, %v6393
      %vm7016 = vcmp.eq.s32.totalorder %v6174, %v6396
      %vm7017 = vcmp.eq.s32.totalorder %v6174, %v6399
      %vm7018 = vcmp.eq.s32.totalorder %v6174, %v6402
      %vm7019 = vcmp.eq.s32.totalorder %v6174, %v6405
      %vm7020 = vcmp.eq.s32.totalorder %v6174, %v6408
      %vm7021 = vcmp.eq.s32.totalorder %v6174, %v6411
      %vm7022 = vcmp.eq.s32.totalorder %v6174, %v6414
      %vm7023 = vcmp.eq.s32.totalorder %v6174, %v6417
      %vm7024 = vcmp.eq.s32.totalorder %v6174, %v6420
      %vm7025 = vcmp.eq.s32.totalorder %v6174, %v6423
      %vm7026 = vcmp.eq.s32.totalorder %v6174, %v6426
      %vm7027 = vcmp.eq.s32.totalorder %v6174, %v6429
      %vm7028 = vcmp.eq.s32.totalorder %v6174, %v6432
      %vm7029 = vcmp.eq.s32.totalorder %v6174, %v6435
      %vm7030 = vcmp.eq.s32.totalorder %v6174, %v6438
      %vm7031 = vcmp.eq.s32.totalorder %v6174, %v6441
      %vm7032 = vcmp.eq.s32.totalorder %v6174, %v6444
      %vm7033 = vcmp.eq.s32.totalorder %v6174, %v6447
      %vm7034 = vcmp.eq.s32.totalorder %v6174, %v6450
      %vm7035 = vcmp.eq.s32.totalorder %v6174, %v6453
      %vm7036 = vcmp.eq.s32.totalorder %v6174, %v6456
      %vm7037 = vcmp.eq.s32.totalorder %v6174, %v6459
      %vm7038 = vcmp.eq.s32.totalorder %v6174, %v6462
      %vm7039 = vcmp.eq.s32.totalorder %v6174, %v6465
      %vm7040 = vcmp.eq.s32.totalorder %v6174, %v6468
      %vm7041 = vcmp.eq.s32.totalorder %v6174, %v6471
      %vm7042 = vcmp.eq.s32.totalorder %v6174, %v6474
      %vm7043 = vcmp.eq.s32.totalorder %v6174, %v6477
      %vm7044 = vcmp.eq.s32.totalorder %v6174, %v6480
      %vm7045 = vcmp.eq.s32.totalorder %v6174, %v6483
      %vm7046 = vcmp.eq.s32.totalorder %v6174, %v6486
      %vm7047 = vcmp.eq.s32.totalorder %v6174, %v6489
      %vm7048 = vcmp.eq.s32.totalorder %v6174, %v6492
      %vm7049 = vcmp.eq.s32.totalorder %v6174, %v6495
      %vm7050 = vcmp.eq.s32.totalorder %v6174, %v6498
      %vm7051 = vcmp.eq.s32.totalorder %v6174, %v6501
      %vm7052 = vcmp.eq.s32.totalorder %v6174, %v6504
      %vm7053 = vcmp.eq.s32.totalorder %v6174, %v6507
      %vm7054 = vcmp.eq.s32.totalorder %v6174, %v6510
      %vm7055 = vcmp.eq.s32.totalorder %v6174, %v6513
      %vm7056 = vcmp.eq.s32.totalorder %v6174, %v6516
      %vm7057 = vcmp.eq.s32.totalorder %v6174, %v6519
      %vm7058 = vcmp.eq.s32.totalorder %v6174, %v6522
      %vm7059 = vcmp.eq.s32.totalorder %v6174, %v6525
      %vm7060 = vcmp.eq.s32.totalorder %v6174, %v6528
      %vm7061 = vcmp.eq.s32.totalorder %v6174, %v6531
      %vm7062 = vcmp.eq.s32.totalorder %v6174, %v6534
      %vm7063 = vcmp.eq.s32.totalorder %v6174, %v6537
      %vm7064 = vcmp.eq.s32.totalorder %v6174, %v6540
      %vm7065 = vcmp.eq.s32.totalorder %v6174, %v6543
      %vm7066 = vcmp.eq.s32.totalorder %v6174, %v6546
      %vm7067 = vcmp.eq.s32.totalorder %v6174, %v6549
      %vm7068 = vcmp.eq.s32.totalorder %v6174, %v6552
      %vm7069 = vcmp.eq.s32.totalorder %v6174, %v6555
      %vm7070 = vcmp.eq.s32.totalorder %v6174, %v6558
      %vm7071 = vcmp.eq.s32.totalorder %v6174, %v6561
      %vm7072 = vcmp.eq.s32.totalorder %v6174, %v6564
      %vm7073 = vcmp.eq.s32.totalorder %v6174, %v6567
      %vm7074 = vcmp.eq.s32.totalorder %v6174, %v6570
      %vm7075 = vcmp.eq.s32.totalorder %v6174, %v6573
      %vm7076 = vcmp.eq.s32.totalorder %v6174, %v6576
      %vm7077 = vcmp.eq.s32.totalorder %v6174, %v6579
      %vm7078 = vcmp.eq.s32.totalorder %v6174, %v6582
      %vm7079 = vcmp.eq.s32.totalorder %v6174, %v6585
      %vm7080 = vcmp.eq.s32.totalorder %v6174, %v6588
      %vm7081 = vcmp.eq.s32.totalorder %v6174, %v6591
      %vm7082 = vcmp.eq.s32.totalorder %v6174, %v6594
      %vm7083 = vcmp.eq.s32.totalorder %v6174, %v6597
      %vm7084 = vcmp.eq.s32.totalorder %v6174, %v6600
      %vm7085 = vcmp.eq.s32.totalorder %v6174, %v6603
      %vm7086 = vcmp.eq.s32.totalorder %v6174, %v6606
      %vm7087 = vcmp.eq.s32.totalorder %v6174, %v6609
      %vm7088 = vcmp.eq.s32.totalorder %v6174, %v6612
      %vm7089 = vcmp.eq.s32.totalorder %v6174, %v6615
      %vm7090 = vcmp.eq.s32.totalorder %v6174, %v6618
      %vm7091 = vcmp.eq.s32.totalorder %v6174, %v6621
      %vm7092 = vcmp.eq.s32.totalorder %v6174, %v6624
      %vm7093 = vcmp.eq.s32.totalorder %v6174, %v6627
      %vm7094 = vcmp.eq.s32.totalorder %v6174, %v6630
      %vm7095 = vcmp.eq.s32.totalorder %v6174, %v6633
      %vm7096 = vcmp.eq.s32.totalorder %v6174, %v6636
      %vm7097 = vcmp.eq.s32.totalorder %v6174, %v6639
      %vm7098 = vcmp.eq.s32.totalorder %v6174, %v6642
      %vm7099 = vcmp.eq.s32.totalorder %v6174, %v6645
      %vm7100 = vcmp.eq.s32.totalorder %v6174, %v6648
      %vm7101 = vcmp.eq.s32.totalorder %v6174, %v6651
      %vm7102 = vcmp.eq.s32.totalorder %v6174, %v6654
      %vm7103 = vcmp.eq.s32.totalorder %v6174, %v6657
      %vm7104 = vcmp.eq.s32.totalorder %v6174, %v6660
      %vm7105 = vcmp.eq.s32.totalorder %v6174, %v6663
      %vm7106 = vcmp.eq.s32.totalorder %v6174, %v6666
      %vm7107 = vcmp.eq.s32.totalorder %v6174, %v6669
      %vm7108 = vcmp.eq.s32.totalorder %v6174, %v6672
      %vm7109 = vcmp.eq.s32.totalorder %v6174, %v6675
      %vm7110 = vcmp.eq.s32.totalorder %v6174, %v6678
      %vm7111 = vcmp.eq.s32.totalorder %v6174, %v6681
      %vm7112 = vcmp.eq.s32.totalorder %v6174, %v6684
      %vm7113 = vcmp.eq.s32.totalorder %v6174, %v6687
      %vm7114 = vcmp.eq.s32.totalorder %v6174, %v6690
      %vm7115 = vcmp.eq.s32.totalorder %v6174, %v6693
      %vm7116 = vcmp.eq.s32.totalorder %v6174, %v6696
      %vm7117 = vcmp.eq.s32.totalorder %v6174, %v6699
      %vm7118 = vcmp.eq.s32.totalorder %v6174, %v6702
      %vm7119 = vcmp.eq.s32.totalorder %v6174, %v6705
      %vm7120 = vcmp.eq.s32.totalorder %v6174, %v6708
      %vm7121 = vcmp.eq.s32.totalorder %v6174, %v6711
      %vm7122 = vcmp.eq.s32.totalorder %v6174, %v6714
      %vm7123 = vcmp.eq.s32.totalorder %v6174, %v6717
      %vm7124 = vcmp.eq.s32.totalorder %v6174, %v6720
      %vm7125 = vcmp.eq.s32.totalorder %v6174, %v6723
      %vm7126 = vcmp.eq.s32.totalorder %v6174, %v6726
      %vm7127 = vcmp.eq.s32.totalorder %v6174, %v6729
      %vm7128 = vcmp.eq.s32.totalorder %v6174, %v6732
      %vm7129 = vcmp.eq.s32.totalorder %v6174, %v6735
      %vm7130 = vcmp.eq.s32.totalorder %v6174, %v6738
      %vm7131 = vcmp.eq.s32.totalorder %v6174, %v6741
      %vm7132 = vcmp.eq.s32.totalorder %v6174, %v6744
      %vm7133 = vcmp.eq.s32.totalorder %v6174, %v6747
      %vm7134 = vcmp.eq.s32.totalorder %v6174, %v6750
      %vm7135 = vcmp.eq.s32.totalorder %v6174, %v6753
      %vm7136 = vcmp.eq.s32.totalorder %v6174, %v6756
      %vm7137 = vcmp.eq.s32.totalorder %v6174, %v6759
      %vm7138 = vcmp.eq.s32.totalorder %v6174, %v6762
      %vm7139 = vcmp.eq.s32.totalorder %v6174, %v6765
      %vm7140 = vcmp.eq.s32.totalorder %v6174, %v6768
      %vm7141 = vcmp.eq.s32.totalorder %v6174, %v6771
      %vm7142 = vcmp.eq.s32.totalorder %v6174, %v6774
      %vm7143 = vcmp.eq.s32.totalorder %v6174, %v6777
      %vm7144 = vcmp.eq.s32.totalorder %v6174, %v6780
      %vm7145 = vcmp.eq.s32.totalorder %v6174, %v6783
      %vm7146 = vcmp.eq.s32.totalorder %v6174, %v6786
      %vm7147 = vcmp.eq.s32.totalorder %v6174, %v6789
      %vm7148 = vcmp.eq.s32.totalorder %v6174, %v6792
      %vm7149 = vcmp.eq.s32.totalorder %v6174, %v6795
      %vm7150 = vcmp.eq.s32.totalorder %v6174, %v6798
      %vm7151 = vcmp.eq.s32.totalorder %v6174, %v6801
      %vm7152 = vcmp.eq.s32.totalorder %v6174, %v6804
      %vm7153 = vcmp.eq.s32.totalorder %v6174, %v6807
      %vm7154 = vcmp.eq.s32.totalorder %v6174, %v6810
      %vm7155 = vcmp.eq.s32.totalorder %v6174, %v6813
      %vm7156 = vcmp.eq.s32.totalorder %v6174, %v6816
      %vm7157 = vcmp.eq.s32.totalorder %v6174, %v6819
      %vm7158 = vcmp.eq.s32.totalorder %v6174, %v6822
      %vm7159 = vcmp.eq.s32.totalorder %v6174, %v6825
      %vm7160 = vcmp.eq.s32.totalorder %v6174, %v6828
      %vm7161 = vcmp.eq.s32.totalorder %v6174, %v6831
      %vm7162 = vcmp.eq.s32.totalorder %v6174, %v6834
      %vm7163 = vcmp.eq.s32.totalorder %v6174, %v6837
      %vm7164 = vcmp.eq.s32.totalorder %v6174, %v6840
      %vm7165 = vcmp.eq.s32.totalorder %v6174, %v6843
      %vm7166 = vcmp.eq.s32.totalorder %v6174, %v6846
      %vm7167 = vcmp.eq.s32.totalorder %v6174, %v6849
      %vm7168 = vcmp.eq.s32.totalorder %v6174, %v6852
      %vm7169 = vcmp.eq.s32.totalorder %v6174, %v6855
      %vm7170 = vcmp.eq.s32.totalorder %v6174, %v6858
      %vm7171 = vcmp.eq.s32.totalorder %v6174, %v6861
      %vm7172 = vcmp.eq.s32.totalorder %v6174, %v6864
      %vm7173 = vcmp.eq.s32.totalorder %v6174, %v6867
      %vm7174 = vcmp.eq.s32.totalorder %v6174, %v6870
      %vm7175 = vcmp.eq.s32.totalorder %v6174, %v6873
      %vm7176 = vcmp.eq.s32.totalorder %v6174, %v6876
      %vm7177 = vcmp.eq.s32.totalorder %v6174, %v6879
      %vm7178 = vcmp.eq.s32.totalorder %v6174, %v6882
      %vm7179 = vcmp.eq.s32.totalorder %v6174, %v6885
      %vm7180 = vcmp.eq.s32.totalorder %v6174, %v6888
      %vm7181 = vcmp.eq.s32.totalorder %v6174, %v6891
      %vm7182 = vcmp.eq.s32.totalorder %v6174, %v6894
      %vm7183 = vcmp.eq.s32.totalorder %v6174, %v6897
      %vm7184 = vcmp.eq.s32.totalorder %v6174, %v6900
      %vm7185 = vcmp.eq.s32.totalorder %v6174, %v6903
      %vm7186 = vcmp.eq.s32.totalorder %v6174, %v6906
      %vm7187 = vcmp.eq.s32.totalorder %v6174, %v6909
      %vm7188 = vcmp.eq.s32.totalorder %v6174, %v6912
      %vm7189 = vcmp.eq.s32.totalorder %v6174, %v6915
      %vm7190 = vcmp.eq.s32.totalorder %v6174, %v6918
      %vm7191 = vcmp.eq.s32.totalorder %v6174, %v6921
      %vm7192 = vcmp.eq.s32.totalorder %v6174, %v6924
      %vm7193 = vcmp.eq.s32.totalorder %v6174, %v6927
      %vm7194 = vcmp.eq.s32.totalorder %v6174, %v6930
      %vm7195 = vcmp.eq.s32.totalorder %v6174, %v6933
      %vm7196 = vcmp.eq.s32.totalorder %v6174, %v6936
      %vm7197 = vcmp.eq.s32.totalorder %v6174, %v6939
      %vm7198 = vcmp.eq.s32.totalorder %v6174, %v6942
      %v7199 = vsel %vm6943, 1, 0
      %v7200 = vsel %vm6944, 1, 0
      %v7201 = vsel %vm6945, 1, 0
      %v7202 = vsel %vm6946, 1, 0
      %v7203 = vsel %vm6947, 1, 0
      %v7204 = vsel %vm6948, 1, 0
      %v7205 = vsel %vm6949, 1, 0
      %v7206 = vsel %vm6950, 1, 0
      %v7207 = vsel %vm6951, 1, 0
      %v7208 = vsel %vm6952, 1, 0
      %v7209 = vsel %vm6953, 1, 0
      %v7210 = vsel %vm6954, 1, 0
      %v7211 = vsel %vm6955, 1, 0
      %v7212 = vsel %vm6956, 1, 0
      %v7213 = vsel %vm6957, 1, 0
      %v7214 = vsel %vm6958, 1, 0
      %v7215 = vsel %vm6959, 1, 0
      %v7216 = vsel %vm6960, 1, 0
      %v7217 = vsel %vm6961, 1, 0
      %v7218 = vsel %vm6962, 1, 0
      %v7219 = vsel %vm6963, 1, 0
      %v7220 = vsel %vm6964, 1, 0
      %v7221 = vsel %vm6965, 1, 0
      %v7222 = vsel %vm6966, 1, 0
      %v7223 = vsel %vm6967, 1, 0
      %v7224 = vsel %vm6968, 1, 0
      %v7225 = vsel %vm6969, 1, 0
      %v7226 = vsel %vm6970, 1, 0
      %v7227 = vsel %vm6971, 1, 0
      %v7228 = vsel %vm6972, 1, 0
      %v7229 = vsel %vm6973, 1, 0
      %v7230 = vsel %vm6974, 1, 0
      %v7231 = vsel %vm6975, 1, 0
      %v7232 = vsel %vm6976, 1, 0
      %v7233 = vsel %vm6977, 1, 0
      %v7234 = vsel %vm6978, 1, 0
      %v7235 = vsel %vm6979, 1, 0
      %v7236 = vsel %vm6980, 1, 0
      %v7237 = vsel %vm6981, 1, 0
      %v7238 = vsel %vm6982, 1, 0
      %v7239 = vsel %vm6983, 1, 0
      %v7240 = vsel %vm6984, 1, 0
      %v7241 = vsel %vm6985, 1, 0
      %v7242 = vsel %vm6986, 1, 0
      %v7243 = vsel %vm6987, 1, 0
      %v7244 = vsel %vm6988, 1, 0
      %v7245 = vsel %vm6989, 1, 0
      %v7246 = vsel %vm6990, 1, 0
      %v7247 = vsel %vm6991, 1, 0
      %v7248 = vsel %vm6992, 1, 0
      %v7249 = vsel %vm6993, 1, 0
      %v7250 = vsel %vm6994, 1, 0
      %v7251 = vsel %vm6995, 1, 0
      %v7252 = vsel %vm6996, 1, 0
      %v7253 = vsel %vm6997, 1, 0
      %v7254 = vsel %vm6998, 1, 0
      %v7255 = vsel %vm6999, 1, 0
      %v7256 = vsel %vm7000, 1, 0
      %v7257 = vsel %vm7001, 1, 0
      %v7258 = vsel %vm7002, 1, 0
      %v7259 = vsel %vm7003, 1, 0
      %v7260 = vsel %vm7004, 1, 0
      %v7261 = vsel %vm7005, 1, 0
      %v7262 = vsel %vm7006, 1, 0
      %v7263 = vsel %vm7007, 1, 0
      %v7264 = vsel %vm7008, 1, 0
      %v7265 = vsel %vm7009, 1, 0
      %v7266 = vsel %vm7010, 1, 0
      %v7267 = vsel %vm7011, 1, 0
      %v7268 = vsel %vm7012, 1, 0
      %v7269 = vsel %vm7013, 1, 0
      %v7270 = vsel %vm7014, 1, 0
      %v7271 = vsel %vm7015, 1, 0
      %v7272 = vsel %vm7016, 1, 0
      %v7273 = vsel %vm7017, 1, 0
      %v7274 = vsel %vm7018, 1, 0
      %v7275 = vsel %vm7019, 1, 0
      %v7276 = vsel %vm7020, 1, 0
      %v7277 = vsel %vm7021, 1, 0
      %v7278 = vsel %vm7022, 1, 0
      %v7279 = vsel %vm7023, 1, 0
      %v7280 = vsel %vm7024, 1, 0
      %v7281 = vsel %vm7025, 1, 0
      %v7282 = vsel %vm7026, 1, 0
      %v7283 = vsel %vm7027, 1, 0
      %v7284 = vsel %vm7028, 1, 0
      %v7285 = vsel %vm7029, 1, 0
      %v7286 = vsel %vm7030, 1, 0
      %v7287 = vsel %vm7031, 1, 0
      %v7288 = vsel %vm7032, 1, 0
      %v7289 = vsel %vm7033, 1, 0
      %v7290 = vsel %vm7034, 1, 0
      %v7291 = vsel %vm7035, 1, 0
      %v7292 = vsel %vm7036, 1, 0
      %v7293 = vsel %vm7037, 1, 0
      %v7294 = vsel %vm7038, 1, 0
      %v7295 = vsel %vm7039, 1, 0
      %v7296 = vsel %vm7040, 1, 0
      %v7297 = vsel %vm7041, 1, 0
      %v7298 = vsel %vm7042, 1, 0
      %v7299 = vsel %vm7043, 1, 0
      %v7300 = vsel %vm7044, 1, 0
      %v7301 = vsel %vm7045, 1, 0
      %v7302 = vsel %vm7046, 1, 0
      %v7303 = vsel %vm7047, 1, 0
      %v7304 = vsel %vm7048, 1, 0
      %v7305 = vsel %vm7049, 1, 0
      %v7306 = vsel %vm7050, 1, 0
      %v7307 = vsel %vm7051, 1, 0
      %v7308 = vsel %vm7052, 1, 0
      %v7309 = vsel %vm7053, 1, 0
      %v7310 = vsel %vm7054, 1, 0
      %v7311 = vsel %vm7055, 1, 0
      %v7312 = vsel %vm7056, 1, 0
      %v7313 = vsel %vm7057, 1, 0
      %v7314 = vsel %vm7058, 1, 0
      %v7315 = vsel %vm7059, 1, 0
      %v7316 = vsel %vm7060, 1, 0
      %v7317 = vsel %vm7061, 1, 0
      %v7318 = vsel %vm7062, 1, 0
      %v7319 = vsel %vm7063, 1, 0
      %v7320 = vsel %vm7064, 1, 0
      %v7321 = vsel %vm7065, 1, 0
      %v7322 = vsel %vm7066, 1, 0
      %v7323 = vsel %vm7067, 1, 0
      %v7324 = vsel %vm7068, 1, 0
      %v7325 = vsel %vm7069, 1, 0
      %v7326 = vsel %vm7070, 1, 0
      %v7327 = vsel %vm7071, 1, 0
      %v7328 = vsel %vm7072, 1, 0
      %v7329 = vsel %vm7073, 1, 0
      %v7330 = vsel %vm7074, 1, 0
      %v7331 = vsel %vm7075, 1, 0
      %v7332 = vsel %vm7076, 1, 0
      %v7333 = vsel %vm7077, 1, 0
      %v7334 = vsel %vm7078, 1, 0
      %v7335 = vsel %vm7079, 1, 0
      %v7336 = vsel %vm7080, 1, 0
      %v7337 = vsel %vm7081, 1, 0
      %v7338 = vsel %vm7082, 1, 0
      %v7339 = vsel %vm7083, 1, 0
      %v7340 = vsel %vm7084, 1, 0
      %v7341 = vsel %vm7085, 1, 0
      %v7342 = vsel %vm7086, 1, 0
      %v7343 = vsel %vm7087, 1, 0
      %v7344 = vsel %vm7088, 1, 0
      %v7345 = vsel %vm7089, 1, 0
      %v7346 = vsel %vm7090, 1, 0
      %v7347 = vsel %vm7091, 1, 0
      %v7348 = vsel %vm7092, 1, 0
      %v7349 = vsel %vm7093, 1, 0
      %v7350 = vsel %vm7094, 1, 0
      %v7351 = vsel %vm7095, 1, 0
      %v7352 = vsel %vm7096, 1, 0
      %v7353 = vsel %vm7097, 1, 0
      %v7354 = vsel %vm7098, 1, 0
      %v7355 = vsel %vm7099, 1, 0
      %v7356 = vsel %vm7100, 1, 0
      %v7357 = vsel %vm7101, 1, 0
      %v7358 = vsel %vm7102, 1, 0
      %v7359 = vsel %vm7103, 1, 0
      %v7360 = vsel %vm7104, 1, 0
      %v7361 = vsel %vm7105, 1, 0
      %v7362 = vsel %vm7106, 1, 0
      %v7363 = vsel %vm7107, 1, 0
      %v7364 = vsel %vm7108, 1, 0
      %v7365 = vsel %vm7109, 1, 0
      %v7366 = vsel %vm7110, 1, 0
      %v7367 = vsel %vm7111, 1, 0
      %v7368 = vsel %vm7112, 1, 0
      %v7369 = vsel %vm7113, 1, 0
      %v7370 = vsel %vm7114, 1, 0
      %v7371 = vsel %vm7115, 1, 0
      %v7372 = vsel %vm7116, 1, 0
      %v7373 = vsel %vm7117, 1, 0
      %v7374 = vsel %vm7118, 1, 0
      %v7375 = vsel %vm7119, 1, 0
      %v7376 = vsel %vm7120, 1, 0
      %v7377 = vsel %vm7121, 1, 0
      %v7378 = vsel %vm7122, 1, 0
      %v7379 = vsel %vm7123, 1, 0
      %v7380 = vsel %vm7124, 1, 0
      %v7381 = vsel %vm7125, 1, 0
      %v7382 = vsel %vm7126, 1, 0
      %v7383 = vsel %vm7127, 1, 0
      %v7384 = vsel %vm7128, 1, 0
      %v7385 = vsel %vm7129, 1, 0
      %v7386 = vsel %vm7130, 1, 0
      %v7387 = vsel %vm7131, 1, 0
      %v7388 = vsel %vm7132, 1, 0
      %v7389 = vsel %vm7133, 1, 0
      %v7390 = vsel %vm7134, 1, 0
      %v7391 = vsel %vm7135, 1, 0
      %v7392 = vsel %vm7136, 1, 0
      %v7393 = vsel %vm7137, 1, 0
      %v7394 = vsel %vm7138, 1, 0
      %v7395 = vsel %vm7139, 1, 0
      %v7396 = vsel %vm7140, 1, 0
      %v7397 = vsel %vm7141, 1, 0
      %v7398 = vsel %vm7142, 1, 0
      %v7399 = vsel %vm7143, 1, 0
      %v7400 = vsel %vm7144, 1, 0
      %v7401 = vsel %vm7145, 1, 0
      %v7402 = vsel %vm7146, 1, 0
      %v7403 = vsel %vm7147, 1, 0
      %v7404 = vsel %vm7148, 1, 0
      %v7405 = vsel %vm7149, 1, 0
      %v7406 = vsel %vm7150, 1, 0
      %v7407 = vsel %vm7151, 1, 0
      %v7408 = vsel %vm7152, 1, 0
      %v7409 = vsel %vm7153, 1, 0
      %v7410 = vsel %vm7154, 1, 0
      %v7411 = vsel %vm7155, 1, 0
      %v7412 = vsel %vm7156, 1, 0
      %v7413 = vsel %vm7157, 1, 0
      %v7414 = vsel %vm7158, 1, 0
      %v7415 = vsel %vm7159, 1, 0
      %v7416 = vsel %vm7160, 1, 0
      %v7417 = vsel %vm7161, 1, 0
      %v7418 = vsel %vm7162, 1, 0
      %v7419 = vsel %vm7163, 1, 0
      %v7420 = vsel %vm7164, 1, 0
      %v7421 = vsel %vm7165, 1, 0
      %v7422 = vsel %vm7166, 1, 0
      %v7423 = vsel %vm7167, 1, 0
      %v7424 = vsel %vm7168, 1, 0
      %v7425 = vsel %vm7169, 1, 0
      %v7426 = vsel %vm7170, 1, 0
      %v7427 = vsel %vm7171, 1, 0
      %v7428 = vsel %vm7172, 1, 0
      %v7429 = vsel %vm7173, 1, 0
      %v7430 = vsel %vm7174, 1, 0
      %v7431 = vsel %vm7175, 1, 0
      %v7432 = vsel %vm7176, 1, 0
      %v7433 = vsel %vm7177, 1, 0
      %v7434 = vsel %vm7178, 1, 0
      %v7435 = vsel %vm7179, 1, 0
      %v7436 = vsel %vm7180, 1, 0
      %v7437 = vsel %vm7181, 1, 0
      %v7438 = vsel %vm7182, 1, 0
      %v7439 = vsel %vm7183, 1, 0
      %v7440 = vsel %vm7184, 1, 0
      %v7441 = vsel %vm7185, 1, 0
      %v7442 = vsel %vm7186, 1, 0
      %v7443 = vsel %vm7187, 1, 0
      %v7444 = vsel %vm7188, 1, 0
      %v7445 = vsel %vm7189, 1, 0
      %v7446 = vsel %vm7190, 1, 0
      %v7447 = vsel %vm7191, 1, 0
      %v7448 = vsel %vm7192, 1, 0
      %v7449 = vsel %vm7193, 1, 0
      %v7450 = vsel %vm7194, 1, 0
      %v7451 = vsel %vm7195, 1, 0
      %v7452 = vsel %vm7196, 1, 0
      %v7453 = vsel %vm7197, 1, 0
      %v7454 = vsel %vm7198, 1, 0
      %v7455 = vcvt.s32.f32 %v7199
      %v7456 = vcvt.s32.f32 %v7200
      %v7457 = vcvt.s32.f32 %v7201
      %v7458 = vcvt.s32.f32 %v7202
      %v7459 = vcvt.s32.f32 %v7203
      %v7460 = vcvt.s32.f32 %v7204
      %v7461 = vcvt.s32.f32 %v7205
      %v7462 = vcvt.s32.f32 %v7206
      %v7463 = vcvt.s32.f32 %v7207
      %v7464 = vcvt.s32.f32 %v7208
      %v7465 = vcvt.s32.f32 %v7209
      %v7466 = vcvt.s32.f32 %v7210
      %v7467 = vcvt.s32.f32 %v7211
      %v7468 = vcvt.s32.f32 %v7212
      %v7469 = vcvt.s32.f32 %v7213
      %v7470 = vcvt.s32.f32 %v7214
      %v7471 = vcvt.s32.f32 %v7215
      %v7472 = vcvt.s32.f32 %v7216
      %v7473 = vcvt.s32.f32 %v7217
      %v7474 = vcvt.s32.f32 %v7218
      %v7475 = vcvt.s32.f32 %v7219
      %v7476 = vcvt.s32.f32 %v7220
      %v7477 = vcvt.s32.f32 %v7221
      %v7478 = vcvt.s32.f32 %v7222
      %v7479 = vcvt.s32.f32 %v7223
      %v7480 = vcvt.s32.f32 %v7224
      %v7481 = vcvt.s32.f32 %v7225
      %v7482 = vcvt.s32.f32 %v7226
      %v7483 = vcvt.s32.f32 %v7227
      %v7484 = vcvt.s32.f32 %v7228
      %v7485 = vcvt.s32.f32 %v7229
      %v7486 = vcvt.s32.f32 %v7230
      %v7487 = vcvt.s32.f32 %v7231
      %v7488 = vcvt.s32.f32 %v7232
      %v7489 = vcvt.s32.f32 %v7233
      %v7490 = vcvt.s32.f32 %v7234
      %v7491 = vcvt.s32.f32 %v7235
      %v7492 = vcvt.s32.f32 %v7236
      %v7493 = vcvt.s32.f32 %v7237
      %v7494 = vcvt.s32.f32 %v7238
      %v7495 = vcvt.s32.f32 %v7239
      %v7496 = vcvt.s32.f32 %v7240
      %v7497 = vcvt.s32.f32 %v7241
      %v7498 = vcvt.s32.f32 %v7242
      %v7499 = vcvt.s32.f32 %v7243
      %v7500 = vcvt.s32.f32 %v7244
      %v7501 = vcvt.s32.f32 %v7245
      %v7502 = vcvt.s32.f32 %v7246
      %v7503 = vcvt.s32.f32 %v7247
      %v7504 = vcvt.s32.f32 %v7248
      %v7505 = vcvt.s32.f32 %v7249
      %v7506 = vcvt.s32.f32 %v7250
      %v7507 = vcvt.s32.f32 %v7251
      %v7508 = vcvt.s32.f32 %v7252
      %v7509 = vcvt.s32.f32 %v7253
      %v7510 = vcvt.s32.f32 %v7254
      %v7511 = vcvt.s32.f32 %v7255
      %v7512 = vcvt.s32.f32 %v7256
      %v7513 = vcvt.s32.f32 %v7257
      %v7514 = vcvt.s32.f32 %v7258
      %v7515 = vcvt.s32.f32 %v7259
      %v7516 = vcvt.s32.f32 %v7260
      %v7517 = vcvt.s32.f32 %v7261
      %v7518 = vcvt.s32.f32 %v7262
      %v7519 = vcvt.s32.f32 %v7263
      %v7520 = vcvt.s32.f32 %v7264
      %v7521 = vcvt.s32.f32 %v7265
      %v7522 = vcvt.s32.f32 %v7266
      %v7523 = vcvt.s32.f32 %v7267
      %v7524 = vcvt.s32.f32 %v7268
      %v7525 = vcvt.s32.f32 %v7269
      %v7526 = vcvt.s32.f32 %v7270
      %v7527 = vcvt.s32.f32 %v7271
      %v7528 = vcvt.s32.f32 %v7272
      %v7529 = vcvt.s32.f32 %v7273
      %v7530 = vcvt.s32.f32 %v7274
      %v7531 = vcvt.s32.f32 %v7275
      %v7532 = vcvt.s32.f32 %v7276
      %v7533 = vcvt.s32.f32 %v7277
      %v7534 = vcvt.s32.f32 %v7278
      %v7535 = vcvt.s32.f32 %v7279
      %v7536 = vcvt.s32.f32 %v7280
      %v7537 = vcvt.s32.f32 %v7281
      %v7538 = vcvt.s32.f32 %v7282
      %v7539 = vcvt.s32.f32 %v7283
      %v7540 = vcvt.s32.f32 %v7284
      %v7541 = vcvt.s32.f32 %v7285
      %v7542 = vcvt.s32.f32 %v7286
      %v7543 = vcvt.s32.f32 %v7287
      %v7544 = vcvt.s32.f32 %v7288
      %v7545 = vcvt.s32.f32 %v7289
      %v7546 = vcvt.s32.f32 %v7290
      %v7547 = vcvt.s32.f32 %v7291
      %v7548 = vcvt.s32.f32 %v7292
      %v7549 = vcvt.s32.f32 %v7293
      %v7550 = vcvt.s32.f32 %v7294
      %v7551 = vcvt.s32.f32 %v7295
      %v7552 = vcvt.s32.f32 %v7296
      %v7553 = vcvt.s32.f32 %v7297
      %v7554 = vcvt.s32.f32 %v7298
      %v7555 = vcvt.s32.f32 %v7299
      %v7556 = vcvt.s32.f32 %v7300
      %v7557 = vcvt.s32.f32 %v7301
      %v7558 = vcvt.s32.f32 %v7302
      %v7559 = vcvt.s32.f32 %v7303
      %v7560 = vcvt.s32.f32 %v7304
      %v7561 = vcvt.s32.f32 %v7305
      %v7562 = vcvt.s32.f32 %v7306
      %v7563 = vcvt.s32.f32 %v7307
      %v7564 = vcvt.s32.f32 %v7308
      %v7565 = vcvt.s32.f32 %v7309
      %v7566 = vcvt.s32.f32 %v7310
      %v7567 = vcvt.s32.f32 %v7311
      %v7568 = vcvt.s32.f32 %v7312
      %v7569 = vcvt.s32.f32 %v7313
      %v7570 = vcvt.s32.f32 %v7314
      %v7571 = vcvt.s32.f32 %v7315
      %v7572 = vcvt.s32.f32 %v7316
      %v7573 = vcvt.s32.f32 %v7317
      %v7574 = vcvt.s32.f32 %v7318
      %v7575 = vcvt.s32.f32 %v7319
      %v7576 = vcvt.s32.f32 %v7320
      %v7577 = vcvt.s32.f32 %v7321
      %v7578 = vcvt.s32.f32 %v7322
      %v7579 = vcvt.s32.f32 %v7323
      %v7580 = vcvt.s32.f32 %v7324
      %v7581 = vcvt.s32.f32 %v7325
      %v7582 = vcvt.s32.f32 %v7326
      %v7583 = vcvt.s32.f32 %v7327
      %v7584 = vcvt.s32.f32 %v7328
      %v7585 = vcvt.s32.f32 %v7329
      %v7586 = vcvt.s32.f32 %v7330
      %v7587 = vcvt.s32.f32 %v7331
      %v7588 = vcvt.s32.f32 %v7332
      %v7589 = vcvt.s32.f32 %v7333
      %v7590 = vcvt.s32.f32 %v7334
      %v7591 = vcvt.s32.f32 %v7335
      %v7592 = vcvt.s32.f32 %v7336
      %v7593 = vcvt.s32.f32 %v7337
      %v7594 = vcvt.s32.f32 %v7338
      %v7595 = vcvt.s32.f32 %v7339
      %v7596 = vcvt.s32.f32 %v7340
      %v7597 = vcvt.s32.f32 %v7341
      %v7598 = vcvt.s32.f32 %v7342
      %v7599 = vcvt.s32.f32 %v7343
      %v7600 = vcvt.s32.f32 %v7344
      %v7601 = vcvt.s32.f32 %v7345
      %v7602 = vcvt.s32.f32 %v7346
      %v7603 = vcvt.s32.f32 %v7347
      %v7604 = vcvt.s32.f32 %v7348
      %v7605 = vcvt.s32.f32 %v7349
      %v7606 = vcvt.s32.f32 %v7350
      %v7607 = vcvt.s32.f32 %v7351
      %v7608 = vcvt.s32.f32 %v7352
      %v7609 = vcvt.s32.f32 %v7353
      %v7610 = vcvt.s32.f32 %v7354
      %v7611 = vcvt.s32.f32 %v7355
      %v7612 = vcvt.s32.f32 %v7356
      %v7613 = vcvt.s32.f32 %v7357
      %v7614 = vcvt.s32.f32 %v7358
      %v7615 = vcvt.s32.f32 %v7359
      %v7616 = vcvt.s32.f32 %v7360
      %v7617 = vcvt.s32.f32 %v7361
      %v7618 = vcvt.s32.f32 %v7362
      %v7619 = vcvt.s32.f32 %v7363
      %v7620 = vcvt.s32.f32 %v7364
      %v7621 = vcvt.s32.f32 %v7365
      %v7622 = vcvt.s32.f32 %v7366
      %v7623 = vcvt.s32.f32 %v7367
      %v7624 = vcvt.s32.f32 %v7368
      %v7625 = vcvt.s32.f32 %v7369
      %v7626 = vcvt.s32.f32 %v7370
      %v7627 = vcvt.s32.f32 %v7371
      %v7628 = vcvt.s32.f32 %v7372
      %v7629 = vcvt.s32.f32 %v7373
      %v7630 = vcvt.s32.f32 %v7374
      %v7631 = vcvt.s32.f32 %v7375
      %v7632 = vcvt.s32.f32 %v7376
      %v7633 = vcvt.s32.f32 %v7377
      %v7634 = vcvt.s32.f32 %v7378
      %v7635 = vcvt.s32.f32 %v7379
      %v7636 = vcvt.s32.f32 %v7380
      %v7637 = vcvt.s32.f32 %v7381
      %v7638 = vcvt.s32.f32 %v7382
      %v7639 = vcvt.s32.f32 %v7383
      %v7640 = vcvt.s32.f32 %v7384
      %v7641 = vcvt.s32.f32 %v7385
      %v7642 = vcvt.s32.f32 %v7386
      %v7643 = vcvt.s32.f32 %v7387
      %v7644 = vcvt.s32.f32 %v7388
      %v7645 = vcvt.s32.f32 %v7389
      %v7646 = vcvt.s32.f32 %v7390
      %v7647 = vcvt.s32.f32 %v7391
      %v7648 = vcvt.s32.f32 %v7392
      %v7649 = vcvt.s32.f32 %v7393
      %v7650 = vcvt.s32.f32 %v7394
      %v7651 = vcvt.s32.f32 %v7395
      %v7652 = vcvt.s32.f32 %v7396
      %v7653 = vcvt.s32.f32 %v7397
      %v7654 = vcvt.s32.f32 %v7398
      %v7655 = vcvt.s32.f32 %v7399
      %v7656 = vcvt.s32.f32 %v7400
      %v7657 = vcvt.s32.f32 %v7401
      %v7658 = vcvt.s32.f32 %v7402
      %v7659 = vcvt.s32.f32 %v7403
      %v7660 = vcvt.s32.f32 %v7404
      %v7661 = vcvt.s32.f32 %v7405
      %v7662 = vcvt.s32.f32 %v7406
      %v7663 = vcvt.s32.f32 %v7407
      %v7664 = vcvt.s32.f32 %v7408
      %v7665 = vcvt.s32.f32 %v7409
      %v7666 = vcvt.s32.f32 %v7410
      %v7667 = vcvt.s32.f32 %v7411
      %v7668 = vcvt.s32.f32 %v7412
      %v7669 = vcvt.s32.f32 %v7413
      %v7670 = vcvt.s32.f32 %v7414
      %v7671 = vcvt.s32.f32 %v7415
      %v7672 = vcvt.s32.f32 %v7416
      %v7673 = vcvt.s32.f32 %v7417
      %v7674 = vcvt.s32.f32 %v7418
      %v7675 = vcvt.s32.f32 %v7419
      %v7676 = vcvt.s32.f32 %v7420
      %v7677 = vcvt.s32.f32 %v7421
      %v7678 = vcvt.s32.f32 %v7422
      %v7679 = vcvt.s32.f32 %v7423
      %v7680 = vcvt.s32.f32 %v7424
      %v7681 = vcvt.s32.f32 %v7425
      %v7682 = vcvt.s32.f32 %v7426
      %v7683 = vcvt.s32.f32 %v7427
      %v7684 = vcvt.s32.f32 %v7428
      %v7685 = vcvt.s32.f32 %v7429
      %v7686 = vcvt.s32.f32 %v7430
      %v7687 = vcvt.s32.f32 %v7431
      %v7688 = vcvt.s32.f32 %v7432
      %v7689 = vcvt.s32.f32 %v7433
      %v7690 = vcvt.s32.f32 %v7434
      %v7691 = vcvt.s32.f32 %v7435
      %v7692 = vcvt.s32.f32 %v7436
      %v7693 = vcvt.s32.f32 %v7437
      %v7694 = vcvt.s32.f32 %v7438
      %v7695 = vcvt.s32.f32 %v7439
      %v7696 = vcvt.s32.f32 %v7440
      %v7697 = vcvt.s32.f32 %v7441
      %v7698 = vcvt.s32.f32 %v7442
      %v7699 = vcvt.s32.f32 %v7443
      %v7700 = vcvt.s32.f32 %v7444
      %v7701 = vcvt.s32.f32 %v7445
      %v7702 = vcvt.s32.f32 %v7446
      %v7703 = vcvt.s32.f32 %v7447
      %v7704 = vcvt.s32.f32 %v7448
      %v7705 = vcvt.s32.f32 %v7449
      %v7706 = vcvt.s32.f32 %v7450
      %v7707 = vcvt.s32.f32 %v7451
      %v7708 = vcvt.s32.f32 %v7452
      %v7709 = vcvt.s32.f32 %v7453
      %v7710 = vcvt.s32.f32 %v7454
      %v7711 = vmul.f32 %v7455, %v2844
      %v7712 = vmul.f32 %v7456, %v2845
      %v7713 = vmul.f32 %v7457, %v2846
      %v7714 = vmul.f32 %v7458, %v2847
      %v7715 = vmul.f32 %v7459, %v2848
      %v7716 = vmul.f32 %v7460, %v2849
      %v7717 = vmul.f32 %v7461, %v2850
      %v7718 = vmul.f32 %v7462, %v2851
      %v7719 = vmul.f32 %v7463, %v2852
      %v7720 = vmul.f32 %v7464, %v2853
      %v7721 = vmul.f32 %v7465, %v2854
      %v7722 = vmul.f32 %v7466, %v2855
      %v7723 = vmul.f32 %v7467, %v2856
      %v7724 = vmul.f32 %v7468, %v2857
      %v7725 = vmul.f32 %v7469, %v2858
      %v7726 = vmul.f32 %v7470, %v2859
      %v7727 = vmul.f32 %v7471, %v2860
      %v7728 = vmul.f32 %v7472, %v2861
      %v7729 = vmul.f32 %v7473, %v2862
      %v7730 = vmul.f32 %v7474, %v2863
      %v7731 = vmul.f32 %v7475, %v2864
      %v7732 = vmul.f32 %v7476, %v2865
      %v7733 = vmul.f32 %v7477, %v2866
      %v7734 = vmul.f32 %v7478, %v2867
      %v7735 = vmul.f32 %v7479, %v2868
      %v7736 = vmul.f32 %v7480, %v2869
      %v7737 = vmul.f32 %v7481, %v2870
      %v7738 = vmul.f32 %v7482, %v2871
      %v7739 = vmul.f32 %v7483, %v2872
      %v7740 = vmul.f32 %v7484, %v2873
      %v7741 = vmul.f32 %v7485, %v2874
      %v7742 = vmul.f32 %v7486, %v2875
      %v7743 = vmul.f32 %v7487, %v2876
      %v7744 = vmul.f32 %v7488, %v2877
      %v7745 = vmul.f32 %v7489, %v2878
      %v7746 = vmul.f32 %v7490, %v2879
      %v7747 = vmul.f32 %v7491, %v2880
      %v7748 = vmul.f32 %v7492, %v2881
      %v7749 = vmul.f32 %v7493, %v2882
      %v7750 = vmul.f32 %v7494, %v2883
      %v7751 = vmul.f32 %v7495, %v2884
      %v7752 = vmul.f32 %v7496, %v2885
      %v7753 = vmul.f32 %v7497, %v2886
      %v7754 = vmul.f32 %v7498, %v2887
      %v7755 = vmul.f32 %v7499, %v2888
      %v7756 = vmul.f32 %v7500, %v2889
      %v7757 = vmul.f32 %v7501, %v2890
      %v7758 = vmul.f32 %v7502, %v2891
      %v7759 = vmul.f32 %v7503, %v2892
      %v7760 = vmul.f32 %v7504, %v2893
      %v7761 = vmul.f32 %v7505, %v2894
      %v7762 = vmul.f32 %v7506, %v2895
      %v7763 = vmul.f32 %v7507, %v2896
      %v7764 = vmul.f32 %v7508, %v2897
      %v7765 = vmul.f32 %v7509, %v2898
      %v7766 = vmul.f32 %v7510, %v2899
      %v7767 = vmul.f32 %v7511, %v2900
      %v7768 = vmul.f32 %v7512, %v2901
      %v7769 = vmul.f32 %v7513, %v2902
      %v7770 = vmul.f32 %v7514, %v2903
      %v7771 = vmul.f32 %v7515, %v2904
      %v7772 = vmul.f32 %v7516, %v2905
      %v7773 = vmul.f32 %v7517, %v2906
      %v7774 = vmul.f32 %v7518, %v2907
      %v7775 = vmul.f32 %v7519, %v2908
      %v7776 = vmul.f32 %v7520, %v2909
      %v7777 = vmul.f32 %v7521, %v2910
      %v7778 = vmul.f32 %v7522, %v2911
      %v7779 = vmul.f32 %v7523, %v2912
      %v7780 = vmul.f32 %v7524, %v2913
      %v7781 = vmul.f32 %v7525, %v2914
      %v7782 = vmul.f32 %v7526, %v2915
      %v7783 = vmul.f32 %v7527, %v2916
      %v7784 = vmul.f32 %v7528, %v2917
      %v7785 = vmul.f32 %v7529, %v2918
      %v7786 = vmul.f32 %v7530, %v2919
      %v7787 = vmul.f32 %v7531, %v2920
      %v7788 = vmul.f32 %v7532, %v2921
      %v7789 = vmul.f32 %v7533, %v2922
      %v7790 = vmul.f32 %v7534, %v2923
      %v7791 = vmul.f32 %v7535, %v2924
      %v7792 = vmul.f32 %v7536, %v2925
      %v7793 = vmul.f32 %v7537, %v2926
      %v7794 = vmul.f32 %v7538, %v2927
      %v7795 = vmul.f32 %v7539, %v2928
      %v7796 = vmul.f32 %v7540, %v2929
      %v7797 = vmul.f32 %v7541, %v2930
      %v7798 = vmul.f32 %v7542, %v2931
      %v7799 = vmul.f32 %v7543, %v2932
      %v7800 = vmul.f32 %v7544, %v2933
      %v7801 = vmul.f32 %v7545, %v2934
      %v7802 = vmul.f32 %v7546, %v2935
      %v7803 = vmul.f32 %v7547, %v2936
      %v7804 = vmul.f32 %v7548, %v2937
      %v7805 = vmul.f32 %v7549, %v2938
      %v7806 = vmul.f32 %v7550, %v2939
      %v7807 = vmul.f32 %v7551, %v2940
      %v7808 = vmul.f32 %v7552, %v2941
      %v7809 = vmul.f32 %v7553, %v2942
      %v7810 = vmul.f32 %v7554, %v2943
      %v7811 = vmul.f32 %v7555, %v2944
      %v7812 = vmul.f32 %v7556, %v2945
      %v7813 = vmul.f32 %v7557, %v2946
      %v7814 = vmul.f32 %v7558, %v2947
      %v7815 = vmul.f32 %v7559, %v2948
      %v7816 = vmul.f32 %v7560, %v2949
      %v7817 = vmul.f32 %v7561, %v2950
      %v7818 = vmul.f32 %v7562, %v2951
      %v7819 = vmul.f32 %v7563, %v2952
      %v7820 = vmul.f32 %v7564, %v2953
      %v7821 = vmul.f32 %v7565, %v2954
      %v7822 = vmul.f32 %v7566, %v2955
      %v7823 = vmul.f32 %v7567, %v2956
      %v7824 = vmul.f32 %v7568, %v2957
      %v7825 = vmul.f32 %v7569, %v2958
      %v7826 = vmul.f32 %v7570, %v2959
      %v7827 = vmul.f32 %v7571, %v2960
      %v7828 = vmul.f32 %v7572, %v2961
      %v7829 = vmul.f32 %v7573, %v2962
      %v7830 = vmul.f32 %v7574, %v2963
      %v7831 = vmul.f32 %v7575, %v2964
      %v7832 = vmul.f32 %v7576, %v2965
      %v7833 = vmul.f32 %v7577, %v2966
      %v7834 = vmul.f32 %v7578, %v2967
      %v7835 = vmul.f32 %v7579, %v2968
      %v7836 = vmul.f32 %v7580, %v2969
      %v7837 = vmul.f32 %v7581, %v2970
      %v7838 = vmul.f32 %v7582, %v2971
      %v7839 = vmul.f32 %v7583, %v2972
      %v7840 = vmul.f32 %v7584, %v2973
      %v7841 = vmul.f32 %v7585, %v2974
      %v7842 = vmul.f32 %v7586, %v2975
      %v7843 = vmul.f32 %v7587, %v2976
      %v7844 = vmul.f32 %v7588, %v2977
      %v7845 = vmul.f32 %v7589, %v2978
      %v7846 = vmul.f32 %v7590, %v2979
      %v7847 = vmul.f32 %v7591, %v2980
      %v7848 = vmul.f32 %v7592, %v2981
      %v7849 = vmul.f32 %v7593, %v2982
      %v7850 = vmul.f32 %v7594, %v2983
      %v7851 = vmul.f32 %v7595, %v2984
      %v7852 = vmul.f32 %v7596, %v2985
      %v7853 = vmul.f32 %v7597, %v2986
      %v7854 = vmul.f32 %v7598, %v2987
      %v7855 = vmul.f32 %v7599, %v2988
      %v7856 = vmul.f32 %v7600, %v2989
      %v7857 = vmul.f32 %v7601, %v2990
      %v7858 = vmul.f32 %v7602, %v2991
      %v7859 = vmul.f32 %v7603, %v2992
      %v7860 = vmul.f32 %v7604, %v2993
      %v7861 = vmul.f32 %v7605, %v2994
      %v7862 = vmul.f32 %v7606, %v2995
      %v7863 = vmul.f32 %v7607, %v2996
      %v7864 = vmul.f32 %v7608, %v2997
      %v7865 = vmul.f32 %v7609, %v2998
      %v7866 = vmul.f32 %v7610, %v2999
      %v7867 = vmul.f32 %v7611, %v3000
      %v7868 = vmul.f32 %v7612, %v3001
      %v7869 = vmul.f32 %v7613, %v3002
      %v7870 = vmul.f32 %v7614, %v3003
      %v7871 = vmul.f32 %v7615, %v3004
      %v7872 = vmul.f32 %v7616, %v3005
      %v7873 = vmul.f32 %v7617, %v3006
      %v7874 = vmul.f32 %v7618, %v3007
      %v7875 = vmul.f32 %v7619, %v3008
      %v7876 = vmul.f32 %v7620, %v3009
      %v7877 = vmul.f32 %v7621, %v3010
      %v7878 = vmul.f32 %v7622, %v3011
      %v7879 = vmul.f32 %v7623, %v3012
      %v7880 = vmul.f32 %v7624, %v3013
      %v7881 = vmul.f32 %v7625, %v3014
      %v7882 = vmul.f32 %v7626, %v3015
      %v7883 = vmul.f32 %v7627, %v3016
      %v7884 = vmul.f32 %v7628, %v3017
      %v7885 = vmul.f32 %v7629, %v3018
      %v7886 = vmul.f32 %v7630, %v3019
      %v7887 = vmul.f32 %v7631, %v3020
      %v7888 = vmul.f32 %v7632, %v3021
      %v7889 = vmul.f32 %v7633, %v3022
      %v7890 = vmul.f32 %v7634, %v3023
      %v7891 = vmul.f32 %v7635, %v3024
      %v7892 = vmul.f32 %v7636, %v3025
      %v7893 = vmul.f32 %v7637, %v3026
      %v7894 = vmul.f32 %v7638, %v3027
      %v7895 = vmul.f32 %v7639, %v3028
      %v7896 = vmul.f32 %v7640, %v3029
      %v7897 = vmul.f32 %v7641, %v3030
      %v7898 = vmul.f32 %v7642, %v3031
      %v7899 = vmul.f32 %v7643, %v3032
      %v7900 = vmul.f32 %v7644, %v3033
      %v7901 = vmul.f32 %v7645, %v3034
      %v7902 = vmul.f32 %v7646, %v3035
      %v7903 = vmul.f32 %v7647, %v3036
      %v7904 = vmul.f32 %v7648, %v3037
      %v7905 = vmul.f32 %v7649, %v3038
      %v7906 = vmul.f32 %v7650, %v3039
      %v7907 = vmul.f32 %v7651, %v3040
      %v7908 = vmul.f32 %v7652, %v3041
      %v7909 = vmul.f32 %v7653, %v3042
      %v7910 = vmul.f32 %v7654, %v3043
      %v7911 = vmul.f32 %v7655, %v3044
      %v7912 = vmul.f32 %v7656, %v3045
      %v7913 = vmul.f32 %v7657, %v3046
      %v7914 = vmul.f32 %v7658, %v3047
      %v7915 = vmul.f32 %v7659, %v3048
      %v7916 = vmul.f32 %v7660, %v3049
      %v7917 = vmul.f32 %v7661, %v3050
      %v7918 = vmul.f32 %v7662, %v3051
      %v7919 = vmul.f32 %v7663, %v3052
      %v7920 = vmul.f32 %v7664, %v3053
      %v7921 = vmul.f32 %v7665, %v3054
      %v7922 = vmul.f32 %v7666, %v3055
      %v7923 = vmul.f32 %v7667, %v3056
      %v7924 = vmul.f32 %v7668, %v3057
      %v7925 = vmul.f32 %v7669, %v3058
      %v7926 = vmul.f32 %v7670, %v3059
      %v7927 = vmul.f32 %v7671, %v3060
      %v7928 = vmul.f32 %v7672, %v3061
      %v7929 = vmul.f32 %v7673, %v3062
      %v7930 = vmul.f32 %v7674, %v3063
      %v7931 = vmul.f32 %v7675, %v3064
      %v7932 = vmul.f32 %v7676, %v3065
      %v7933 = vmul.f32 %v7677, %v3066
      %v7934 = vmul.f32 %v7678, %v3067
      %v7935 = vmul.f32 %v7679, %v3068
      %v7936 = vmul.f32 %v7680, %v3069
      %v7937 = vmul.f32 %v7681, %v3070
      %v7938 = vmul.f32 %v7682, %v3071
      %v7939 = vmul.f32 %v7683, %v3072
      %v7940 = vmul.f32 %v7684, %v3073
      %v7941 = vmul.f32 %v7685, %v3074
      %v7942 = vmul.f32 %v7686, %v3075
      %v7943 = vmul.f32 %v7687, %v3076
      %v7944 = vmul.f32 %v7688, %v3077
      %v7945 = vmul.f32 %v7689, %v3078
      %v7946 = vmul.f32 %v7690, %v3079
      %v7947 = vmul.f32 %v7691, %v3080
      %v7948 = vmul.f32 %v7692, %v3081
      %v7949 = vmul.f32 %v7693, %v3082
      %v7950 = vmul.f32 %v7694, %v3083
      %v7951 = vmul.f32 %v7695, %v3084
      %v7952 = vmul.f32 %v7696, %v3085
      %v7953 = vmul.f32 %v7697, %v3086
      %v7954 = vmul.f32 %v7698, %v3087
      %v7955 = vmul.f32 %v7699, %v3088
      %v7956 = vmul.f32 %v7700, %v3089
      %v7957 = vmul.f32 %v7701, %v3090
      %v7958 = vmul.f32 %v7702, %v3091
      %v7959 = vmul.f32 %v7703, %v3092
      %v7960 = vmul.f32 %v7704, %v3093
      %v7961 = vmul.f32 %v7705, %v3094
      %v7962 = vmul.f32 %v7706, %v3095
      %v7963 = vmul.f32 %v7707, %v3096
      %v7964 = vmul.f32 %v7708, %v3097
      %v7965 = vmul.f32 %v7709, %v3098
      %v7966 = vmul.f32 %v7710, %v3099
      %v7967 = vsel %vm3100, %v7711, 0.0
      %7968 = vadd.xlane.f32.xlu0 %v7967
      %v7969 = vpop.xlane.xlu0 %7968
      %v7970 = vsel %vm3100, %v7712, 0.0
      %7971 = vadd.xlane.f32.xlu0 %v7970
      %v7972 = vpop.xlane.xlu0 %7971
      %v7973 = vsel %vm3100, %v7713, 0.0
      %7974 = vadd.xlane.f32.xlu0 %v7973
      %v7975 = vpop.xlane.xlu0 %7974
      %v7976 = vsel %vm3100, %v7714, 0.0
      %7977 = vadd.xlane.f32.xlu0 %v7976
      %v7978 = vpop.xlane.xlu0 %7977
      %v7979 = vsel %vm3100, %v7715, 0.0
      %7980 = vadd.xlane.f32.xlu0 %v7979
      %v7981 = vpop.xlane.xlu0 %7980
      %v7982 = vsel %vm3100, %v7716, 0.0
      %7983 = vadd.xlane.f32.xlu0 %v7982
      %v7984 = vpop.xlane.xlu0 %7983
      %v7985 = vsel %vm3100, %v7717, 0.0
      %7986 = vadd.xlane.f32.xlu0 %v7985
      %v7987 = vpop.xlane.xlu0 %7986
      %v7988 = vsel %vm3100, %v7718, 0.0
      %7989 = vadd.xlane.f32.xlu0 %v7988
      %v7990 = vpop.xlane.xlu0 %7989
      %v7991 = vsel %vm3100, %v7719, 0.0
      %7992 = vadd.xlane.f32.xlu0 %v7991
      %v7993 = vpop.xlane.xlu0 %7992
      %v7994 = vsel %vm3100, %v7720, 0.0
      %7995 = vadd.xlane.f32.xlu0 %v7994
      %v7996 = vpop.xlane.xlu0 %7995
      %v7997 = vsel %vm3100, %v7721, 0.0
      %7998 = vadd.xlane.f32.xlu0 %v7997
      %v7999 = vpop.xlane.xlu0 %7998
      %v8000 = vsel %vm3100, %v7722, 0.0
      %8001 = vadd.xlane.f32.xlu0 %v8000
      %v8002 = vpop.xlane.xlu0 %8001
      %v8003 = vsel %vm3100, %v7723, 0.0
      %8004 = vadd.xlane.f32.xlu0 %v8003
      %v8005 = vpop.xlane.xlu0 %8004
      %v8006 = vsel %vm3100, %v7724, 0.0
      %8007 = vadd.xlane.f32.xlu0 %v8006
      %v8008 = vpop.xlane.xlu0 %8007
      %v8009 = vsel %vm3100, %v7725, 0.0
      %8010 = vadd.xlane.f32.xlu0 %v8009
      %v8011 = vpop.xlane.xlu0 %8010
      %v8012 = vsel %vm3100, %v7726, 0.0
      %8013 = vadd.xlane.f32.xlu0 %v8012
      %v8014 = vpop.xlane.xlu0 %8013
      %v8015 = vsel %vm3100, %v7727, 0.0
      %8016 = vadd.xlane.f32.xlu0 %v8015
      %v8017 = vpop.xlane.xlu0 %8016
      %v8018 = vsel %vm3100, %v7728, 0.0
      %8019 = vadd.xlane.f32.xlu0 %v8018
      %v8020 = vpop.xlane.xlu0 %8019
      %v8021 = vsel %vm3100, %v7729, 0.0
      %8022 = vadd.xlane.f32.xlu0 %v8021
      %v8023 = vpop.xlane.xlu0 %8022
      %v8024 = vsel %vm3100, %v7730, 0.0
      %8025 = vadd.xlane.f32.xlu0 %v8024
      %v8026 = vpop.xlane.xlu0 %8025
      %v8027 = vsel %vm3100, %v7731, 0.0
      %8028 = vadd.xlane.f32.xlu0 %v8027
      %v8029 = vpop.xlane.xlu0 %8028
      %v8030 = vsel %vm3100, %v7732, 0.0
      %8031 = vadd.xlane.f32.xlu0 %v8030
      %v8032 = vpop.xlane.xlu0 %8031
      %v8033 = vsel %vm3100, %v7733, 0.0
      %8034 = vadd.xlane.f32.xlu0 %v8033
      %v8035 = vpop.xlane.xlu0 %8034
      %v8036 = vsel %vm3100, %v7734, 0.0
      %8037 = vadd.xlane.f32.xlu0 %v8036
      %v8038 = vpop.xlane.xlu0 %8037
      %v8039 = vsel %vm3100, %v7735, 0.0
      %8040 = vadd.xlane.f32.xlu0 %v8039
      %v8041 = vpop.xlane.xlu0 %8040
      %v8042 = vsel %vm3100, %v7736, 0.0
      %8043 = vadd.xlane.f32.xlu0 %v8042
      %v8044 = vpop.xlane.xlu0 %8043
      %v8045 = vsel %vm3100, %v7737, 0.0
      %8046 = vadd.xlane.f32.xlu0 %v8045
      %v8047 = vpop.xlane.xlu0 %8046
      %v8048 = vsel %vm3100, %v7738, 0.0
      %8049 = vadd.xlane.f32.xlu0 %v8048
      %v8050 = vpop.xlane.xlu0 %8049
      %v8051 = vsel %vm3100, %v7739, 0.0
      %8052 = vadd.xlane.f32.xlu0 %v8051
      %v8053 = vpop.xlane.xlu0 %8052
      %v8054 = vsel %vm3100, %v7740, 0.0
      %8055 = vadd.xlane.f32.xlu0 %v8054
      %v8056 = vpop.xlane.xlu0 %8055
      %v8057 = vsel %vm3100, %v7741, 0.0
      %8058 = vadd.xlane.f32.xlu0 %v8057
      %v8059 = vpop.xlane.xlu0 %8058
      %v8060 = vsel %vm3100, %v7742, 0.0
      %8061 = vadd.xlane.f32.xlu0 %v8060
      %v8062 = vpop.xlane.xlu0 %8061
      %v8063 = vsel %vm3100, %v7743, 0.0
      %8064 = vadd.xlane.f32.xlu0 %v8063
      %v8065 = vpop.xlane.xlu0 %8064
      %v8066 = vsel %vm3100, %v7744, 0.0
      %8067 = vadd.xlane.f32.xlu0 %v8066
      %v8068 = vpop.xlane.xlu0 %8067
      %v8069 = vsel %vm3100, %v7745, 0.0
      %8070 = vadd.xlane.f32.xlu0 %v8069
      %v8071 = vpop.xlane.xlu0 %8070
      %v8072 = vsel %vm3100, %v7746, 0.0
      %8073 = vadd.xlane.f32.xlu0 %v8072
      %v8074 = vpop.xlane.xlu0 %8073
      %v8075 = vsel %vm3100, %v7747, 0.0
      %8076 = vadd.xlane.f32.xlu0 %v8075
      %v8077 = vpop.xlane.xlu0 %8076
      %v8078 = vsel %vm3100, %v7748, 0.0
      %8079 = vadd.xlane.f32.xlu0 %v8078
      %v8080 = vpop.xlane.xlu0 %8079
      %v8081 = vsel %vm3100, %v7749, 0.0
      %8082 = vadd.xlane.f32.xlu0 %v8081
      %v8083 = vpop.xlane.xlu0 %8082
      %v8084 = vsel %vm3100, %v7750, 0.0
      %8085 = vadd.xlane.f32.xlu0 %v8084
      %v8086 = vpop.xlane.xlu0 %8085
      %v8087 = vsel %vm3100, %v7751, 0.0
      %8088 = vadd.xlane.f32.xlu0 %v8087
      %v8089 = vpop.xlane.xlu0 %8088
      %v8090 = vsel %vm3100, %v7752, 0.0
      %8091 = vadd.xlane.f32.xlu0 %v8090
      %v8092 = vpop.xlane.xlu0 %8091
      %v8093 = vsel %vm3100, %v7753, 0.0
      %8094 = vadd.xlane.f32.xlu0 %v8093
      %v8095 = vpop.xlane.xlu0 %8094
      %v8096 = vsel %vm3100, %v7754, 0.0
      %8097 = vadd.xlane.f32.xlu0 %v8096
      %v8098 = vpop.xlane.xlu0 %8097
      %v8099 = vsel %vm3100, %v7755, 0.0
      %8100 = vadd.xlane.f32.xlu0 %v8099
      %v8101 = vpop.xlane.xlu0 %8100
      %v8102 = vsel %vm3100, %v7756, 0.0
      %8103 = vadd.xlane.f32.xlu0 %v8102
      %v8104 = vpop.xlane.xlu0 %8103
      %v8105 = vsel %vm3100, %v7757, 0.0
      %8106 = vadd.xlane.f32.xlu0 %v8105
      %v8107 = vpop.xlane.xlu0 %8106
      %v8108 = vsel %vm3100, %v7758, 0.0
      %8109 = vadd.xlane.f32.xlu0 %v8108
      %v8110 = vpop.xlane.xlu0 %8109
      %v8111 = vsel %vm3100, %v7759, 0.0
      %8112 = vadd.xlane.f32.xlu0 %v8111
      %v8113 = vpop.xlane.xlu0 %8112
      %v8114 = vsel %vm3100, %v7760, 0.0
      %8115 = vadd.xlane.f32.xlu0 %v8114
      %v8116 = vpop.xlane.xlu0 %8115
      %v8117 = vsel %vm3100, %v7761, 0.0
      %8118 = vadd.xlane.f32.xlu0 %v8117
      %v8119 = vpop.xlane.xlu0 %8118
      %v8120 = vsel %vm3100, %v7762, 0.0
      %8121 = vadd.xlane.f32.xlu0 %v8120
      %v8122 = vpop.xlane.xlu0 %8121
      %v8123 = vsel %vm3100, %v7763, 0.0
      %8124 = vadd.xlane.f32.xlu0 %v8123
      %v8125 = vpop.xlane.xlu0 %8124
      %v8126 = vsel %vm3100, %v7764, 0.0
      %8127 = vadd.xlane.f32.xlu0 %v8126
      %v8128 = vpop.xlane.xlu0 %8127
      %v8129 = vsel %vm3100, %v7765, 0.0
      %8130 = vadd.xlane.f32.xlu0 %v8129
      %v8131 = vpop.xlane.xlu0 %8130
      %v8132 = vsel %vm3100, %v7766, 0.0
      %8133 = vadd.xlane.f32.xlu0 %v8132
      %v8134 = vpop.xlane.xlu0 %8133
      %v8135 = vsel %vm3100, %v7767, 0.0
      %8136 = vadd.xlane.f32.xlu0 %v8135
      %v8137 = vpop.xlane.xlu0 %8136
      %v8138 = vsel %vm3100, %v7768, 0.0
      %8139 = vadd.xlane.f32.xlu0 %v8138
      %v8140 = vpop.xlane.xlu0 %8139
      %v8141 = vsel %vm3100, %v7769, 0.0
      %8142 = vadd.xlane.f32.xlu0 %v8141
      %v8143 = vpop.xlane.xlu0 %8142
      %v8144 = vsel %vm3100, %v7770, 0.0
      %8145 = vadd.xlane.f32.xlu0 %v8144
      %v8146 = vpop.xlane.xlu0 %8145
      %v8147 = vsel %vm3100, %v7771, 0.0
      %8148 = vadd.xlane.f32.xlu0 %v8147
      %v8149 = vpop.xlane.xlu0 %8148
      %v8150 = vsel %vm3100, %v7772, 0.0
      %8151 = vadd.xlane.f32.xlu0 %v8150
      %v8152 = vpop.xlane.xlu0 %8151
      %v8153 = vsel %vm3100, %v7773, 0.0
      %8154 = vadd.xlane.f32.xlu0 %v8153
      %v8155 = vpop.xlane.xlu0 %8154
      %v8156 = vsel %vm3100, %v7774, 0.0
      %8157 = vadd.xlane.f32.xlu0 %v8156
      %v8158 = vpop.xlane.xlu0 %8157
      %v8159 = vsel %vm3100, %v7775, 0.0
      %8160 = vadd.xlane.f32.xlu0 %v8159
      %v8161 = vpop.xlane.xlu0 %8160
      %v8162 = vsel %vm3100, %v7776, 0.0
      %8163 = vadd.xlane.f32.xlu0 %v8162
      %v8164 = vpop.xlane.xlu0 %8163
      %v8165 = vsel %vm3100, %v7777, 0.0
      %8166 = vadd.xlane.f32.xlu0 %v8165
      %v8167 = vpop.xlane.xlu0 %8166
      %v8168 = vsel %vm3100, %v7778, 0.0
      %8169 = vadd.xlane.f32.xlu0 %v8168
      %v8170 = vpop.xlane.xlu0 %8169
      %v8171 = vsel %vm3100, %v7779, 0.0
      %8172 = vadd.xlane.f32.xlu0 %v8171
      %v8173 = vpop.xlane.xlu0 %8172
      %v8174 = vsel %vm3100, %v7780, 0.0
      %8175 = vadd.xlane.f32.xlu0 %v8174
      %v8176 = vpop.xlane.xlu0 %8175
      %v8177 = vsel %vm3100, %v7781, 0.0
      %8178 = vadd.xlane.f32.xlu0 %v8177
      %v8179 = vpop.xlane.xlu0 %8178
      %v8180 = vsel %vm3100, %v7782, 0.0
      %8181 = vadd.xlane.f32.xlu0 %v8180
      %v8182 = vpop.xlane.xlu0 %8181
      %v8183 = vsel %vm3100, %v7783, 0.0
      %8184 = vadd.xlane.f32.xlu0 %v8183
      %v8185 = vpop.xlane.xlu0 %8184
      %v8186 = vsel %vm3100, %v7784, 0.0
      %8187 = vadd.xlane.f32.xlu0 %v8186
      %v8188 = vpop.xlane.xlu0 %8187
      %v8189 = vsel %vm3100, %v7785, 0.0
      %8190 = vadd.xlane.f32.xlu0 %v8189
      %v8191 = vpop.xlane.xlu0 %8190
      %v8192 = vsel %vm3100, %v7786, 0.0
      %8193 = vadd.xlane.f32.xlu0 %v8192
      %v8194 = vpop.xlane.xlu0 %8193
      %v8195 = vsel %vm3100, %v7787, 0.0
      %8196 = vadd.xlane.f32.xlu0 %v8195
      %v8197 = vpop.xlane.xlu0 %8196
      %v8198 = vsel %vm3100, %v7788, 0.0
      %8199 = vadd.xlane.f32.xlu0 %v8198
      %v8200 = vpop.xlane.xlu0 %8199
      %v8201 = vsel %vm3100, %v7789, 0.0
      %8202 = vadd.xlane.f32.xlu0 %v8201
      %v8203 = vpop.xlane.xlu0 %8202
      %v8204 = vsel %vm3100, %v7790, 0.0
      %8205 = vadd.xlane.f32.xlu0 %v8204
      %v8206 = vpop.xlane.xlu0 %8205
      %v8207 = vsel %vm3100, %v7791, 0.0
      %8208 = vadd.xlane.f32.xlu0 %v8207
      %v8209 = vpop.xlane.xlu0 %8208
      %v8210 = vsel %vm3100, %v7792, 0.0
      %8211 = vadd.xlane.f32.xlu0 %v8210
      %v8212 = vpop.xlane.xlu0 %8211
      %v8213 = vsel %vm3100, %v7793, 0.0
      %8214 = vadd.xlane.f32.xlu0 %v8213
      %v8215 = vpop.xlane.xlu0 %8214
      %v8216 = vsel %vm3100, %v7794, 0.0
      %8217 = vadd.xlane.f32.xlu0 %v8216
      %v8218 = vpop.xlane.xlu0 %8217
      %v8219 = vsel %vm3100, %v7795, 0.0
      %8220 = vadd.xlane.f32.xlu0 %v8219
      %v8221 = vpop.xlane.xlu0 %8220
      %v8222 = vsel %vm3100, %v7796, 0.0
      %8223 = vadd.xlane.f32.xlu0 %v8222
      %v8224 = vpop.xlane.xlu0 %8223
      %v8225 = vsel %vm3100, %v7797, 0.0
      %8226 = vadd.xlane.f32.xlu0 %v8225
      %v8227 = vpop.xlane.xlu0 %8226
      %v8228 = vsel %vm3100, %v7798, 0.0
      %8229 = vadd.xlane.f32.xlu0 %v8228
      %v8230 = vpop.xlane.xlu0 %8229
      %v8231 = vsel %vm3100, %v7799, 0.0
      %8232 = vadd.xlane.f32.xlu0 %v8231
      %v8233 = vpop.xlane.xlu0 %8232
      %v8234 = vsel %vm3100, %v7800, 0.0
      %8235 = vadd.xlane.f32.xlu0 %v8234
      %v8236 = vpop.xlane.xlu0 %8235
      %v8237 = vsel %vm3100, %v7801, 0.0
      %8238 = vadd.xlane.f32.xlu0 %v8237
      %v8239 = vpop.xlane.xlu0 %8238
      %v8240 = vsel %vm3100, %v7802, 0.0
      %8241 = vadd.xlane.f32.xlu0 %v8240
      %v8242 = vpop.xlane.xlu0 %8241
      %v8243 = vsel %vm3100, %v7803, 0.0
      %8244 = vadd.xlane.f32.xlu0 %v8243
      %v8245 = vpop.xlane.xlu0 %8244
      %v8246 = vsel %vm3100, %v7804, 0.0
      %8247 = vadd.xlane.f32.xlu0 %v8246
      %v8248 = vpop.xlane.xlu0 %8247
      %v8249 = vsel %vm3100, %v7805, 0.0
      %8250 = vadd.xlane.f32.xlu0 %v8249
      %v8251 = vpop.xlane.xlu0 %8250
      %v8252 = vsel %vm3100, %v7806, 0.0
      %8253 = vadd.xlane.f32.xlu0 %v8252
      %v8254 = vpop.xlane.xlu0 %8253
      %v8255 = vsel %vm3100, %v7807, 0.0
      %8256 = vadd.xlane.f32.xlu0 %v8255
      %v8257 = vpop.xlane.xlu0 %8256
      %v8258 = vsel %vm3100, %v7808, 0.0
      %8259 = vadd.xlane.f32.xlu0 %v8258
      %v8260 = vpop.xlane.xlu0 %8259
      %v8261 = vsel %vm3100, %v7809, 0.0
      %8262 = vadd.xlane.f32.xlu0 %v8261
      %v8263 = vpop.xlane.xlu0 %8262
      %v8264 = vsel %vm3100, %v7810, 0.0
      %8265 = vadd.xlane.f32.xlu0 %v8264
      %v8266 = vpop.xlane.xlu0 %8265
      %v8267 = vsel %vm3100, %v7811, 0.0
      %8268 = vadd.xlane.f32.xlu0 %v8267
      %v8269 = vpop.xlane.xlu0 %8268
      %v8270 = vsel %vm3100, %v7812, 0.0
      %8271 = vadd.xlane.f32.xlu0 %v8270
      %v8272 = vpop.xlane.xlu0 %8271
      %v8273 = vsel %vm3100, %v7813, 0.0
      %8274 = vadd.xlane.f32.xlu0 %v8273
      %v8275 = vpop.xlane.xlu0 %8274
      %v8276 = vsel %vm3100, %v7814, 0.0
      %8277 = vadd.xlane.f32.xlu0 %v8276
      %v8278 = vpop.xlane.xlu0 %8277
      %v8279 = vsel %vm3100, %v7815, 0.0
      %8280 = vadd.xlane.f32.xlu0 %v8279
      %v8281 = vpop.xlane.xlu0 %8280
      %v8282 = vsel %vm3100, %v7816, 0.0
      %8283 = vadd.xlane.f32.xlu0 %v8282
      %v8284 = vpop.xlane.xlu0 %8283
      %v8285 = vsel %vm3100, %v7817, 0.0
      %8286 = vadd.xlane.f32.xlu0 %v8285
      %v8287 = vpop.xlane.xlu0 %8286
      %v8288 = vsel %vm3100, %v7818, 0.0
      %8289 = vadd.xlane.f32.xlu0 %v8288
      %v8290 = vpop.xlane.xlu0 %8289
      %v8291 = vsel %vm3100, %v7819, 0.0
      %8292 = vadd.xlane.f32.xlu0 %v8291
      %v8293 = vpop.xlane.xlu0 %8292
      %v8294 = vsel %vm3100, %v7820, 0.0
      %8295 = vadd.xlane.f32.xlu0 %v8294
      %v8296 = vpop.xlane.xlu0 %8295
      %v8297 = vsel %vm3100, %v7821, 0.0
      %8298 = vadd.xlane.f32.xlu0 %v8297
      %v8299 = vpop.xlane.xlu0 %8298
      %v8300 = vsel %vm3100, %v7822, 0.0
      %8301 = vadd.xlane.f32.xlu0 %v8300
      %v8302 = vpop.xlane.xlu0 %8301
      %v8303 = vsel %vm3100, %v7823, 0.0
      %8304 = vadd.xlane.f32.xlu0 %v8303
      %v8305 = vpop.xlane.xlu0 %8304
      %v8306 = vsel %vm3100, %v7824, 0.0
      %8307 = vadd.xlane.f32.xlu0 %v8306
      %v8308 = vpop.xlane.xlu0 %8307
      %v8309 = vsel %vm3100, %v7825, 0.0
      %8310 = vadd.xlane.f32.xlu0 %v8309
      %v8311 = vpop.xlane.xlu0 %8310
      %v8312 = vsel %vm3100, %v7826, 0.0
      %8313 = vadd.xlane.f32.xlu0 %v8312
      %v8314 = vpop.xlane.xlu0 %8313
      %v8315 = vsel %vm3100, %v7827, 0.0
      %8316 = vadd.xlane.f32.xlu0 %v8315
      %v8317 = vpop.xlane.xlu0 %8316
      %v8318 = vsel %vm3100, %v7828, 0.0
      %8319 = vadd.xlane.f32.xlu0 %v8318
      %v8320 = vpop.xlane.xlu0 %8319
      %v8321 = vsel %vm3100, %v7829, 0.0
      %8322 = vadd.xlane.f32.xlu0 %v8321
      %v8323 = vpop.xlane.xlu0 %8322
      %v8324 = vsel %vm3100, %v7830, 0.0
      %8325 = vadd.xlane.f32.xlu0 %v8324
      %v8326 = vpop.xlane.xlu0 %8325
      %v8327 = vsel %vm3100, %v7831, 0.0
      %8328 = vadd.xlane.f32.xlu0 %v8327
      %v8329 = vpop.xlane.xlu0 %8328
      %v8330 = vsel %vm3100, %v7832, 0.0
      %8331 = vadd.xlane.f32.xlu0 %v8330
      %v8332 = vpop.xlane.xlu0 %8331
      %v8333 = vsel %vm3100, %v7833, 0.0
      %8334 = vadd.xlane.f32.xlu0 %v8333
      %v8335 = vpop.xlane.xlu0 %8334
      %v8336 = vsel %vm3100, %v7834, 0.0
      %8337 = vadd.xlane.f32.xlu0 %v8336
      %v8338 = vpop.xlane.xlu0 %8337
      %v8339 = vsel %vm3100, %v7835, 0.0
      %8340 = vadd.xlane.f32.xlu0 %v8339
      %v8341 = vpop.xlane.xlu0 %8340
      %v8342 = vsel %vm3100, %v7836, 0.0
      %8343 = vadd.xlane.f32.xlu0 %v8342
      %v8344 = vpop.xlane.xlu0 %8343
      %v8345 = vsel %vm3100, %v7837, 0.0
      %8346 = vadd.xlane.f32.xlu0 %v8345
      %v8347 = vpop.xlane.xlu0 %8346
      %v8348 = vsel %vm3100, %v7838, 0.0
      %8349 = vadd.xlane.f32.xlu0 %v8348
      %v8350 = vpop.xlane.xlu0 %8349
      %v8351 = vsel %vm3100, %v7839, 0.0
      %8352 = vadd.xlane.f32.xlu0 %v8351
      %v8353 = vpop.xlane.xlu0 %8352
      %v8354 = vsel %vm3100, %v7840, 0.0
      %8355 = vadd.xlane.f32.xlu0 %v8354
      %v8356 = vpop.xlane.xlu0 %8355
      %v8357 = vsel %vm3100, %v7841, 0.0
      %8358 = vadd.xlane.f32.xlu0 %v8357
      %v8359 = vpop.xlane.xlu0 %8358
      %v8360 = vsel %vm3100, %v7842, 0.0
      %8361 = vadd.xlane.f32.xlu0 %v8360
      %v8362 = vpop.xlane.xlu0 %8361
      %v8363 = vsel %vm3100, %v7843, 0.0
      %8364 = vadd.xlane.f32.xlu0 %v8363
      %v8365 = vpop.xlane.xlu0 %8364
      %v8366 = vsel %vm3100, %v7844, 0.0
      %8367 = vadd.xlane.f32.xlu0 %v8366
      %v8368 = vpop.xlane.xlu0 %8367
      %v8369 = vsel %vm3100, %v7845, 0.0
      %8370 = vadd.xlane.f32.xlu0 %v8369
      %v8371 = vpop.xlane.xlu0 %8370
      %v8372 = vsel %vm3100, %v7846, 0.0
      %8373 = vadd.xlane.f32.xlu0 %v8372
      %v8374 = vpop.xlane.xlu0 %8373
      %v8375 = vsel %vm3100, %v7847, 0.0
      %8376 = vadd.xlane.f32.xlu0 %v8375
      %v8377 = vpop.xlane.xlu0 %8376
      %v8378 = vsel %vm3100, %v7848, 0.0
      %8379 = vadd.xlane.f32.xlu0 %v8378
      %v8380 = vpop.xlane.xlu0 %8379
      %v8381 = vsel %vm3100, %v7849, 0.0
      %8382 = vadd.xlane.f32.xlu0 %v8381
      %v8383 = vpop.xlane.xlu0 %8382
      %v8384 = vsel %vm3100, %v7850, 0.0
      %8385 = vadd.xlane.f32.xlu0 %v8384
      %v8386 = vpop.xlane.xlu0 %8385
      %v8387 = vsel %vm3100, %v7851, 0.0
      %8388 = vadd.xlane.f32.xlu0 %v8387
      %v8389 = vpop.xlane.xlu0 %8388
      %v8390 = vsel %vm3100, %v7852, 0.0
      %8391 = vadd.xlane.f32.xlu0 %v8390
      %v8392 = vpop.xlane.xlu0 %8391
      %v8393 = vsel %vm3100, %v7853, 0.0
      %8394 = vadd.xlane.f32.xlu0 %v8393
      %v8395 = vpop.xlane.xlu0 %8394
      %v8396 = vsel %vm3100, %v7854, 0.0
      %8397 = vadd.xlane.f32.xlu0 %v8396
      %v8398 = vpop.xlane.xlu0 %8397
      %v8399 = vsel %vm3100, %v7855, 0.0
      %8400 = vadd.xlane.f32.xlu0 %v8399
      %v8401 = vpop.xlane.xlu0 %8400
      %v8402 = vsel %vm3100, %v7856, 0.0
      %8403 = vadd.xlane.f32.xlu0 %v8402
      %v8404 = vpop.xlane.xlu0 %8403
      %v8405 = vsel %vm3100, %v7857, 0.0
      %8406 = vadd.xlane.f32.xlu0 %v8405
      %v8407 = vpop.xlane.xlu0 %8406
      %v8408 = vsel %vm3100, %v7858, 0.0
      %8409 = vadd.xlane.f32.xlu0 %v8408
      %v8410 = vpop.xlane.xlu0 %8409
      %v8411 = vsel %vm3100, %v7859, 0.0
      %8412 = vadd.xlane.f32.xlu0 %v8411
      %v8413 = vpop.xlane.xlu0 %8412
      %v8414 = vsel %vm3100, %v7860, 0.0
      %8415 = vadd.xlane.f32.xlu0 %v8414
      %v8416 = vpop.xlane.xlu0 %8415
      %v8417 = vsel %vm3100, %v7861, 0.0
      %8418 = vadd.xlane.f32.xlu0 %v8417
      %v8419 = vpop.xlane.xlu0 %8418
      %v8420 = vsel %vm3100, %v7862, 0.0
      %8421 = vadd.xlane.f32.xlu0 %v8420
      %v8422 = vpop.xlane.xlu0 %8421
      %v8423 = vsel %vm3100, %v7863, 0.0
      %8424 = vadd.xlane.f32.xlu0 %v8423
      %v8425 = vpop.xlane.xlu0 %8424
      %v8426 = vsel %vm3100, %v7864, 0.0
      %8427 = vadd.xlane.f32.xlu0 %v8426
      %v8428 = vpop.xlane.xlu0 %8427
      %v8429 = vsel %vm3100, %v7865, 0.0
      %8430 = vadd.xlane.f32.xlu0 %v8429
      %v8431 = vpop.xlane.xlu0 %8430
      %v8432 = vsel %vm3100, %v7866, 0.0
      %8433 = vadd.xlane.f32.xlu0 %v8432
      %v8434 = vpop.xlane.xlu0 %8433
      %v8435 = vsel %vm3100, %v7867, 0.0
      %8436 = vadd.xlane.f32.xlu0 %v8435
      %v8437 = vpop.xlane.xlu0 %8436
      %v8438 = vsel %vm3100, %v7868, 0.0
      %8439 = vadd.xlane.f32.xlu0 %v8438
      %v8440 = vpop.xlane.xlu0 %8439
      %v8441 = vsel %vm3100, %v7869, 0.0
      %8442 = vadd.xlane.f32.xlu0 %v8441
      %v8443 = vpop.xlane.xlu0 %8442
      %v8444 = vsel %vm3100, %v7870, 0.0
      %8445 = vadd.xlane.f32.xlu0 %v8444
      %v8446 = vpop.xlane.xlu0 %8445
      %v8447 = vsel %vm3100, %v7871, 0.0
      %8448 = vadd.xlane.f32.xlu0 %v8447
      %v8449 = vpop.xlane.xlu0 %8448
      %v8450 = vsel %vm3100, %v7872, 0.0
      %8451 = vadd.xlane.f32.xlu0 %v8450
      %v8452 = vpop.xlane.xlu0 %8451
      %v8453 = vsel %vm3100, %v7873, 0.0
      %8454 = vadd.xlane.f32.xlu0 %v8453
      %v8455 = vpop.xlane.xlu0 %8454
      %v8456 = vsel %vm3100, %v7874, 0.0
      %8457 = vadd.xlane.f32.xlu0 %v8456
      %v8458 = vpop.xlane.xlu0 %8457
      %v8459 = vsel %vm3100, %v7875, 0.0
      %8460 = vadd.xlane.f32.xlu0 %v8459
      %v8461 = vpop.xlane.xlu0 %8460
      %v8462 = vsel %vm3100, %v7876, 0.0
      %8463 = vadd.xlane.f32.xlu0 %v8462
      %v8464 = vpop.xlane.xlu0 %8463
      %v8465 = vsel %vm3100, %v7877, 0.0
      %8466 = vadd.xlane.f32.xlu0 %v8465
      %v8467 = vpop.xlane.xlu0 %8466
      %v8468 = vsel %vm3100, %v7878, 0.0
      %8469 = vadd.xlane.f32.xlu0 %v8468
      %v8470 = vpop.xlane.xlu0 %8469
      %v8471 = vsel %vm3100, %v7879, 0.0
      %8472 = vadd.xlane.f32.xlu0 %v8471
      %v8473 = vpop.xlane.xlu0 %8472
      %v8474 = vsel %vm3100, %v7880, 0.0
      %8475 = vadd.xlane.f32.xlu0 %v8474
      %v8476 = vpop.xlane.xlu0 %8475
      %v8477 = vsel %vm3100, %v7881, 0.0
      %8478 = vadd.xlane.f32.xlu0 %v8477
      %v8479 = vpop.xlane.xlu0 %8478
      %v8480 = vsel %vm3100, %v7882, 0.0
      %8481 = vadd.xlane.f32.xlu0 %v8480
      %v8482 = vpop.xlane.xlu0 %8481
      %v8483 = vsel %vm3100, %v7883, 0.0
      %8484 = vadd.xlane.f32.xlu0 %v8483
      %v8485 = vpop.xlane.xlu0 %8484
      %v8486 = vsel %vm3100, %v7884, 0.0
      %8487 = vadd.xlane.f32.xlu0 %v8486
      %v8488 = vpop.xlane.xlu0 %8487
      %v8489 = vsel %vm3100, %v7885, 0.0
      %8490 = vadd.xlane.f32.xlu0 %v8489
      %v8491 = vpop.xlane.xlu0 %8490
      %v8492 = vsel %vm3100, %v7886, 0.0
      %8493 = vadd.xlane.f32.xlu0 %v8492
      %v8494 = vpop.xlane.xlu0 %8493
      %v8495 = vsel %vm3100, %v7887, 0.0
      %8496 = vadd.xlane.f32.xlu0 %v8495
      %v8497 = vpop.xlane.xlu0 %8496
      %v8498 = vsel %vm3100, %v7888, 0.0
      %8499 = vadd.xlane.f32.xlu0 %v8498
      %v8500 = vpop.xlane.xlu0 %8499
      %v8501 = vsel %vm3100, %v7889, 0.0
      %8502 = vadd.xlane.f32.xlu0 %v8501
      %v8503 = vpop.xlane.xlu0 %8502
      %v8504 = vsel %vm3100, %v7890, 0.0
      %8505 = vadd.xlane.f32.xlu0 %v8504
      %v8506 = vpop.xlane.xlu0 %8505
      %v8507 = vsel %vm3100, %v7891, 0.0
      %8508 = vadd.xlane.f32.xlu0 %v8507
      %v8509 = vpop.xlane.xlu0 %8508
      %v8510 = vsel %vm3100, %v7892, 0.0
      %8511 = vadd.xlane.f32.xlu0 %v8510
      %v8512 = vpop.xlane.xlu0 %8511
      %v8513 = vsel %vm3100, %v7893, 0.0
      %8514 = vadd.xlane.f32.xlu0 %v8513
      %v8515 = vpop.xlane.xlu0 %8514
      %v8516 = vsel %vm3100, %v7894, 0.0
      %8517 = vadd.xlane.f32.xlu0 %v8516
      %v8518 = vpop.xlane.xlu0 %8517
      %v8519 = vsel %vm3100, %v7895, 0.0
      %8520 = vadd.xlane.f32.xlu0 %v8519
      %v8521 = vpop.xlane.xlu0 %8520
      %v8522 = vsel %vm3100, %v7896, 0.0
      %8523 = vadd.xlane.f32.xlu0 %v8522
      %v8524 = vpop.xlane.xlu0 %8523
      %v8525 = vsel %vm3100, %v7897, 0.0
      %8526 = vadd.xlane.f32.xlu0 %v8525
      %v8527 = vpop.xlane.xlu0 %8526
      %v8528 = vsel %vm3100, %v7898, 0.0
      %8529 = vadd.xlane.f32.xlu0 %v8528
      %v8530 = vpop.xlane.xlu0 %8529
      %v8531 = vsel %vm3100, %v7899, 0.0
      %8532 = vadd.xlane.f32.xlu0 %v8531
      %v8533 = vpop.xlane.xlu0 %8532
      %v8534 = vsel %vm3100, %v7900, 0.0
      %8535 = vadd.xlane.f32.xlu0 %v8534
      %v8536 = vpop.xlane.xlu0 %8535
      %v8537 = vsel %vm3100, %v7901, 0.0
      %8538 = vadd.xlane.f32.xlu0 %v8537
      %v8539 = vpop.xlane.xlu0 %8538
      %v8540 = vsel %vm3100, %v7902, 0.0
      %8541 = vadd.xlane.f32.xlu0 %v8540
      %v8542 = vpop.xlane.xlu0 %8541
      %v8543 = vsel %vm3100, %v7903, 0.0
      %8544 = vadd.xlane.f32.xlu0 %v8543
      %v8545 = vpop.xlane.xlu0 %8544
      %v8546 = vsel %vm3100, %v7904, 0.0
      %8547 = vadd.xlane.f32.xlu0 %v8546
      %v8548 = vpop.xlane.xlu0 %8547
      %v8549 = vsel %vm3100, %v7905, 0.0
      %8550 = vadd.xlane.f32.xlu0 %v8549
      %v8551 = vpop.xlane.xlu0 %8550
      %v8552 = vsel %vm3100, %v7906, 0.0
      %8553 = vadd.xlane.f32.xlu0 %v8552
      %v8554 = vpop.xlane.xlu0 %8553
      %v8555 = vsel %vm3100, %v7907, 0.0
      %8556 = vadd.xlane.f32.xlu0 %v8555
      %v8557 = vpop.xlane.xlu0 %8556
      %v8558 = vsel %vm3100, %v7908, 0.0
      %8559 = vadd.xlane.f32.xlu0 %v8558
      %v8560 = vpop.xlane.xlu0 %8559
      %v8561 = vsel %vm3100, %v7909, 0.0
      %8562 = vadd.xlane.f32.xlu0 %v8561
      %v8563 = vpop.xlane.xlu0 %8562
      %v8564 = vsel %vm3100, %v7910, 0.0
      %8565 = vadd.xlane.f32.xlu0 %v8564
      %v8566 = vpop.xlane.xlu0 %8565
      %v8567 = vsel %vm3100, %v7911, 0.0
      %8568 = vadd.xlane.f32.xlu0 %v8567
      %v8569 = vpop.xlane.xlu0 %8568
      %v8570 = vsel %vm3100, %v7912, 0.0
      %8571 = vadd.xlane.f32.xlu0 %v8570
      %v8572 = vpop.xlane.xlu0 %8571
      %v8573 = vsel %vm3100, %v7913, 0.0
      %8574 = vadd.xlane.f32.xlu0 %v8573
      %v8575 = vpop.xlane.xlu0 %8574
      %v8576 = vsel %vm3100, %v7914, 0.0
      %8577 = vadd.xlane.f32.xlu0 %v8576
      %v8578 = vpop.xlane.xlu0 %8577
      %v8579 = vsel %vm3100, %v7915, 0.0
      %8580 = vadd.xlane.f32.xlu0 %v8579
      %v8581 = vpop.xlane.xlu0 %8580
      %v8582 = vsel %vm3100, %v7916, 0.0
      %8583 = vadd.xlane.f32.xlu0 %v8582
      %v8584 = vpop.xlane.xlu0 %8583
      %v8585 = vsel %vm3100, %v7917, 0.0
      %8586 = vadd.xlane.f32.xlu0 %v8585
      %v8587 = vpop.xlane.xlu0 %8586
      %v8588 = vsel %vm3100, %v7918, 0.0
      %8589 = vadd.xlane.f32.xlu0 %v8588
      %v8590 = vpop.xlane.xlu0 %8589
      %v8591 = vsel %vm3100, %v7919, 0.0
      %8592 = vadd.xlane.f32.xlu0 %v8591
      %v8593 = vpop.xlane.xlu0 %8592
      %v8594 = vsel %vm3100, %v7920, 0.0
      %8595 = vadd.xlane.f32.xlu0 %v8594
      %v8596 = vpop.xlane.xlu0 %8595
      %v8597 = vsel %vm3100, %v7921, 0.0
      %8598 = vadd.xlane.f32.xlu0 %v8597
      %v8599 = vpop.xlane.xlu0 %8598
      %v8600 = vsel %vm3100, %v7922, 0.0
      %8601 = vadd.xlane.f32.xlu0 %v8600
      %v8602 = vpop.xlane.xlu0 %8601
      %v8603 = vsel %vm3100, %v7923, 0.0
      %8604 = vadd.xlane.f32.xlu0 %v8603
      %v8605 = vpop.xlane.xlu0 %8604
      %v8606 = vsel %vm3100, %v7924, 0.0
      %8607 = vadd.xlane.f32.xlu0 %v8606
      %v8608 = vpop.xlane.xlu0 %8607
      %v8609 = vsel %vm3100, %v7925, 0.0
      %8610 = vadd.xlane.f32.xlu0 %v8609
      %v8611 = vpop.xlane.xlu0 %8610
      %v8612 = vsel %vm3100, %v7926, 0.0
      %8613 = vadd.xlane.f32.xlu0 %v8612
      %v8614 = vpop.xlane.xlu0 %8613
      %v8615 = vsel %vm3100, %v7927, 0.0
      %8616 = vadd.xlane.f32.xlu0 %v8615
      %v8617 = vpop.xlane.xlu0 %8616
      %v8618 = vsel %vm3100, %v7928, 0.0
      %8619 = vadd.xlane.f32.xlu0 %v8618
      %v8620 = vpop.xlane.xlu0 %8619
      %v8621 = vsel %vm3100, %v7929, 0.0
      %8622 = vadd.xlane.f32.xlu0 %v8621
      %v8623 = vpop.xlane.xlu0 %8622
      %v8624 = vsel %vm3100, %v7930, 0.0
      %8625 = vadd.xlane.f32.xlu0 %v8624
      %v8626 = vpop.xlane.xlu0 %8625
      %v8627 = vsel %vm3100, %v7931, 0.0
      %8628 = vadd.xlane.f32.xlu0 %v8627
      %v8629 = vpop.xlane.xlu0 %8628
      %v8630 = vsel %vm3100, %v7932, 0.0
      %8631 = vadd.xlane.f32.xlu0 %v8630
      %v8632 = vpop.xlane.xlu0 %8631
      %v8633 = vsel %vm3100, %v7933, 0.0
      %8634 = vadd.xlane.f32.xlu0 %v8633
      %v8635 = vpop.xlane.xlu0 %8634
      %v8636 = vsel %vm3100, %v7934, 0.0
      %8637 = vadd.xlane.f32.xlu0 %v8636
      %v8638 = vpop.xlane.xlu0 %8637
      %v8639 = vsel %vm3100, %v7935, 0.0
      %8640 = vadd.xlane.f32.xlu0 %v8639
      %v8641 = vpop.xlane.xlu0 %8640
      %v8642 = vsel %vm3100, %v7936, 0.0
      %8643 = vadd.xlane.f32.xlu0 %v8642
      %v8644 = vpop.xlane.xlu0 %8643
      %v8645 = vsel %vm3100, %v7937, 0.0
      %8646 = vadd.xlane.f32.xlu0 %v8645
      %v8647 = vpop.xlane.xlu0 %8646
      %v8648 = vsel %vm3100, %v7938, 0.0
      %8649 = vadd.xlane.f32.xlu0 %v8648
      %v8650 = vpop.xlane.xlu0 %8649
      %v8651 = vsel %vm3100, %v7939, 0.0
      %8652 = vadd.xlane.f32.xlu0 %v8651
      %v8653 = vpop.xlane.xlu0 %8652
      %v8654 = vsel %vm3100, %v7940, 0.0
      %8655 = vadd.xlane.f32.xlu0 %v8654
      %v8656 = vpop.xlane.xlu0 %8655
      %v8657 = vsel %vm3100, %v7941, 0.0
      %8658 = vadd.xlane.f32.xlu0 %v8657
      %v8659 = vpop.xlane.xlu0 %8658
      %v8660 = vsel %vm3100, %v7942, 0.0
      %8661 = vadd.xlane.f32.xlu0 %v8660
      %v8662 = vpop.xlane.xlu0 %8661
      %v8663 = vsel %vm3100, %v7943, 0.0
      %8664 = vadd.xlane.f32.xlu0 %v8663
      %v8665 = vpop.xlane.xlu0 %8664
      %v8666 = vsel %vm3100, %v7944, 0.0
      %8667 = vadd.xlane.f32.xlu0 %v8666
      %v8668 = vpop.xlane.xlu0 %8667
      %v8669 = vsel %vm3100, %v7945, 0.0
      %8670 = vadd.xlane.f32.xlu0 %v8669
      %v8671 = vpop.xlane.xlu0 %8670
      %v8672 = vsel %vm3100, %v7946, 0.0
      %8673 = vadd.xlane.f32.xlu0 %v8672
      %v8674 = vpop.xlane.xlu0 %8673
      %v8675 = vsel %vm3100, %v7947, 0.0
      %8676 = vadd.xlane.f32.xlu0 %v8675
      %v8677 = vpop.xlane.xlu0 %8676
      %v8678 = vsel %vm3100, %v7948, 0.0
      %8679 = vadd.xlane.f32.xlu0 %v8678
      %v8680 = vpop.xlane.xlu0 %8679
      %v8681 = vsel %vm3100, %v7949, 0.0
      %8682 = vadd.xlane.f32.xlu0 %v8681
      %v8683 = vpop.xlane.xlu0 %8682
      %v8684 = vsel %vm3100, %v7950, 0.0
      %8685 = vadd.xlane.f32.xlu0 %v8684
      %v8686 = vpop.xlane.xlu0 %8685
      %v8687 = vsel %vm3100, %v7951, 0.0
      %8688 = vadd.xlane.f32.xlu0 %v8687
      %v8689 = vpop.xlane.xlu0 %8688
      %v8690 = vsel %vm3100, %v7952, 0.0
      %8691 = vadd.xlane.f32.xlu0 %v8690
      %v8692 = vpop.xlane.xlu0 %8691
      %v8693 = vsel %vm3100, %v7953, 0.0
      %8694 = vadd.xlane.f32.xlu0 %v8693
      %v8695 = vpop.xlane.xlu0 %8694
      %v8696 = vsel %vm3100, %v7954, 0.0
      %8697 = vadd.xlane.f32.xlu0 %v8696
      %v8698 = vpop.xlane.xlu0 %8697
      %v8699 = vsel %vm3100, %v7955, 0.0
      %8700 = vadd.xlane.f32.xlu0 %v8699
      %v8701 = vpop.xlane.xlu0 %8700
      %v8702 = vsel %vm3100, %v7956, 0.0
      %8703 = vadd.xlane.f32.xlu0 %v8702
      %v8704 = vpop.xlane.xlu0 %8703
      %v8705 = vsel %vm3100, %v7957, 0.0
      %8706 = vadd.xlane.f32.xlu0 %v8705
      %v8707 = vpop.xlane.xlu0 %8706
      %v8708 = vsel %vm3100, %v7958, 0.0
      %8709 = vadd.xlane.f32.xlu0 %v8708
      %v8710 = vpop.xlane.xlu0 %8709
      %v8711 = vsel %vm3100, %v7959, 0.0
      %8712 = vadd.xlane.f32.xlu0 %v8711
      %v8713 = vpop.xlane.xlu0 %8712
      %v8714 = vsel %vm3100, %v7960, 0.0
      %8715 = vadd.xlane.f32.xlu0 %v8714
      %v8716 = vpop.xlane.xlu0 %8715
      %v8717 = vsel %vm3100, %v7961, 0.0
      %8718 = vadd.xlane.f32.xlu0 %v8717
      %v8719 = vpop.xlane.xlu0 %8718
      %v8720 = vsel %vm3100, %v7962, 0.0
      %8721 = vadd.xlane.f32.xlu0 %v8720
      %v8722 = vpop.xlane.xlu0 %8721
      %v8723 = vsel %vm3100, %v7963, 0.0
      %8724 = vadd.xlane.f32.xlu0 %v8723
      %v8725 = vpop.xlane.xlu0 %8724
      %v8726 = vsel %vm3100, %v7964, 0.0
      %8727 = vadd.xlane.f32.xlu0 %v8726
      %v8728 = vpop.xlane.xlu0 %8727
      %v8729 = vsel %vm3100, %v7965, 0.0
      %8730 = vadd.xlane.f32.xlu0 %v8729
      %v8731 = vpop.xlane.xlu0 %8730
      %v8732 = vsel %vm3100, %v7966, 0.0
      %8733 = vadd.xlane.f32.xlu0 %v8732
      %v8734 = vpop.xlane.xlu0 %8733
      %v8735 = vsub.f32 %v5917, %v7969
      %v8736 = vsub.f32 %v5918, %v7972
      %v8737 = vsub.f32 %v5919, %v7975
      %v8738 = vsub.f32 %v5920, %v7978
      %v8739 = vsub.f32 %v5921, %v7981
      %v8740 = vsub.f32 %v5922, %v7984
      %v8741 = vsub.f32 %v5923, %v7987
      %v8742 = vsub.f32 %v5924, %v7990
      %v8743 = vsub.f32 %v5925, %v7993
      %v8744 = vsub.f32 %v5926, %v7996
      %v8745 = vsub.f32 %v5927, %v7999
      %v8746 = vsub.f32 %v5928, %v8002
      %v8747 = vsub.f32 %v5929, %v8005
      %v8748 = vsub.f32 %v5930, %v8008
      %v8749 = vsub.f32 %v5931, %v8011
      %v8750 = vsub.f32 %v5932, %v8014
      %v8751 = vsub.f32 %v5933, %v8017
      %v8752 = vsub.f32 %v5934, %v8020
      %v8753 = vsub.f32 %v5935, %v8023
      %v8754 = vsub.f32 %v5936, %v8026
      %v8755 = vsub.f32 %v5937, %v8029
      %v8756 = vsub.f32 %v5938, %v8032
      %v8757 = vsub.f32 %v5939, %v8035
      %v8758 = vsub.f32 %v5940, %v8038
      %v8759 = vsub.f32 %v5941, %v8041
      %v8760 = vsub.f32 %v5942, %v8044
      %v8761 = vsub.f32 %v5943, %v8047
      %v8762 = vsub.f32 %v5944, %v8050
      %v8763 = vsub.f32 %v5945, %v8053
      %v8764 = vsub.f32 %v5946, %v8056
      %v8765 = vsub.f32 %v5947, %v8059
      %v8766 = vsub.f32 %v5948, %v8062
      %v8767 = vsub.f32 %v5949, %v8065
      %v8768 = vsub.f32 %v5950, %v8068
      %v8769 = vsub.f32 %v5951, %v8071
      %v8770 = vsub.f32 %v5952, %v8074
      %v8771 = vsub.f32 %v5953, %v8077
      %v8772 = vsub.f32 %v5954, %v8080
      %v8773 = vsub.f32 %v5955, %v8083
      %v8774 = vsub.f32 %v5956, %v8086
      %v8775 = vsub.f32 %v5957, %v8089
      %v8776 = vsub.f32 %v5958, %v8092
      %v8777 = vsub.f32 %v5959, %v8095
      %v8778 = vsub.f32 %v5960, %v8098
      %v8779 = vsub.f32 %v5961, %v8101
      %v8780 = vsub.f32 %v5962, %v8104
      %v8781 = vsub.f32 %v5963, %v8107
      %v8782 = vsub.f32 %v5964, %v8110
      %v8783 = vsub.f32 %v5965, %v8113
      %v8784 = vsub.f32 %v5966, %v8116
      %v8785 = vsub.f32 %v5967, %v8119
      %v8786 = vsub.f32 %v5968, %v8122
      %v8787 = vsub.f32 %v5969, %v8125
      %v8788 = vsub.f32 %v5970, %v8128
      %v8789 = vsub.f32 %v5971, %v8131
      %v8790 = vsub.f32 %v5972, %v8134
      %v8791 = vsub.f32 %v5973, %v8137
      %v8792 = vsub.f32 %v5974, %v8140
      %v8793 = vsub.f32 %v5975, %v8143
      %v8794 = vsub.f32 %v5976, %v8146
      %v8795 = vsub.f32 %v5977, %v8149
      %v8796 = vsub.f32 %v5978, %v8152
      %v8797 = vsub.f32 %v5979, %v8155
      %v8798 = vsub.f32 %v5980, %v8158
      %v8799 = vsub.f32 %v5981, %v8161
      %v8800 = vsub.f32 %v5982, %v8164
      %v8801 = vsub.f32 %v5983, %v8167
      %v8802 = vsub.f32 %v5984, %v8170
      %v8803 = vsub.f32 %v5985, %v8173
      %v8804 = vsub.f32 %v5986, %v8176
      %v8805 = vsub.f32 %v5987, %v8179
      %v8806 = vsub.f32 %v5988, %v8182
      %v8807 = vsub.f32 %v5989, %v8185
      %v8808 = vsub.f32 %v5990, %v8188
      %v8809 = vsub.f32 %v5991, %v8191
      %v8810 = vsub.f32 %v5992, %v8194
      %v8811 = vsub.f32 %v5993, %v8197
      %v8812 = vsub.f32 %v5994, %v8200
      %v8813 = vsub.f32 %v5995, %v8203
      %v8814 = vsub.f32 %v5996, %v8206
      %v8815 = vsub.f32 %v5997, %v8209
      %v8816 = vsub.f32 %v5998, %v8212
      %v8817 = vsub.f32 %v5999, %v8215
      %v8818 = vsub.f32 %v6000, %v8218
      %v8819 = vsub.f32 %v6001, %v8221
      %v8820 = vsub.f32 %v6002, %v8224
      %v8821 = vsub.f32 %v6003, %v8227
      %v8822 = vsub.f32 %v6004, %v8230
      %v8823 = vsub.f32 %v6005, %v8233
      %v8824 = vsub.f32 %v6006, %v8236
      %v8825 = vsub.f32 %v6007, %v8239
      %v8826 = vsub.f32 %v6008, %v8242
      %v8827 = vsub.f32 %v6009, %v8245
      %v8828 = vsub.f32 %v6010, %v8248
      %v8829 = vsub.f32 %v6011, %v8251
      %v8830 = vsub.f32 %v6012, %v8254
      %v8831 = vsub.f32 %v6013, %v8257
      %v8832 = vsub.f32 %v6014, %v8260
      %v8833 = vsub.f32 %v6015, %v8263
      %v8834 = vsub.f32 %v6016, %v8266
      %v8835 = vsub.f32 %v6017, %v8269
      %v8836 = vsub.f32 %v6018, %v8272
      %v8837 = vsub.f32 %v6019, %v8275
      %v8838 = vsub.f32 %v6020, %v8278
      %v8839 = vsub.f32 %v6021, %v8281
      %v8840 = vsub.f32 %v6022, %v8284
      %v8841 = vsub.f32 %v6023, %v8287
      %v8842 = vsub.f32 %v6024, %v8290
      %v8843 = vsub.f32 %v6025, %v8293
      %v8844 = vsub.f32 %v6026, %v8296
      %v8845 = vsub.f32 %v6027, %v8299
      %v8846 = vsub.f32 %v6028, %v8302
      %v8847 = vsub.f32 %v6029, %v8305
      %v8848 = vsub.f32 %v6030, %v8308
      %v8849 = vsub.f32 %v6031, %v8311
      %v8850 = vsub.f32 %v6032, %v8314
      %v8851 = vsub.f32 %v6033, %v8317
      %v8852 = vsub.f32 %v6034, %v8320
      %v8853 = vsub.f32 %v6035, %v8323
      %v8854 = vsub.f32 %v6036, %v8326
      %v8855 = vsub.f32 %v6037, %v8329
      %v8856 = vsub.f32 %v6038, %v8332
      %v8857 = vsub.f32 %v6039, %v8335
      %v8858 = vsub.f32 %v6040, %v8338
      %v8859 = vsub.f32 %v6041, %v8341
      %v8860 = vsub.f32 %v6042, %v8344
      %v8861 = vsub.f32 %v6043, %v8347
      %v8862 = vsub.f32 %v6044, %v8350
      %v8863 = vsub.f32 %v6045, %v8353
      %v8864 = vsub.f32 %v6046, %v8356
      %v8865 = vsub.f32 %v6047, %v8359
      %v8866 = vsub.f32 %v6048, %v8362
      %v8867 = vsub.f32 %v6049, %v8365
      %v8868 = vsub.f32 %v6050, %v8368
      %v8869 = vsub.f32 %v6051, %v8371
      %v8870 = vsub.f32 %v6052, %v8374
      %v8871 = vsub.f32 %v6053, %v8377
      %v8872 = vsub.f32 %v6054, %v8380
      %v8873 = vsub.f32 %v6055, %v8383
      %v8874 = vsub.f32 %v6056, %v8386
      %v8875 = vsub.f32 %v6057, %v8389
      %v8876 = vsub.f32 %v6058, %v8392
      %v8877 = vsub.f32 %v6059, %v8395
      %v8878 = vsub.f32 %v6060, %v8398
      %v8879 = vsub.f32 %v6061, %v8401
      %v8880 = vsub.f32 %v6062, %v8404
      %v8881 = vsub.f32 %v6063, %v8407
      %v8882 = vsub.f32 %v6064, %v8410
      %v8883 = vsub.f32 %v6065, %v8413
      %v8884 = vsub.f32 %v6066, %v8416
      %v8885 = vsub.f32 %v6067, %v8419
      %v8886 = vsub.f32 %v6068, %v8422
      %v8887 = vsub.f32 %v6069, %v8425
      %v8888 = vsub.f32 %v6070, %v8428
      %v8889 = vsub.f32 %v6071, %v8431
      %v8890 = vsub.f32 %v6072, %v8434
      %v8891 = vsub.f32 %v6073, %v8437
      %v8892 = vsub.f32 %v6074, %v8440
      %v8893 = vsub.f32 %v6075, %v8443
      %v8894 = vsub.f32 %v6076, %v8446
      %v8895 = vsub.f32 %v6077, %v8449
      %v8896 = vsub.f32 %v6078, %v8452
      %v8897 = vsub.f32 %v6079, %v8455
      %v8898 = vsub.f32 %v6080, %v8458
      %v8899 = vsub.f32 %v6081, %v8461
      %v8900 = vsub.f32 %v6082, %v8464
      %v8901 = vsub.f32 %v6083, %v8467
      %v8902 = vsub.f32 %v6084, %v8470
      %v8903 = vsub.f32 %v6085, %v8473
      %v8904 = vsub.f32 %v6086, %v8476
      %v8905 = vsub.f32 %v6087, %v8479
      %v8906 = vsub.f32 %v6088, %v8482
      %v8907 = vsub.f32 %v6089, %v8485
      %v8908 = vsub.f32 %v6090, %v8488
      %v8909 = vsub.f32 %v6091, %v8491
      %v8910 = vsub.f32 %v6092, %v8494
      %v8911 = vsub.f32 %v6093, %v8497
      %v8912 = vsub.f32 %v6094, %v8500
      %v8913 = vsub.f32 %v6095, %v8503
      %v8914 = vsub.f32 %v6096, %v8506
      %v8915 = vsub.f32 %v6097, %v8509
      %v8916 = vsub.f32 %v6098, %v8512
      %v8917 = vsub.f32 %v6099, %v8515
      %v8918 = vsub.f32 %v6100, %v8518
      %v8919 = vsub.f32 %v6101, %v8521
      %v8920 = vsub.f32 %v6102, %v8524
      %v8921 = vsub.f32 %v6103, %v8527
      %v8922 = vsub.f32 %v6104, %v8530
      %v8923 = vsub.f32 %v6105, %v8533
      %v8924 = vsub.f32 %v6106, %v8536
      %v8925 = vsub.f32 %v6107, %v8539
      %v8926 = vsub.f32 %v6108, %v8542
      %v8927 = vsub.f32 %v6109, %v8545
      %v8928 = vsub.f32 %v6110, %v8548
      %v8929 = vsub.f32 %v6111, %v8551
      %v8930 = vsub.f32 %v6112, %v8554
      %v8931 = vsub.f32 %v6113, %v8557
      %v8932 = vsub.f32 %v6114, %v8560
      %v8933 = vsub.f32 %v6115, %v8563
      %v8934 = vsub.f32 %v6116, %v8566
      %v8935 = vsub.f32 %v6117, %v8569
      %v8936 = vsub.f32 %v6118, %v8572
      %v8937 = vsub.f32 %v6119, %v8575
      %v8938 = vsub.f32 %v6120, %v8578
      %v8939 = vsub.f32 %v6121, %v8581
      %v8940 = vsub.f32 %v6122, %v8584
      %v8941 = vsub.f32 %v6123, %v8587
      %v8942 = vsub.f32 %v6124, %v8590
      %v8943 = vsub.f32 %v6125, %v8593
      %v8944 = vsub.f32 %v6126, %v8596
      %v8945 = vsub.f32 %v6127, %v8599
      %v8946 = vsub.f32 %v6128, %v8602
      %v8947 = vsub.f32 %v6129, %v8605
      %v8948 = vsub.f32 %v6130, %v8608
      %v8949 = vsub.f32 %v6131, %v8611
      %v8950 = vsub.f32 %v6132, %v8614
      %v8951 = vsub.f32 %v6133, %v8617
      %v8952 = vsub.f32 %v6134, %v8620
      %v8953 = vsub.f32 %v6135, %v8623
      %v8954 = vsub.f32 %v6136, %v8626
      %v8955 = vsub.f32 %v6137, %v8629
      %v8956 = vsub.f32 %v6138, %v8632
      %v8957 = vsub.f32 %v6139, %v8635
      %v8958 = vsub.f32 %v6140, %v8638
      %v8959 = vsub.f32 %v6141, %v8641
      %v8960 = vsub.f32 %v6142, %v8644
      %v8961 = vsub.f32 %v6143, %v8647
      %v8962 = vsub.f32 %v6144, %v8650
      %v8963 = vsub.f32 %v6145, %v8653
      %v8964 = vsub.f32 %v6146, %v8656
      %v8965 = vsub.f32 %v6147, %v8659
      %v8966 = vsub.f32 %v6148, %v8662
      %v8967 = vsub.f32 %v6149, %v8665
      %v8968 = vsub.f32 %v6150, %v8668
      %v8969 = vsub.f32 %v6151, %v8671
      %v8970 = vsub.f32 %v6152, %v8674
      %v8971 = vsub.f32 %v6153, %v8677
      %v8972 = vsub.f32 %v6154, %v8680
      %v8973 = vsub.f32 %v6155, %v8683
      %v8974 = vsub.f32 %v6156, %v8686
      %v8975 = vsub.f32 %v6157, %v8689
      %v8976 = vsub.f32 %v6158, %v8692
      %v8977 = vsub.f32 %v6159, %v8695
      %v8978 = vsub.f32 %v6160, %v8698
      %v8979 = vsub.f32 %v6161, %v8701
      %v8980 = vsub.f32 %v6162, %v8704
      %v8981 = vsub.f32 %v6163, %v8707
      %v8982 = vsub.f32 %v6164, %v8710
      %v8983 = vsub.f32 %v6165, %v8713
      %v8984 = vsub.f32 %v6166, %v8716
      %v8985 = vsub.f32 %v6167, %v8719
      %v8986 = vsub.f32 %v6168, %v8722
      %v8987 = vsub.f32 %v6169, %v8725
      %v8988 = vsub.f32 %v6170, %v8728
      %v8989 = vsub.f32 %v6171, %v8731
      %v8990 = vsub.f32 %v6172, %v8734
      %v8991 = vld [vmem:[%s273] sm:$0x1]
      %v8992 = vmul.f32 %v8735, %v2076
      %v8993 = vmul.f32 %v8736, %v2077
      %v8994 = vmul.f32 %v8737, %v2078
      %v8995 = vmul.f32 %v8738, %v2079
      %v8996 = vmul.f32 %v8739, %v2080
      %v8997 = vmul.f32 %v8740, %v2081
      %v8998 = vmul.f32 %v8741, %v2082
      %v8999 = vmul.f32 %v8742, %v2083
      %v9000 = vmul.f32 %v8743, %v2084
      %v9001 = vmul.f32 %v8744, %v2085
      %v9002 = vmul.f32 %v8745, %v2086
      %v9003 = vmul.f32 %v8746, %v2087
      %v9004 = vmul.f32 %v8747, %v2088
      %v9005 = vmul.f32 %v8748, %v2089
      %v9006 = vmul.f32 %v8749, %v2090
      %v9007 = vmul.f32 %v8750, %v2091
      %v9008 = vmul.f32 %v8751, %v2092
      %v9009 = vmul.f32 %v8752, %v2093
      %v9010 = vmul.f32 %v8753, %v2094
      %v9011 = vmul.f32 %v8754, %v2095
      %v9012 = vmul.f32 %v8755, %v2096
      %v9013 = vmul.f32 %v8756, %v2097
      %v9014 = vmul.f32 %v8757, %v2098
      %v9015 = vmul.f32 %v8758, %v2099
      %v9016 = vmul.f32 %v8759, %v2100
      %v9017 = vmul.f32 %v8760, %v2101
      %v9018 = vmul.f32 %v8761, %v2102
      %v9019 = vmul.f32 %v8762, %v2103
      %v9020 = vmul.f32 %v8763, %v2104
      %v9021 = vmul.f32 %v8764, %v2105
      %v9022 = vmul.f32 %v8765, %v2106
      %v9023 = vmul.f32 %v8766, %v2107
      %v9024 = vmul.f32 %v8767, %v2108
      %v9025 = vmul.f32 %v8768, %v2109
      %v9026 = vmul.f32 %v8769, %v2110
      %v9027 = vmul.f32 %v8770, %v2111
      %v9028 = vmul.f32 %v8771, %v2112
      %v9029 = vmul.f32 %v8772, %v2113
      %v9030 = vmul.f32 %v8773, %v2114
      %v9031 = vmul.f32 %v8774, %v2115
      %v9032 = vmul.f32 %v8775, %v2116
      %v9033 = vmul.f32 %v8776, %v2117
      %v9034 = vmul.f32 %v8777, %v2118
      %v9035 = vmul.f32 %v8778, %v2119
      %v9036 = vmul.f32 %v8779, %v2120
      %v9037 = vmul.f32 %v8780, %v2121
      %v9038 = vmul.f32 %v8781, %v2122
      %v9039 = vmul.f32 %v8782, %v2123
      %v9040 = vmul.f32 %v8783, %v2124
      %v9041 = vmul.f32 %v8784, %v2125
      %v9042 = vmul.f32 %v8785, %v2126
      %v9043 = vmul.f32 %v8786, %v2127
      %v9044 = vmul.f32 %v8787, %v2128
      %v9045 = vmul.f32 %v8788, %v2129
      %v9046 = vmul.f32 %v8789, %v2130
      %v9047 = vmul.f32 %v8790, %v2131
      %v9048 = vmul.f32 %v8791, %v2132
      %v9049 = vmul.f32 %v8792, %v2133
      %v9050 = vmul.f32 %v8793, %v2134
      %v9051 = vmul.f32 %v8794, %v2135
      %v9052 = vmul.f32 %v8795, %v2136
      %v9053 = vmul.f32 %v8796, %v2137
      %v9054 = vmul.f32 %v8797, %v2138
      %v9055 = vmul.f32 %v8798, %v2139
      %v9056 = vmul.f32 %v8799, %v2140
      %v9057 = vmul.f32 %v8800, %v2141
      %v9058 = vmul.f32 %v8801, %v2142
      %v9059 = vmul.f32 %v8802, %v2143
      %v9060 = vmul.f32 %v8803, %v2144
      %v9061 = vmul.f32 %v8804, %v2145
      %v9062 = vmul.f32 %v8805, %v2146
      %v9063 = vmul.f32 %v8806, %v2147
      %v9064 = vmul.f32 %v8807, %v2148
      %v9065 = vmul.f32 %v8808, %v2149
      %v9066 = vmul.f32 %v8809, %v2150
      %v9067 = vmul.f32 %v8810, %v2151
      %v9068 = vmul.f32 %v8811, %v2152
      %v9069 = vmul.f32 %v8812, %v2153
      %v9070 = vmul.f32 %v8813, %v2154
      %v9071 = vmul.f32 %v8814, %v2155
      %v9072 = vmul.f32 %v8815, %v2156
      %v9073 = vmul.f32 %v8816, %v2157
      %v9074 = vmul.f32 %v8817, %v2158
      %v9075 = vmul.f32 %v8818, %v2159
      %v9076 = vmul.f32 %v8819, %v2160
      %v9077 = vmul.f32 %v8820, %v2161
      %v9078 = vmul.f32 %v8821, %v2162
      %v9079 = vmul.f32 %v8822, %v2163
      %v9080 = vmul.f32 %v8823, %v2164
      %v9081 = vmul.f32 %v8824, %v2165
      %v9082 = vmul.f32 %v8825, %v2166
      %v9083 = vmul.f32 %v8826, %v2167
      %v9084 = vmul.f32 %v8827, %v2168
      %v9085 = vmul.f32 %v8828, %v2169
      %v9086 = vmul.f32 %v8829, %v2170
      %v9087 = vmul.f32 %v8830, %v2171
      %v9088 = vmul.f32 %v8831, %v2172
      %v9089 = vmul.f32 %v8832, %v2173
      %v9090 = vmul.f32 %v8833, %v2174
      %v9091 = vmul.f32 %v8834, %v2175
      %v9092 = vmul.f32 %v8835, %v2176
      %v9093 = vmul.f32 %v8836, %v2177
      %v9094 = vmul.f32 %v8837, %v2178
      %v9095 = vmul.f32 %v8838, %v2179
      %v9096 = vmul.f32 %v8839, %v2180
      %v9097 = vmul.f32 %v8840, %v2181
      %v9098 = vmul.f32 %v8841, %v2182
      %v9099 = vmul.f32 %v8842, %v2183
      %v9100 = vmul.f32 %v8843, %v2184
      %v9101 = vmul.f32 %v8844, %v2185
      %v9102 = vmul.f32 %v8845, %v2186
      %v9103 = vmul.f32 %v8846, %v2187
      %v9104 = vmul.f32 %v8847, %v2188
      %v9105 = vmul.f32 %v8848, %v2189
      %v9106 = vmul.f32 %v8849, %v2190
      %v9107 = vmul.f32 %v8850, %v2191
      %v9108 = vmul.f32 %v8851, %v2192
      %v9109 = vmul.f32 %v8852, %v2193
      %v9110 = vmul.f32 %v8853, %v2194
      %v9111 = vmul.f32 %v8854, %v2195
      %v9112 = vmul.f32 %v8855, %v2196
      %v9113 = vmul.f32 %v8856, %v2197
      %v9114 = vmul.f32 %v8857, %v2198
      %v9115 = vmul.f32 %v8858, %v2199
      %v9116 = vmul.f32 %v8859, %v2200
      %v9117 = vmul.f32 %v8860, %v2201
      %v9118 = vmul.f32 %v8861, %v2202
      %v9119 = vmul.f32 %v8862, %v2203
      %v9120 = vmul.f32 %v8863, %v2204
      %v9121 = vmul.f32 %v8864, %v2205
      %v9122 = vmul.f32 %v8865, %v2206
      %v9123 = vmul.f32 %v8866, %v2207
      %v9124 = vmul.f32 %v8867, %v2208
      %v9125 = vmul.f32 %v8868, %v2209
      %v9126 = vmul.f32 %v8869, %v2210
      %v9127 = vmul.f32 %v8870, %v2211
      %v9128 = vmul.f32 %v8871, %v2212
      %v9129 = vmul.f32 %v8872, %v2213
      %v9130 = vmul.f32 %v8873, %v2214
      %v9131 = vmul.f32 %v8874, %v2215
      %v9132 = vmul.f32 %v8875, %v2216
      %v9133 = vmul.f32 %v8876, %v2217
      %v9134 = vmul.f32 %v8877, %v2218
      %v9135 = vmul.f32 %v8878, %v2219
      %v9136 = vmul.f32 %v8879, %v2220
      %v9137 = vmul.f32 %v8880, %v2221
      %v9138 = vmul.f32 %v8881, %v2222
      %v9139 = vmul.f32 %v8882, %v2223
      %v9140 = vmul.f32 %v8883, %v2224
      %v9141 = vmul.f32 %v8884, %v2225
      %v9142 = vmul.f32 %v8885, %v2226
      %v9143 = vmul.f32 %v8886, %v2227
      %v9144 = vmul.f32 %v8887, %v2228
      %v9145 = vmul.f32 %v8888, %v2229
      %v9146 = vmul.f32 %v8889, %v2230
      %v9147 = vmul.f32 %v8890, %v2231
      %v9148 = vmul.f32 %v8891, %v2232
      %v9149 = vmul.f32 %v8892, %v2233
      %v9150 = vmul.f32 %v8893, %v2234
      %v9151 = vmul.f32 %v8894, %v2235
      %v9152 = vmul.f32 %v8895, %v2236
      %v9153 = vmul.f32 %v8896, %v2237
      %v9154 = vmul.f32 %v8897, %v2238
      %v9155 = vmul.f32 %v8898, %v2239
      %v9156 = vmul.f32 %v8899, %v2240
      %v9157 = vmul.f32 %v8900, %v2241
      %v9158 = vmul.f32 %v8901, %v2242
      %v9159 = vmul.f32 %v8902, %v2243
      %v9160 = vmul.f32 %v8903, %v2244
      %v9161 = vmul.f32 %v8904, %v2245
      %v9162 = vmul.f32 %v8905, %v2246
      %v9163 = vmul.f32 %v8906, %v2247
      %v9164 = vmul.f32 %v8907, %v2248
      %v9165 = vmul.f32 %v8908, %v2249
      %v9166 = vmul.f32 %v8909, %v2250
      %v9167 = vmul.f32 %v8910, %v2251
      %v9168 = vmul.f32 %v8911, %v2252
      %v9169 = vmul.f32 %v8912, %v2253
      %v9170 = vmul.f32 %v8913, %v2254
      %v9171 = vmul.f32 %v8914, %v2255
      %v9172 = vmul.f32 %v8915, %v2256
      %v9173 = vmul.f32 %v8916, %v2257
      %v9174 = vmul.f32 %v8917, %v2258
      %v9175 = vmul.f32 %v8918, %v2259
      %v9176 = vmul.f32 %v8919, %v2260
      %v9177 = vmul.f32 %v8920, %v2261
      %v9178 = vmul.f32 %v8921, %v2262
      %v9179 = vmul.f32 %v8922, %v2263
      %v9180 = vmul.f32 %v8923, %v2264
      %v9181 = vmul.f32 %v8924, %v2265
      %v9182 = vmul.f32 %v8925, %v2266
      %v9183 = vmul.f32 %v8926, %v2267
      %v9184 = vmul.f32 %v8927, %v2268
      %v9185 = vmul.f32 %v8928, %v2269
      %v9186 = vmul.f32 %v8929, %v2270
      %v9187 = vmul.f32 %v8930, %v2271
      %v9188 = vmul.f32 %v8931, %v2272
      %v9189 = vmul.f32 %v8932, %v2273
      %v9190 = vmul.f32 %v8933, %v2274
      %v9191 = vmul.f32 %v8934, %v2275
      %v9192 = vmul.f32 %v8935, %v2276
      %v9193 = vmul.f32 %v8936, %v2277
      %v9194 = vmul.f32 %v8937, %v2278
      %v9195 = vmul.f32 %v8938, %v2279
      %v9196 = vmul.f32 %v8939, %v2280
      %v9197 = vmul.f32 %v8940, %v2281
      %v9198 = vmul.f32 %v8941, %v2282
      %v9199 = vmul.f32 %v8942, %v2283
      %v9200 = vmul.f32 %v8943, %v2284
      %v9201 = vmul.f32 %v8944, %v2285
      %v9202 = vmul.f32 %v8945, %v2286
      %v9203 = vmul.f32 %v8946, %v2287
      %v9204 = vmul.f32 %v8947, %v2288
      %v9205 = vmul.f32 %v8948, %v2289
      %v9206 = vmul.f32 %v8949, %v2290
      %v9207 = vmul.f32 %v8950, %v2291
      %v9208 = vmul.f32 %v8951, %v2292
      %v9209 = vmul.f32 %v8952, %v2293
      %v9210 = vmul.f32 %v8953, %v2294
      %v9211 = vmul.f32 %v8954, %v2295
      %v9212 = vmul.f32 %v8955, %v2296
      %v9213 = vmul.f32 %v8956, %v2297
      %v9214 = vmul.f32 %v8957, %v2298
      %v9215 = vmul.f32 %v8958, %v2299
      %v9216 = vmul.f32 %v8959, %v2300
      %v9217 = vmul.f32 %v8960, %v2301
      %v9218 = vmul.f32 %v8961, %v2302
      %v9219 = vmul.f32 %v8962, %v2303
      %v9220 = vmul.f32 %v8963, %v2304
      %v9221 = vmul.f32 %v8964, %v2305
      %v9222 = vmul.f32 %v8965, %v2306
      %v9223 = vmul.f32 %v8966, %v2307
      %v9224 = vmul.f32 %v8967, %v2308
      %v9225 = vmul.f32 %v8968, %v2309
      %v9226 = vmul.f32 %v8969, %v2310
      %v9227 = vmul.f32 %v8970, %v2311
      %v9228 = vmul.f32 %v8971, %v2312
      %v9229 = vmul.f32 %v8972, %v2313
      %v9230 = vmul.f32 %v8973, %v2314
      %v9231 = vmul.f32 %v8974, %v2315
      %v9232 = vmul.f32 %v8975, %v2316
      %v9233 = vmul.f32 %v8976, %v2317
      %v9234 = vmul.f32 %v8977, %v2318
      %v9235 = vmul.f32 %v8978, %v2319
      %v9236 = vmul.f32 %v8979, %v2320
      %v9237 = vmul.f32 %v8980, %v2321
      %v9238 = vmul.f32 %v8981, %v2322
      %v9239 = vmul.f32 %v8982, %v2323
      %v9240 = vmul.f32 %v8983, %v2324
      %v9241 = vmul.f32 %v8984, %v2325
      %v9242 = vmul.f32 %v8985, %v2326
      %v9243 = vmul.f32 %v8986, %v2327
      %v9244 = vmul.f32 %v8987, %v2328
      %v9245 = vmul.f32 %v8988, %v2329
      %v9246 = vmul.f32 %v8989, %v2330
      %v9247 = vmul.f32 %v8990, %v2331
      %vm9248 = vcmask 7168
      %v9249 = vsel %vm9248, %v8992, 0.0
      %v9250 = vsel %vm9248, %v8993, 0.0
      %v9251 = vadd.f32 %v9249, %v9250
      %v9252 = vsel %vm9248, %v8994, 0.0
      %v9253 = vadd.f32 %v9251, %v9252
      %v9254 = vsel %vm9248, %v8995, 0.0
      %v9255 = vadd.f32 %v9253, %v9254
      %v9256 = vsel %vm9248, %v8996, 0.0
      %v9257 = vadd.f32 %v9255, %v9256
      %v9258 = vsel %vm9248, %v8997, 0.0
      %v9259 = vadd.f32 %v9257, %v9258
      %v9260 = vsel %vm9248, %v8998, 0.0
      %v9261 = vadd.f32 %v9259, %v9260
      %v9262 = vsel %vm9248, %v8999, 0.0
      %v9263 = vadd.f32 %v9261, %v9262
      %v9264 = vsel %vm9248, %v9000, 0.0
      %v9265 = vadd.f32 %v9263, %v9264
      %v9266 = vsel %vm9248, %v9001, 0.0
      %v9267 = vadd.f32 %v9265, %v9266
      %v9268 = vsel %vm9248, %v9002, 0.0
      %v9269 = vadd.f32 %v9267, %v9268
      %v9270 = vsel %vm9248, %v9003, 0.0
      %v9271 = vadd.f32 %v9269, %v9270
      %v9272 = vsel %vm9248, %v9004, 0.0
      %v9273 = vadd.f32 %v9271, %v9272
      %v9274 = vsel %vm9248, %v9005, 0.0
      %v9275 = vadd.f32 %v9273, %v9274
      %v9276 = vsel %vm9248, %v9006, 0.0
      %v9277 = vadd.f32 %v9275, %v9276
      %v9278 = vsel %vm9248, %v9007, 0.0
      %v9279 = vadd.f32 %v9277, %v9278
      %v9280 = vsel %vm9248, %v9008, 0.0
      %v9281 = vadd.f32 %v9279, %v9280
      %v9282 = vsel %vm9248, %v9009, 0.0
      %v9283 = vadd.f32 %v9281, %v9282
      %v9284 = vsel %vm9248, %v9010, 0.0
      %v9285 = vadd.f32 %v9283, %v9284
      %v9286 = vsel %vm9248, %v9011, 0.0
      %v9287 = vadd.f32 %v9285, %v9286
      %v9288 = vsel %vm9248, %v9012, 0.0
      %v9289 = vadd.f32 %v9287, %v9288
      %v9290 = vsel %vm9248, %v9013, 0.0
      %v9291 = vadd.f32 %v9289, %v9290
      %v9292 = vsel %vm9248, %v9014, 0.0
      %v9293 = vadd.f32 %v9291, %v9292
      %v9294 = vsel %vm9248, %v9015, 0.0
      %v9295 = vadd.f32 %v9293, %v9294
      %v9296 = vsel %vm9248, %v9016, 0.0
      %v9297 = vadd.f32 %v9295, %v9296
      %v9298 = vsel %vm9248, %v9017, 0.0
      %v9299 = vadd.f32 %v9297, %v9298
      %v9300 = vsel %vm9248, %v9018, 0.0
      %v9301 = vadd.f32 %v9299, %v9300
      %v9302 = vsel %vm9248, %v9019, 0.0
      %v9303 = vadd.f32 %v9301, %v9302
      %v9304 = vsel %vm9248, %v9020, 0.0
      %v9305 = vadd.f32 %v9303, %v9304
      %v9306 = vsel %vm9248, %v9021, 0.0
      %v9307 = vadd.f32 %v9305, %v9306
      %v9308 = vsel %vm9248, %v9022, 0.0
      %v9309 = vadd.f32 %v9307, %v9308
      %v9310 = vsel %vm9248, %v9023, 0.0
      %v9311 = vadd.f32 %v9309, %v9310
      %v9312 = vsel %vm9248, %v9024, 0.0
      %v9313 = vadd.f32 %v9311, %v9312
      %v9314 = vsel %vm9248, %v9025, 0.0
      %v9315 = vadd.f32 %v9313, %v9314
      %v9316 = vsel %vm9248, %v9026, 0.0
      %v9317 = vadd.f32 %v9315, %v9316
      %v9318 = vsel %vm9248, %v9027, 0.0
      %v9319 = vadd.f32 %v9317, %v9318
      %v9320 = vsel %vm9248, %v9028, 0.0
      %v9321 = vadd.f32 %v9319, %v9320
      %v9322 = vsel %vm9248, %v9029, 0.0
      %v9323 = vadd.f32 %v9321, %v9322
      %v9324 = vsel %vm9248, %v9030, 0.0
      %v9325 = vadd.f32 %v9323, %v9324
      %v9326 = vsel %vm9248, %v9031, 0.0
      %v9327 = vadd.f32 %v9325, %v9326
      %v9328 = vsel %vm9248, %v9032, 0.0
      %v9329 = vadd.f32 %v9327, %v9328
      %v9330 = vsel %vm9248, %v9033, 0.0
      %v9331 = vadd.f32 %v9329, %v9330
      %v9332 = vsel %vm9248, %v9034, 0.0
      %v9333 = vadd.f32 %v9331, %v9332
      %v9334 = vsel %vm9248, %v9035, 0.0
      %v9335 = vadd.f32 %v9333, %v9334
      %v9336 = vsel %vm9248, %v9036, 0.0
      %v9337 = vadd.f32 %v9335, %v9336
      %v9338 = vsel %vm9248, %v9037, 0.0
      %v9339 = vadd.f32 %v9337, %v9338
      %v9340 = vsel %vm9248, %v9038, 0.0
      %v9341 = vadd.f32 %v9339, %v9340
      %v9342 = vsel %vm9248, %v9039, 0.0
      %v9343 = vadd.f32 %v9341, %v9342
      %v9344 = vsel %vm9248, %v9040, 0.0
      %v9345 = vadd.f32 %v9343, %v9344
      %v9346 = vsel %vm9248, %v9041, 0.0
      %v9347 = vadd.f32 %v9345, %v9346
      %v9348 = vsel %vm9248, %v9042, 0.0
      %v9349 = vadd.f32 %v9347, %v9348
      %v9350 = vsel %vm9248, %v9043, 0.0
      %v9351 = vadd.f32 %v9349, %v9350
      %v9352 = vsel %vm9248, %v9044, 0.0
      %v9353 = vadd.f32 %v9351, %v9352
      %v9354 = vsel %vm9248, %v9045, 0.0
      %v9355 = vadd.f32 %v9353, %v9354
      %v9356 = vsel %vm9248, %v9046, 0.0
      %v9357 = vadd.f32 %v9355, %v9356
      %v9358 = vsel %vm9248, %v9047, 0.0
      %v9359 = vadd.f32 %v9357, %v9358
      %v9360 = vsel %vm9248, %v9048, 0.0
      %v9361 = vadd.f32 %v9359, %v9360
      %v9362 = vsel %vm9248, %v9049, 0.0
      %v9363 = vadd.f32 %v9361, %v9362
      %v9364 = vsel %vm9248, %v9050, 0.0
      %v9365 = vadd.f32 %v9363, %v9364
      %v9366 = vsel %vm9248, %v9051, 0.0
      %v9367 = vadd.f32 %v9365, %v9366
      %v9368 = vsel %vm9248, %v9052, 0.0
      %v9369 = vadd.f32 %v9367, %v9368
      %v9370 = vsel %vm9248, %v9053, 0.0
      %v9371 = vadd.f32 %v9369, %v9370
      %v9372 = vsel %vm9248, %v9054, 0.0
      %v9373 = vadd.f32 %v9371, %v9372
      %v9374 = vsel %vm9248, %v9055, 0.0
      %v9375 = vadd.f32 %v9373, %v9374
      %v9376 = vsel %vm9248, %v9056, 0.0
      %v9377 = vadd.f32 %v9375, %v9376
      %v9378 = vsel %vm9248, %v9057, 0.0
      %v9379 = vadd.f32 %v9377, %v9378
      %v9380 = vsel %vm9248, %v9058, 0.0
      %v9381 = vadd.f32 %v9379, %v9380
      %v9382 = vsel %vm9248, %v9059, 0.0
      %v9383 = vadd.f32 %v9381, %v9382
      %v9384 = vsel %vm9248, %v9060, 0.0
      %v9385 = vadd.f32 %v9383, %v9384
      %v9386 = vsel %vm9248, %v9061, 0.0
      %v9387 = vadd.f32 %v9385, %v9386
      %v9388 = vsel %vm9248, %v9062, 0.0
      %v9389 = vadd.f32 %v9387, %v9388
      %v9390 = vsel %vm9248, %v9063, 0.0
      %v9391 = vadd.f32 %v9389, %v9390
      %v9392 = vsel %vm9248, %v9064, 0.0
      %v9393 = vadd.f32 %v9391, %v9392
      %v9394 = vsel %vm9248, %v9065, 0.0
      %v9395 = vadd.f32 %v9393, %v9394
      %v9396 = vsel %vm9248, %v9066, 0.0
      %v9397 = vadd.f32 %v9395, %v9396
      %v9398 = vsel %vm9248, %v9067, 0.0
      %v9399 = vadd.f32 %v9397, %v9398
      %v9400 = vsel %vm9248, %v9068, 0.0
      %v9401 = vadd.f32 %v9399, %v9400
      %v9402 = vsel %vm9248, %v9069, 0.0
      %v9403 = vadd.f32 %v9401, %v9402
      %v9404 = vsel %vm9248, %v9070, 0.0
      %v9405 = vadd.f32 %v9403, %v9404
      %v9406 = vsel %vm9248, %v9071, 0.0
      %v9407 = vadd.f32 %v9405, %v9406
      %v9408 = vsel %vm9248, %v9072, 0.0
      %v9409 = vadd.f32 %v9407, %v9408
      %v9410 = vsel %vm9248, %v9073, 0.0
      %v9411 = vadd.f32 %v9409, %v9410
      %v9412 = vsel %vm9248, %v9074, 0.0
      %v9413 = vadd.f32 %v9411, %v9412
      %v9414 = vsel %vm9248, %v9075, 0.0
      %v9415 = vadd.f32 %v9413, %v9414
      %v9416 = vsel %vm9248, %v9076, 0.0
      %v9417 = vadd.f32 %v9415, %v9416
      %v9418 = vsel %vm9248, %v9077, 0.0
      %v9419 = vadd.f32 %v9417, %v9418
      %v9420 = vsel %vm9248, %v9078, 0.0
      %v9421 = vadd.f32 %v9419, %v9420
      %v9422 = vsel %vm9248, %v9079, 0.0
      %v9423 = vadd.f32 %v9421, %v9422
      %v9424 = vsel %vm9248, %v9080, 0.0
      %v9425 = vadd.f32 %v9423, %v9424
      %v9426 = vsel %vm9248, %v9081, 0.0
      %v9427 = vadd.f32 %v9425, %v9426
      %v9428 = vsel %vm9248, %v9082, 0.0
      %v9429 = vadd.f32 %v9427, %v9428
      %v9430 = vsel %vm9248, %v9083, 0.0
      %v9431 = vadd.f32 %v9429, %v9430
      %v9432 = vsel %vm9248, %v9084, 0.0
      %v9433 = vadd.f32 %v9431, %v9432
      %v9434 = vsel %vm9248, %v9085, 0.0
      %v9435 = vadd.f32 %v9433, %v9434
      %v9436 = vsel %vm9248, %v9086, 0.0
      %v9437 = vadd.f32 %v9435, %v9436
      %v9438 = vsel %vm9248, %v9087, 0.0
      %v9439 = vadd.f32 %v9437, %v9438
      %v9440 = vsel %vm9248, %v9088, 0.0
      %v9441 = vadd.f32 %v9439, %v9440
      %v9442 = vsel %vm9248, %v9089, 0.0
      %v9443 = vadd.f32 %v9441, %v9442
      %v9444 = vsel %vm9248, %v9090, 0.0
      %v9445 = vadd.f32 %v9443, %v9444
      %v9446 = vsel %vm9248, %v9091, 0.0
      %v9447 = vadd.f32 %v9445, %v9446
      %v9448 = vsel %vm9248, %v9092, 0.0
      %v9449 = vadd.f32 %v9447, %v9448
      %v9450 = vsel %vm9248, %v9093, 0.0
      %v9451 = vadd.f32 %v9449, %v9450
      %v9452 = vsel %vm9248, %v9094, 0.0
      %v9453 = vadd.f32 %v9451, %v9452
      %v9454 = vsel %vm9248, %v9095, 0.0
      %v9455 = vadd.f32 %v9453, %v9454
      %v9456 = vsel %vm9248, %v9096, 0.0
      %v9457 = vadd.f32 %v9455, %v9456
      %v9458 = vsel %vm9248, %v9097, 0.0
      %v9459 = vadd.f32 %v9457, %v9458
      %v9460 = vsel %vm9248, %v9098, 0.0
      %v9461 = vadd.f32 %v9459, %v9460
      %v9462 = vsel %vm9248, %v9099, 0.0
      %v9463 = vadd.f32 %v9461, %v9462
      %v9464 = vsel %vm9248, %v9100, 0.0
      %v9465 = vadd.f32 %v9463, %v9464
      %v9466 = vsel %vm9248, %v9101, 0.0
      %v9467 = vadd.f32 %v9465, %v9466
      %v9468 = vsel %vm9248, %v9102, 0.0
      %v9469 = vadd.f32 %v9467, %v9468
      %v9470 = vsel %vm9248, %v9103, 0.0
      %v9471 = vadd.f32 %v9469, %v9470
      %v9472 = vsel %vm9248, %v9104, 0.0
      %v9473 = vadd.f32 %v9471, %v9472
      %v9474 = vsel %vm9248, %v9105, 0.0
      %v9475 = vadd.f32 %v9473, %v9474
      %v9476 = vsel %vm9248, %v9106, 0.0
      %v9477 = vadd.f32 %v9475, %v9476
      %v9478 = vsel %vm9248, %v9107, 0.0
      %v9479 = vadd.f32 %v9477, %v9478
      %v9480 = vsel %vm9248, %v9108, 0.0
      %v9481 = vadd.f32 %v9479, %v9480
      %v9482 = vsel %vm9248, %v9109, 0.0
      %v9483 = vadd.f32 %v9481, %v9482
      %v9484 = vsel %vm9248, %v9110, 0.0
      %v9485 = vadd.f32 %v9483, %v9484
      %v9486 = vsel %vm9248, %v9111, 0.0
      %v9487 = vadd.f32 %v9485, %v9486
      %v9488 = vsel %vm9248, %v9112, 0.0
      %v9489 = vadd.f32 %v9487, %v9488
      %v9490 = vsel %vm9248, %v9113, 0.0
      %v9491 = vadd.f32 %v9489, %v9490
      %v9492 = vsel %vm9248, %v9114, 0.0
      %v9493 = vadd.f32 %v9491, %v9492
      %v9494 = vsel %vm9248, %v9115, 0.0
      %v9495 = vadd.f32 %v9493, %v9494
      %v9496 = vsel %vm9248, %v9116, 0.0
      %v9497 = vadd.f32 %v9495, %v9496
      %v9498 = vsel %vm9248, %v9117, 0.0
      %v9499 = vadd.f32 %v9497, %v9498
      %v9500 = vsel %vm9248, %v9118, 0.0
      %v9501 = vadd.f32 %v9499, %v9500
      %v9502 = vsel %vm9248, %v9119, 0.0
      %v9503 = vadd.f32 %v9501, %v9502
      %v9504 = vsel %vm9248, %v9120, 0.0
      %v9505 = vadd.f32 %v9503, %v9504
      %v9506 = vsel %vm9248, %v9121, 0.0
      %v9507 = vadd.f32 %v9505, %v9506
      %v9508 = vsel %vm9248, %v9122, 0.0
      %v9509 = vadd.f32 %v9507, %v9508
      %v9510 = vsel %vm9248, %v9123, 0.0
      %v9511 = vadd.f32 %v9509, %v9510
      %v9512 = vsel %vm9248, %v9124, 0.0
      %v9513 = vadd.f32 %v9511, %v9512
      %v9514 = vsel %vm9248, %v9125, 0.0
      %v9515 = vadd.f32 %v9513, %v9514
      %v9516 = vsel %vm9248, %v9126, 0.0
      %v9517 = vadd.f32 %v9515, %v9516
      %v9518 = vsel %vm9248, %v9127, 0.0
      %v9519 = vadd.f32 %v9517, %v9518
      %v9520 = vsel %vm9248, %v9128, 0.0
      %v9521 = vadd.f32 %v9519, %v9520
      %v9522 = vsel %vm9248, %v9129, 0.0
      %v9523 = vadd.f32 %v9521, %v9522
      %v9524 = vsel %vm9248, %v9130, 0.0
      %v9525 = vadd.f32 %v9523, %v9524
      %v9526 = vsel %vm9248, %v9131, 0.0
      %v9527 = vadd.f32 %v9525, %v9526
      %v9528 = vsel %vm9248, %v9132, 0.0
      %v9529 = vadd.f32 %v9527, %v9528
      %v9530 = vsel %vm9248, %v9133, 0.0
      %v9531 = vadd.f32 %v9529, %v9530
      %v9532 = vsel %vm9248, %v9134, 0.0
      %v9533 = vadd.f32 %v9531, %v9532
      %v9534 = vsel %vm9248, %v9135, 0.0
      %v9535 = vadd.f32 %v9533, %v9534
      %v9536 = vsel %vm9248, %v9136, 0.0
      %v9537 = vadd.f32 %v9535, %v9536
      %v9538 = vsel %vm9248, %v9137, 0.0
      %v9539 = vadd.f32 %v9537, %v9538
      %v9540 = vsel %vm9248, %v9138, 0.0
      %v9541 = vadd.f32 %v9539, %v9540
      %v9542 = vsel %vm9248, %v9139, 0.0
      %v9543 = vadd.f32 %v9541, %v9542
      %v9544 = vsel %vm9248, %v9140, 0.0
      %v9545 = vadd.f32 %v9543, %v9544
      %v9546 = vsel %vm9248, %v9141, 0.0
      %v9547 = vadd.f32 %v9545, %v9546
      %v9548 = vsel %vm9248, %v9142, 0.0
      %v9549 = vadd.f32 %v9547, %v9548
      %v9550 = vsel %vm9248, %v9143, 0.0
      %v9551 = vadd.f32 %v9549, %v9550
      %v9552 = vsel %vm9248, %v9144, 0.0
      %v9553 = vadd.f32 %v9551, %v9552
      %v9554 = vsel %vm9248, %v9145, 0.0
      %v9555 = vadd.f32 %v9553, %v9554
      %v9556 = vsel %vm9248, %v9146, 0.0
      %v9557 = vadd.f32 %v9555, %v9556
      %v9558 = vsel %vm9248, %v9147, 0.0
      %v9559 = vadd.f32 %v9557, %v9558
      %v9560 = vsel %vm9248, %v9148, 0.0
      %v9561 = vadd.f32 %v9559, %v9560
      %v9562 = vsel %vm9248, %v9149, 0.0
      %v9563 = vadd.f32 %v9561, %v9562
      %v9564 = vsel %vm9248, %v9150, 0.0
      %v9565 = vadd.f32 %v9563, %v9564
      %v9566 = vsel %vm9248, %v9151, 0.0
      %v9567 = vadd.f32 %v9565, %v9566
      %v9568 = vsel %vm9248, %v9152, 0.0
      %v9569 = vadd.f32 %v9567, %v9568
      %v9570 = vsel %vm9248, %v9153, 0.0
      %v9571 = vadd.f32 %v9569, %v9570
      %v9572 = vsel %vm9248, %v9154, 0.0
      %v9573 = vadd.f32 %v9571, %v9572
      %v9574 = vsel %vm9248, %v9155, 0.0
      %v9575 = vadd.f32 %v9573, %v9574
      %v9576 = vsel %vm9248, %v9156, 0.0
      %v9577 = vadd.f32 %v9575, %v9576
      %v9578 = vsel %vm9248, %v9157, 0.0
      %v9579 = vadd.f32 %v9577, %v9578
      %v9580 = vsel %vm9248, %v9158, 0.0
      %v9581 = vadd.f32 %v9579, %v9580
      %v9582 = vsel %vm9248, %v9159, 0.0
      %v9583 = vadd.f32 %v9581, %v9582
      %v9584 = vsel %vm9248, %v9160, 0.0
      %v9585 = vadd.f32 %v9583, %v9584
      %v9586 = vsel %vm9248, %v9161, 0.0
      %v9587 = vadd.f32 %v9585, %v9586
      %v9588 = vsel %vm9248, %v9162, 0.0
      %v9589 = vadd.f32 %v9587, %v9588
      %v9590 = vsel %vm9248, %v9163, 0.0
      %v9591 = vadd.f32 %v9589, %v9590
      %v9592 = vsel %vm9248, %v9164, 0.0
      %v9593 = vadd.f32 %v9591, %v9592
      %v9594 = vsel %vm9248, %v9165, 0.0
      %v9595 = vadd.f32 %v9593, %v9594
      %v9596 = vsel %vm9248, %v9166, 0.0
      %v9597 = vadd.f32 %v9595, %v9596
      %v9598 = vsel %vm9248, %v9167, 0.0
      %v9599 = vadd.f32 %v9597, %v9598
      %v9600 = vsel %vm9248, %v9168, 0.0
      %v9601 = vadd.f32 %v9599, %v9600
      %v9602 = vsel %vm9248, %v9169, 0.0
      %v9603 = vadd.f32 %v9601, %v9602
      %v9604 = vsel %vm9248, %v9170, 0.0
      %v9605 = vadd.f32 %v9603, %v9604
      %v9606 = vsel %vm9248, %v9171, 0.0
      %v9607 = vadd.f32 %v9605, %v9606
      %v9608 = vsel %vm9248, %v9172, 0.0
      %v9609 = vadd.f32 %v9607, %v9608
      %v9610 = vsel %vm9248, %v9173, 0.0
      %v9611 = vadd.f32 %v9609, %v9610
      %v9612 = vsel %vm9248, %v9174, 0.0
      %v9613 = vadd.f32 %v9611, %v9612
      %v9614 = vsel %vm9248, %v9175, 0.0
      %v9615 = vadd.f32 %v9613, %v9614
      %v9616 = vsel %vm9248, %v9176, 0.0
      %v9617 = vadd.f32 %v9615, %v9616
      %v9618 = vsel %vm9248, %v9177, 0.0
      %v9619 = vadd.f32 %v9617, %v9618
      %v9620 = vsel %vm9248, %v9178, 0.0
      %v9621 = vadd.f32 %v9619, %v9620
      %v9622 = vsel %vm9248, %v9179, 0.0
      %v9623 = vadd.f32 %v9621, %v9622
      %v9624 = vsel %vm9248, %v9180, 0.0
      %v9625 = vadd.f32 %v9623, %v9624
      %v9626 = vsel %vm9248, %v9181, 0.0
      %v9627 = vadd.f32 %v9625, %v9626
      %v9628 = vsel %vm9248, %v9182, 0.0
      %v9629 = vadd.f32 %v9627, %v9628
      %v9630 = vsel %vm9248, %v9183, 0.0
      %v9631 = vadd.f32 %v9629, %v9630
      %v9632 = vsel %vm9248, %v9184, 0.0
      %v9633 = vadd.f32 %v9631, %v9632
      %v9634 = vsel %vm9248, %v9185, 0.0
      %v9635 = vadd.f32 %v9633, %v9634
      %v9636 = vsel %vm9248, %v9186, 0.0
      %v9637 = vadd.f32 %v9635, %v9636
      %v9638 = vsel %vm9248, %v9187, 0.0
      %v9639 = vadd.f32 %v9637, %v9638
      %v9640 = vsel %vm9248, %v9188, 0.0
      %v9641 = vadd.f32 %v9639, %v9640
      %v9642 = vsel %vm9248, %v9189, 0.0
      %v9643 = vadd.f32 %v9641, %v9642
      %v9644 = vsel %vm9248, %v9190, 0.0
      %v9645 = vadd.f32 %v9643, %v9644
      %v9646 = vsel %vm9248, %v9191, 0.0
      %v9647 = vadd.f32 %v9645, %v9646
      %v9648 = vsel %vm9248, %v9192, 0.0
      %v9649 = vadd.f32 %v9647, %v9648
      %v9650 = vsel %vm9248, %v9193, 0.0
      %v9651 = vadd.f32 %v9649, %v9650
      %v9652 = vsel %vm9248, %v9194, 0.0
      %v9653 = vadd.f32 %v9651, %v9652
      %v9654 = vsel %vm9248, %v9195, 0.0
      %v9655 = vadd.f32 %v9653, %v9654
      %v9656 = vsel %vm9248, %v9196, 0.0
      %v9657 = vadd.f32 %v9655, %v9656
      %v9658 = vsel %vm9248, %v9197, 0.0
      %v9659 = vadd.f32 %v9657, %v9658
      %v9660 = vsel %vm9248, %v9198, 0.0
      %v9661 = vadd.f32 %v9659, %v9660
      %v9662 = vsel %vm9248, %v9199, 0.0
      %v9663 = vadd.f32 %v9661, %v9662
      %v9664 = vsel %vm9248, %v9200, 0.0
      %v9665 = vadd.f32 %v9663, %v9664
      %v9666 = vsel %vm9248, %v9201, 0.0
      %v9667 = vadd.f32 %v9665, %v9666
      %v9668 = vsel %vm9248, %v9202, 0.0
      %v9669 = vadd.f32 %v9667, %v9668
      %v9670 = vsel %vm9248, %v9203, 0.0
      %v9671 = vadd.f32 %v9669, %v9670
      %v9672 = vsel %vm9248, %v9204, 0.0
      %v9673 = vadd.f32 %v9671, %v9672
      %v9674 = vsel %vm9248, %v9205, 0.0
      %v9675 = vadd.f32 %v9673, %v9674
      %v9676 = vsel %vm9248, %v9206, 0.0
      %v9677 = vadd.f32 %v9675, %v9676
      %v9678 = vsel %vm9248, %v9207, 0.0
      %v9679 = vadd.f32 %v9677, %v9678
      %v9680 = vsel %vm9248, %v9208, 0.0
      %v9681 = vadd.f32 %v9679, %v9680
      %v9682 = vsel %vm9248, %v9209, 0.0
      %v9683 = vadd.f32 %v9681, %v9682
      %v9684 = vsel %vm9248, %v9210, 0.0
      %v9685 = vadd.f32 %v9683, %v9684
      %v9686 = vsel %vm9248, %v9211, 0.0
      %v9687 = vadd.f32 %v9685, %v9686
      %v9688 = vsel %vm9248, %v9212, 0.0
      %v9689 = vadd.f32 %v9687, %v9688
      %v9690 = vsel %vm9248, %v9213, 0.0
      %v9691 = vadd.f32 %v9689, %v9690
      %v9692 = vsel %vm9248, %v9214, 0.0
      %v9693 = vadd.f32 %v9691, %v9692
      %v9694 = vsel %vm9248, %v9215, 0.0
      %v9695 = vadd.f32 %v9693, %v9694
      %v9696 = vsel %vm9248, %v9216, 0.0
      %v9697 = vadd.f32 %v9695, %v9696
      %v9698 = vsel %vm9248, %v9217, 0.0
      %v9699 = vadd.f32 %v9697, %v9698
      %v9700 = vsel %vm9248, %v9218, 0.0
      %v9701 = vadd.f32 %v9699, %v9700
      %v9702 = vsel %vm9248, %v9219, 0.0
      %v9703 = vadd.f32 %v9701, %v9702
      %v9704 = vsel %vm9248, %v9220, 0.0
      %v9705 = vadd.f32 %v9703, %v9704
      %v9706 = vsel %vm9248, %v9221, 0.0
      %v9707 = vadd.f32 %v9705, %v9706
      %v9708 = vsel %vm9248, %v9222, 0.0
      %v9709 = vadd.f32 %v9707, %v9708
      %v9710 = vsel %vm9248, %v9223, 0.0
      %v9711 = vadd.f32 %v9709, %v9710
      %v9712 = vsel %vm9248, %v9224, 0.0
      %v9713 = vadd.f32 %v9711, %v9712
      %v9714 = vsel %vm9248, %v9225, 0.0
      %v9715 = vadd.f32 %v9713, %v9714
      %v9716 = vsel %vm9248, %v9226, 0.0
      %v9717 = vadd.f32 %v9715, %v9716
      %v9718 = vsel %vm9248, %v9227, 0.0
      %v9719 = vadd.f32 %v9717, %v9718
      %v9720 = vsel %vm9248, %v9228, 0.0
      %v9721 = vadd.f32 %v9719, %v9720
      %v9722 = vsel %vm9248, %v9229, 0.0
      %v9723 = vadd.f32 %v9721, %v9722
      %v9724 = vsel %vm9248, %v9230, 0.0
      %v9725 = vadd.f32 %v9723, %v9724
      %v9726 = vsel %vm9248, %v9231, 0.0
      %v9727 = vadd.f32 %v9725, %v9726
      %v9728 = vsel %vm9248, %v9232, 0.0
      %v9729 = vadd.f32 %v9727, %v9728
      %v9730 = vsel %vm9248, %v9233, 0.0
      %v9731 = vadd.f32 %v9729, %v9730
      %v9732 = vsel %vm9248, %v9234, 0.0
      %v9733 = vadd.f32 %v9731, %v9732
      %v9734 = vsel %vm9248, %v9235, 0.0
      %v9735 = vadd.f32 %v9733, %v9734
      %v9736 = vsel %vm9248, %v9236, 0.0
      %v9737 = vadd.f32 %v9735, %v9736
      %v9738 = vsel %vm9248, %v9237, 0.0
      %v9739 = vadd.f32 %v9737, %v9738
      %v9740 = vsel %vm9248, %v9238, 0.0
      %v9741 = vadd.f32 %v9739, %v9740
      %v9742 = vsel %vm9248, %v9239, 0.0
      %v9743 = vadd.f32 %v9741, %v9742
      %v9744 = vsel %vm9248, %v9240, 0.0
      %v9745 = vadd.f32 %v9743, %v9744
      %v9746 = vsel %vm9248, %v9241, 0.0
      %v9747 = vadd.f32 %v9745, %v9746
      %v9748 = vsel %vm9248, %v9242, 0.0
      %v9749 = vadd.f32 %v9747, %v9748
      %v9750 = vsel %vm9248, %v9243, 0.0
      %v9751 = vadd.f32 %v9749, %v9750
      %v9752 = vsel %vm9248, %v9244, 0.0
      %v9753 = vadd.f32 %v9751, %v9752
      %v9754 = vsel %vm9248, %v9245, 0.0
      %v9755 = vadd.f32 %v9753, %v9754
      %v9756 = vsel %vm9248, %v9246, 0.0
      %v9757 = vadd.f32 %v9755, %v9756
      %v9758 = vsel %vm9248, %v9247, 0.0
      %v9759 = vadd.f32 %v9757, %v9758
      %v9760 = vrot.slane %v9759, 4
      %v9761 = vadd.f32 %v9759, %v9760
      %v9762 = vrot.slane %v9761, 2
      %v9763 = vadd.f32 %v9761, %v9762
      %v9764 = vrot.slane %v9763, 1
      %v9765 = vadd.f32 %v9763, %v9764
      %v9766 = vadd.f32 %v8991, %v9765
      %vm9767 = vcmask 0
      %9768 = vst.msk [vmem:[%s273] sm:$0x1] %vm9767, %v9766
      %v9769 = vld [vmem:[%s273 + $0x1] sm:$0x1]
      %v9770 = vmul.f32 %v8735, 1.442695
      %v9771 = vpow.pop %v9770
      %v9772 = vmul.f32 %v8736, 1.442695
      %v9773 = vpow.pop %v9772
      %v9774 = vmul.f32 %v8737, 1.442695
      %v9775 = vpow.pop %v9774
      %v9776 = vmul.f32 %v8738, 1.442695
      %v9777 = vpow.pop %v9776
      %v9778 = vmul.f32 %v8739, 1.442695
      %v9779 = vpow.pop %v9778
      %v9780 = vmul.f32 %v8740, 1.442695
      %v9781 = vpow.pop %v9780
      %v9782 = vmul.f32 %v8741, 1.442695
      %v9783 = vpow.pop %v9782
      %v9784 = vmul.f32 %v8742, 1.442695
      %v9785 = vpow.pop %v9784
      %v9786 = vmul.f32 %v8743, 1.442695
      %v9787 = vpow.pop %v9786
      %v9788 = vmul.f32 %v8744, 1.442695
      %v9789 = vpow.pop %v9788
      %v9790 = vmul.f32 %v8745, 1.442695
      %v9791 = vpow.pop %v9790
      %v9792 = vmul.f32 %v8746, 1.442695
      %v9793 = vpow.pop %v9792
      %v9794 = vmul.f32 %v8747, 1.442695
      %v9795 = vpow.pop %v9794
      %v9796 = vmul.f32 %v8748, 1.442695
      %v9797 = vpow.pop %v9796
      %v9798 = vmul.f32 %v8749, 1.442695
      %v9799 = vpow.pop %v9798
      %v9800 = vmul.f32 %v8750, 1.442695
      %v9801 = vpow.pop %v9800
      %v9802 = vmul.f32 %v8751, 1.442695
      %v9803 = vpow.pop %v9802
      %v9804 = vmul.f32 %v8752, 1.442695
      %v9805 = vpow.pop %v9804
      %v9806 = vmul.f32 %v8753, 1.442695
      %v9807 = vpow.pop %v9806
      %v9808 = vmul.f32 %v8754, 1.442695
      %v9809 = vpow.pop %v9808
      %v9810 = vmul.f32 %v8755, 1.442695
      %v9811 = vpow.pop %v9810
      %v9812 = vmul.f32 %v8756, 1.442695
      %v9813 = vpow.pop %v9812
      %v9814 = vmul.f32 %v8757, 1.442695
      %v9815 = vpow.pop %v9814
      %v9816 = vmul.f32 %v8758, 1.442695
      %v9817 = vpow.pop %v9816
      %v9818 = vmul.f32 %v8759, 1.442695
      %v9819 = vpow.pop %v9818
      %v9820 = vmul.f32 %v8760, 1.442695
      %v9821 = vpow.pop %v9820
      %v9822 = vmul.f32 %v8761, 1.442695
      %v9823 = vpow.pop %v9822
      %v9824 = vmul.f32 %v8762, 1.442695
      %v9825 = vpow.pop %v9824
      %v9826 = vmul.f32 %v8763, 1.442695
      %v9827 = vpow.pop %v9826
      %v9828 = vmul.f32 %v8764, 1.442695
      %v9829 = vpow.pop %v9828
      %v9830 = vmul.f32 %v8765, 1.442695
      %v9831 = vpow.pop %v9830
      %v9832 = vmul.f32 %v8766, 1.442695
      %v9833 = vpow.pop %v9832
      %v9834 = vmul.f32 %v8767, 1.442695
      %v9835 = vpow.pop %v9834
      %v9836 = vmul.f32 %v8768, 1.442695
      %v9837 = vpow.pop %v9836
      %v9838 = vmul.f32 %v8769, 1.442695
      %v9839 = vpow.pop %v9838
      %v9840 = vmul.f32 %v8770, 1.442695
      %v9841 = vpow.pop %v9840
      %v9842 = vmul.f32 %v8771, 1.442695
      %v9843 = vpow.pop %v9842
      %v9844 = vmul.f32 %v8772, 1.442695
      %v9845 = vpow.pop %v9844
      %v9846 = vmul.f32 %v8773, 1.442695
      %v9847 = vpow.pop %v9846
      %v9848 = vmul.f32 %v8774, 1.442695
      %v9849 = vpow.pop %v9848
      %v9850 = vmul.f32 %v8775, 1.442695
      %v9851 = vpow.pop %v9850
      %v9852 = vmul.f32 %v8776, 1.442695
      %v9853 = vpow.pop %v9852
      %v9854 = vmul.f32 %v8777, 1.442695
      %v9855 = vpow.pop %v9854
      %v9856 = vmul.f32 %v8778, 1.442695
      %v9857 = vpow.pop %v9856
      %v9858 = vmul.f32 %v8779, 1.442695
      %v9859 = vpow.pop %v9858
      %v9860 = vmul.f32 %v8780, 1.442695
      %v9861 = vpow.pop %v9860
      %v9862 = vmul.f32 %v8781, 1.442695
      %v9863 = vpow.pop %v9862
      %v9864 = vmul.f32 %v8782, 1.442695
      %v9865 = vpow.pop %v9864
      %v9866 = vmul.f32 %v8783, 1.442695
      %v9867 = vpow.pop %v9866
      %v9868 = vmul.f32 %v8784, 1.442695
      %v9869 = vpow.pop %v9868
      %v9870 = vmul.f32 %v8785, 1.442695
      %v9871 = vpow.pop %v9870
      %v9872 = vmul.f32 %v8786, 1.442695
      %v9873 = vpow.pop %v9872
      %v9874 = vmul.f32 %v8787, 1.442695
      %v9875 = vpow.pop %v9874
      %v9876 = vmul.f32 %v8788, 1.442695
      %v9877 = vpow.pop %v9876
      %v9878 = vmul.f32 %v8789, 1.442695
      %v9879 = vpow.pop %v9878
      %v9880 = vmul.f32 %v8790, 1.442695
      %v9881 = vpow.pop %v9880
      %v9882 = vmul.f32 %v8791, 1.442695
      %v9883 = vpow.pop %v9882
      %v9884 = vmul.f32 %v8792, 1.442695
      %v9885 = vpow.pop %v9884
      %v9886 = vmul.f32 %v8793, 1.442695
      %v9887 = vpow.pop %v9886
      %v9888 = vmul.f32 %v8794, 1.442695
      %v9889 = vpow.pop %v9888
      %v9890 = vmul.f32 %v8795, 1.442695
      %v9891 = vpow.pop %v9890
      %v9892 = vmul.f32 %v8796, 1.442695
      %v9893 = vpow.pop %v9892
      %v9894 = vmul.f32 %v8797, 1.442695
      %v9895 = vpow.pop %v9894
      %v9896 = vmul.f32 %v8798, 1.442695
      %v9897 = vpow.pop %v9896
      %v9898 = vmul.f32 %v8799, 1.442695
      %v9899 = vpow.pop %v9898
      %v9900 = vmul.f32 %v8800, 1.442695
      %v9901 = vpow.pop %v9900
      %v9902 = vmul.f32 %v8801, 1.442695
      %v9903 = vpow.pop %v9902
      %v9904 = vmul.f32 %v8802, 1.442695
      %v9905 = vpow.pop %v9904
      %v9906 = vmul.f32 %v8803, 1.442695
      %v9907 = vpow.pop %v9906
      %v9908 = vmul.f32 %v8804, 1.442695
      %v9909 = vpow.pop %v9908
      %v9910 = vmul.f32 %v8805, 1.442695
      %v9911 = vpow.pop %v9910
      %v9912 = vmul.f32 %v8806, 1.442695
      %v9913 = vpow.pop %v9912
      %v9914 = vmul.f32 %v8807, 1.442695
      %v9915 = vpow.pop %v9914
      %v9916 = vmul.f32 %v8808, 1.442695
      %v9917 = vpow.pop %v9916
      %v9918 = vmul.f32 %v8809, 1.442695
      %v9919 = vpow.pop %v9918
      %v9920 = vmul.f32 %v8810, 1.442695
      %v9921 = vpow.pop %v9920
      %v9922 = vmul.f32 %v8811, 1.442695
      %v9923 = vpow.pop %v9922
      %v9924 = vmul.f32 %v8812, 1.442695
      %v9925 = vpow.pop %v9924
      %v9926 = vmul.f32 %v8813, 1.442695
      %v9927 = vpow.pop %v9926
      %v9928 = vmul.f32 %v8814, 1.442695
      %v9929 = vpow.pop %v9928
      %v9930 = vmul.f32 %v8815, 1.442695
      %v9931 = vpow.pop %v9930
      %v9932 = vmul.f32 %v8816, 1.442695
      %v9933 = vpow.pop %v9932
      %v9934 = vmul.f32 %v8817, 1.442695
      %v9935 = vpow.pop %v9934
      %v9936 = vmul.f32 %v8818, 1.442695
      %v9937 = vpow.pop %v9936
      %v9938 = vmul.f32 %v8819, 1.442695
      %v9939 = vpow.pop %v9938
      %v9940 = vmul.f32 %v8820, 1.442695
      %v9941 = vpow.pop %v9940
      %v9942 = vmul.f32 %v8821, 1.442695
      %v9943 = vpow.pop %v9942
      %v9944 = vmul.f32 %v8822, 1.442695
      %v9945 = vpow.pop %v9944
      %v9946 = vmul.f32 %v8823, 1.442695
      %v9947 = vpow.pop %v9946
      %v9948 = vmul.f32 %v8824, 1.442695
      %v9949 = vpow.pop %v9948
      %v9950 = vmul.f32 %v8825, 1.442695
      %v9951 = vpow.pop %v9950
      %v9952 = vmul.f32 %v8826, 1.442695
      %v9953 = vpow.pop %v9952
      %v9954 = vmul.f32 %v8827, 1.442695
      %v9955 = vpow.pop %v9954
      %v9956 = vmul.f32 %v8828, 1.442695
      %v9957 = vpow.pop %v9956
      %v9958 = vmul.f32 %v8829, 1.442695
      %v9959 = vpow.pop %v9958
      %v9960 = vmul.f32 %v8830, 1.442695
      %v9961 = vpow.pop %v9960
      %v9962 = vmul.f32 %v8831, 1.442695
      %v9963 = vpow.pop %v9962
      %v9964 = vmul.f32 %v8832, 1.442695
      %v9965 = vpow.pop %v9964
      %v9966 = vmul.f32 %v8833, 1.442695
      %v9967 = vpow.pop %v9966
      %v9968 = vmul.f32 %v8834, 1.442695
      %v9969 = vpow.pop %v9968
      %v9970 = vmul.f32 %v8835, 1.442695
      %v9971 = vpow.pop %v9970
      %v9972 = vmul.f32 %v8836, 1.442695
      %v9973 = vpow.pop %v9972
      %v9974 = vmul.f32 %v8837, 1.442695
      %v9975 = vpow.pop %v9974
      %v9976 = vmul.f32 %v8838, 1.442695
      %v9977 = vpow.pop %v9976
      %v9978 = vmul.f32 %v8839, 1.442695
      %v9979 = vpow.pop %v9978
      %v9980 = vmul.f32 %v8840, 1.442695
      %v9981 = vpow.pop %v9980
      %v9982 = vmul.f32 %v8841, 1.442695
      %v9983 = vpow.pop %v9982
      %v9984 = vmul.f32 %v8842, 1.442695
      %v9985 = vpow.pop %v9984
      %v9986 = vmul.f32 %v8843, 1.442695
      %v9987 = vpow.pop %v9986
      %v9988 = vmul.f32 %v8844, 1.442695
      %v9989 = vpow.pop %v9988
      %v9990 = vmul.f32 %v8845, 1.442695
      %v9991 = vpow.pop %v9990
      %v9992 = vmul.f32 %v8846, 1.442695
      %v9993 = vpow.pop %v9992
      %v9994 = vmul.f32 %v8847, 1.442695
      %v9995 = vpow.pop %v9994
      %v9996 = vmul.f32 %v8848, 1.442695
      %v9997 = vpow.pop %v9996
      %v9998 = vmul.f32 %v8849, 1.442695
      %v9999 = vpow.pop %v9998
      %v10000 = vmul.f32 %v8850, 1.442695
      %v10001 = vpow.pop %v10000
      %v10002 = vmul.f32 %v8851, 1.442695
      %v10003 = vpow.pop %v10002
      %v10004 = vmul.f32 %v8852, 1.442695
      %v10005 = vpow.pop %v10004
      %v10006 = vmul.f32 %v8853, 1.442695
      %v10007 = vpow.pop %v10006
      %v10008 = vmul.f32 %v8854, 1.442695
      %v10009 = vpow.pop %v10008
      %v10010 = vmul.f32 %v8855, 1.442695
      %v10011 = vpow.pop %v10010
      %v10012 = vmul.f32 %v8856, 1.442695
      %v10013 = vpow.pop %v10012
      %v10014 = vmul.f32 %v8857, 1.442695
      %v10015 = vpow.pop %v10014
      %v10016 = vmul.f32 %v8858, 1.442695
      %v10017 = vpow.pop %v10016
      %v10018 = vmul.f32 %v8859, 1.442695
      %v10019 = vpow.pop %v10018
      %v10020 = vmul.f32 %v8860, 1.442695
      %v10021 = vpow.pop %v10020
      %v10022 = vmul.f32 %v8861, 1.442695
      %v10023 = vpow.pop %v10022
      %v10024 = vmul.f32 %v8862, 1.442695
      %v10025 = vpow.pop %v10024
      %v10026 = vmul.f32 %v8863, 1.442695
      %v10027 = vpow.pop %v10026
      %v10028 = vmul.f32 %v8864, 1.442695
      %v10029 = vpow.pop %v10028
      %v10030 = vmul.f32 %v8865, 1.442695
      %v10031 = vpow.pop %v10030
      %v10032 = vmul.f32 %v8866, 1.442695
      %v10033 = vpow.pop %v10032
      %v10034 = vmul.f32 %v8867, 1.442695
      %v10035 = vpow.pop %v10034
      %v10036 = vmul.f32 %v8868, 1.442695
      %v10037 = vpow.pop %v10036
      %v10038 = vmul.f32 %v8869, 1.442695
      %v10039 = vpow.pop %v10038
      %v10040 = vmul.f32 %v8870, 1.442695
      %v10041 = vpow.pop %v10040
      %v10042 = vmul.f32 %v8871, 1.442695
      %v10043 = vpow.pop %v10042
      %v10044 = vmul.f32 %v8872, 1.442695
      %v10045 = vpow.pop %v10044
      %v10046 = vmul.f32 %v8873, 1.442695
      %v10047 = vpow.pop %v10046
      %v10048 = vmul.f32 %v8874, 1.442695
      %v10049 = vpow.pop %v10048
      %v10050 = vmul.f32 %v8875, 1.442695
      %v10051 = vpow.pop %v10050
      %v10052 = vmul.f32 %v8876, 1.442695
      %v10053 = vpow.pop %v10052
      %v10054 = vmul.f32 %v8877, 1.442695
      %v10055 = vpow.pop %v10054
      %v10056 = vmul.f32 %v8878, 1.442695
      %v10057 = vpow.pop %v10056
      %v10058 = vmul.f32 %v8879, 1.442695
      %v10059 = vpow.pop %v10058
      %v10060 = vmul.f32 %v8880, 1.442695
      %v10061 = vpow.pop %v10060
      %v10062 = vmul.f32 %v8881, 1.442695
      %v10063 = vpow.pop %v10062
      %v10064 = vmul.f32 %v8882, 1.442695
      %v10065 = vpow.pop %v10064
      %v10066 = vmul.f32 %v8883, 1.442695
      %v10067 = vpow.pop %v10066
      %v10068 = vmul.f32 %v8884, 1.442695
      %v10069 = vpow.pop %v10068
      %v10070 = vmul.f32 %v8885, 1.442695
      %v10071 = vpow.pop %v10070
      %v10072 = vmul.f32 %v8886, 1.442695
      %v10073 = vpow.pop %v10072
      %v10074 = vmul.f32 %v8887, 1.442695
      %v10075 = vpow.pop %v10074
      %v10076 = vmul.f32 %v8888, 1.442695
      %v10077 = vpow.pop %v10076
      %v10078 = vmul.f32 %v8889, 1.442695
      %v10079 = vpow.pop %v10078
      %v10080 = vmul.f32 %v8890, 1.442695
      %v10081 = vpow.pop %v10080
      %v10082 = vmul.f32 %v8891, 1.442695
      %v10083 = vpow.pop %v10082
      %v10084 = vmul.f32 %v8892, 1.442695
      %v10085 = vpow.pop %v10084
      %v10086 = vmul.f32 %v8893, 1.442695
      %v10087 = vpow.pop %v10086
      %v10088 = vmul.f32 %v8894, 1.442695
      %v10089 = vpow.pop %v10088
      %v10090 = vmul.f32 %v8895, 1.442695
      %v10091 = vpow.pop %v10090
      %v10092 = vmul.f32 %v8896, 1.442695
      %v10093 = vpow.pop %v10092
      %v10094 = vmul.f32 %v8897, 1.442695
      %v10095 = vpow.pop %v10094
      %v10096 = vmul.f32 %v8898, 1.442695
      %v10097 = vpow.pop %v10096
      %v10098 = vmul.f32 %v8899, 1.442695
      %v10099 = vpow.pop %v10098
      %v10100 = vmul.f32 %v8900, 1.442695
      %v10101 = vpow.pop %v10100
      %v10102 = vmul.f32 %v8901, 1.442695
      %v10103 = vpow.pop %v10102
      %v10104 = vmul.f32 %v8902, 1.442695
      %v10105 = vpow.pop %v10104
      %v10106 = vmul.f32 %v8903, 1.442695
      %v10107 = vpow.pop %v10106
      %v10108 = vmul.f32 %v8904, 1.442695
      %v10109 = vpow.pop %v10108
      %v10110 = vmul.f32 %v8905, 1.442695
      %v10111 = vpow.pop %v10110
      %v10112 = vmul.f32 %v8906, 1.442695
      %v10113 = vpow.pop %v10112
      %v10114 = vmul.f32 %v8907, 1.442695
      %v10115 = vpow.pop %v10114
      %v10116 = vmul.f32 %v8908, 1.442695
      %v10117 = vpow.pop %v10116
      %v10118 = vmul.f32 %v8909, 1.442695
      %v10119 = vpow.pop %v10118
      %v10120 = vmul.f32 %v8910, 1.442695
      %v10121 = vpow.pop %v10120
      %v10122 = vmul.f32 %v8911, 1.442695
      %v10123 = vpow.pop %v10122
      %v10124 = vmul.f32 %v8912, 1.442695
      %v10125 = vpow.pop %v10124
      %v10126 = vmul.f32 %v8913, 1.442695
      %v10127 = vpow.pop %v10126
      %v10128 = vmul.f32 %v8914, 1.442695
      %v10129 = vpow.pop %v10128
      %v10130 = vmul.f32 %v8915, 1.442695
      %v10131 = vpow.pop %v10130
      %v10132 = vmul.f32 %v8916, 1.442695
      %v10133 = vpow.pop %v10132
      %v10134 = vmul.f32 %v8917, 1.442695
      %v10135 = vpow.pop %v10134
      %v10136 = vmul.f32 %v8918, 1.442695
      %v10137 = vpow.pop %v10136
      %v10138 = vmul.f32 %v8919, 1.442695
      %v10139 = vpow.pop %v10138
      %v10140 = vmul.f32 %v8920, 1.442695
      %v10141 = vpow.pop %v10140
      %v10142 = vmul.f32 %v8921, 1.442695
      %v10143 = vpow.pop %v10142
      %v10144 = vmul.f32 %v8922, 1.442695
      %v10145 = vpow.pop %v10144
      %v10146 = vmul.f32 %v8923, 1.442695
      %v10147 = vpow.pop %v10146
      %v10148 = vmul.f32 %v8924, 1.442695
      %v10149 = vpow.pop %v10148
      %v10150 = vmul.f32 %v8925, 1.442695
      %v10151 = vpow.pop %v10150
      %v10152 = vmul.f32 %v8926, 1.442695
      %v10153 = vpow.pop %v10152
      %v10154 = vmul.f32 %v8927, 1.442695
      %v10155 = vpow.pop %v10154
      %v10156 = vmul.f32 %v8928, 1.442695
      %v10157 = vpow.pop %v10156
      %v10158 = vmul.f32 %v8929, 1.442695
      %v10159 = vpow.pop %v10158
      %v10160 = vmul.f32 %v8930, 1.442695
      %v10161 = vpow.pop %v10160
      %v10162 = vmul.f32 %v8931, 1.442695
      %v10163 = vpow.pop %v10162
      %v10164 = vmul.f32 %v8932, 1.442695
      %v10165 = vpow.pop %v10164
      %v10166 = vmul.f32 %v8933, 1.442695
      %v10167 = vpow.pop %v10166
      %v10168 = vmul.f32 %v8934, 1.442695
      %v10169 = vpow.pop %v10168
      %v10170 = vmul.f32 %v8935, 1.442695
      %v10171 = vpow.pop %v10170
      %v10172 = vmul.f32 %v8936, 1.442695
      %v10173 = vpow.pop %v10172
      %v10174 = vmul.f32 %v8937, 1.442695
      %v10175 = vpow.pop %v10174
      %v10176 = vmul.f32 %v8938, 1.442695
      %v10177 = vpow.pop %v10176
      %v10178 = vmul.f32 %v8939, 1.442695
      %v10179 = vpow.pop %v10178
      %v10180 = vmul.f32 %v8940, 1.442695
      %v10181 = vpow.pop %v10180
      %v10182 = vmul.f32 %v8941, 1.442695
      %v10183 = vpow.pop %v10182
      %v10184 = vmul.f32 %v8942, 1.442695
      %v10185 = vpow.pop %v10184
      %v10186 = vmul.f32 %v8943, 1.442695
      %v10187 = vpow.pop %v10186
      %v10188 = vmul.f32 %v8944, 1.442695
      %v10189 = vpow.pop %v10188
      %v10190 = vmul.f32 %v8945, 1.442695
      %v10191 = vpow.pop %v10190
      %v10192 = vmul.f32 %v8946, 1.442695
      %v10193 = vpow.pop %v10192
      %v10194 = vmul.f32 %v8947, 1.442695
      %v10195 = vpow.pop %v10194
      %v10196 = vmul.f32 %v8948, 1.442695
      %v10197 = vpow.pop %v10196
      %v10198 = vmul.f32 %v8949, 1.442695
      %v10199 = vpow.pop %v10198
      %v10200 = vmul.f32 %v8950, 1.442695
      %v10201 = vpow.pop %v10200
      %v10202 = vmul.f32 %v8951, 1.442695
      %v10203 = vpow.pop %v10202
      %v10204 = vmul.f32 %v8952, 1.442695
      %v10205 = vpow.pop %v10204
      %v10206 = vmul.f32 %v8953, 1.442695
      %v10207 = vpow.pop %v10206
      %v10208 = vmul.f32 %v8954, 1.442695
      %v10209 = vpow.pop %v10208
      %v10210 = vmul.f32 %v8955, 1.442695
      %v10211 = vpow.pop %v10210
      %v10212 = vmul.f32 %v8956, 1.442695
      %v10213 = vpow.pop %v10212
      %v10214 = vmul.f32 %v8957, 1.442695
      %v10215 = vpow.pop %v10214
      %v10216 = vmul.f32 %v8958, 1.442695
      %v10217 = vpow.pop %v10216
      %v10218 = vmul.f32 %v8959, 1.442695
      %v10219 = vpow.pop %v10218
      %v10220 = vmul.f32 %v8960, 1.442695
      %v10221 = vpow.pop %v10220
      %v10222 = vmul.f32 %v8961, 1.442695
      %v10223 = vpow.pop %v10222
      %v10224 = vmul.f32 %v8962, 1.442695
      %v10225 = vpow.pop %v10224
      %v10226 = vmul.f32 %v8963, 1.442695
      %v10227 = vpow.pop %v10226
      %v10228 = vmul.f32 %v8964, 1.442695
      %v10229 = vpow.pop %v10228
      %v10230 = vmul.f32 %v8965, 1.442695
      %v10231 = vpow.pop %v10230
      %v10232 = vmul.f32 %v8966, 1.442695
      %v10233 = vpow.pop %v10232
      %v10234 = vmul.f32 %v8967, 1.442695
      %v10235 = vpow.pop %v10234
      %v10236 = vmul.f32 %v8968, 1.442695
      %v10237 = vpow.pop %v10236
      %v10238 = vmul.f32 %v8969, 1.442695
      %v10239 = vpow.pop %v10238
      %v10240 = vmul.f32 %v8970, 1.442695
      %v10241 = vpow.pop %v10240
      %v10242 = vmul.f32 %v8971, 1.442695
      %v10243 = vpow.pop %v10242
      %v10244 = vmul.f32 %v8972, 1.442695
      %v10245 = vpow.pop %v10244
      %v10246 = vmul.f32 %v8973, 1.442695
      %v10247 = vpow.pop %v10246
      %v10248 = vmul.f32 %v8974, 1.442695
      %v10249 = vpow.pop %v10248
      %v10250 = vmul.f32 %v8975, 1.442695
      %v10251 = vpow.pop %v10250
      %v10252 = vmul.f32 %v8976, 1.442695
      %v10253 = vpow.pop %v10252
      %v10254 = vmul.f32 %v8977, 1.442695
      %v10255 = vpow.pop %v10254
      %v10256 = vmul.f32 %v8978, 1.442695
      %v10257 = vpow.pop %v10256
      %v10258 = vmul.f32 %v8979, 1.442695
      %v10259 = vpow.pop %v10258
      %v10260 = vmul.f32 %v8980, 1.442695
      %v10261 = vpow.pop %v10260
      %v10262 = vmul.f32 %v8981, 1.442695
      %v10263 = vpow.pop %v10262
      %v10264 = vmul.f32 %v8982, 1.442695
      %v10265 = vpow.pop %v10264
      %v10266 = vmul.f32 %v8983, 1.442695
      %v10267 = vpow.pop %v10266
      %v10268 = vmul.f32 %v8984, 1.442695
      %v10269 = vpow.pop %v10268
      %v10270 = vmul.f32 %v8985, 1.442695
      %v10271 = vpow.pop %v10270
      %v10272 = vmul.f32 %v8986, 1.442695
      %v10273 = vpow.pop %v10272
      %v10274 = vmul.f32 %v8987, 1.442695
      %v10275 = vpow.pop %v10274
      %v10276 = vmul.f32 %v8988, 1.442695
      %v10277 = vpow.pop %v10276
      %v10278 = vmul.f32 %v8989, 1.442695
      %v10279 = vpow.pop %v10278
      %v10280 = vmul.f32 %v8990, 1.442695
      %v10281 = vpow.pop %v10280
      %v10282 = vmul.f32 %v9771, %v2076
      %v10283 = vmul.f32 %v9773, %v2077
      %v10284 = vmul.f32 %v9775, %v2078
      %v10285 = vmul.f32 %v9777, %v2079
      %v10286 = vmul.f32 %v9779, %v2080
      %v10287 = vmul.f32 %v9781, %v2081
      %v10288 = vmul.f32 %v9783, %v2082
      %v10289 = vmul.f32 %v9785, %v2083
      %v10290 = vmul.f32 %v9787, %v2084
      %v10291 = vmul.f32 %v9789, %v2085
      %v10292 = vmul.f32 %v9791, %v2086
      %v10293 = vmul.f32 %v9793, %v2087
      %v10294 = vmul.f32 %v9795, %v2088
      %v10295 = vmul.f32 %v9797, %v2089
      %v10296 = vmul.f32 %v9799, %v2090
      %v10297 = vmul.f32 %v9801, %v2091
      %v10298 = vmul.f32 %v9803, %v2092
      %v10299 = vmul.f32 %v9805, %v2093
      %v10300 = vmul.f32 %v9807, %v2094
      %v10301 = vmul.f32 %v9809, %v2095
      %v10302 = vmul.f32 %v9811, %v2096
      %v10303 = vmul.f32 %v9813, %v2097
      %v10304 = vmul.f32 %v9815, %v2098
      %v10305 = vmul.f32 %v9817, %v2099
      %v10306 = vmul.f32 %v9819, %v2100
      %v10307 = vmul.f32 %v9821, %v2101
      %v10308 = vmul.f32 %v9823, %v2102
      %v10309 = vmul.f32 %v9825, %v2103
      %v10310 = vmul.f32 %v9827, %v2104
      %v10311 = vmul.f32 %v9829, %v2105
      %v10312 = vmul.f32 %v9831, %v2106
      %v10313 = vmul.f32 %v9833, %v2107
      %v10314 = vmul.f32 %v9835, %v2108
      %v10315 = vmul.f32 %v9837, %v2109
      %v10316 = vmul.f32 %v9839, %v2110
      %v10317 = vmul.f32 %v9841, %v2111
      %v10318 = vmul.f32 %v9843, %v2112
      %v10319 = vmul.f32 %v9845, %v2113
      %v10320 = vmul.f32 %v9847, %v2114
      %v10321 = vmul.f32 %v9849, %v2115
      %v10322 = vmul.f32 %v9851, %v2116
      %v10323 = vmul.f32 %v9853, %v2117
      %v10324 = vmul.f32 %v9855, %v2118
      %v10325 = vmul.f32 %v9857, %v2119
      %v10326 = vmul.f32 %v9859, %v2120
      %v10327 = vmul.f32 %v9861, %v2121
      %v10328 = vmul.f32 %v9863, %v2122
      %v10329 = vmul.f32 %v9865, %v2123
      %v10330 = vmul.f32 %v9867, %v2124
      %v10331 = vmul.f32 %v9869, %v2125
      %v10332 = vmul.f32 %v9871, %v2126
      %v10333 = vmul.f32 %v9873, %v2127
      %v10334 = vmul.f32 %v9875, %v2128
      %v10335 = vmul.f32 %v9877, %v2129
      %v10336 = vmul.f32 %v9879, %v2130
      %v10337 = vmul.f32 %v9881, %v2131
      %v10338 = vmul.f32 %v9883, %v2132
      %v10339 = vmul.f32 %v9885, %v2133
      %v10340 = vmul.f32 %v9887, %v2134
      %v10341 = vmul.f32 %v9889, %v2135
      %v10342 = vmul.f32 %v9891, %v2136
      %v10343 = vmul.f32 %v9893, %v2137
      %v10344 = vmul.f32 %v9895, %v2138
      %v10345 = vmul.f32 %v9897, %v2139
      %v10346 = vmul.f32 %v9899, %v2140
      %v10347 = vmul.f32 %v9901, %v2141
      %v10348 = vmul.f32 %v9903, %v2142
      %v10349 = vmul.f32 %v9905, %v2143
      %v10350 = vmul.f32 %v9907, %v2144
      %v10351 = vmul.f32 %v9909, %v2145
      %v10352 = vmul.f32 %v9911, %v2146
      %v10353 = vmul.f32 %v9913, %v2147
      %v10354 = vmul.f32 %v9915, %v2148
      %v10355 = vmul.f32 %v9917, %v2149
      %v10356 = vmul.f32 %v9919, %v2150
      %v10357 = vmul.f32 %v9921, %v2151
      %v10358 = vmul.f32 %v9923, %v2152
      %v10359 = vmul.f32 %v9925, %v2153
      %v10360 = vmul.f32 %v9927, %v2154
      %v10361 = vmul.f32 %v9929, %v2155
      %v10362 = vmul.f32 %v9931, %v2156
      %v10363 = vmul.f32 %v9933, %v2157
      %v10364 = vmul.f32 %v9935, %v2158
      %v10365 = vmul.f32 %v9937, %v2159
      %v10366 = vmul.f32 %v9939, %v2160
      %v10367 = vmul.f32 %v9941, %v2161
      %v10368 = vmul.f32 %v9943, %v2162
      %v10369 = vmul.f32 %v9945, %v2163
      %v10370 = vmul.f32 %v9947, %v2164
      %v10371 = vmul.f32 %v9949, %v2165
      %v10372 = vmul.f32 %v9951, %v2166
      %v10373 = vmul.f32 %v9953, %v2167
      %v10374 = vmul.f32 %v9955, %v2168
      %v10375 = vmul.f32 %v9957, %v2169
      %v10376 = vmul.f32 %v9959, %v2170
      %v10377 = vmul.f32 %v9961, %v2171
      %v10378 = vmul.f32 %v9963, %v2172
      %v10379 = vmul.f32 %v9965, %v2173
      %v10380 = vmul.f32 %v9967, %v2174
      %v10381 = vmul.f32 %v9969, %v2175
      %v10382 = vmul.f32 %v9971, %v2176
      %v10383 = vmul.f32 %v9973, %v2177
      %v10384 = vmul.f32 %v9975, %v2178
      %v10385 = vmul.f32 %v9977, %v2179
      %v10386 = vmul.f32 %v9979, %v2180
      %v10387 = vmul.f32 %v9981, %v2181
      %v10388 = vmul.f32 %v9983, %v2182
      %v10389 = vmul.f32 %v9985, %v2183
      %v10390 = vmul.f32 %v9987, %v2184
      %v10391 = vmul.f32 %v9989, %v2185
      %v10392 = vmul.f32 %v9991, %v2186
      %v10393 = vmul.f32 %v9993, %v2187
      %v10394 = vmul.f32 %v9995, %v2188
      %v10395 = vmul.f32 %v9997, %v2189
      %v10396 = vmul.f32 %v9999, %v2190
      %v10397 = vmul.f32 %v10001, %v2191
      %v10398 = vmul.f32 %v10003, %v2192
      %v10399 = vmul.f32 %v10005, %v2193
      %v10400 = vmul.f32 %v10007, %v2194
      %v10401 = vmul.f32 %v10009, %v2195
      %v10402 = vmul.f32 %v10011, %v2196
      %v10403 = vmul.f32 %v10013, %v2197
      %v10404 = vmul.f32 %v10015, %v2198
      %v10405 = vmul.f32 %v10017, %v2199
      %v10406 = vmul.f32 %v10019, %v2200
      %v10407 = vmul.f32 %v10021, %v2201
      %v10408 = vmul.f32 %v10023, %v2202
      %v10409 = vmul.f32 %v10025, %v2203
      %v10410 = vmul.f32 %v10027, %v2204
      %v10411 = vmul.f32 %v10029, %v2205
      %v10412 = vmul.f32 %v10031, %v2206
      %v10413 = vmul.f32 %v10033, %v2207
      %v10414 = vmul.f32 %v10035, %v2208
      %v10415 = vmul.f32 %v10037, %v2209
      %v10416 = vmul.f32 %v10039, %v2210
      %v10417 = vmul.f32 %v10041, %v2211
      %v10418 = vmul.f32 %v10043, %v2212
      %v10419 = vmul.f32 %v10045, %v2213
      %v10420 = vmul.f32 %v10047, %v2214
      %v10421 = vmul.f32 %v10049, %v2215
      %v10422 = vmul.f32 %v10051, %v2216
      %v10423 = vmul.f32 %v10053, %v2217
      %v10424 = vmul.f32 %v10055, %v2218
      %v10425 = vmul.f32 %v10057, %v2219
      %v10426 = vmul.f32 %v10059, %v2220
      %v10427 = vmul.f32 %v10061, %v2221
      %v10428 = vmul.f32 %v10063, %v2222
      %v10429 = vmul.f32 %v10065, %v2223
      %v10430 = vmul.f32 %v10067, %v2224
      %v10431 = vmul.f32 %v10069, %v2225
      %v10432 = vmul.f32 %v10071, %v2226
      %v10433 = vmul.f32 %v10073, %v2227
      %v10434 = vmul.f32 %v10075, %v2228
      %v10435 = vmul.f32 %v10077, %v2229
      %v10436 = vmul.f32 %v10079, %v2230
      %v10437 = vmul.f32 %v10081, %v2231
      %v10438 = vmul.f32 %v10083, %v2232
      %v10439 = vmul.f32 %v10085, %v2233
      %v10440 = vmul.f32 %v10087, %v2234
      %v10441 = vmul.f32 %v10089, %v2235
      %v10442 = vmul.f32 %v10091, %v2236
      %v10443 = vmul.f32 %v10093, %v2237
      %v10444 = vmul.f32 %v10095, %v2238
      %v10445 = vmul.f32 %v10097, %v2239
      %v10446 = vmul.f32 %v10099, %v2240
      %v10447 = vmul.f32 %v10101, %v2241
      %v10448 = vmul.f32 %v10103, %v2242
      %v10449 = vmul.f32 %v10105, %v2243
      %v10450 = vmul.f32 %v10107, %v2244
      %v10451 = vmul.f32 %v10109, %v2245
      %v10452 = vmul.f32 %v10111, %v2246
      %v10453 = vmul.f32 %v10113, %v2247
      %v10454 = vmul.f32 %v10115, %v2248
      %v10455 = vmul.f32 %v10117, %v2249
      %v10456 = vmul.f32 %v10119, %v2250
      %v10457 = vmul.f32 %v10121, %v2251
      %v10458 = vmul.f32 %v10123, %v2252
      %v10459 = vmul.f32 %v10125, %v2253
      %v10460 = vmul.f32 %v10127, %v2254
      %v10461 = vmul.f32 %v10129, %v2255
      %v10462 = vmul.f32 %v10131, %v2256
      %v10463 = vmul.f32 %v10133, %v2257
      %v10464 = vmul.f32 %v10135, %v2258
      %v10465 = vmul.f32 %v10137, %v2259
      %v10466 = vmul.f32 %v10139, %v2260
      %v10467 = vmul.f32 %v10141, %v2261
      %v10468 = vmul.f32 %v10143, %v2262
      %v10469 = vmul.f32 %v10145, %v2263
      %v10470 = vmul.f32 %v10147, %v2264
      %v10471 = vmul.f32 %v10149, %v2265
      %v10472 = vmul.f32 %v10151, %v2266
      %v10473 = vmul.f32 %v10153, %v2267
      %v10474 = vmul.f32 %v10155, %v2268
      %v10475 = vmul.f32 %v10157, %v2269
      %v10476 = vmul.f32 %v10159, %v2270
      %v10477 = vmul.f32 %v10161, %v2271
      %v10478 = vmul.f32 %v10163, %v2272
      %v10479 = vmul.f32 %v10165, %v2273
      %v10480 = vmul.f32 %v10167, %v2274
      %v10481 = vmul.f32 %v10169, %v2275
      %v10482 = vmul.f32 %v10171, %v2276
      %v10483 = vmul.f32 %v10173, %v2277
      %v10484 = vmul.f32 %v10175, %v2278
      %v10485 = vmul.f32 %v10177, %v2279
      %v10486 = vmul.f32 %v10179, %v2280
      %v10487 = vmul.f32 %v10181, %v2281
      %v10488 = vmul.f32 %v10183, %v2282
      %v10489 = vmul.f32 %v10185, %v2283
      %v10490 = vmul.f32 %v10187, %v2284
      %v10491 = vmul.f32 %v10189, %v2285
      %v10492 = vmul.f32 %v10191, %v2286
      %v10493 = vmul.f32 %v10193, %v2287
      %v10494 = vmul.f32 %v10195, %v2288
      %v10495 = vmul.f32 %v10197, %v2289
      %v10496 = vmul.f32 %v10199, %v2290
      %v10497 = vmul.f32 %v10201, %v2291
      %v10498 = vmul.f32 %v10203, %v2292
      %v10499 = vmul.f32 %v10205, %v2293
      %v10500 = vmul.f32 %v10207, %v2294
      %v10501 = vmul.f32 %v10209, %v2295
      %v10502 = vmul.f32 %v10211, %v2296
      %v10503 = vmul.f32 %v10213, %v2297
      %v10504 = vmul.f32 %v10215, %v2298
      %v10505 = vmul.f32 %v10217, %v2299
      %v10506 = vmul.f32 %v10219, %v2300
      %v10507 = vmul.f32 %v10221, %v2301
      %v10508 = vmul.f32 %v10223, %v2302
      %v10509 = vmul.f32 %v10225, %v2303
      %v10510 = vmul.f32 %v10227, %v2304
      %v10511 = vmul.f32 %v10229, %v2305
      %v10512 = vmul.f32 %v10231, %v2306
      %v10513 = vmul.f32 %v10233, %v2307
      %v10514 = vmul.f32 %v10235, %v2308
      %v10515 = vmul.f32 %v10237, %v2309
      %v10516 = vmul.f32 %v10239, %v2310
      %v10517 = vmul.f32 %v10241, %v2311
      %v10518 = vmul.f32 %v10243, %v2312
      %v10519 = vmul.f32 %v10245, %v2313
      %v10520 = vmul.f32 %v10247, %v2314
      %v10521 = vmul.f32 %v10249, %v2315
      %v10522 = vmul.f32 %v10251, %v2316
      %v10523 = vmul.f32 %v10253, %v2317
      %v10524 = vmul.f32 %v10255, %v2318
      %v10525 = vmul.f32 %v10257, %v2319
      %v10526 = vmul.f32 %v10259, %v2320
      %v10527 = vmul.f32 %v10261, %v2321
      %v10528 = vmul.f32 %v10263, %v2322
      %v10529 = vmul.f32 %v10265, %v2323
      %v10530 = vmul.f32 %v10267, %v2324
      %v10531 = vmul.f32 %v10269, %v2325
      %v10532 = vmul.f32 %v10271, %v2326
      %v10533 = vmul.f32 %v10273, %v2327
      %v10534 = vmul.f32 %v10275, %v2328
      %v10535 = vmul.f32 %v10277, %v2329
      %v10536 = vmul.f32 %v10279, %v2330
      %v10537 = vmul.f32 %v10281, %v2331
      %v10538 = vsel %vm9248, %v10282, 0.0
      %v10539 = vsel %vm9248, %v10283, 0.0
      %v10540 = vadd.f32 %v10538, %v10539
      %v10541 = vsel %vm9248, %v10284, 0.0
      %v10542 = vadd.f32 %v10540, %v10541
      %v10543 = vsel %vm9248, %v10285, 0.0
      %v10544 = vadd.f32 %v10542, %v10543
      %v10545 = vsel %vm9248, %v10286, 0.0
      %v10546 = vadd.f32 %v10544, %v10545
      %v10547 = vsel %vm9248, %v10287, 0.0
      %v10548 = vadd.f32 %v10546, %v10547
      %v10549 = vsel %vm9248, %v10288, 0.0
      %v10550 = vadd.f32 %v10548, %v10549
      %v10551 = vsel %vm9248, %v10289, 0.0
      %v10552 = vadd.f32 %v10550, %v10551
      %v10553 = vsel %vm9248, %v10290, 0.0
      %v10554 = vadd.f32 %v10552, %v10553
      %v10555 = vsel %vm9248, %v10291, 0.0
      %v10556 = vadd.f32 %v10554, %v10555
      %v10557 = vsel %vm9248, %v10292, 0.0
      %v10558 = vadd.f32 %v10556, %v10557
      %v10559 = vsel %vm9248, %v10293, 0.0
      %v10560 = vadd.f32 %v10558, %v10559
      %v10561 = vsel %vm9248, %v10294, 0.0
      %v10562 = vadd.f32 %v10560, %v10561
      %v10563 = vsel %vm9248, %v10295, 0.0
      %v10564 = vadd.f32 %v10562, %v10563
      %v10565 = vsel %vm9248, %v10296, 0.0
      %v10566 = vadd.f32 %v10564, %v10565
      %v10567 = vsel %vm9248, %v10297, 0.0
      %v10568 = vadd.f32 %v10566, %v10567
      %v10569 = vsel %vm9248, %v10298, 0.0
      %v10570 = vadd.f32 %v10568, %v10569
      %v10571 = vsel %vm9248, %v10299, 0.0
      %v10572 = vadd.f32 %v10570, %v10571
      %v10573 = vsel %vm9248, %v10300, 0.0
      %v10574 = vadd.f32 %v10572, %v10573
      %v10575 = vsel %vm9248, %v10301, 0.0
      %v10576 = vadd.f32 %v10574, %v10575
      %v10577 = vsel %vm9248, %v10302, 0.0
      %v10578 = vadd.f32 %v10576, %v10577
      %v10579 = vsel %vm9248, %v10303, 0.0
      %v10580 = vadd.f32 %v10578, %v10579
      %v10581 = vsel %vm9248, %v10304, 0.0
      %v10582 = vadd.f32 %v10580, %v10581
      %v10583 = vsel %vm9248, %v10305, 0.0
      %v10584 = vadd.f32 %v10582, %v10583
      %v10585 = vsel %vm9248, %v10306, 0.0
      %v10586 = vadd.f32 %v10584, %v10585
      %v10587 = vsel %vm9248, %v10307, 0.0
      %v10588 = vadd.f32 %v10586, %v10587
      %v10589 = vsel %vm9248, %v10308, 0.0
      %v10590 = vadd.f32 %v10588, %v10589
      %v10591 = vsel %vm9248, %v10309, 0.0
      %v10592 = vadd.f32 %v10590, %v10591
      %v10593 = vsel %vm9248, %v10310, 0.0
      %v10594 = vadd.f32 %v10592, %v10593
      %v10595 = vsel %vm9248, %v10311, 0.0
      %v10596 = vadd.f32 %v10594, %v10595
      %v10597 = vsel %vm9248, %v10312, 0.0
      %v10598 = vadd.f32 %v10596, %v10597
      %v10599 = vsel %vm9248, %v10313, 0.0
      %v10600 = vadd.f32 %v10598, %v10599
      %v10601 = vsel %vm9248, %v10314, 0.0
      %v10602 = vadd.f32 %v10600, %v10601
      %v10603 = vsel %vm9248, %v10315, 0.0
      %v10604 = vadd.f32 %v10602, %v10603
      %v10605 = vsel %vm9248, %v10316, 0.0
      %v10606 = vadd.f32 %v10604, %v10605
      %v10607 = vsel %vm9248, %v10317, 0.0
      %v10608 = vadd.f32 %v10606, %v10607
      %v10609 = vsel %vm9248, %v10318, 0.0
      %v10610 = vadd.f32 %v10608, %v10609
      %v10611 = vsel %vm9248, %v10319, 0.0
      %v10612 = vadd.f32 %v10610, %v10611
      %v10613 = vsel %vm9248, %v10320, 0.0
      %v10614 = vadd.f32 %v10612, %v10613
      %v10615 = vsel %vm9248, %v10321, 0.0
      %v10616 = vadd.f32 %v10614, %v10615
      %v10617 = vsel %vm9248, %v10322, 0.0
      %v10618 = vadd.f32 %v10616, %v10617
      %v10619 = vsel %vm9248, %v10323, 0.0
      %v10620 = vadd.f32 %v10618, %v10619
      %v10621 = vsel %vm9248, %v10324, 0.0
      %v10622 = vadd.f32 %v10620, %v10621
      %v10623 = vsel %vm9248, %v10325, 0.0
      %v10624 = vadd.f32 %v10622, %v10623
      %v10625 = vsel %vm9248, %v10326, 0.0
      %v10626 = vadd.f32 %v10624, %v10625
      %v10627 = vsel %vm9248, %v10327, 0.0
      %v10628 = vadd.f32 %v10626, %v10627
      %v10629 = vsel %vm9248, %v10328, 0.0
      %v10630 = vadd.f32 %v10628, %v10629
      %v10631 = vsel %vm9248, %v10329, 0.0
      %v10632 = vadd.f32 %v10630, %v10631
      %v10633 = vsel %vm9248, %v10330, 0.0
      %v10634 = vadd.f32 %v10632, %v10633
      %v10635 = vsel %vm9248, %v10331, 0.0
      %v10636 = vadd.f32 %v10634, %v10635
      %v10637 = vsel %vm9248, %v10332, 0.0
      %v10638 = vadd.f32 %v10636, %v10637
      %v10639 = vsel %vm9248, %v10333, 0.0
      %v10640 = vadd.f32 %v10638, %v10639
      %v10641 = vsel %vm9248, %v10334, 0.0
      %v10642 = vadd.f32 %v10640, %v10641
      %v10643 = vsel %vm9248, %v10335, 0.0
      %v10644 = vadd.f32 %v10642, %v10643
      %v10645 = vsel %vm9248, %v10336, 0.0
      %v10646 = vadd.f32 %v10644, %v10645
      %v10647 = vsel %vm9248, %v10337, 0.0
      %v10648 = vadd.f32 %v10646, %v10647
      %v10649 = vsel %vm9248, %v10338, 0.0
      %v10650 = vadd.f32 %v10648, %v10649
      %v10651 = vsel %vm9248, %v10339, 0.0
      %v10652 = vadd.f32 %v10650, %v10651
      %v10653 = vsel %vm9248, %v10340, 0.0
      %v10654 = vadd.f32 %v10652, %v10653
      %v10655 = vsel %vm9248, %v10341, 0.0
      %v10656 = vadd.f32 %v10654, %v10655
      %v10657 = vsel %vm9248, %v10342, 0.0
      %v10658 = vadd.f32 %v10656, %v10657
      %v10659 = vsel %vm9248, %v10343, 0.0
      %v10660 = vadd.f32 %v10658, %v10659
      %v10661 = vsel %vm9248, %v10344, 0.0
      %v10662 = vadd.f32 %v10660, %v10661
      %v10663 = vsel %vm9248, %v10345, 0.0
      %v10664 = vadd.f32 %v10662, %v10663
      %v10665 = vsel %vm9248, %v10346, 0.0
      %v10666 = vadd.f32 %v10664, %v10665
      %v10667 = vsel %vm9248, %v10347, 0.0
      %v10668 = vadd.f32 %v10666, %v10667
      %v10669 = vsel %vm9248, %v10348, 0.0
      %v10670 = vadd.f32 %v10668, %v10669
      %v10671 = vsel %vm9248, %v10349, 0.0
      %v10672 = vadd.f32 %v10670, %v10671
      %v10673 = vsel %vm9248, %v10350, 0.0
      %v10674 = vadd.f32 %v10672, %v10673
      %v10675 = vsel %vm9248, %v10351, 0.0
      %v10676 = vadd.f32 %v10674, %v10675
      %v10677 = vsel %vm9248, %v10352, 0.0
      %v10678 = vadd.f32 %v10676, %v10677
      %v10679 = vsel %vm9248, %v10353, 0.0
      %v10680 = vadd.f32 %v10678, %v10679
      %v10681 = vsel %vm9248, %v10354, 0.0
      %v10682 = vadd.f32 %v10680, %v10681
      %v10683 = vsel %vm9248, %v10355, 0.0
      %v10684 = vadd.f32 %v10682, %v10683
      %v10685 = vsel %vm9248, %v10356, 0.0
      %v10686 = vadd.f32 %v10684, %v10685
      %v10687 = vsel %vm9248, %v10357, 0.0
      %v10688 = vadd.f32 %v10686, %v10687
      %v10689 = vsel %vm9248, %v10358, 0.0
      %v10690 = vadd.f32 %v10688, %v10689
      %v10691 = vsel %vm9248, %v10359, 0.0
      %v10692 = vadd.f32 %v10690, %v10691
      %v10693 = vsel %vm9248, %v10360, 0.0
      %v10694 = vadd.f32 %v10692, %v10693
      %v10695 = vsel %vm9248, %v10361, 0.0
      %v10696 = vadd.f32 %v10694, %v10695
      %v10697 = vsel %vm9248, %v10362, 0.0
      %v10698 = vadd.f32 %v10696, %v10697
      %v10699 = vsel %vm9248, %v10363, 0.0
      %v10700 = vadd.f32 %v10698, %v10699
      %v10701 = vsel %vm9248, %v10364, 0.0
      %v10702 = vadd.f32 %v10700, %v10701
      %v10703 = vsel %vm9248, %v10365, 0.0
      %v10704 = vadd.f32 %v10702, %v10703
      %v10705 = vsel %vm9248, %v10366, 0.0
      %v10706 = vadd.f32 %v10704, %v10705
      %v10707 = vsel %vm9248, %v10367, 0.0
      %v10708 = vadd.f32 %v10706, %v10707
      %v10709 = vsel %vm9248, %v10368, 0.0
      %v10710 = vadd.f32 %v10708, %v10709
      %v10711 = vsel %vm9248, %v10369, 0.0
      %v10712 = vadd.f32 %v10710, %v10711
      %v10713 = vsel %vm9248, %v10370, 0.0
      %v10714 = vadd.f32 %v10712, %v10713
      %v10715 = vsel %vm9248, %v10371, 0.0
      %v10716 = vadd.f32 %v10714, %v10715
      %v10717 = vsel %vm9248, %v10372, 0.0
      %v10718 = vadd.f32 %v10716, %v10717
      %v10719 = vsel %vm9248, %v10373, 0.0
      %v10720 = vadd.f32 %v10718, %v10719
      %v10721 = vsel %vm9248, %v10374, 0.0
      %v10722 = vadd.f32 %v10720, %v10721
      %v10723 = vsel %vm9248, %v10375, 0.0
      %v10724 = vadd.f32 %v10722, %v10723
      %v10725 = vsel %vm9248, %v10376, 0.0
      %v10726 = vadd.f32 %v10724, %v10725
      %v10727 = vsel %vm9248, %v10377, 0.0
      %v10728 = vadd.f32 %v10726, %v10727
      %v10729 = vsel %vm9248, %v10378, 0.0
      %v10730 = vadd.f32 %v10728, %v10729
      %v10731 = vsel %vm9248, %v10379, 0.0
      %v10732 = vadd.f32 %v10730, %v10731
      %v10733 = vsel %vm9248, %v10380, 0.0
      %v10734 = vadd.f32 %v10732, %v10733
      %v10735 = vsel %vm9248, %v10381, 0.0
      %v10736 = vadd.f32 %v10734, %v10735
      %v10737 = vsel %vm9248, %v10382, 0.0
      %v10738 = vadd.f32 %v10736, %v10737
      %v10739 = vsel %vm9248, %v10383, 0.0
      %v10740 = vadd.f32 %v10738, %v10739
      %v10741 = vsel %vm9248, %v10384, 0.0
      %v10742 = vadd.f32 %v10740, %v10741
      %v10743 = vsel %vm9248, %v10385, 0.0
      %v10744 = vadd.f32 %v10742, %v10743
      %v10745 = vsel %vm9248, %v10386, 0.0
      %v10746 = vadd.f32 %v10744, %v10745
      %v10747 = vsel %vm9248, %v10387, 0.0
      %v10748 = vadd.f32 %v10746, %v10747
      %v10749 = vsel %vm9248, %v10388, 0.0
      %v10750 = vadd.f32 %v10748, %v10749
      %v10751 = vsel %vm9248, %v10389, 0.0
      %v10752 = vadd.f32 %v10750, %v10751
      %v10753 = vsel %vm9248, %v10390, 0.0
      %v10754 = vadd.f32 %v10752, %v10753
      %v10755 = vsel %vm9248, %v10391, 0.0
      %v10756 = vadd.f32 %v10754, %v10755
      %v10757 = vsel %vm9248, %v10392, 0.0
      %v10758 = vadd.f32 %v10756, %v10757
      %v10759 = vsel %vm9248, %v10393, 0.0
      %v10760 = vadd.f32 %v10758, %v10759
      %v10761 = vsel %vm9248, %v10394, 0.0
      %v10762 = vadd.f32 %v10760, %v10761
      %v10763 = vsel %vm9248, %v10395, 0.0
      %v10764 = vadd.f32 %v10762, %v10763
      %v10765 = vsel %vm9248, %v10396, 0.0
      %v10766 = vadd.f32 %v10764, %v10765
      %v10767 = vsel %vm9248, %v10397, 0.0
      %v10768 = vadd.f32 %v10766, %v10767
      %v10769 = vsel %vm9248, %v10398, 0.0
      %v10770 = vadd.f32 %v10768, %v10769
      %v10771 = vsel %vm9248, %v10399, 0.0
      %v10772 = vadd.f32 %v10770, %v10771
      %v10773 = vsel %vm9248, %v10400, 0.0
      %v10774 = vadd.f32 %v10772, %v10773
      %v10775 = vsel %vm9248, %v10401, 0.0
      %v10776 = vadd.f32 %v10774, %v10775
      %v10777 = vsel %vm9248, %v10402, 0.0
      %v10778 = vadd.f32 %v10776, %v10777
      %v10779 = vsel %vm9248, %v10403, 0.0
      %v10780 = vadd.f32 %v10778, %v10779
      %v10781 = vsel %vm9248, %v10404, 0.0
      %v10782 = vadd.f32 %v10780, %v10781
      %v10783 = vsel %vm9248, %v10405, 0.0
      %v10784 = vadd.f32 %v10782, %v10783
      %v10785 = vsel %vm9248, %v10406, 0.0
      %v10786 = vadd.f32 %v10784, %v10785
      %v10787 = vsel %vm9248, %v10407, 0.0
      %v10788 = vadd.f32 %v10786, %v10787
      %v10789 = vsel %vm9248, %v10408, 0.0
      %v10790 = vadd.f32 %v10788, %v10789
      %v10791 = vsel %vm9248, %v10409, 0.0
      %v10792 = vadd.f32 %v10790, %v10791
      %v10793 = vsel %vm9248, %v10410, 0.0
      %v10794 = vadd.f32 %v10792, %v10793
      %v10795 = vsel %vm9248, %v10411, 0.0
      %v10796 = vadd.f32 %v10794, %v10795
      %v10797 = vsel %vm9248, %v10412, 0.0
      %v10798 = vadd.f32 %v10796, %v10797
      %v10799 = vsel %vm9248, %v10413, 0.0
      %v10800 = vadd.f32 %v10798, %v10799
      %v10801 = vsel %vm9248, %v10414, 0.0
      %v10802 = vadd.f32 %v10800, %v10801
      %v10803 = vsel %vm9248, %v10415, 0.0
      %v10804 = vadd.f32 %v10802, %v10803
      %v10805 = vsel %vm9248, %v10416, 0.0
      %v10806 = vadd.f32 %v10804, %v10805
      %v10807 = vsel %vm9248, %v10417, 0.0
      %v10808 = vadd.f32 %v10806, %v10807
      %v10809 = vsel %vm9248, %v10418, 0.0
      %v10810 = vadd.f32 %v10808, %v10809
      %v10811 = vsel %vm9248, %v10419, 0.0
      %v10812 = vadd.f32 %v10810, %v10811
      %v10813 = vsel %vm9248, %v10420, 0.0
      %v10814 = vadd.f32 %v10812, %v10813
      %v10815 = vsel %vm9248, %v10421, 0.0
      %v10816 = vadd.f32 %v10814, %v10815
      %v10817 = vsel %vm9248, %v10422, 0.0
      %v10818 = vadd.f32 %v10816, %v10817
      %v10819 = vsel %vm9248, %v10423, 0.0
      %v10820 = vadd.f32 %v10818, %v10819
      %v10821 = vsel %vm9248, %v10424, 0.0
      %v10822 = vadd.f32 %v10820, %v10821
      %v10823 = vsel %vm9248, %v10425, 0.0
      %v10824 = vadd.f32 %v10822, %v10823
      %v10825 = vsel %vm9248, %v10426, 0.0
      %v10826 = vadd.f32 %v10824, %v10825
      %v10827 = vsel %vm9248, %v10427, 0.0
      %v10828 = vadd.f32 %v10826, %v10827
      %v10829 = vsel %vm9248, %v10428, 0.0
      %v10830 = vadd.f32 %v10828, %v10829
      %v10831 = vsel %vm9248, %v10429, 0.0
      %v10832 = vadd.f32 %v10830, %v10831
      %v10833 = vsel %vm9248, %v10430, 0.0
      %v10834 = vadd.f32 %v10832, %v10833
      %v10835 = vsel %vm9248, %v10431, 0.0
      %v10836 = vadd.f32 %v10834, %v10835
      %v10837 = vsel %vm9248, %v10432, 0.0
      %v10838 = vadd.f32 %v10836, %v10837
      %v10839 = vsel %vm9248, %v10433, 0.0
      %v10840 = vadd.f32 %v10838, %v10839
      %v10841 = vsel %vm9248, %v10434, 0.0
      %v10842 = vadd.f32 %v10840, %v10841
      %v10843 = vsel %vm9248, %v10435, 0.0
      %v10844 = vadd.f32 %v10842, %v10843
      %v10845 = vsel %vm9248, %v10436, 0.0
      %v10846 = vadd.f32 %v10844, %v10845
      %v10847 = vsel %vm9248, %v10437, 0.0
      %v10848 = vadd.f32 %v10846, %v10847
      %v10849 = vsel %vm9248, %v10438, 0.0
      %v10850 = vadd.f32 %v10848, %v10849
      %v10851 = vsel %vm9248, %v10439, 0.0
      %v10852 = vadd.f32 %v10850, %v10851
      %v10853 = vsel %vm9248, %v10440, 0.0
      %v10854 = vadd.f32 %v10852, %v10853
      %v10855 = vsel %vm9248, %v10441, 0.0
      %v10856 = vadd.f32 %v10854, %v10855
      %v10857 = vsel %vm9248, %v10442, 0.0
      %v10858 = vadd.f32 %v10856, %v10857
      %v10859 = vsel %vm9248, %v10443, 0.0
      %v10860 = vadd.f32 %v10858, %v10859
      %v10861 = vsel %vm9248, %v10444, 0.0
      %v10862 = vadd.f32 %v10860, %v10861
      %v10863 = vsel %vm9248, %v10445, 0.0
      %v10864 = vadd.f32 %v10862, %v10863
      %v10865 = vsel %vm9248, %v10446, 0.0
      %v10866 = vadd.f32 %v10864, %v10865
      %v10867 = vsel %vm9248, %v10447, 0.0
      %v10868 = vadd.f32 %v10866, %v10867
      %v10869 = vsel %vm9248, %v10448, 0.0
      %v10870 = vadd.f32 %v10868, %v10869
      %v10871 = vsel %vm9248, %v10449, 0.0
      %v10872 = vadd.f32 %v10870, %v10871
      %v10873 = vsel %vm9248, %v10450, 0.0
      %v10874 = vadd.f32 %v10872, %v10873
      %v10875 = vsel %vm9248, %v10451, 0.0
      %v10876 = vadd.f32 %v10874, %v10875
      %v10877 = vsel %vm9248, %v10452, 0.0
      %v10878 = vadd.f32 %v10876, %v10877
      %v10879 = vsel %vm9248, %v10453, 0.0
      %v10880 = vadd.f32 %v10878, %v10879
      %v10881 = vsel %vm9248, %v10454, 0.0
      %v10882 = vadd.f32 %v10880, %v10881
      %v10883 = vsel %vm9248, %v10455, 0.0
      %v10884 = vadd.f32 %v10882, %v10883
      %v10885 = vsel %vm9248, %v10456, 0.0
      %v10886 = vadd.f32 %v10884, %v10885
      %v10887 = vsel %vm9248, %v10457, 0.0
      %v10888 = vadd.f32 %v10886, %v10887
      %v10889 = vsel %vm9248, %v10458, 0.0
      %v10890 = vadd.f32 %v10888, %v10889
      %v10891 = vsel %vm9248, %v10459, 0.0
      %v10892 = vadd.f32 %v10890, %v10891
      %v10893 = vsel %vm9248, %v10460, 0.0
      %v10894 = vadd.f32 %v10892, %v10893
      %v10895 = vsel %vm9248, %v10461, 0.0
      %v10896 = vadd.f32 %v10894, %v10895
      %v10897 = vsel %vm9248, %v10462, 0.0
      %v10898 = vadd.f32 %v10896, %v10897
      %v10899 = vsel %vm9248, %v10463, 0.0
      %v10900 = vadd.f32 %v10898, %v10899
      %v10901 = vsel %vm9248, %v10464, 0.0
      %v10902 = vadd.f32 %v10900, %v10901
      %v10903 = vsel %vm9248, %v10465, 0.0
      %v10904 = vadd.f32 %v10902, %v10903
      %v10905 = vsel %vm9248, %v10466, 0.0
      %v10906 = vadd.f32 %v10904, %v10905
      %v10907 = vsel %vm9248, %v10467, 0.0
      %v10908 = vadd.f32 %v10906, %v10907
      %v10909 = vsel %vm9248, %v10468, 0.0
      %v10910 = vadd.f32 %v10908, %v10909
      %v10911 = vsel %vm9248, %v10469, 0.0
      %v10912 = vadd.f32 %v10910, %v10911
      %v10913 = vsel %vm9248, %v10470, 0.0
      %v10914 = vadd.f32 %v10912, %v10913
      %v10915 = vsel %vm9248, %v10471, 0.0
      %v10916 = vadd.f32 %v10914, %v10915
      %v10917 = vsel %vm9248, %v10472, 0.0
      %v10918 = vadd.f32 %v10916, %v10917
      %v10919 = vsel %vm9248, %v10473, 0.0
      %v10920 = vadd.f32 %v10918, %v10919
      %v10921 = vsel %vm9248, %v10474, 0.0
      %v10922 = vadd.f32 %v10920, %v10921
      %v10923 = vsel %vm9248, %v10475, 0.0
      %v10924 = vadd.f32 %v10922, %v10923
      %v10925 = vsel %vm9248, %v10476, 0.0
      %v10926 = vadd.f32 %v10924, %v10925
      %v10927 = vsel %vm9248, %v10477, 0.0
      %v10928 = vadd.f32 %v10926, %v10927
      %v10929 = vsel %vm9248, %v10478, 0.0
      %v10930 = vadd.f32 %v10928, %v10929
      %v10931 = vsel %vm9248, %v10479, 0.0
      %v10932 = vadd.f32 %v10930, %v10931
      %v10933 = vsel %vm9248, %v10480, 0.0
      %v10934 = vadd.f32 %v10932, %v10933
      %v10935 = vsel %vm9248, %v10481, 0.0
      %v10936 = vadd.f32 %v10934, %v10935
      %v10937 = vsel %vm9248, %v10482, 0.0
      %v10938 = vadd.f32 %v10936, %v10937
      %v10939 = vsel %vm9248, %v10483, 0.0
      %v10940 = vadd.f32 %v10938, %v10939
      %v10941 = vsel %vm9248, %v10484, 0.0
      %v10942 = vadd.f32 %v10940, %v10941
      %v10943 = vsel %vm9248, %v10485, 0.0
      %v10944 = vadd.f32 %v10942, %v10943
      %v10945 = vsel %vm9248, %v10486, 0.0
      %v10946 = vadd.f32 %v10944, %v10945
      %v10947 = vsel %vm9248, %v10487, 0.0
      %v10948 = vadd.f32 %v10946, %v10947
      %v10949 = vsel %vm9248, %v10488, 0.0
      %v10950 = vadd.f32 %v10948, %v10949
      %v10951 = vsel %vm9248, %v10489, 0.0
      %v10952 = vadd.f32 %v10950, %v10951
      %v10953 = vsel %vm9248, %v10490, 0.0
      %v10954 = vadd.f32 %v10952, %v10953
      %v10955 = vsel %vm9248, %v10491, 0.0
      %v10956 = vadd.f32 %v10954, %v10955
      %v10957 = vsel %vm9248, %v10492, 0.0
      %v10958 = vadd.f32 %v10956, %v10957
      %v10959 = vsel %vm9248, %v10493, 0.0
      %v10960 = vadd.f32 %v10958, %v10959
      %v10961 = vsel %vm9248, %v10494, 0.0
      %v10962 = vadd.f32 %v10960, %v10961
      %v10963 = vsel %vm9248, %v10495, 0.0
      %v10964 = vadd.f32 %v10962, %v10963
      %v10965 = vsel %vm9248, %v10496, 0.0
      %v10966 = vadd.f32 %v10964, %v10965
      %v10967 = vsel %vm9248, %v10497, 0.0
      %v10968 = vadd.f32 %v10966, %v10967
      %v10969 = vsel %vm9248, %v10498, 0.0
      %v10970 = vadd.f32 %v10968, %v10969
      %v10971 = vsel %vm9248, %v10499, 0.0
      %v10972 = vadd.f32 %v10970, %v10971
      %v10973 = vsel %vm9248, %v10500, 0.0
      %v10974 = vadd.f32 %v10972, %v10973
      %v10975 = vsel %vm9248, %v10501, 0.0
      %v10976 = vadd.f32 %v10974, %v10975
      %v10977 = vsel %vm9248, %v10502, 0.0
      %v10978 = vadd.f32 %v10976, %v10977
      %v10979 = vsel %vm9248, %v10503, 0.0
      %v10980 = vadd.f32 %v10978, %v10979
      %v10981 = vsel %vm9248, %v10504, 0.0
      %v10982 = vadd.f32 %v10980, %v10981
      %v10983 = vsel %vm9248, %v10505, 0.0
      %v10984 = vadd.f32 %v10982, %v10983
      %v10985 = vsel %vm9248, %v10506, 0.0
      %v10986 = vadd.f32 %v10984, %v10985
      %v10987 = vsel %vm9248, %v10507, 0.0
      %v10988 = vadd.f32 %v10986, %v10987
      %v10989 = vsel %vm9248, %v10508, 0.0
      %v10990 = vadd.f32 %v10988, %v10989
      %v10991 = vsel %vm9248, %v10509, 0.0
      %v10992 = vadd.f32 %v10990, %v10991
      %v10993 = vsel %vm9248, %v10510, 0.0
      %v10994 = vadd.f32 %v10992, %v10993
      %v10995 = vsel %vm9248, %v10511, 0.0
      %v10996 = vadd.f32 %v10994, %v10995
      %v10997 = vsel %vm9248, %v10512, 0.0
      %v10998 = vadd.f32 %v10996, %v10997
      %v10999 = vsel %vm9248, %v10513, 0.0
      %v11000 = vadd.f32 %v10998, %v10999
      %v11001 = vsel %vm9248, %v10514, 0.0
      %v11002 = vadd.f32 %v11000, %v11001
      %v11003 = vsel %vm9248, %v10515, 0.0
      %v11004 = vadd.f32 %v11002, %v11003
      %v11005 = vsel %vm9248, %v10516, 0.0
      %v11006 = vadd.f32 %v11004, %v11005
      %v11007 = vsel %vm9248, %v10517, 0.0
      %v11008 = vadd.f32 %v11006, %v11007
      %v11009 = vsel %vm9248, %v10518, 0.0
      %v11010 = vadd.f32 %v11008, %v11009
      %v11011 = vsel %vm9248, %v10519, 0.0
      %v11012 = vadd.f32 %v11010, %v11011
      %v11013 = vsel %vm9248, %v10520, 0.0
      %v11014 = vadd.f32 %v11012, %v11013
      %v11015 = vsel %vm9248, %v10521, 0.0
      %v11016 = vadd.f32 %v11014, %v11015
      %v11017 = vsel %vm9248, %v10522, 0.0
      %v11018 = vadd.f32 %v11016, %v11017
      %v11019 = vsel %vm9248, %v10523, 0.0
      %v11020 = vadd.f32 %v11018, %v11019
      %v11021 = vsel %vm9248, %v10524, 0.0
      %v11022 = vadd.f32 %v11020, %v11021
      %v11023 = vsel %vm9248, %v10525, 0.0
      %v11024 = vadd.f32 %v11022, %v11023
      %v11025 = vsel %vm9248, %v10526, 0.0
      %v11026 = vadd.f32 %v11024, %v11025
      %v11027 = vsel %vm9248, %v10527, 0.0
      %v11028 = vadd.f32 %v11026, %v11027
      %v11029 = vsel %vm9248, %v10528, 0.0
      %v11030 = vadd.f32 %v11028, %v11029
      %v11031 = vsel %vm9248, %v10529, 0.0
      %v11032 = vadd.f32 %v11030, %v11031
      %v11033 = vsel %vm9248, %v10530, 0.0
      %v11034 = vadd.f32 %v11032, %v11033
      %v11035 = vsel %vm9248, %v10531, 0.0
      %v11036 = vadd.f32 %v11034, %v11035
      %v11037 = vsel %vm9248, %v10532, 0.0
      %v11038 = vadd.f32 %v11036, %v11037
      %v11039 = vsel %vm9248, %v10533, 0.0
      %v11040 = vadd.f32 %v11038, %v11039
      %v11041 = vsel %vm9248, %v10534, 0.0
      %v11042 = vadd.f32 %v11040, %v11041
      %v11043 = vsel %vm9248, %v10535, 0.0
      %v11044 = vadd.f32 %v11042, %v11043
      %v11045 = vsel %vm9248, %v10536, 0.0
      %v11046 = vadd.f32 %v11044, %v11045
      %v11047 = vsel %vm9248, %v10537, 0.0
      %v11048 = vadd.f32 %v11046, %v11047
      %v11049 = vrot.slane %v11048, 4
      %v11050 = vadd.f32 %v11048, %v11049
      %v11051 = vrot.slane %v11050, 2
      %v11052 = vadd.f32 %v11050, %v11051
      %v11053 = vrot.slane %v11052, 1
      %v11054 = vadd.f32 %v11052, %v11053
      %v11055 = vadd.f32 %v9769, %v11054
      %11056 = vst.msk [vmem:[%s273 + $0x1] sm:$0x1] %vm9767, %v11055
      %v11057 = vld [vmem:[%s273 + $0x2] sm:$0x1]
      %v11058 = vsel %vm9248, %v2076, 0.0
      %v11059 = vsel %vm9248, %v2077, 0.0
      %v11060 = vadd.f32 %v11058, %v11059
      %v11061 = vsel %vm9248, %v2078, 0.0
      %v11062 = vadd.f32 %v11060, %v11061
      %v11063 = vsel %vm9248, %v2079, 0.0
      %v11064 = vadd.f32 %v11062, %v11063
      %v11065 = vsel %vm9248, %v2080, 0.0
      %v11066 = vadd.f32 %v11064, %v11065
      %v11067 = vsel %vm9248, %v2081, 0.0
      %v11068 = vadd.f32 %v11066, %v11067
      %v11069 = vsel %vm9248, %v2082, 0.0
      %v11070 = vadd.f32 %v11068, %v11069
      %v11071 = vsel %vm9248, %v2083, 0.0
      %v11072 = vadd.f32 %v11070, %v11071
      %v11073 = vsel %vm9248, %v2084, 0.0
      %v11074 = vadd.f32 %v11072, %v11073
      %v11075 = vsel %vm9248, %v2085, 0.0
      %v11076 = vadd.f32 %v11074, %v11075
      %v11077 = vsel %vm9248, %v2086, 0.0
      %v11078 = vadd.f32 %v11076, %v11077
      %v11079 = vsel %vm9248, %v2087, 0.0
      %v11080 = vadd.f32 %v11078, %v11079
      %v11081 = vsel %vm9248, %v2088, 0.0
      %v11082 = vadd.f32 %v11080, %v11081
      %v11083 = vsel %vm9248, %v2089, 0.0
      %v11084 = vadd.f32 %v11082, %v11083
      %v11085 = vsel %vm9248, %v2090, 0.0
      %v11086 = vadd.f32 %v11084, %v11085
      %v11087 = vsel %vm9248, %v2091, 0.0
      %v11088 = vadd.f32 %v11086, %v11087
      %v11089 = vsel %vm9248, %v2092, 0.0
      %v11090 = vadd.f32 %v11088, %v11089
      %v11091 = vsel %vm9248, %v2093, 0.0
      %v11092 = vadd.f32 %v11090, %v11091
      %v11093 = vsel %vm9248, %v2094, 0.0
      %v11094 = vadd.f32 %v11092, %v11093
      %v11095 = vsel %vm9248, %v2095, 0.0
      %v11096 = vadd.f32 %v11094, %v11095
      %v11097 = vsel %vm9248, %v2096, 0.0
      %v11098 = vadd.f32 %v11096, %v11097
      %v11099 = vsel %vm9248, %v2097, 0.0
      %v11100 = vadd.f32 %v11098, %v11099
      %v11101 = vsel %vm9248, %v2098, 0.0
      %v11102 = vadd.f32 %v11100, %v11101
      %v11103 = vsel %vm9248, %v2099, 0.0
      %v11104 = vadd.f32 %v11102, %v11103
      %v11105 = vsel %vm9248, %v2100, 0.0
      %v11106 = vadd.f32 %v11104, %v11105
      %v11107 = vsel %vm9248, %v2101, 0.0
      %v11108 = vadd.f32 %v11106, %v11107
      %v11109 = vsel %vm9248, %v2102, 0.0
      %v11110 = vadd.f32 %v11108, %v11109
      %v11111 = vsel %vm9248, %v2103, 0.0
      %v11112 = vadd.f32 %v11110, %v11111
      %v11113 = vsel %vm9248, %v2104, 0.0
      %v11114 = vadd.f32 %v11112, %v11113
      %v11115 = vsel %vm9248, %v2105, 0.0
      %v11116 = vadd.f32 %v11114, %v11115
      %v11117 = vsel %vm9248, %v2106, 0.0
      %v11118 = vadd.f32 %v11116, %v11117
      %v11119 = vsel %vm9248, %v2107, 0.0
      %v11120 = vadd.f32 %v11118, %v11119
      %v11121 = vsel %vm9248, %v2108, 0.0
      %v11122 = vadd.f32 %v11120, %v11121
      %v11123 = vsel %vm9248, %v2109, 0.0
      %v11124 = vadd.f32 %v11122, %v11123
      %v11125 = vsel %vm9248, %v2110, 0.0
      %v11126 = vadd.f32 %v11124, %v11125
      %v11127 = vsel %vm9248, %v2111, 0.0
      %v11128 = vadd.f32 %v11126, %v11127
      %v11129 = vsel %vm9248, %v2112, 0.0
      %v11130 = vadd.f32 %v11128, %v11129
      %v11131 = vsel %vm9248, %v2113, 0.0
      %v11132 = vadd.f32 %v11130, %v11131
      %v11133 = vsel %vm9248, %v2114, 0.0
      %v11134 = vadd.f32 %v11132, %v11133
      %v11135 = vsel %vm9248, %v2115, 0.0
      %v11136 = vadd.f32 %v11134, %v11135
      %v11137 = vsel %vm9248, %v2116, 0.0
      %v11138 = vadd.f32 %v11136, %v11137
      %v11139 = vsel %vm9248, %v2117, 0.0
      %v11140 = vadd.f32 %v11138, %v11139
      %v11141 = vsel %vm9248, %v2118, 0.0
      %v11142 = vadd.f32 %v11140, %v11141
      %v11143 = vsel %vm9248, %v2119, 0.0
      %v11144 = vadd.f32 %v11142, %v11143
      %v11145 = vsel %vm9248, %v2120, 0.0
      %v11146 = vadd.f32 %v11144, %v11145
      %v11147 = vsel %vm9248, %v2121, 0.0
      %v11148 = vadd.f32 %v11146, %v11147
      %v11149 = vsel %vm9248, %v2122, 0.0
      %v11150 = vadd.f32 %v11148, %v11149
      %v11151 = vsel %vm9248, %v2123, 0.0
      %v11152 = vadd.f32 %v11150, %v11151
      %v11153 = vsel %vm9248, %v2124, 0.0
      %v11154 = vadd.f32 %v11152, %v11153
      %v11155 = vsel %vm9248, %v2125, 0.0
      %v11156 = vadd.f32 %v11154, %v11155
      %v11157 = vsel %vm9248, %v2126, 0.0
      %v11158 = vadd.f32 %v11156, %v11157
      %v11159 = vsel %vm9248, %v2127, 0.0
      %v11160 = vadd.f32 %v11158, %v11159
      %v11161 = vsel %vm9248, %v2128, 0.0
      %v11162 = vadd.f32 %v11160, %v11161
      %v11163 = vsel %vm9248, %v2129, 0.0
      %v11164 = vadd.f32 %v11162, %v11163
      %v11165 = vsel %vm9248, %v2130, 0.0
      %v11166 = vadd.f32 %v11164, %v11165
      %v11167 = vsel %vm9248, %v2131, 0.0
      %v11168 = vadd.f32 %v11166, %v11167
      %v11169 = vsel %vm9248, %v2132, 0.0
      %v11170 = vadd.f32 %v11168, %v11169
      %v11171 = vsel %vm9248, %v2133, 0.0
      %v11172 = vadd.f32 %v11170, %v11171
      %v11173 = vsel %vm9248, %v2134, 0.0
      %v11174 = vadd.f32 %v11172, %v11173
      %v11175 = vsel %vm9248, %v2135, 0.0
      %v11176 = vadd.f32 %v11174, %v11175
      %v11177 = vsel %vm9248, %v2136, 0.0
      %v11178 = vadd.f32 %v11176, %v11177
      %v11179 = vsel %vm9248, %v2137, 0.0
      %v11180 = vadd.f32 %v11178, %v11179
      %v11181 = vsel %vm9248, %v2138, 0.0
      %v11182 = vadd.f32 %v11180, %v11181
      %v11183 = vsel %vm9248, %v2139, 0.0
      %v11184 = vadd.f32 %v11182, %v11183
      %v11185 = vsel %vm9248, %v2140, 0.0
      %v11186 = vadd.f32 %v11184, %v11185
      %v11187 = vsel %vm9248, %v2141, 0.0
      %v11188 = vadd.f32 %v11186, %v11187
      %v11189 = vsel %vm9248, %v2142, 0.0
      %v11190 = vadd.f32 %v11188, %v11189
      %v11191 = vsel %vm9248, %v2143, 0.0
      %v11192 = vadd.f32 %v11190, %v11191
      %v11193 = vsel %vm9248, %v2144, 0.0
      %v11194 = vadd.f32 %v11192, %v11193
      %v11195 = vsel %vm9248, %v2145, 0.0
      %v11196 = vadd.f32 %v11194, %v11195
      %v11197 = vsel %vm9248, %v2146, 0.0
      %v11198 = vadd.f32 %v11196, %v11197
      %v11199 = vsel %vm9248, %v2147, 0.0
      %v11200 = vadd.f32 %v11198, %v11199
      %v11201 = vsel %vm9248, %v2148, 0.0
      %v11202 = vadd.f32 %v11200, %v11201
      %v11203 = vsel %vm9248, %v2149, 0.0
      %v11204 = vadd.f32 %v11202, %v11203
      %v11205 = vsel %vm9248, %v2150, 0.0
      %v11206 = vadd.f32 %v11204, %v11205
      %v11207 = vsel %vm9248, %v2151, 0.0
      %v11208 = vadd.f32 %v11206, %v11207
      %v11209 = vsel %vm9248, %v2152, 0.0
      %v11210 = vadd.f32 %v11208, %v11209
      %v11211 = vsel %vm9248, %v2153, 0.0
      %v11212 = vadd.f32 %v11210, %v11211
      %v11213 = vsel %vm9248, %v2154, 0.0
      %v11214 = vadd.f32 %v11212, %v11213
      %v11215 = vsel %vm9248, %v2155, 0.0
      %v11216 = vadd.f32 %v11214, %v11215
      %v11217 = vsel %vm9248, %v2156, 0.0
      %v11218 = vadd.f32 %v11216, %v11217
      %v11219 = vsel %vm9248, %v2157, 0.0
      %v11220 = vadd.f32 %v11218, %v11219
      %v11221 = vsel %vm9248, %v2158, 0.0
      %v11222 = vadd.f32 %v11220, %v11221
      %v11223 = vsel %vm9248, %v2159, 0.0
      %v11224 = vadd.f32 %v11222, %v11223
      %v11225 = vsel %vm9248, %v2160, 0.0
      %v11226 = vadd.f32 %v11224, %v11225
      %v11227 = vsel %vm9248, %v2161, 0.0
      %v11228 = vadd.f32 %v11226, %v11227
      %v11229 = vsel %vm9248, %v2162, 0.0
      %v11230 = vadd.f32 %v11228, %v11229
      %v11231 = vsel %vm9248, %v2163, 0.0
      %v11232 = vadd.f32 %v11230, %v11231
      %v11233 = vsel %vm9248, %v2164, 0.0
      %v11234 = vadd.f32 %v11232, %v11233
      %v11235 = vsel %vm9248, %v2165, 0.0
      %v11236 = vadd.f32 %v11234, %v11235
      %v11237 = vsel %vm9248, %v2166, 0.0
      %v11238 = vadd.f32 %v11236, %v11237
      %v11239 = vsel %vm9248, %v2167, 0.0
      %v11240 = vadd.f32 %v11238, %v11239
      %v11241 = vsel %vm9248, %v2168, 0.0
      %v11242 = vadd.f32 %v11240, %v11241
      %v11243 = vsel %vm9248, %v2169, 0.0
      %v11244 = vadd.f32 %v11242, %v11243
      %v11245 = vsel %vm9248, %v2170, 0.0
      %v11246 = vadd.f32 %v11244, %v11245
      %v11247 = vsel %vm9248, %v2171, 0.0
      %v11248 = vadd.f32 %v11246, %v11247
      %v11249 = vsel %vm9248, %v2172, 0.0
      %v11250 = vadd.f32 %v11248, %v11249
      %v11251 = vsel %vm9248, %v2173, 0.0
      %v11252 = vadd.f32 %v11250, %v11251
      %v11253 = vsel %vm9248, %v2174, 0.0
      %v11254 = vadd.f32 %v11252, %v11253
      %v11255 = vsel %vm9248, %v2175, 0.0
      %v11256 = vadd.f32 %v11254, %v11255
      %v11257 = vsel %vm9248, %v2176, 0.0
      %v11258 = vadd.f32 %v11256, %v11257
      %v11259 = vsel %vm9248, %v2177, 0.0
      %v11260 = vadd.f32 %v11258, %v11259
      %v11261 = vsel %vm9248, %v2178, 0.0
      %v11262 = vadd.f32 %v11260, %v11261
      %v11263 = vsel %vm9248, %v2179, 0.0
      %v11264 = vadd.f32 %v11262, %v11263
      %v11265 = vsel %vm9248, %v2180, 0.0
      %v11266 = vadd.f32 %v11264, %v11265
      %v11267 = vsel %vm9248, %v2181, 0.0
      %v11268 = vadd.f32 %v11266, %v11267
      %v11269 = vsel %vm9248, %v2182, 0.0
      %v11270 = vadd.f32 %v11268, %v11269
      %v11271 = vsel %vm9248, %v2183, 0.0
      %v11272 = vadd.f32 %v11270, %v11271
      %v11273 = vsel %vm9248, %v2184, 0.0
      %v11274 = vadd.f32 %v11272, %v11273
      %v11275 = vsel %vm9248, %v2185, 0.0
      %v11276 = vadd.f32 %v11274, %v11275
      %v11277 = vsel %vm9248, %v2186, 0.0
      %v11278 = vadd.f32 %v11276, %v11277
      %v11279 = vsel %vm9248, %v2187, 0.0
      %v11280 = vadd.f32 %v11278, %v11279
      %v11281 = vsel %vm9248, %v2188, 0.0
      %v11282 = vadd.f32 %v11280, %v11281
      %v11283 = vsel %vm9248, %v2189, 0.0
      %v11284 = vadd.f32 %v11282, %v11283
      %v11285 = vsel %vm9248, %v2190, 0.0
      %v11286 = vadd.f32 %v11284, %v11285
      %v11287 = vsel %vm9248, %v2191, 0.0
      %v11288 = vadd.f32 %v11286, %v11287
      %v11289 = vsel %vm9248, %v2192, 0.0
      %v11290 = vadd.f32 %v11288, %v11289
      %v11291 = vsel %vm9248, %v2193, 0.0
      %v11292 = vadd.f32 %v11290, %v11291
      %v11293 = vsel %vm9248, %v2194, 0.0
      %v11294 = vadd.f32 %v11292, %v11293
      %v11295 = vsel %vm9248, %v2195, 0.0
      %v11296 = vadd.f32 %v11294, %v11295
      %v11297 = vsel %vm9248, %v2196, 0.0
      %v11298 = vadd.f32 %v11296, %v11297
      %v11299 = vsel %vm9248, %v2197, 0.0
      %v11300 = vadd.f32 %v11298, %v11299
      %v11301 = vsel %vm9248, %v2198, 0.0
      %v11302 = vadd.f32 %v11300, %v11301
      %v11303 = vsel %vm9248, %v2199, 0.0
      %v11304 = vadd.f32 %v11302, %v11303
      %v11305 = vsel %vm9248, %v2200, 0.0
      %v11306 = vadd.f32 %v11304, %v11305
      %v11307 = vsel %vm9248, %v2201, 0.0
      %v11308 = vadd.f32 %v11306, %v11307
      %v11309 = vsel %vm9248, %v2202, 0.0
      %v11310 = vadd.f32 %v11308, %v11309
      %v11311 = vsel %vm9248, %v2203, 0.0
      %v11312 = vadd.f32 %v11310, %v11311
      %v11313 = vsel %vm9248, %v2204, 0.0
      %v11314 = vadd.f32 %v11312, %v11313
      %v11315 = vsel %vm9248, %v2205, 0.0
      %v11316 = vadd.f32 %v11314, %v11315
      %v11317 = vsel %vm9248, %v2206, 0.0
      %v11318 = vadd.f32 %v11316, %v11317
      %v11319 = vsel %vm9248, %v2207, 0.0
      %v11320 = vadd.f32 %v11318, %v11319
      %v11321 = vsel %vm9248, %v2208, 0.0
      %v11322 = vadd.f32 %v11320, %v11321
      %v11323 = vsel %vm9248, %v2209, 0.0
      %v11324 = vadd.f32 %v11322, %v11323
      %v11325 = vsel %vm9248, %v2210, 0.0
      %v11326 = vadd.f32 %v11324, %v11325
      %v11327 = vsel %vm9248, %v2211, 0.0
      %v11328 = vadd.f32 %v11326, %v11327
      %v11329 = vsel %vm9248, %v2212, 0.0
      %v11330 = vadd.f32 %v11328, %v11329
      %v11331 = vsel %vm9248, %v2213, 0.0
      %v11332 = vadd.f32 %v11330, %v11331
      %v11333 = vsel %vm9248, %v2214, 0.0
      %v11334 = vadd.f32 %v11332, %v11333
      %v11335 = vsel %vm9248, %v2215, 0.0
      %v11336 = vadd.f32 %v11334, %v11335
      %v11337 = vsel %vm9248, %v2216, 0.0
      %v11338 = vadd.f32 %v11336, %v11337
      %v11339 = vsel %vm9248, %v2217, 0.0
      %v11340 = vadd.f32 %v11338, %v11339
      %v11341 = vsel %vm9248, %v2218, 0.0
      %v11342 = vadd.f32 %v11340, %v11341
      %v11343 = vsel %vm9248, %v2219, 0.0
      %v11344 = vadd.f32 %v11342, %v11343
      %v11345 = vsel %vm9248, %v2220, 0.0
      %v11346 = vadd.f32 %v11344, %v11345
      %v11347 = vsel %vm9248, %v2221, 0.0
      %v11348 = vadd.f32 %v11346, %v11347
      %v11349 = vsel %vm9248, %v2222, 0.0
      %v11350 = vadd.f32 %v11348, %v11349
      %v11351 = vsel %vm9248, %v2223, 0.0
      %v11352 = vadd.f32 %v11350, %v11351
      %v11353 = vsel %vm9248, %v2224, 0.0
      %v11354 = vadd.f32 %v11352, %v11353
      %v11355 = vsel %vm9248, %v2225, 0.0
      %v11356 = vadd.f32 %v11354, %v11355
      %v11357 = vsel %vm9248, %v2226, 0.0
      %v11358 = vadd.f32 %v11356, %v11357
      %v11359 = vsel %vm9248, %v2227, 0.0
      %v11360 = vadd.f32 %v11358, %v11359
      %v11361 = vsel %vm9248, %v2228, 0.0
      %v11362 = vadd.f32 %v11360, %v11361
      %v11363 = vsel %vm9248, %v2229, 0.0
      %v11364 = vadd.f32 %v11362, %v11363
      %v11365 = vsel %vm9248, %v2230, 0.0
      %v11366 = vadd.f32 %v11364, %v11365
      %v11367 = vsel %vm9248, %v2231, 0.0
      %v11368 = vadd.f32 %v11366, %v11367
      %v11369 = vsel %vm9248, %v2232, 0.0
      %v11370 = vadd.f32 %v11368, %v11369
      %v11371 = vsel %vm9248, %v2233, 0.0
      %v11372 = vadd.f32 %v11370, %v11371
      %v11373 = vsel %vm9248, %v2234, 0.0
      %v11374 = vadd.f32 %v11372, %v11373
      %v11375 = vsel %vm9248, %v2235, 0.0
      %v11376 = vadd.f32 %v11374, %v11375
      %v11377 = vsel %vm9248, %v2236, 0.0
      %v11378 = vadd.f32 %v11376, %v11377
      %v11379 = vsel %vm9248, %v2237, 0.0
      %v11380 = vadd.f32 %v11378, %v11379
      %v11381 = vsel %vm9248, %v2238, 0.0
      %v11382 = vadd.f32 %v11380, %v11381
      %v11383 = vsel %vm9248, %v2239, 0.0
      %v11384 = vadd.f32 %v11382, %v11383
      %v11385 = vsel %vm9248, %v2240, 0.0
      %v11386 = vadd.f32 %v11384, %v11385
      %v11387 = vsel %vm9248, %v2241, 0.0
      %v11388 = vadd.f32 %v11386, %v11387
      %v11389 = vsel %vm9248, %v2242, 0.0
      %v11390 = vadd.f32 %v11388, %v11389
      %v11391 = vsel %vm9248, %v2243, 0.0
      %v11392 = vadd.f32 %v11390, %v11391
      %v11393 = vsel %vm9248, %v2244, 0.0
      %v11394 = vadd.f32 %v11392, %v11393
      %v11395 = vsel %vm9248, %v2245, 0.0
      %v11396 = vadd.f32 %v11394, %v11395
      %v11397 = vsel %vm9248, %v2246, 0.0
      %v11398 = vadd.f32 %v11396, %v11397
      %v11399 = vsel %vm9248, %v2247, 0.0
      %v11400 = vadd.f32 %v11398, %v11399
      %v11401 = vsel %vm9248, %v2248, 0.0
      %v11402 = vadd.f32 %v11400, %v11401
      %v11403 = vsel %vm9248, %v2249, 0.0
      %v11404 = vadd.f32 %v11402, %v11403
      %v11405 = vsel %vm9248, %v2250, 0.0
      %v11406 = vadd.f32 %v11404, %v11405
      %v11407 = vsel %vm9248, %v2251, 0.0
      %v11408 = vadd.f32 %v11406, %v11407
      %v11409 = vsel %vm9248, %v2252, 0.0
      %v11410 = vadd.f32 %v11408, %v11409
      %v11411 = vsel %vm9248, %v2253, 0.0
      %v11412 = vadd.f32 %v11410, %v11411
      %v11413 = vsel %vm9248, %v2254, 0.0
      %v11414 = vadd.f32 %v11412, %v11413
      %v11415 = vsel %vm9248, %v2255, 0.0
      %v11416 = vadd.f32 %v11414, %v11415
      %v11417 = vsel %vm9248, %v2256, 0.0
      %v11418 = vadd.f32 %v11416, %v11417
      %v11419 = vsel %vm9248, %v2257, 0.0
      %v11420 = vadd.f32 %v11418, %v11419
      %v11421 = vsel %vm9248, %v2258, 0.0
      %v11422 = vadd.f32 %v11420, %v11421
      %v11423 = vsel %vm9248, %v2259, 0.0
      %v11424 = vadd.f32 %v11422, %v11423
      %v11425 = vsel %vm9248, %v2260, 0.0
      %v11426 = vadd.f32 %v11424, %v11425
      %v11427 = vsel %vm9248, %v2261, 0.0
      %v11428 = vadd.f32 %v11426, %v11427
      %v11429 = vsel %vm9248, %v2262, 0.0
      %v11430 = vadd.f32 %v11428, %v11429
      %v11431 = vsel %vm9248, %v2263, 0.0
      %v11432 = vadd.f32 %v11430, %v11431
      %v11433 = vsel %vm9248, %v2264, 0.0
      %v11434 = vadd.f32 %v11432, %v11433
      %v11435 = vsel %vm9248, %v2265, 0.0
      %v11436 = vadd.f32 %v11434, %v11435
      %v11437 = vsel %vm9248, %v2266, 0.0
      %v11438 = vadd.f32 %v11436, %v11437
      %v11439 = vsel %vm9248, %v2267, 0.0
      %v11440 = vadd.f32 %v11438, %v11439
      %v11441 = vsel %vm9248, %v2268, 0.0
      %v11442 = vadd.f32 %v11440, %v11441
      %v11443 = vsel %vm9248, %v2269, 0.0
      %v11444 = vadd.f32 %v11442, %v11443
      %v11445 = vsel %vm9248, %v2270, 0.0
      %v11446 = vadd.f32 %v11444, %v11445
      %v11447 = vsel %vm9248, %v2271, 0.0
      %v11448 = vadd.f32 %v11446, %v11447
      %v11449 = vsel %vm9248, %v2272, 0.0
      %v11450 = vadd.f32 %v11448, %v11449
      %v11451 = vsel %vm9248, %v2273, 0.0
      %v11452 = vadd.f32 %v11450, %v11451
      %v11453 = vsel %vm9248, %v2274, 0.0
      %v11454 = vadd.f32 %v11452, %v11453
      %v11455 = vsel %vm9248, %v2275, 0.0
      %v11456 = vadd.f32 %v11454, %v11455
      %v11457 = vsel %vm9248, %v2276, 0.0
      %v11458 = vadd.f32 %v11456, %v11457
      %v11459 = vsel %vm9248, %v2277, 0.0
      %v11460 = vadd.f32 %v11458, %v11459
      %v11461 = vsel %vm9248, %v2278, 0.0
      %v11462 = vadd.f32 %v11460, %v11461
      %v11463 = vsel %vm9248, %v2279, 0.0
      %v11464 = vadd.f32 %v11462, %v11463
      %v11465 = vsel %vm9248, %v2280, 0.0
      %v11466 = vadd.f32 %v11464, %v11465
      %v11467 = vsel %vm9248, %v2281, 0.0
      %v11468 = vadd.f32 %v11466, %v11467
      %v11469 = vsel %vm9248, %v2282, 0.0
      %v11470 = vadd.f32 %v11468, %v11469
      %v11471 = vsel %vm9248, %v2283, 0.0
      %v11472 = vadd.f32 %v11470, %v11471
      %v11473 = vsel %vm9248, %v2284, 0.0
      %v11474 = vadd.f32 %v11472, %v11473
      %v11475 = vsel %vm9248, %v2285, 0.0
      %v11476 = vadd.f32 %v11474, %v11475
      %v11477 = vsel %vm9248, %v2286, 0.0
      %v11478 = vadd.f32 %v11476, %v11477
      %v11479 = vsel %vm9248, %v2287, 0.0
      %v11480 = vadd.f32 %v11478, %v11479
      %v11481 = vsel %vm9248, %v2288, 0.0
      %v11482 = vadd.f32 %v11480, %v11481
      %v11483 = vsel %vm9248, %v2289, 0.0
      %v11484 = vadd.f32 %v11482, %v11483
      %v11485 = vsel %vm9248, %v2290, 0.0
      %v11486 = vadd.f32 %v11484, %v11485
      %v11487 = vsel %vm9248, %v2291, 0.0
      %v11488 = vadd.f32 %v11486, %v11487
      %v11489 = vsel %vm9248, %v2292, 0.0
      %v11490 = vadd.f32 %v11488, %v11489
      %v11491 = vsel %vm9248, %v2293, 0.0
      %v11492 = vadd.f32 %v11490, %v11491
      %v11493 = vsel %vm9248, %v2294, 0.0
      %v11494 = vadd.f32 %v11492, %v11493
      %v11495 = vsel %vm9248, %v2295, 0.0
      %v11496 = vadd.f32 %v11494, %v11495
      %v11497 = vsel %vm9248, %v2296, 0.0
      %v11498 = vadd.f32 %v11496, %v11497
      %v11499 = vsel %vm9248, %v2297, 0.0
      %v11500 = vadd.f32 %v11498, %v11499
      %v11501 = vsel %vm9248, %v2298, 0.0
      %v11502 = vadd.f32 %v11500, %v11501
      %v11503 = vsel %vm9248, %v2299, 0.0
      %v11504 = vadd.f32 %v11502, %v11503
      %v11505 = vsel %vm9248, %v2300, 0.0
      %v11506 = vadd.f32 %v11504, %v11505
      %v11507 = vsel %vm9248, %v2301, 0.0
      %v11508 = vadd.f32 %v11506, %v11507
      %v11509 = vsel %vm9248, %v2302, 0.0
      %v11510 = vadd.f32 %v11508, %v11509
      %v11511 = vsel %vm9248, %v2303, 0.0
      %v11512 = vadd.f32 %v11510, %v11511
      %v11513 = vsel %vm9248, %v2304, 0.0
      %v11514 = vadd.f32 %v11512, %v11513
      %v11515 = vsel %vm9248, %v2305, 0.0
      %v11516 = vadd.f32 %v11514, %v11515
      %v11517 = vsel %vm9248, %v2306, 0.0
      %v11518 = vadd.f32 %v11516, %v11517
      %v11519 = vsel %vm9248, %v2307, 0.0
      %v11520 = vadd.f32 %v11518, %v11519
      %v11521 = vsel %vm9248, %v2308, 0.0
      %v11522 = vadd.f32 %v11520, %v11521
      %v11523 = vsel %vm9248, %v2309, 0.0
      %v11524 = vadd.f32 %v11522, %v11523
      %v11525 = vsel %vm9248, %v2310, 0.0
      %v11526 = vadd.f32 %v11524, %v11525
      %v11527 = vsel %vm9248, %v2311, 0.0
      %v11528 = vadd.f32 %v11526, %v11527
      %v11529 = vsel %vm9248, %v2312, 0.0
      %v11530 = vadd.f32 %v11528, %v11529
      %v11531 = vsel %vm9248, %v2313, 0.0
      %v11532 = vadd.f32 %v11530, %v11531
      %v11533 = vsel %vm9248, %v2314, 0.0
      %v11534 = vadd.f32 %v11532, %v11533
      %v11535 = vsel %vm9248, %v2315, 0.0
      %v11536 = vadd.f32 %v11534, %v11535
      %v11537 = vsel %vm9248, %v2316, 0.0
      %v11538 = vadd.f32 %v11536, %v11537
      %v11539 = vsel %vm9248, %v2317, 0.0
      %v11540 = vadd.f32 %v11538, %v11539
      %v11541 = vsel %vm9248, %v2318, 0.0
      %v11542 = vadd.f32 %v11540, %v11541
      %v11543 = vsel %vm9248, %v2319, 0.0
      %v11544 = vadd.f32 %v11542, %v11543
      %v11545 = vsel %vm9248, %v2320, 0.0
      %v11546 = vadd.f32 %v11544, %v11545
      %v11547 = vsel %vm9248, %v2321, 0.0
      %v11548 = vadd.f32 %v11546, %v11547
      %v11549 = vsel %vm9248, %v2322, 0.0
      %v11550 = vadd.f32 %v11548, %v11549
      %v11551 = vsel %vm9248, %v2323, 0.0
      %v11552 = vadd.f32 %v11550, %v11551
      %v11553 = vsel %vm9248, %v2324, 0.0
      %v11554 = vadd.f32 %v11552, %v11553
      %v11555 = vsel %vm9248, %v2325, 0.0
      %v11556 = vadd.f32 %v11554, %v11555
      %v11557 = vsel %vm9248, %v2326, 0.0
      %v11558 = vadd.f32 %v11556, %v11557
      %v11559 = vsel %vm9248, %v2327, 0.0
      %v11560 = vadd.f32 %v11558, %v11559
      %v11561 = vsel %vm9248, %v2328, 0.0
      %v11562 = vadd.f32 %v11560, %v11561
      %v11563 = vsel %vm9248, %v2329, 0.0
      %v11564 = vadd.f32 %v11562, %v11563
      %v11565 = vsel %vm9248, %v2330, 0.0
      %v11566 = vadd.f32 %v11564, %v11565
      %v11567 = vsel %vm9248, %v2331, 0.0
      %v11568 = vadd.f32 %v11566, %v11567
      %v11569 = vrot.slane %v11568, 4
      %v11570 = vadd.f32 %v11568, %v11569
      %v11571 = vrot.slane %v11570, 2
      %v11572 = vadd.f32 %v11570, %v11571
      %v11573 = vrot.slane %v11572, 1
      %v11574 = vadd.f32 %v11572, %v11573
      %v11575 = vadd.f32 %v11057, %v11574
      %11576 = vst.msk [vmem:[%s273 + $0x2] sm:$0x1] %vm9767, %v11575
      %p11577 = scmp.lt.s32.totalorder %s17, 1
      %s11578 = scalar_select %p11577, %s17, 1
      %s11579 = smul.addr %s11578, 8
      %s11580 = scalar_lea.vmem %s2, %s11579
      // Predicated region
      $region33: #{reconstruction_loss.1} parent=27 // pred_check
        %p11581 = pneg %p111
      $region34: #{reconstruction_loss.1} parent=27 // pred_check_branch
        %11583 = sbr.rel (%p11581) target = $region36
      $region35: #{reconstruction_loss.1} parent=27 // pred_region
        _
      $region36: #{reconstruction_loss.1} parent=27 // pred_fallthru
        _
    $region28: #{reconstruction_loss.1} parent=5 // pred_fallthru
      _
    %p11584 = scmp.le.s32.totalorder 2, %s8
    // Predicated region
    $region37: #{reconstruction_loss.1} parent=5 // pred_check
      %p11585 = pneg %p11584
    $region38: #{reconstruction_loss.1} parent=5 // pred_check_branch
      %11587 = sbr.rel (%p11585) target = $region40
    $region39: #{reconstruction_loss.1} parent=5 // pred_region
      %s11588 = ssub.s32 %s8, 2
      // Predicated region
      $region41: #{reconstruction_loss.1} parent=39 // pred_check
        %p11589 = pneg %p117
      $region42: #{reconstruction_loss.1} parent=39 // pred_check_branch
        %11591 = sbr.rel (%p11589) target = $region44
      $region43: #{reconstruction_loss.1} parent=39 // pred_region
        %p11592 = scmp.lt.s32.totalorder %s19, 1
        %s11593 = scalar_select %p11592, %s19, 1
        %s11594 = smul.addr %s11593, 8
        %s11595 = scalar_lea.vmem %s2, %s11594
      $region44: #{reconstruction_loss.1} parent=39 // pred_fallthru
        _
    $region40: #{reconstruction_loss.1} parent=5 // pred_fallthru
      _
  $region6: #{reconstruction_loss.1} parent=0 // loop_footer
    %s12 = sadd.s32 1, %s8
  $region7: #{reconstruction_loss.1} parent=0 // loop_footer_branch
    %7 = sbr.rel target = $region3
  $region8: #{reconstruction_loss.1} parent=0 // loop_exit
    _

</llo_original>
